<compile_context>
chip_gen: v7x
topology: tpu7x:2x2x1
jax: 0.10.0
libtpu: 0.0.40
codegen_flags: <defaults>
</compile_context>

<pallas_src>
import math
from functools import partial

import jax
import jax.numpy as jnp
from jax import lax
from jax.experimental import pallas as pl
from jax.experimental.pallas import tpu as pltpu


# ----------------------------- fused kernel ----------------------------------

def _fused_kernel(N, C, d_inner, d_state, d_conv, chunk,
                  t2_ref, t1_ref, t2res_ref, t1res_ref,
                  consts_ref, win_ref, wdt_ref, wbc_ref, wout_ref,
                  out_ref):
    di = d_inner
    ds = d_state
    D = 2 * di                       # packed inner width (both encoders)
    f32 = jnp.float32
    bf16 = jnp.bfloat16

    cvec = consts_ref[...]                              # (ds + d_conv + 4, D) f32
    a_neg = cvec[0:ds, :]                               # (ds, D)  = [-exp(A2)| -exp(A1)]
    conv_w = cvec[ds:ds + d_conv, :]                    # (d_conv, D)
    r = ds + d_conv
    conv_b = cvec[r:r + 1, :]                           # (1, D)
    dt_b = cvec[r + 1:r + 2, :]                         # (1, D)
    d_skip = cvec[r + 2:r + 3, :]                       # (1, D)
    ln_row = cvec[r + 3:r + 4, :]                       # (1, D): [w1|w2|b1|b2]

    # ---- residual add + per-stream WithBias LayerNorm ------------------------
    t2r = t2_ref[0] + t2res_ref[0]                      # (N, C)
    t1r = t1_ref[0] + t1res_ref[0]
    res = jnp.concatenate([t2r, t1r], axis=-1)          # (N, 2C) residual outputs

    def layernorm(x, w, b):
        mu = jnp.mean(x, axis=-1, keepdims=True)
        var = jnp.mean((x - mu) ** 2, axis=-1, keepdims=True)   # unbiased=False
        return (x - mu) / jnp.sqrt(var + 1e-5) * w + b

    t2n = layernorm(t2r, ln_row[:, 0:C], ln_row[:, 2 * C:3 * C])
    t1n = layernorm(t1r, ln_row[:, C:2 * C], ln_row[:, 3 * C:4 * C])
    norm = jnp.concatenate([t2n, t1n], axis=-1)         # (N, 2C)
    # NOTE: the half-channel token swap is folded into win's row permutation.

    # ---- fused in_proj for both encoders: columns [x2 | x1 | z2 | z1] --------
    xz = jnp.dot(norm.astype(bf16), win_ref[...], preferred_element_type=f32)  # (N, 2D)
    x_in = xz[:, :D]
    z = xz[:, D:]

    # ---- causal depthwise conv1d + bias + SiLU (both encoders lane-packed) ---
    row_idx = lax.broadcasted_iota(jnp.int32, (N, D), 0)
    acc = x_in * conv_w[d_conv - 1:d_conv, :]           # tap with shift 0
    for k in range(d_conv - 1):
        s = d_conv - 1 - k
        shifted = jnp.where(row_idx >= s, jnp.roll(x_in, s, axis=0), 0.0)
        acc = acc + shifted * conv_w[k:k + 1, :]
    xc = acc + conv_b
    xc = xc * jax.nn.sigmoid(xc)                        # SiLU, (N, D) f32
    xc_b = xc.astype(bf16)

    # ---- whole-sequence dt and B|C projections (two lane-dense matmuls) ------
    dt_all = jax.nn.softplus(
        jnp.dot(xc_b, wdt_ref[...], preferred_element_type=f32) + dt_b)        # (N, D)
    # state-major B|C: rows [B2 | C2 | B1 | C1], columns = tokens
    bcT = lax.dot_general(wbc_ref[...], xc_b, (((1,), (1,)), ((), ())),
                          preferred_element_type=f32)                           # (4ds, N)
    u_all = dt_all * xc                                  # (N, D)

    # ---- selective scan (fully unrolled; exp / broadcasts / reduce are off the
    #      h critical path so the scheduler pipelines them across tokens) ------
    lane_half = lax.broadcasted_iota(jnp.int32, (ds, D), 1) < di
    h = jnp.zeros((ds, D), f32)
    y_blocks = []
    for c0 in range(0, N, chunk):
        rows = []
        for t in range(c0, c0 + chunk):
            da = jnp.exp(dt_all[t:t + 1, :] * a_neg)                         # (ds, D)
            b_col = jnp.where(lane_half, bcT[0:ds, t:t + 1],
                              bcT[2 * ds:3 * ds, t:t + 1])                    # (ds, D)
            c_col = jnp.where(lane_half, bcT[ds:2 * ds, t:t + 1],
                              bcT[3 * ds:4 * ds, t:t + 1])                    # (ds, D)
            h = da * h + u_all[t:t + 1, :] * b_col                            # 2 VPU ops
            rows.append(jnp.sum(h * c_col, axis=0, keepdims=True))            # (1, D)
        y_blocks.append(jnp.concatenate(rows, axis=0))
    y = jnp.concatenate(y_blocks, axis=0)                # (N, D)

    # ---- D skip, SiLU(z) gate, fused out_proj, single lane-dense store -------
    y = y + d_skip * xc
    y = y * (z * jax.nn.sigmoid(z))
    out2_1 = jnp.dot(y.astype(bf16), wout_ref[...], preferred_element_type=f32)  # (N, 2C)
    out_ref[0] = jnp.concatenate([out2_1, res], axis=-1)  # (N, 4C): [t2|t1|t2r|t1r]


# ----------------------------- weight packing ---------------------------------

def _pack_weights(params, C, d_inner, d_state, d_conv):
    """Pack both encoders' params into the lane-dense fused layout."""
    p2, p1 = params["t2encoder"], params["t1encoder"]
    di, ds = d_inner, d_state
    half = C // 2
    f32 = jnp.float32

    # fused in_proj (token swap folded into the row permutation); cols [x2|x1|z2|z1]
    win = jnp.zeros((2 * C, 4 * di), f32)
    win = win.at[0:half, di:2 * di].set(p1["wx"][0:half])            # t2n[:h] -> enc1
    win = win.at[0:half, 3 * di:4 * di].set(p1["wz"][0:half])
    win = win.at[half:C, 0:di].set(p2["wx"][half:C])                 # t2n[h:] -> enc2
    win = win.at[half:C, 2 * di:3 * di].set(p2["wz"][half:C])
    win = win.at[C:C + half, 0:di].set(p2["wx"][0:half])             # t1n[:h] -> enc2
    win = win.at[C:C + half, 2 * di:3 * di].set(p2["wz"][0:half])
    win = win.at[C + half:2 * C, di:2 * di].set(p1["wx"][half:C])    # t1n[h:] -> enc1
    win = win.at[C + half:2 * C, 3 * di:4 * di].set(p1["wz"][half:C])

    # block-diagonal effective dt projection (x_proj dt rows folded with dt_proj)
    wdt = jnp.zeros((2 * di, 2 * di), f32)
    wdt = wdt.at[0:di, 0:di].set(p2["wdt"] @ p2["dtw"])
    wdt = wdt.at[di:2 * di, di:2 * di].set(p1["wdt"] @ p1["dtw"])

    # state-major fused B|C projection: rows [B2 | C2 | B1 | C1]
    wbc = jnp.zeros((4 * ds, 2 * di), f32)
    wbc = wbc.at[0 * ds:1 * ds, 0:di].set(p2["wB"].T)
    wbc = wbc.at[1 * ds:2 * ds, 0:di].set(p2["wC"].T)
    wbc = wbc.at[2 * ds:3 * ds, di:2 * di].set(p1["wB"].T)
    wbc = wbc.at[3 * ds:4 * ds, di:2 * di].set(p1["wC"].T)

    # fused out_proj -> packed [t2_out | t1_out] lanes
    wout = jnp.zeros((2 * di, 2 * C), f32)
    wout = wout.at[0:di, 0:C].set(p2["wout"])
    wout = wout.at[di:2 * di, C:2 * C].set(p1["wout"])

    # packed small f32 constants: rows [A (ds) | conv taps | conv_b | dt_b | D | LN]
    n_rows = ds + d_conv + 4                      # = 24 for the default config
    consts = jnp.zeros((n_rows, 2 * di), f32)
    a_packed = jnp.concatenate([-jnp.exp(p2["AlogT"]), -jnp.exp(p1["AlogT"])], axis=1)
    consts = consts.at[0:ds, :].set(a_packed)
    convw = jnp.concatenate([p2["convw"], p1["convw"]], axis=1)      # (d_conv, 2*di)
    consts = consts.at[ds:ds + d_conv, :].set(convw)
    r = ds + d_conv
    consts = consts.at[r, :].set(jnp.concatenate([p2["convb"][0], p1["convb"][0]]))
    consts = consts.at[r + 1, :].set(jnp.concatenate([p2["dtb"][0], p1["dtb"][0]]))
    consts = consts.at[r + 2, :].set(jnp.concatenate([p2["D"][0], p1["D"][0]]))
    ln_vec = jnp.concatenate([params["norm1"]["weight"][0], params["norm2"]["weight"][0],
                              params["norm1"]["bias"][0], params["norm2"]["bias"][0]])
    consts = consts.at[r + 3, 0:4 * C].set(ln_vec)

    bf16 = jnp.bfloat16
    return consts, win.astype(bf16), wdt.astype(bf16), wbc.astype(bf16), wout.astype(bf16)


# ----------------------------- TokenSwapMamba forward -------------------------

@jax.jit
def token_swap_mamba(t2, t1, t2_residual, t1_residual, params):
    B, N, C = t2.shape
    p2 = params["t2encoder"]
    d_inner = p2["wx"].shape[1]
    d_state = p2["wB"].shape[1]
    d_conv = p2["convw"].shape[0]
    chunk = 8
    assert N % chunk == 0, "token count must be a multiple of the scan chunk (8)"
    assert 4 * C <= 2 * d_inner, "constants row packing assumes 4*C <= 2*d_inner"

    consts, win, wdt, wbc, wout = _pack_weights(params, C, d_inner, d_state, d_conv)
    weights = [consts, win, wdt, wbc, wout]

    tok_spec = pl.BlockSpec((1, N, C), lambda b: (b, 0, 0))
    out_spec = pl.BlockSpec((1, N, 4 * C), lambda b: (b, 0, 0))

    def full_spec(a):
        nd = a.ndim
        return pl.BlockSpec(a.shape, lambda b, nd=nd: (0,) * nd)

    kernel = partial(_fused_kernel, N, C, d_inner, d_state, d_conv, chunk)

    packed = pl.pallas_call(
        kernel,
        grid=(B,),
        in_specs=[tok_spec] * 4 + [full_spec(w) for w in weights],
        out_specs=out_spec,
        out_shape=jax.ShapeDtypeStruct((B, N, 4 * C), jnp.float32),
        compiler_params=pltpu.CompilerParams(
            dimension_semantics=("parallel",)),      # shard batch over TCs
    )(t2, t1, t2_residual, t1_residual, *weights)

    # split the lane-packed slab back into the module's four outputs
    t2_out = packed[:, :, 0:C]
    t1_out = packed[:, :, C:2 * C]
    t2r_out = packed[:, :, 2 * C:3 * C]
    t1r_out = packed[:, :, 3 * C:4 * C]
    return t2_out, t1_out, t2r_out, t1r_out


# ----------------------------- parameter construction -------------------------

def init_mamba_params(key, dim, d_state=16, d_conv=4, expand=2):
    d_inner = expand * dim
    dt_rank = math.ceil(dim / 16)
    ks = jax.random.split(key, 8)
    s_in = 1.0 / math.sqrt(dim)
    s_di = 1.0 / math.sqrt(d_inner)
    return {
        "wx": jax.random.normal(ks[0], (dim, d_inner), jnp.float32) * s_in,
        "wz": jax.random.normal(ks[1], (dim, d_inner), jnp.float32) * s_in,
        "convw": jax.random.normal(ks[2], (d_conv, d_inner), jnp.float32) * 0.5,
        "convb": jnp.zeros((1, d_inner), jnp.float32),
        "wdt": jax.random.normal(ks[3], (d_inner, dt_rank), jnp.float32) * s_di,
        "wB": jax.random.normal(ks[4], (d_inner, d_state), jnp.float32) * s_di,
        "wC": jax.random.normal(ks[5], (d_inner, d_state), jnp.float32) * s_di,
        "dtw": jax.random.normal(ks[6], (dt_rank, d_inner), jnp.float32)
               * (dt_rank ** -0.5),
        "dtb": jnp.full((1, d_inner), math.log(math.expm1(0.01)), jnp.float32),
        "AlogT": jnp.log(jnp.broadcast_to(
            jnp.arange(1, d_state + 1, dtype=jnp.float32)[:, None],
            (d_state, d_inner))),
        "D": jnp.ones((1, d_inner), jnp.float32),
        "wout": jax.random.normal(ks[7], (d_inner, dim), jnp.float32) * s_di,
    }


def init_layernorm_params(dim):
    # torch WithBias_LayerNorm init: weight = ones, bias = zeros
    return {"weight": jnp.ones((1, dim), jnp.float32),
            "bias": jnp.zeros((1, dim), jnp.float32)}


# ----------------------------- demo --------------------------------------------

if __name__ == "__main__":
    B, H, W, C = 2, 8, 8, 32       # dim = 32 channels, N = H*W = 64 tokens
    N = H * W

    key = jax.random.PRNGKey(0)
    k_in, k_p1, k_p2 = jax.random.split(key, 3)
    kt2, kt1, kr2, kr1 = jax.random.split(k_in, 4)

    t2 = jax.random.normal(kt2, (B, N, C), jnp.float32)
    t1 = jax.random.normal(kt1, (B, N, C), jnp.float32)
    t2_residual = jax.random.normal(kr2, (B, N, C), jnp.float32)
    t1_residual = jax.random.normal(kr1, (B, N, C), jnp.float32)

    params = {
        "t2encoder": init_mamba_params(k_p1, C),
        "t1encoder": init_mamba_params(k_p2, C),
        "norm1": init_layernorm_params(C),
        "norm2": init_layernorm_params(C),
    }

    outs = token_swap_mamba(t2, t1, t2_residual, t1_residual, params)
    outs = jax.block_until_ready(outs)

    t2_swap, t1_swap, t2_res, t1_res = outs
    assert t2_swap.shape == (B, N, C) and t1_swap.shape == (B, N, C)
    assert t2_res.shape == (B, N, C) and t1_res.shape == (B, N, C)
    assert all(bool(jnp.all(jnp.isfinite(o))) for o in outs)
    # residual pass-through sanity check (pure f32 path, validates output packing)
    assert bool(jnp.allclose(t2_res, t2 + t2_residual, atol=1e-6))
    assert bool(jnp.allclose(t1_res, t1 + t1_residual, atol=1e-6))
    print("KERNEL_OK")
</pallas_src>

<mosaic_0001>
module attributes {stable_mosaic.version = 11 : i64} {
  func.func @_fused_kernel(%arg0: i32, %arg1: memref<1x64x32xf32, #tpu.memory_space<vmem>>, %arg2: memref<1x64x32xf32, #tpu.memory_space<vmem>>, %arg3: memref<1x64x32xf32, #tpu.memory_space<vmem>>, %arg4: memref<1x64x32xf32, #tpu.memory_space<vmem>>, %arg5: memref<24x128xf32, #tpu.memory_space<vmem>>, %arg6: memref<64x256xbf16, #tpu.memory_space<vmem>>, %arg7: memref<128x128xbf16, #tpu.memory_space<vmem>>, %arg8: memref<64x128xbf16, #tpu.memory_space<vmem>>, %arg9: memref<128x64xbf16, #tpu.memory_space<vmem>>, %arg10: memref<1x64x128xf32, #tpu.memory_space<vmem>>) attributes {dimension_semantics = [#tpu.dimension_semantics<parallel>], iteration_bounds = array<i64: 2>, scalar_prefetch = 0 : i64, scratch_operands = 0 : i64, tpu.core_type = #tpu.core_type<tc>, window_params = [{transform_indices = @transform_0, window_bounds = array<i64: 1, 64, 32>}, {transform_indices = @transform_1, window_bounds = array<i64: 1, 64, 32>}, {transform_indices = @transform_2, window_bounds = array<i64: 1, 64, 32>}, {transform_indices = @transform_3, window_bounds = array<i64: 1, 64, 32>}, {pipeline_mode = #tpu.pipeline_mode<synchronous>, transform_indices = @transform_4, window_bounds = array<i64: 24, 128>}, {pipeline_mode = #tpu.pipeline_mode<synchronous>, transform_indices = @transform_5, window_bounds = array<i64: 64, 256>}, {pipeline_mode = #tpu.pipeline_mode<synchronous>, transform_indices = @transform_6, window_bounds = array<i64: 128, 128>}, {pipeline_mode = #tpu.pipeline_mode<synchronous>, transform_indices = @transform_7, window_bounds = array<i64: 64, 128>}, {pipeline_mode = #tpu.pipeline_mode<synchronous>, transform_indices = @transform_8, window_bounds = array<i64: 128, 64>}, {transform_indices = @transform_9, window_bounds = array<i64: 1, 64, 128>}]} {
    %c0 = arith.constant 0 : index
    %c0_0 = arith.constant 0 : index
    %0 = vector.load %arg5[%c0, %c0_0] : memref<24x128xf32, #tpu.memory_space<vmem>>, vector<24x128xf32>
    %1 = vector.extract_strided_slice %0 {offsets = [0, 0], sizes = [16, 128], strides = [1, 1]} : vector<24x128xf32> to vector<16x128xf32>
    %2 = vector.extract_strided_slice %0 {offsets = [16, 0], sizes = [4, 128], strides = [1, 1]} : vector<24x128xf32> to vector<4x128xf32>
    %3 = vector.extract_strided_slice %0 {offsets = [20, 0], sizes = [1, 128], strides = [1, 1]} : vector<24x128xf32> to vector<1x128xf32>
    %4 = vector.extract_strided_slice %0 {offsets = [21, 0], sizes = [1, 128], strides = [1, 1]} : vector<24x128xf32> to vector<1x128xf32>
    %5 = vector.extract_strided_slice %0 {offsets = [22, 0], sizes = [1, 128], strides = [1, 1]} : vector<24x128xf32> to vector<1x128xf32>
    %6 = vector.extract_strided_slice %0 {offsets = [23, 0], sizes = [1, 128], strides = [1, 1]} : vector<24x128xf32> to vector<1x128xf32>
    %c0_1 = arith.constant 0 : index
    %c0_2 = arith.constant 0 : index
    %c0_3 = arith.constant 0 : index
    %7 = vector.load %arg1[%c0_1, %c0_2, %c0_3] : memref<1x64x32xf32, #tpu.memory_space<vmem>>, vector<1x64x32xf32>
    %8 = vector.shape_cast %7 : vector<1x64x32xf32> to vector<64x32xf32>
    %c0_4 = arith.constant 0 : index
    %c0_5 = arith.constant 0 : index
    %c0_6 = arith.constant 0 : index
    %9 = vector.load %arg3[%c0_4, %c0_5, %c0_6] : memref<1x64x32xf32, #tpu.memory_space<vmem>>, vector<1x64x32xf32>
    %10 = vector.shape_cast %9 : vector<1x64x32xf32> to vector<64x32xf32>
    %11 = arith.addf %8, %10 : vector<64x32xf32>
    %c0_7 = arith.constant 0 : index
    %c0_8 = arith.constant 0 : index
    %c0_9 = arith.constant 0 : index
    %12 = vector.load %arg2[%c0_7, %c0_8, %c0_9] : memref<1x64x32xf32, #tpu.memory_space<vmem>>, vector<1x64x32xf32>
    %13 = vector.shape_cast %12 : vector<1x64x32xf32> to vector<64x32xf32>
    %c0_10 = arith.constant 0 : index
    %c0_11 = arith.constant 0 : index
    %c0_12 = arith.constant 0 : index
    %14 = vector.load %arg4[%c0_10, %c0_11, %c0_12] : memref<1x64x32xf32, #tpu.memory_space<vmem>>, vector<1x64x32xf32>
    %15 = vector.shape_cast %14 : vector<1x64x32xf32> to vector<64x32xf32>
    %16 = arith.addf %13, %15 : vector<64x32xf32>
    %17 = tpu.concatenate %11, %16 in 1 : vector<64x32xf32>, vector<64x32xf32> -> vector<64x64xf32>
    %18 = vector.extract_strided_slice %6 {offsets = [0, 0], sizes = [1, 32], strides = [1, 1]} : vector<1x128xf32> to vector<1x32xf32>
    %19 = vector.extract_strided_slice %6 {offsets = [0, 64], sizes = [1, 32], strides = [1, 1]} : vector<1x128xf32> to vector<1x32xf32>
    %cst = arith.constant dense<0.000000e+00> : vector<64xf32>
    %20 = vector.multi_reduction <add>, %11, %cst [1] : vector<64x32xf32> to vector<64xf32>
    %21 = vector.shape_cast %20 : vector<64xf32> to vector<64x1xf32>
    %cst_13 = arith.constant 3.200000e+01 : f32
    %22 = vector.broadcast %cst_13 : f32 to vector<64x1xf32>
    %23 = arith.divf %21, %22 : vector<64x1xf32>
    %24 = vector.broadcast %23 : vector<64x1xf32> to vector<64x32xf32>
    %25 = arith.subf %11, %24 : vector<64x32xf32>
    %26 = arith.mulf %25, %25 : vector<64x32xf32>
    %cst_14 = arith.constant dense<0.000000e+00> : vector<64xf32>
    %27 = vector.multi_reduction <add>, %26, %cst_14 [1] : vector<64x32xf32> to vector<64xf32>
    %28 = vector.shape_cast %27 : vector<64xf32> to vector<64x1xf32>
    %cst_15 = arith.constant 3.200000e+01 : f32
    %29 = vector.broadcast %cst_15 : f32 to vector<64x1xf32>
    %30 = arith.divf %28, %29 : vector<64x1xf32>
    %31 = vector.broadcast %23 : vector<64x1xf32> to vector<64x32xf32>
    %32 = arith.subf %11, %31 : vector<64x32xf32>
    %cst_16 = arith.constant 9.99999974E-6 : f32
    %33 = vector.broadcast %cst_16 : f32 to vector<64x1xf32>
    %34 = arith.addf %30, %33 : vector<64x1xf32>
    %35 = math.sqrt %34 : vector<64x1xf32>
    %36 = vector.broadcast %35 : vector<64x1xf32> to vector<64x32xf32>
    %37 = arith.divf %32, %36 : vector<64x32xf32>
    %38 = vector.broadcast %18 : vector<1x32xf32> to vector<64x32xf32>
    %39 = arith.mulf %37, %38 : vector<64x32xf32>
    %40 = vector.broadcast %19 : vector<1x32xf32> to vector<64x32xf32>
    %41 = arith.addf %39, %40 : vector<64x32xf32>
    %42 = vector.extract_strided_slice %6 {offsets = [0, 32], sizes = [1, 32], strides = [1, 1]} : vector<1x128xf32> to vector<1x32xf32>
    %43 = vector.extract_strided_slice %6 {offsets = [0, 96], sizes = [1, 32], strides = [1, 1]} : vector<1x128xf32> to vector<1x32xf32>
    %cst_17 = arith.constant dense<0.000000e+00> : vector<64xf32>
    %44 = vector.multi_reduction <add>, %16, %cst_17 [1] : vector<64x32xf32> to vector<64xf32>
    %45 = vector.shape_cast %44 : vector<64xf32> to vector<64x1xf32>
    %cst_18 = arith.constant 3.200000e+01 : f32
    %46 = vector.broadcast %cst_18 : f32 to vector<64x1xf32>
    %47 = arith.divf %45, %46 : vector<64x1xf32>
    %48 = vector.broadcast %47 : vector<64x1xf32> to vector<64x32xf32>
    %49 = arith.subf %16, %48 : vector<64x32xf32>
    %50 = arith.mulf %49, %49 : vector<64x32xf32>
    %cst_19 = arith.constant dense<0.000000e+00> : vector<64xf32>
    %51 = vector.multi_reduction <add>, %50, %cst_19 [1] : vector<64x32xf32> to vector<64xf32>
    %52 = vector.shape_cast %51 : vector<64xf32> to vector<64x1xf32>
    %cst_20 = arith.constant 3.200000e+01 : f32
    %53 = vector.broadcast %cst_20 : f32 to vector<64x1xf32>
    %54 = arith.divf %52, %53 : vector<64x1xf32>
    %55 = vector.broadcast %47 : vector<64x1xf32> to vector<64x32xf32>
    %56 = arith.subf %16, %55 : vector<64x32xf32>
    %cst_21 = arith.constant 9.99999974E-6 : f32
    %57 = vector.broadcast %cst_21 : f32 to vector<64x1xf32>
    %58 = arith.addf %54, %57 : vector<64x1xf32>
    %59 = math.sqrt %58 : vector<64x1xf32>
    %60 = vector.broadcast %59 : vector<64x1xf32> to vector<64x32xf32>
    %61 = arith.divf %56, %60 : vector<64x32xf32>
    %62 = vector.broadcast %42 : vector<1x32xf32> to vector<64x32xf32>
    %63 = arith.mulf %61, %62 : vector<64x32xf32>
    %64 = vector.broadcast %43 : vector<1x32xf32> to vector<64x32xf32>
    %65 = arith.addf %63, %64 : vector<64x32xf32>
    %66 = tpu.concatenate %41, %65 in 1 : vector<64x32xf32>, vector<64x32xf32> -> vector<64x64xf32>
    %67 = arith.truncf %66 : vector<64x64xf32> to vector<64x64xbf16>
    %c0_22 = arith.constant 0 : index
    %c0_23 = arith.constant 0 : index
    %68 = vector.load %arg6[%c0_22, %c0_23] : memref<64x256xbf16, #tpu.memory_space<vmem>>, vector<64x256xbf16>
    %cst_24 = arith.constant dense<0.000000e+00> : vector<64x256xf32>
    %69 = tpu.matmul %67, %68, %cst_24 {dimension_numbers = #tpu.dot_dimension_numbers<[1], [0], [0], [1], [0, 0, 1, 1], [], []>} : vector<64x64xbf16>, vector<64x256xbf16>, vector<64x256xf32> -> vector<64x256xf32>
    %70 = vector.extract_strided_slice %69 {offsets = [0, 0], sizes = [64, 128], strides = [1, 1]} : vector<64x256xf32> to vector<64x128xf32>
    %71 = vector.extract_strided_slice %69 {offsets = [0, 128], sizes = [64, 128], strides = [1, 1]} : vector<64x256xf32> to vector<64x128xf32>
    %72 = tpu.iota {dimensions = array<i32: 0>} : vector<64x128xi32>
    %73 = vector.extract_strided_slice %2 {offsets = [3, 0], sizes = [1, 128], strides = [1, 1]} : vector<4x128xf32> to vector<1x128xf32>
    %74 = vector.broadcast %73 : vector<1x128xf32> to vector<64x128xf32>
    %75 = arith.mulf %70, %74 : vector<64x128xf32>
    %c3_i32 = arith.constant 3 : i32
    %76 = vector.broadcast %c3_i32 : i32 to vector<64x128xi32>
    %77 = arith.cmpi sge, %72, %76 : vector<64x128xi32>
    %78 = vector.extract_strided_slice %70 {offsets = [61, 0], sizes = [3, 128], strides = [1, 1]} : vector<64x128xf32> to vector<3x128xf32>
    %79 = vector.extract_strided_slice %70 {offsets = [0, 0], sizes = [61, 128], strides = [1, 1]} : vector<64x128xf32> to vector<61x128xf32>
    %80 = tpu.concatenate %78, %79 in 0 : vector<3x128xf32>, vector<61x128xf32> -> vector<64x128xf32>
    %cst_25 = arith.constant 0.000000e+00 : f32
    %81 = vector.broadcast %cst_25 : f32 to vector<64x128xf32>
    %82 = arith.select %77, %80, %81 : vector<64x128xi1>, vector<64x128xf32>
    %83 = vector.extract_strided_slice %2 {offsets = [0, 0], sizes = [1, 128], strides = [1, 1]} : vector<4x128xf32> to vector<1x128xf32>
    %84 = vector.broadcast %83 : vector<1x128xf32> to vector<64x128xf32>
    %85 = arith.mulf %82, %84 : vector<64x128xf32>
    %86 = arith.addf %75, %85 : vector<64x128xf32>
    %c2_i32 = arith.constant 2 : i32
    %87 = vector.broadcast %c2_i32 : i32 to vector<64x128xi32>
    %88 = arith.cmpi sge, %72, %87 : vector<64x128xi32>
    %89 = vector.extract_strided_slice %70 {offsets = [62, 0], sizes = [2, 128], strides = [1, 1]} : vector<64x128xf32> to vector<2x128xf32>
    %90 = vector.extract_strided_slice %70 {offsets = [0, 0], sizes = [62, 128], strides = [1, 1]} : vector<64x128xf32> to vector<62x128xf32>
    %91 = tpu.concatenate %89, %90 in 0 : vector<2x128xf32>, vector<62x128xf32> -> vector<64x128xf32>
    %cst_26 = arith.constant 0.000000e+00 : f32
    %92 = vector.broadcast %cst_26 : f32 to vector<64x128xf32>
    %93 = arith.select %88, %91, %92 : vector<64x128xi1>, vector<64x128xf32>
    %94 = vector.extract_strided_slice %2 {offsets = [1, 0], sizes = [1, 128], strides = [1, 1]} : vector<4x128xf32> to vector<1x128xf32>
    %95 = vector.broadcast %94 : vector<1x128xf32> to vector<64x128xf32>
    %96 = arith.mulf %93, %95 : vector<64x128xf32>
    %97 = arith.addf %86, %96 : vector<64x128xf32>
    %c1_i32 = arith.constant 1 : i32
    %98 = vector.broadcast %c1_i32 : i32 to vector<64x128xi32>
    %99 = arith.cmpi sge, %72, %98 : vector<64x128xi32>
    %100 = vector.extract_strided_slice %70 {offsets = [63, 0], sizes = [1, 128], strides = [1, 1]} : vector<64x128xf32> to vector<1x128xf32>
    %101 = vector.extract_strided_slice %70 {offsets = [0, 0], sizes = [63, 128], strides = [1, 1]} : vector<64x128xf32> to vector<63x128xf32>
    %102 = tpu.concatenate %100, %101 in 0 : vector<1x128xf32>, vector<63x128xf32> -> vector<64x128xf32>
    %cst_27 = arith.constant 0.000000e+00 : f32
    %103 = vector.broadcast %cst_27 : f32 to vector<64x128xf32>
    %104 = arith.select %99, %102, %103 : vector<64x128xi1>, vector<64x128xf32>
    %105 = vector.extract_strided_slice %2 {offsets = [2, 0], sizes = [1, 128], strides = [1, 1]} : vector<4x128xf32> to vector<1x128xf32>
    %106 = vector.broadcast %105 : vector<1x128xf32> to vector<64x128xf32>
    %107 = arith.mulf %104, %106 : vector<64x128xf32>
    %108 = arith.addf %97, %107 : vector<64x128xf32>
    %109 = vector.broadcast %3 : vector<1x128xf32> to vector<64x128xf32>
    %110 = arith.addf %108, %109 : vector<64x128xf32>
    %111 = arith.negf %110 : vector<64x128xf32>
    %112 = math.exp %111 : vector<64x128xf32>
    %cst_28 = arith.constant 1.000000e+00 : f32
    %113 = vector.broadcast %cst_28 : f32 to vector<64x128xf32>
    %114 = arith.addf %113, %112 : vector<64x128xf32>
    %115 = arith.divf %113, %114 : vector<64x128xf32>
    %116 = arith.mulf %110, %115 : vector<64x128xf32>
    %117 = arith.truncf %116 : vector<64x128xf32> to vector<64x128xbf16>
    %c0_29 = arith.constant 0 : index
    %c0_30 = arith.constant 0 : index
    %118 = vector.load %arg7[%c0_29, %c0_30] : memref<128x128xbf16, #tpu.memory_space<vmem>>, vector<128x128xbf16>
    %cst_31 = arith.constant dense<0.000000e+00> : vector<64x128xf32>
    %119 = tpu.matmul %117, %118, %cst_31 {dimension_numbers = #tpu.dot_dimension_numbers<[1], [0], [0], [1], [0, 0, 1, 1], [], []>} : vector<64x128xbf16>, vector<128x128xbf16>, vector<64x128xf32> -> vector<64x128xf32>
    %120 = vector.broadcast %4 : vector<1x128xf32> to vector<64x128xf32>
    %121 = arith.addf %119, %120 : vector<64x128xf32>
    %cst_32 = arith.constant 0.000000e+00 : f32
    %122 = vector.broadcast %cst_32 : f32 to vector<64x128xf32>
    %123 = arith.maximumf %121, %122 : vector<64x128xf32>
    %124 = vector.broadcast %cst_32 : f32 to vector<64x128xf32>
    %125 = arith.subf %121, %124 : vector<64x128xf32>
    %126 = arith.cmpf one, %125, %125 : vector<64x128xf32>
    %127 = vector.broadcast %cst_32 : f32 to vector<64x128xf32>
    %128 = arith.addf %121, %127 : vector<64x128xf32>
    %129 = math.absf %125 : vector<64x128xf32>
    %cst_33 = arith.constant 0.000000e+00 : f32
    %130 = vector.broadcast %cst_33 : f32 to vector<64x128xf32>
    %131 = arith.subf %130, %129 : vector<64x128xf32>
    %132 = math.exp %131 : vector<64x128xf32>
    %133 = math.log1p %132 : vector<64x128xf32>
    %134 = arith.addf %123, %133 : vector<64x128xf32>
    %135 = arith.select %126, %128, %134 : vector<64x128xi1>, vector<64x128xf32>
    %c0_34 = arith.constant 0 : index
    %c0_35 = arith.constant 0 : index
    %136 = vector.load %arg8[%c0_34, %c0_35] : memref<64x128xbf16, #tpu.memory_space<vmem>>, vector<64x128xbf16>
    %cst_36 = arith.constant dense<0.000000e+00> : vector<64x64xf32>
    %137 = tpu.matmul %136, %117, %cst_36 {dimension_numbers = #tpu.dot_dimension_numbers<[1], [1], [0], [0], [0, 0, 1, 0], [], []>} : vector<64x128xbf16>, vector<64x128xbf16>, vector<64x64xf32> -> vector<64x64xf32>
    %138 = arith.mulf %135, %116 : vector<64x128xf32>
    %139 = tpu.iota {dimensions = array<i32: 1>} : vector<16x128xi32>
    %c64_i32 = arith.constant 64 : i32
    %140 = vector.broadcast %c64_i32 : i32 to vector<16x128xi32>
    %141 = arith.cmpi slt, %139, %140 : vector<16x128xi32>
    %cst_37 = arith.constant 0.000000e+00 : f32
    %142 = vector.broadcast %cst_37 : f32 to vector<16x128xf32>
    %143 = vector.extract_strided_slice %135 {offsets = [0, 0], sizes = [1, 128], strides = [1, 1]} : vector<64x128xf32> to vector<1x128xf32>
    %144 = vector.broadcast %143 : vector<1x128xf32> to vector<16x128xf32>
    %145 = arith.mulf %144, %1 : vector<16x128xf32>
    %146 = math.exp %145 : vector<16x128xf32>
    %147 = vector.extract_strided_slice %137 {offsets = [0, 0], sizes = [16, 1], strides = [1, 1]} : vector<64x64xf32> to vector<16x1xf32>
    %148 = vector.extract_strided_slice %137 {offsets = [32, 0], sizes = [16, 1], strides = [1, 1]} : vector<64x64xf32> to vector<16x1xf32>
    %149 = vector.shape_cast %147 : vector<16x1xf32> to vector<16x1xf32>
    %150 = vector.broadcast %149 : vector<16x1xf32> to vector<16x128xf32>
    %151 = vector.shape_cast %148 : vector<16x1xf32> to vector<16x1xf32>
    %152 = vector.broadcast %151 : vector<16x1xf32> to vector<16x128xf32>
    %153 = arith.select %141, %150, %152 : vector<16x128xi1>, vector<16x128xf32>
    %154 = vector.extract_strided_slice %137 {offsets = [16, 0], sizes = [16, 1], strides = [1, 1]} : vector<64x64xf32> to vector<16x1xf32>
    %155 = vector.extract_strided_slice %137 {offsets = [48, 0], sizes = [16, 1], strides = [1, 1]} : vector<64x64xf32> to vector<16x1xf32>
    %156 = vector.shape_cast %154 : vector<16x1xf32> to vector<16x1xf32>
    %157 = vector.broadcast %156 : vector<16x1xf32> to vector<16x128xf32>
    %158 = vector.shape_cast %155 : vector<16x1xf32> to vector<16x1xf32>
    %159 = vector.broadcast %158 : vector<16x1xf32> to vector<16x128xf32>
    %160 = arith.select %141, %157, %159 : vector<16x128xi1>, vector<16x128xf32>
    %161 = arith.mulf %146, %142 : vector<16x128xf32>
    %162 = vector.extract_strided_slice %138 {offsets = [0, 0], sizes = [1, 128], strides = [1, 1]} : vector<64x128xf32> to vector<1x128xf32>
    %163 = vector.broadcast %162 : vector<1x128xf32> to vector<16x128xf32>
    %164 = arith.mulf %163, %153 : vector<16x128xf32>
    %165 = arith.addf %161, %164 : vector<16x128xf32>
    %166 = arith.mulf %165, %160 : vector<16x128xf32>
    %cst_38 = arith.constant dense<0.000000e+00> : vector<128xf32>
    %167 = vector.multi_reduction <add>, %166, %cst_38 [0] : vector<16x128xf32> to vector<128xf32>
    %168 = vector.shape_cast %167 : vector<128xf32> to vector<1x128xf32>
    %169 = vector.extract_strided_slice %135 {offsets = [1, 0], sizes = [1, 128], strides = [1, 1]} : vector<64x128xf32> to vector<1x128xf32>
    %170 = vector.broadcast %169 : vector<1x128xf32> to vector<16x128xf32>
    %171 = arith.mulf %170, %1 : vector<16x128xf32>
    %172 = math.exp %171 : vector<16x128xf32>
    %173 = vector.extract_strided_slice %137 {offsets = [0, 1], sizes = [16, 1], strides = [1, 1]} : vector<64x64xf32> to vector<16x1xf32>
    %174 = vector.extract_strided_slice %137 {offsets = [32, 1], sizes = [16, 1], strides = [1, 1]} : vector<64x64xf32> to vector<16x1xf32>
    %175 = vector.shape_cast %173 : vector<16x1xf32> to vector<16x1xf32>
    %176 = vector.broadcast %175 : vector<16x1xf32> to vector<16x128xf32>
    %177 = vector.shape_cast %174 : vector<16x1xf32> to vector<16x1xf32>
    %178 = vector.broadcast %177 : vector<16x1xf32> to vector<16x128xf32>
    %179 = arith.select %141, %176, %178 : vector<16x128xi1>, vector<16x128xf32>
    %180 = vector.extract_strided_slice %137 {offsets = [16, 1], sizes = [16, 1], strides = [1, 1]} : vector<64x64xf32> to vector<16x1xf32>
    %181 = vector.extract_strided_slice %137 {offsets = [48, 1], sizes = [16, 1], strides = [1, 1]} : vector<64x64xf32> to vector<16x1xf32>
    %182 = vector.shape_cast %180 : vector<16x1xf32> to vector<16x1xf32>
    %183 = vector.broadcast %182 : vector<16x1xf32> to vector<16x128xf32>
    %184 = vector.shape_cast %181 : vector<16x1xf32> to vector<16x1xf32>
    %185 = vector.broadcast %184 : vector<16x1xf32> to vector<16x128xf32>
    %186 = arith.select %141, %183, %185 : vector<16x128xi1>, vector<16x128xf32>
    %187 = arith.mulf %172, %165 : vector<16x128xf32>
    %188 = vector.extract_strided_slice %138 {offsets = [1, 0], sizes = [1, 128], strides = [1, 1]} : vector<64x128xf32> to vector<1x128xf32>
    %189 = vector.broadcast %188 : vector<1x128xf32> to vector<16x128xf32>
    %190 = arith.mulf %189, %179 : vector<16x128xf32>
    %191 = arith.addf %187, %190 : vector<16x128xf32>
    %192 = arith.mulf %191, %186 : vector<16x128xf32>
    %cst_39 = arith.constant dense<0.000000e+00> : vector<128xf32>
    %193 = vector.multi_reduction <add>, %192, %cst_39 [0] : vector<16x128xf32> to vector<128xf32>
    %194 = vector.shape_cast %193 : vector<128xf32> to vector<1x128xf32>
    %195 = vector.extract_strided_slice %135 {offsets = [2, 0], sizes = [1, 128], strides = [1, 1]} : vector<64x128xf32> to vector<1x128xf32>
    %196 = vector.broadcast %195 : vector<1x128xf32> to vector<16x128xf32>
    %197 = arith.mulf %196, %1 : vector<16x128xf32>
    %198 = math.exp %197 : vector<16x128xf32>
    %199 = vector.extract_strided_slice %137 {offsets = [0, 2], sizes = [16, 1], strides = [1, 1]} : vector<64x64xf32> to vector<16x1xf32>
    %200 = vector.extract_strided_slice %137 {offsets = [32, 2], sizes = [16, 1], strides = [1, 1]} : vector<64x64xf32> to vector<16x1xf32>
    %201 = vector.shape_cast %199 : vector<16x1xf32> to vector<16x1xf32>
    %202 = vector.broadcast %201 : vector<16x1xf32> to vector<16x128xf32>
    %203 = vector.shape_cast %200 : vector<16x1xf32> to vector<16x1xf32>
    %204 = vector.broadcast %203 : vector<16x1xf32> to vector<16x128xf32>
    %205 = arith.select %141, %202, %204 : vector<16x128xi1>, vector<16x128xf32>
    %206 = vector.extract_strided_slice %137 {offsets = [16, 2], sizes = [16, 1], strides = [1, 1]} : vector<64x64xf32> to vector<16x1xf32>
    %207 = vector.extract_strided_slice %137 {offsets = [48, 2], sizes = [16, 1], strides = [1, 1]} : vector<64x64xf32> to vector<16x1xf32>
    %208 = vector.shape_cast %206 : vector<16x1xf32> to vector<16x1xf32>
    %209 = vector.broadcast %208 : vector<16x1xf32> to vector<16x128xf32>
    %210 = vector.shape_cast %207 : vector<16x1xf32> to vector<16x1xf32>
    %211 = vector.broadcast %210 : vector<16x1xf32> to vector<16x128xf32>
    %212 = arith.select %141, %209, %211 : vector<16x128xi1>, vector<16x128xf32>
    %213 = arith.mulf %198, %191 : vector<16x128xf32>
    %214 = vector.extract_strided_slice %138 {offsets = [2, 0], sizes = [1, 128], strides = [1, 1]} : vector<64x128xf32> to vector<1x128xf32>
    %215 = vector.broadcast %214 : vector<1x128xf32> to vector<16x128xf32>
    %216 = arith.mulf %215, %205 : vector<16x128xf32>
    %217 = arith.addf %213, %216 : vector<16x128xf32>
    %218 = arith.mulf %217, %212 : vector<16x128xf32>
    %cst_40 = arith.constant dense<0.000000e+00> : vector<128xf32>
    %219 = vector.multi_reduction <add>, %218, %cst_40 [0] : vector<16x128xf32> to vector<128xf32>
    %220 = vector.shape_cast %219 : vector<128xf32> to vector<1x128xf32>
    %221 = vector.extract_strided_slice %135 {offsets = [3, 0], sizes = [1, 128], strides = [1, 1]} : vector<64x128xf32> to vector<1x128xf32>
    %222 = vector.broadcast %221 : vector<1x128xf32> to vector<16x128xf32>
    %223 = arith.mulf %222, %1 : vector<16x128xf32>
    %224 = math.exp %223 : vector<16x128xf32>
    %225 = vector.extract_strided_slice %137 {offsets = [0, 3], sizes = [16, 1], strides = [1, 1]} : vector<64x64xf32> to vector<16x1xf32>
    %226 = vector.extract_strided_slice %137 {offsets = [32, 3], sizes = [16, 1], strides = [1, 1]} : vector<64x64xf32> to vector<16x1xf32>
    %227 = vector.shape_cast %225 : vector<16x1xf32> to vector<16x1xf32>
    %228 = vector.broadcast %227 : vector<16x1xf32> to vector<16x128xf32>
    %229 = vector.shape_cast %226 : vector<16x1xf32> to vector<16x1xf32>
    %230 = vector.broadcast %229 : vector<16x1xf32> to vector<16x128xf32>
    %231 = arith.select %141, %228, %230 : vector<16x128xi1>, vector<16x128xf32>
    %232 = vector.extract_strided_slice %137 {offsets = [16, 3], sizes = [16, 1], strides = [1, 1]} : vector<64x64xf32> to vector<16x1xf32>
    %233 = vector.extract_strided_slice %137 {offsets = [48, 3], sizes = [16, 1], strides = [1, 1]} : vector<64x64xf32> to vector<16x1xf32>
    %234 = vector.shape_cast %232 : vector<16x1xf32> to vector<16x1xf32>
    %235 = vector.broadcast %234 : vector<16x1xf32> to vector<16x128xf32>
    %236 = vector.shape_cast %233 : vector<16x1xf32> to vector<16x1xf32>
    %237 = vector.broadcast %236 : vector<16x1xf32> to vector<16x128xf32>
    %238 = arith.select %141, %235, %237 : vector<16x128xi1>, vector<16x128xf32>
    %239 = arith.mulf %224, %217 : vector<16x128xf32>
    %240 = vector.extract_strided_slice %138 {offsets = [3, 0], sizes = [1, 128], strides = [1, 1]} : vector<64x128xf32> to vector<1x128xf32>
    %241 = vector.broadcast %240 : vector<1x128xf32> to vector<16x128xf32>
    %242 = arith.mulf %241, %231 : vector<16x128xf32>
    %243 = arith.addf %239, %242 : vector<16x128xf32>
    %244 = arith.mulf %243, %238 : vector<16x128xf32>
    %cst_41 = arith.constant dense<0.000000e+00> : vector<128xf32>
    %245 = vector.multi_reduction <add>, %244, %cst_41 [0] : vector<16x128xf32> to vector<128xf32>
    %246 = vector.shape_cast %245 : vector<128xf32> to vector<1x128xf32>
    %247 = vector.extract_strided_slice %135 {offsets = [4, 0], sizes = [1, 128], strides = [1, 1]} : vector<64x128xf32> to vector<1x128xf32>
    %248 = vector.broadcast %247 : vector<1x128xf32> to vector<16x128xf32>
    %249 = arith.mulf %248, %1 : vector<16x128xf32>
    %250 = math.exp %249 : vector<16x128xf32>
    %251 = vector.extract_strided_slice %137 {offsets = [0, 4], sizes = [16, 1], strides = [1, 1]} : vector<64x64xf32> to vector<16x1xf32>
    %252 = vector.extract_strided_slice %137 {offsets = [32, 4], sizes = [16, 1], strides = [1, 1]} : vector<64x64xf32> to vector<16x1xf32>
    %253 = vector.shape_cast %251 : vector<16x1xf32> to vector<16x1xf32>
    %254 = vector.broadcast %253 : vector<16x1xf32> to vector<16x128xf32>
    %255 = vector.shape_cast %252 : vector<16x1xf32> to vector<16x1xf32>
    %256 = vector.broadcast %255 : vector<16x1xf32> to vector<16x128xf32>
    %257 = arith.select %141, %254, %256 : vector<16x128xi1>, vector<16x128xf32>
    %258 = vector.extract_strided_slice %137 {offsets = [16, 4], sizes = [16, 1], strides = [1, 1]} : vector<64x64xf32> to vector<16x1xf32>
    %259 = vector.extract_strided_slice %137 {offsets = [48, 4], sizes = [16, 1], strides = [1, 1]} : vector<64x64xf32> to vector<16x1xf32>
    %260 = vector.shape_cast %258 : vector<16x1xf32> to vector<16x1xf32>
    %261 = vector.broadcast %260 : vector<16x1xf32> to vector<16x128xf32>
    %262 = vector.shape_cast %259 : vector<16x1xf32> to vector<16x1xf32>
    %263 = vector.broadcast %262 : vector<16x1xf32> to vector<16x128xf32>
    %264 = arith.select %141, %261, %263 : vector<16x128xi1>, vector<16x128xf32>
    %265 = arith.mulf %250, %243 : vector<16x128xf32>
    %266 = vector.extract_strided_slice %138 {offsets = [4, 0], sizes = [1, 128], strides = [1, 1]} : vector<64x128xf32> to vector<1x128xf32>
    %267 = vector.broadcast %266 : vector<1x128xf32> to vector<16x128xf32>
    %268 = arith.mulf %267, %257 : vector<16x128xf32>
    %269 = arith.addf %265, %268 : vector<16x128xf32>
    %270 = arith.mulf %269, %264 : vector<16x128xf32>
    %cst_42 = arith.constant dense<0.000000e+00> : vector<128xf32>
    %271 = vector.multi_reduction <add>, %270, %cst_42 [0] : vector<16x128xf32> to vector<128xf32>
    %272 = vector.shape_cast %271 : vector<128xf32> to vector<1x128xf32>
    %273 = vector.extract_strided_slice %135 {offsets = [5, 0], sizes = [1, 128], strides = [1, 1]} : vector<64x128xf32> to vector<1x128xf32>
    %274 = vector.broadcast %273 : vector<1x128xf32> to vector<16x128xf32>
    %275 = arith.mulf %274, %1 : vector<16x128xf32>
    %276 = math.exp %275 : vector<16x128xf32>
    %277 = vector.extract_strided_slice %137 {offsets = [0, 5], sizes = [16, 1], strides = [1, 1]} : vector<64x64xf32> to vector<16x1xf32>
    %278 = vector.extract_strided_slice %137 {offsets = [32, 5], sizes = [16, 1], strides = [1, 1]} : vector<64x64xf32> to vector<16x1xf32>
    %279 = vector.shape_cast %277 : vector<16x1xf32> to vector<16x1xf32>
    %280 = vector.broadcast %279 : vector<16x1xf32> to vector<16x128xf32>
    %281 = vector.shape_cast %278 : vector<16x1xf32> to vector<16x1xf32>
    %282 = vector.broadcast %281 : vector<16x1xf32> to vector<16x128xf32>
    %283 = arith.select %141, %280, %282 : vector<16x128xi1>, vector<16x128xf32>
    %284 = vector.extract_strided_slice %137 {offsets = [16, 5], sizes = [16, 1], strides = [1, 1]} : vector<64x64xf32> to vector<16x1xf32>
    %285 = vector.extract_strided_slice %137 {offsets = [48, 5], sizes = [16, 1], strides = [1, 1]} : vector<64x64xf32> to vector<16x1xf32>
    %286 = vector.shape_cast %284 : vector<16x1xf32> to vector<16x1xf32>
    %287 = vector.broadcast %286 : vector<16x1xf32> to vector<16x128xf32>
    %288 = vector.shape_cast %285 : vector<16x1xf32> to vector<16x1xf32>
    %289 = vector.broadcast %288 : vector<16x1xf32> to vector<16x128xf32>
    %290 = arith.select %141, %287, %289 : vector<16x128xi1>, vector<16x128xf32>
    %291 = arith.mulf %276, %269 : vector<16x128xf32>
    %292 = vector.extract_strided_slice %138 {offsets = [5, 0], sizes = [1, 128], strides = [1, 1]} : vector<64x128xf32> to vector<1x128xf32>
    %293 = vector.broadcast %292 : vector<1x128xf32> to vector<16x128xf32>
    %294 = arith.mulf %293, %283 : vector<16x128xf32>
    %295 = arith.addf %291, %294 : vector<16x128xf32>
    %296 = arith.mulf %295, %290 : vector<16x128xf32>
    %cst_43 = arith.constant dense<0.000000e+00> : vector<128xf32>
    %297 = vector.multi_reduction <add>, %296, %cst_43 [0] : vector<16x128xf32> to vector<128xf32>
    %298 = vector.shape_cast %297 : vector<128xf32> to vector<1x128xf32>
    %299 = vector.extract_strided_slice %135 {offsets = [6, 0], sizes = [1, 128], strides = [1, 1]} : vector<64x128xf32> to vector<1x128xf32>
    %300 = vector.broadcast %299 : vector<1x128xf32> to vector<16x128xf32>
    %301 = arith.mulf %300, %1 : vector<16x128xf32>
    %302 = math.exp %301 : vector<16x128xf32>
    %303 = vector.extract_strided_slice %137 {offsets = [0, 6], sizes = [16, 1], strides = [1, 1]} : vector<64x64xf32> to vector<16x1xf32>
    %304 = vector.extract_strided_slice %137 {offsets = [32, 6], sizes = [16, 1], strides = [1, 1]} : vector<64x64xf32> to vector<16x1xf32>
    %305 = vector.shape_cast %303 : vector<16x1xf32> to vector<16x1xf32>
    %306 = vector.broadcast %305 : vector<16x1xf32> to vector<16x128xf32>
    %307 = vector.shape_cast %304 : vector<16x1xf32> to vector<16x1xf32>
    %308 = vector.broadcast %307 : vector<16x1xf32> to vector<16x128xf32>
    %309 = arith.select %141, %306, %308 : vector<16x128xi1>, vector<16x128xf32>
    %310 = vector.extract_strided_slice %137 {offsets = [16, 6], sizes = [16, 1], strides = [1, 1]} : vector<64x64xf32> to vector<16x1xf32>
    %311 = vector.extract_strided_slice %137 {offsets = [48, 6], sizes = [16, 1], strides = [1, 1]} : vector<64x64xf32> to vector<16x1xf32>
    %312 = vector.shape_cast %310 : vector<16x1xf32> to vector<16x1xf32>
    %313 = vector.broadcast %312 : vector<16x1xf32> to vector<16x128xf32>
    %314 = vector.shape_cast %311 : vector<16x1xf32> to vector<16x1xf32>
    %315 = vector.broadcast %314 : vector<16x1xf32> to vector<16x128xf32>
    %316 = arith.select %141, %313, %315 : vector<16x128xi1>, vector<16x128xf32>
    %317 = arith.mulf %302, %295 : vector<16x128xf32>
    %318 = vector.extract_strided_slice %138 {offsets = [6, 0], sizes = [1, 128], strides = [1, 1]} : vector<64x128xf32> to vector<1x128xf32>
    %319 = vector.broadcast %318 : vector<1x128xf32> to vector<16x128xf32>
    %320 = arith.mulf %319, %309 : vector<16x128xf32>
    %321 = arith.addf %317, %320 : vector<16x128xf32>
    %322 = arith.mulf %321, %316 : vector<16x128xf32>
    %cst_44 = arith.constant dense<0.000000e+00> : vector<128xf32>
    %323 = vector.multi_reduction <add>, %322, %cst_44 [0] : vector<16x128xf32> to vector<128xf32>
    %324 = vector.shape_cast %323 : vector<128xf32> to vector<1x128xf32>
    %325 = vector.extract_strided_slice %135 {offsets = [7, 0], sizes = [1, 128], strides = [1, 1]} : vector<64x128xf32> to vector<1x128xf32>
    %326 = vector.broadcast %325 : vector<1x128xf32> to vector<16x128xf32>
    %327 = arith.mulf %326, %1 : vector<16x128xf32>
    %328 = math.exp %327 : vector<16x128xf32>
    %329 = vector.extract_strided_slice %137 {offsets = [0, 7], sizes = [16, 1], strides = [1, 1]} : vector<64x64xf32> to vector<16x1xf32>
    %330 = vector.extract_strided_slice %137 {offsets = [32, 7], sizes = [16, 1], strides = [1, 1]} : vector<64x64xf32> to vector<16x1xf32>
    %331 = vector.shape_cast %329 : vector<16x1xf32> to vector<16x1xf32>
    %332 = vector.broadcast %331 : vector<16x1xf32> to vector<16x128xf32>
    %333 = vector.shape_cast %330 : vector<16x1xf32> to vector<16x1xf32>
    %334 = vector.broadcast %333 : vector<16x1xf32> to vector<16x128xf32>
    %335 = arith.select %141, %332, %334 : vector<16x128xi1>, vector<16x128xf32>
    %336 = vector.extract_strided_slice %137 {offsets = [16, 7], sizes = [16, 1], strides = [1, 1]} : vector<64x64xf32> to vector<16x1xf32>
    %337 = vector.extract_strided_slice %137 {offsets = [48, 7], sizes = [16, 1], strides = [1, 1]} : vector<64x64xf32> to vector<16x1xf32>
    %338 = vector.shape_cast %336 : vector<16x1xf32> to vector<16x1xf32>
    %339 = vector.broadcast %338 : vector<16x1xf32> to vector<16x128xf32>
    %340 = vector.shape_cast %337 : vector<16x1xf32> to vector<16x1xf32>
    %341 = vector.broadcast %340 : vector<16x1xf32> to vector<16x128xf32>
    %342 = arith.select %141, %339, %341 : vector<16x128xi1>, vector<16x128xf32>
    %343 = arith.mulf %328, %321 : vector<16x128xf32>
    %344 = vector.extract_strided_slice %138 {offsets = [7, 0], sizes = [1, 128], strides = [1, 1]} : vector<64x128xf32> to vector<1x128xf32>
    %345 = vector.broadcast %344 : vector<1x128xf32> to vector<16x128xf32>
    %346 = arith.mulf %345, %335 : vector<16x128xf32>
    %347 = arith.addf %343, %346 : vector<16x128xf32>
    %348 = arith.mulf %347, %342 : vector<16x128xf32>
    %cst_45 = arith.constant dense<0.000000e+00> : vector<128xf32>
    %349 = vector.multi_reduction <add>, %348, %cst_45 [0] : vector<16x128xf32> to vector<128xf32>
    %350 = vector.shape_cast %349 : vector<128xf32> to vector<1x128xf32>
    %351 = tpu.concatenate %168, %194, %220, %246, %272, %298, %324, %350 in 0 : vector<1x128xf32>, vector<1x128xf32>, vector<1x128xf32>, vector<1x128xf32>, vector<1x128xf32>, vector<1x128xf32>, vector<1x128xf32>, vector<1x128xf32> -> vector<8x128xf32>
    %352 = vector.extract_strided_slice %135 {offsets = [8, 0], sizes = [1, 128], strides = [1, 1]} : vector<64x128xf32> to vector<1x128xf32>
    %353 = vector.broadcast %352 : vector<1x128xf32> to vector<16x128xf32>
    %354 = arith.mulf %353, %1 : vector<16x128xf32>
    %355 = math.exp %354 : vector<16x128xf32>
    %356 = vector.extract_strided_slice %137 {offsets = [0, 8], sizes = [16, 1], strides = [1, 1]} : vector<64x64xf32> to vector<16x1xf32>
    %357 = vector.extract_strided_slice %137 {offsets = [32, 8], sizes = [16, 1], strides = [1, 1]} : vector<64x64xf32> to vector<16x1xf32>
    %358 = vector.shape_cast %356 : vector<16x1xf32> to vector<16x1xf32>
    %359 = vector.broadcast %358 : vector<16x1xf32> to vector<16x128xf32>
    %360 = vector.shape_cast %357 : vector<16x1xf32> to vector<16x1xf32>
    %361 = vector.broadcast %360 : vector<16x1xf32> to vector<16x128xf32>
    %362 = arith.select %141, %359, %361 : vector<16x128xi1>, vector<16x128xf32>
    %363 = vector.extract_strided_slice %137 {offsets = [16, 8], sizes = [16, 1], strides = [1, 1]} : vector<64x64xf32> to vector<16x1xf32>
    %364 = vector.extract_strided_slice %137 {offsets = [48, 8], sizes = [16, 1], strides = [1, 1]} : vector<64x64xf32> to vector<16x1xf32>
    %365 = vector.shape_cast %363 : vector<16x1xf32> to vector<16x1xf32>
    %366 = vector.broadcast %365 : vector<16x1xf32> to vector<16x128xf32>
    %367 = vector.shape_cast %364 : vector<16x1xf32> to vector<16x1xf32>
    %368 = vector.broadcast %367 : vector<16x1xf32> to vector<16x128xf32>
    %369 = arith.select %141, %366, %368 : vector<16x128xi1>, vector<16x128xf32>
    %370 = arith.mulf %355, %347 : vector<16x128xf32>
    %371 = vector.extract_strided_slice %138 {offsets = [8, 0], sizes = [1, 128], strides = [1, 1]} : vector<64x128xf32> to vector<1x128xf32>
    %372 = vector.broadcast %371 : vector<1x128xf32> to vector<16x128xf32>
    %373 = arith.mulf %372, %362 : vector<16x128xf32>
    %374 = arith.addf %370, %373 : vector<16x128xf32>
    %375 = arith.mulf %374, %369 : vector<16x128xf32>
    %cst_46 = arith.constant dense<0.000000e+00> : vector<128xf32>
    %376 = vector.multi_reduction <add>, %375, %cst_46 [0] : vector<16x128xf32> to vector<128xf32>
    %377 = vector.shape_cast %376 : vector<128xf32> to vector<1x128xf32>
    %378 = vector.extract_strided_slice %135 {offsets = [9, 0], sizes = [1, 128], strides = [1, 1]} : vector<64x128xf32> to vector<1x128xf32>
    %379 = vector.broadcast %378 : vector<1x128xf32> to vector<16x128xf32>
    %380 = arith.mulf %379, %1 : vector<16x128xf32>
    %381 = math.exp %380 : vector<16x128xf32>
    %382 = vector.extract_strided_slice %137 {offsets = [0, 9], sizes = [16, 1], strides = [1, 1]} : vector<64x64xf32> to vector<16x1xf32>
    %383 = vector.extract_strided_slice %137 {offsets = [32, 9], sizes = [16, 1], strides = [1, 1]} : vector<64x64xf32> to vector<16x1xf32>
    %384 = vector.shape_cast %382 : vector<16x1xf32> to vector<16x1xf32>
    %385 = vector.broadcast %384 : vector<16x1xf32> to vector<16x128xf32>
    %386 = vector.shape_cast %383 : vector<16x1xf32> to vector<16x1xf32>
    %387 = vector.broadcast %386 : vector<16x1xf32> to vector<16x128xf32>
    %388 = arith.select %141, %385, %387 : vector<16x128xi1>, vector<16x128xf32>
    %389 = vector.extract_strided_slice %137 {offsets = [16, 9], sizes = [16, 1], strides = [1, 1]} : vector<64x64xf32> to vector<16x1xf32>
    %390 = vector.extract_strided_slice %137 {offsets = [48, 9], sizes = [16, 1], strides = [1, 1]} : vector<64x64xf32> to vector<16x1xf32>
    %391 = vector.shape_cast %389 : vector<16x1xf32> to vector<16x1xf32>
    %392 = vector.broadcast %391 : vector<16x1xf32> to vector<16x128xf32>
    %393 = vector.shape_cast %390 : vector<16x1xf32> to vector<16x1xf32>
    %394 = vector.broadcast %393 : vector<16x1xf32> to vector<16x128xf32>
    %395 = arith.select %141, %392, %394 : vector<16x128xi1>, vector<16x128xf32>
    %396 = arith.mulf %381, %374 : vector<16x128xf32>
    %397 = vector.extract_strided_slice %138 {offsets = [9, 0], sizes = [1, 128], strides = [1, 1]} : vector<64x128xf32> to vector<1x128xf32>
    %398 = vector.broadcast %397 : vector<1x128xf32> to vector<16x128xf32>
    %399 = arith.mulf %398, %388 : vector<16x128xf32>
    %400 = arith.addf %396, %399 : vector<16x128xf32>
    %401 = arith.mulf %400, %395 : vector<16x128xf32>
    %cst_47 = arith.constant dense<0.000000e+00> : vector<128xf32>
    %402 = vector.multi_reduction <add>, %401, %cst_47 [0] : vector<16x128xf32> to vector<128xf32>
    %403 = vector.shape_cast %402 : vector<128xf32> to vector<1x128xf32>
    %404 = vector.extract_strided_slice %135 {offsets = [10, 0], sizes = [1, 128], strides = [1, 1]} : vector<64x128xf32> to vector<1x128xf32>
    %405 = vector.broadcast %404 : vector<1x128xf32> to vector<16x128xf32>
    %406 = arith.mulf %405, %1 : vector<16x128xf32>
    %407 = math.exp %406 : vector<16x128xf32>
    %408 = vector.extract_strided_slice %137 {offsets = [0, 10], sizes = [16, 1], strides = [1, 1]} : vector<64x64xf32> to vector<16x1xf32>
    %409 = vector.extract_strided_slice %137 {offsets = [32, 10], sizes = [16, 1], strides = [1, 1]} : vector<64x64xf32> to vector<16x1xf32>
    %410 = vector.shape_cast %408 : vector<16x1xf32> to vector<16x1xf32>
    %411 = vector.broadcast %410 : vector<16x1xf32> to vector<16x128xf32>
    %412 = vector.shape_cast %409 : vector<16x1xf32> to vector<16x1xf32>
    %413 = vector.broadcast %412 : vector<16x1xf32> to vector<16x128xf32>
    %414 = arith.select %141, %411, %413 : vector<16x128xi1>, vector<16x128xf32>
    %415 = vector.extract_strided_slice %137 {offsets = [16, 10], sizes = [16, 1], strides = [1, 1]} : vector<64x64xf32> to vector<16x1xf32>
    %416 = vector.extract_strided_slice %137 {offsets = [48, 10], sizes = [16, 1], strides = [1, 1]} : vector<64x64xf32> to vector<16x1xf32>
    %417 = vector.shape_cast %415 : vector<16x1xf32> to vector<16x1xf32>
    %418 = vector.broadcast %417 : vector<16x1xf32> to vector<16x128xf32>
    %419 = vector.shape_cast %416 : vector<16x1xf32> to vector<16x1xf32>
    %420 = vector.broadcast %419 : vector<16x1xf32> to vector<16x128xf32>
    %421 = arith.select %141, %418, %420 : vector<16x128xi1>, vector<16x128xf32>
    %422 = arith.mulf %407, %400 : vector<16x128xf32>
    %423 = vector.extract_strided_slice %138 {offsets = [10, 0], sizes = [1, 128], strides = [1, 1]} : vector<64x128xf32> to vector<1x128xf32>
    %424 = vector.broadcast %423 : vector<1x128xf32> to vector<16x128xf32>
    %425 = arith.mulf %424, %414 : vector<16x128xf32>
    %426 = arith.addf %422, %425 : vector<16x128xf32>
    %427 = arith.mulf %426, %421 : vector<16x128xf32>
    %cst_48 = arith.constant dense<0.000000e+00> : vector<128xf32>
    %428 = vector.multi_reduction <add>, %427, %cst_48 [0] : vector<16x128xf32> to vector<128xf32>
    %429 = vector.shape_cast %428 : vector<128xf32> to vector<1x128xf32>
    %430 = vector.extract_strided_slice %135 {offsets = [11, 0], sizes = [1, 128], strides = [1, 1]} : vector<64x128xf32> to vector<1x128xf32>
    %431 = vector.broadcast %430 : vector<1x128xf32> to vector<16x128xf32>
    %432 = arith.mulf %431, %1 : vector<16x128xf32>
    %433 = math.exp %432 : vector<16x128xf32>
    %434 = vector.extract_strided_slice %137 {offsets = [0, 11], sizes = [16, 1], strides = [1, 1]} : vector<64x64xf32> to vector<16x1xf32>
    %435 = vector.extract_strided_slice %137 {offsets = [32, 11], sizes = [16, 1], strides = [1, 1]} : vector<64x64xf32> to vector<16x1xf32>
    %436 = vector.shape_cast %434 : vector<16x1xf32> to vector<16x1xf32>
    %437 = vector.broadcast %436 : vector<16x1xf32> to vector<16x128xf32>
    %438 = vector.shape_cast %435 : vector<16x1xf32> to vector<16x1xf32>
    %439 = vector.broadcast %438 : vector<16x1xf32> to vector<16x128xf32>
    %440 = arith.select %141, %437, %439 : vector<16x128xi1>, vector<16x128xf32>
    %441 = vector.extract_strided_slice %137 {offsets = [16, 11], sizes = [16, 1], strides = [1, 1]} : vector<64x64xf32> to vector<16x1xf32>
    %442 = vector.extract_strided_slice %137 {offsets = [48, 11], sizes = [16, 1], strides = [1, 1]} : vector<64x64xf32> to vector<16x1xf32>
    %443 = vector.shape_cast %441 : vector<16x1xf32> to vector<16x1xf32>
    %444 = vector.broadcast %443 : vector<16x1xf32> to vector<16x128xf32>
    %445 = vector.shape_cast %442 : vector<16x1xf32> to vector<16x1xf32>
    %446 = vector.broadcast %445 : vector<16x1xf32> to vector<16x128xf32>
    %447 = arith.select %141, %444, %446 : vector<16x128xi1>, vector<16x128xf32>
    %448 = arith.mulf %433, %426 : vector<16x128xf32>
    %449 = vector.extract_strided_slice %138 {offsets = [11, 0], sizes = [1, 128], strides = [1, 1]} : vector<64x128xf32> to vector<1x128xf32>
    %450 = vector.broadcast %449 : vector<1x128xf32> to vector<16x128xf32>
    %451 = arith.mulf %450, %440 : vector<16x128xf32>
    %452 = arith.addf %448, %451 : vector<16x128xf32>
    %453 = arith.mulf %452, %447 : vector<16x128xf32>
    %cst_49 = arith.constant dense<0.000000e+00> : vector<128xf32>
    %454 = vector.multi_reduction <add>, %453, %cst_49 [0] : vector<16x128xf32> to vector<128xf32>
    %455 = vector.shape_cast %454 : vector<128xf32> to vector<1x128xf32>
    %456 = vector.extract_strided_slice %135 {offsets = [12, 0], sizes = [1, 128], strides = [1, 1]} : vector<64x128xf32> to vector<1x128xf32>
    %457 = vector.broadcast %456 : vector<1x128xf32> to vector<16x128xf32>
    %458 = arith.mulf %457, %1 : vector<16x128xf32>
    %459 = math.exp %458 : vector<16x128xf32>
    %460 = vector.extract_strided_slice %137 {offsets = [0, 12], sizes = [16, 1], strides = [1, 1]} : vector<64x64xf32> to vector<16x1xf32>
    %461 = vector.extract_strided_slice %137 {offsets = [32, 12], sizes = [16, 1], strides = [1, 1]} : vector<64x64xf32> to vector<16x1xf32>
    %462 = vector.shape_cast %460 : vector<16x1xf32> to vector<16x1xf32>
    %463 = vector.broadcast %462 : vector<16x1xf32> to vector<16x128xf32>
    %464 = vector.shape_cast %461 : vector<16x1xf32> to vector<16x1xf32>
    %465 = vector.broadcast %464 : vector<16x1xf32> to vector<16x128xf32>
    %466 = arith.select %141, %463, %465 : vector<16x128xi1>, vector<16x128xf32>
    %467 = vector.extract_strided_slice %137 {offsets = [16, 12], sizes = [16, 1], strides = [1, 1]} : vector<64x64xf32> to vector<16x1xf32>
    %468 = vector.extract_strided_slice %137 {offsets = [48, 12], sizes = [16, 1], strides = [1, 1]} : vector<64x64xf32> to vector<16x1xf32>
    %469 = vector.shape_cast %467 : vector<16x1xf32> to vector<16x1xf32>
    %470 = vector.broadcast %469 : vector<16x1xf32> to vector<16x128xf32>
    %471 = vector.shape_cast %468 : vector<16x1xf32> to vector<16x1xf32>
    %472 = vector.broadcast %471 : vector<16x1xf32> to vector<16x128xf32>
    %473 = arith.select %141, %470, %472 : vector<16x128xi1>, vector<16x128xf32>
    %474 = arith.mulf %459, %452 : vector<16x128xf32>
    %475 = vector.extract_strided_slice %138 {offsets = [12, 0], sizes = [1, 128], strides = [1, 1]} : vector<64x128xf32> to vector<1x128xf32>
    %476 = vector.broadcast %475 : vector<1x128xf32> to vector<16x128xf32>
    %477 = arith.mulf %476, %466 : vector<16x128xf32>
    %478 = arith.addf %474, %477 : vector<16x128xf32>
    %479 = arith.mulf %478, %473 : vector<16x128xf32>
    %cst_50 = arith.constant dense<0.000000e+00> : vector<128xf32>
    %480 = vector.multi_reduction <add>, %479, %cst_50 [0] : vector<16x128xf32> to vector<128xf32>
    %481 = vector.shape_cast %480 : vector<128xf32> to vector<1x128xf32>
    %482 = vector.extract_strided_slice %135 {offsets = [13, 0], sizes = [1, 128], strides = [1, 1]} : vector<64x128xf32> to vector<1x128xf32>
    %483 = vector.broadcast %482 : vector<1x128xf32> to vector<16x128xf32>
    %484 = arith.mulf %483, %1 : vector<16x128xf32>
    %485 = math.exp %484 : vector<16x128xf32>
    %486 = vector.extract_strided_slice %137 {offsets = [0, 13], sizes = [16, 1], strides = [1, 1]} : vector<64x64xf32> to vector<16x1xf32>
    %487 = vector.extract_strided_slice %137 {offsets = [32, 13], sizes = [16, 1], strides = [1, 1]} : vector<64x64xf32> to vector<16x1xf32>
    %488 = vector.shape_cast %486 : vector<16x1xf32> to vector<16x1xf32>
    %489 = vector.broadcast %488 : vector<16x1xf32> to vector<16x128xf32>
    %490 = vector.shape_cast %487 : vector<16x1xf32> to vector<16x1xf32>
    %491 = vector.broadcast %490 : vector<16x1xf32> to vector<16x128xf32>
    %492 = arith.select %141, %489, %491 : vector<16x128xi1>, vector<16x128xf32>
    %493 = vector.extract_strided_slice %137 {offsets = [16, 13], sizes = [16, 1], strides = [1, 1]} : vector<64x64xf32> to vector<16x1xf32>
    %494 = vector.extract_strided_slice %137 {offsets = [48, 13], sizes = [16, 1], strides = [1, 1]} : vector<64x64xf32> to vector<16x1xf32>
    %495 = vector.shape_cast %493 : vector<16x1xf32> to vector<16x1xf32>
    %496 = vector.broadcast %495 : vector<16x1xf32> to vector<16x128xf32>
    %497 = vector.shape_cast %494 : vector<16x1xf32> to vector<16x1xf32>
    %498 = vector.broadcast %497 : vector<16x1xf32> to vector<16x128xf32>
    %499 = arith.select %141, %496, %498 : vector<16x128xi1>, vector<16x128xf32>
    %500 = arith.mulf %485, %478 : vector<16x128xf32>
    %501 = vector.extract_strided_slice %138 {offsets = [13, 0], sizes = [1, 128], strides = [1, 1]} : vector<64x128xf32> to vector<1x128xf32>
    %502 = vector.broadcast %501 : vector<1x128xf32> to vector<16x128xf32>
    %503 = arith.mulf %502, %492 : vector<16x128xf32>
    %504 = arith.addf %500, %503 : vector<16x128xf32>
    %505 = arith.mulf %504, %499 : vector<16x128xf32>
    %cst_51 = arith.constant dense<0.000000e+00> : vector<128xf32>
    %506 = vector.multi_reduction <add>, %505, %cst_51 [0] : vector<16x128xf32> to vector<128xf32>
    %507 = vector.shape_cast %506 : vector<128xf32> to vector<1x128xf32>
    %508 = vector.extract_strided_slice %135 {offsets = [14, 0], sizes = [1, 128], strides = [1, 1]} : vector<64x128xf32> to vector<1x128xf32>
    %509 = vector.broadcast %508 : vector<1x128xf32> to vector<16x128xf32>
    %510 = arith.mulf %509, %1 : vector<16x128xf32>
    %511 = math.exp %510 : vector<16x128xf32>
    %512 = vector.extract_strided_slice %137 {offsets = [0, 14], sizes = [16, 1], strides = [1, 1]} : vector<64x64xf32> to vector<16x1xf32>
    %513 = vector.extract_strided_slice %137 {offsets = [32, 14], sizes = [16, 1], strides = [1, 1]} : vector<64x64xf32> to vector<16x1xf32>
    %514 = vector.shape_cast %512 : vector<16x1xf32> to vector<16x1xf32>
    %515 = vector.broadcast %514 : vector<16x1xf32> to vector<16x128xf32>
    %516 = vector.shape_cast %513 : vector<16x1xf32> to vector<16x1xf32>
    %517 = vector.broadcast %516 : vector<16x1xf32> to vector<16x128xf32>
    %518 = arith.select %141, %515, %517 : vector<16x128xi1>, vector<16x128xf32>
    %519 = vector.extract_strided_slice %137 {offsets = [16, 14], sizes = [16, 1], strides = [1, 1]} : vector<64x64xf32> to vector<16x1xf32>
    %520 = vector.extract_strided_slice %137 {offsets = [48, 14], sizes = [16, 1], strides = [1, 1]} : vector<64x64xf32> to vector<16x1xf32>
    %521 = vector.shape_cast %519 : vector<16x1xf32> to vector<16x1xf32>
    %522 = vector.broadcast %521 : vector<16x1xf32> to vector<16x128xf32>
    %523 = vector.shape_cast %520 : vector<16x1xf32> to vector<16x1xf32>
    %524 = vector.broadcast %523 : vector<16x1xf32> to vector<16x128xf32>
    %525 = arith.select %141, %522, %524 : vector<16x128xi1>, vector<16x128xf32>
    %526 = arith.mulf %511, %504 : vector<16x128xf32>
    %527 = vector.extract_strided_slice %138 {offsets = [14, 0], sizes = [1, 128], strides = [1, 1]} : vector<64x128xf32> to vector<1x128xf32>
    %528 = vector.broadcast %527 : vector<1x128xf32> to vector<16x128xf32>
    %529 = arith.mulf %528, %518 : vector<16x128xf32>
    %530 = arith.addf %526, %529 : vector<16x128xf32>
    %531 = arith.mulf %530, %525 : vector<16x128xf32>
    %cst_52 = arith.constant dense<0.000000e+00> : vector<128xf32>
    %532 = vector.multi_reduction <add>, %531, %cst_52 [0] : vector<16x128xf32> to vector<128xf32>
    %533 = vector.shape_cast %532 : vector<128xf32> to vector<1x128xf32>
    %534 = vector.extract_strided_slice %135 {offsets = [15, 0], sizes = [1, 128], strides = [1, 1]} : vector<64x128xf32> to vector<1x128xf32>
    %535 = vector.broadcast %534 : vector<1x128xf32> to vector<16x128xf32>
    %536 = arith.mulf %535, %1 : vector<16x128xf32>
    %537 = math.exp %536 : vector<16x128xf32>
    %538 = vector.extract_strided_slice %137 {offsets = [0, 15], sizes = [16, 1], strides = [1, 1]} : vector<64x64xf32> to vector<16x1xf32>
    %539 = vector.extract_strided_slice %137 {offsets = [32, 15], sizes = [16, 1], strides = [1, 1]} : vector<64x64xf32> to vector<16x1xf32>
    %540 = vector.shape_cast %538 : vector<16x1xf32> to vector<16x1xf32>
    %541 = vector.broadcast %540 : vector<16x1xf32> to vector<16x128xf32>
    %542 = vector.shape_cast %539 : vector<16x1xf32> to vector<16x1xf32>
    %543 = vector.broadcast %542 : vector<16x1xf32> to vector<16x128xf32>
    %544 = arith.select %141, %541, %543 : vector<16x128xi1>, vector<16x128xf32>
    %545 = vector.extract_strided_slice %137 {offsets = [16, 15], sizes = [16, 1], strides = [1, 1]} : vector<64x64xf32> to vector<16x1xf32>
    %546 = vector.extract_strided_slice %137 {offsets = [48, 15], sizes = [16, 1], strides = [1, 1]} : vector<64x64xf32> to vector<16x1xf32>
    %547 = vector.shape_cast %545 : vector<16x1xf32> to vector<16x1xf32>
    %548 = vector.broadcast %547 : vector<16x1xf32> to vector<16x128xf32>
    %549 = vector.shape_cast %546 : vector<16x1xf32> to vector<16x1xf32>
    %550 = vector.broadcast %549 : vector<16x1xf32> to vector<16x128xf32>
    %551 = arith.select %141, %548, %550 : vector<16x128xi1>, vector<16x128xf32>
    %552 = arith.mulf %537, %530 : vector<16x128xf32>
    %553 = vector.extract_strided_slice %138 {offsets = [15, 0], sizes = [1, 128], strides = [1, 1]} : vector<64x128xf32> to vector<1x128xf32>
    %554 = vector.broadcast %553 : vector<1x128xf32> to vector<16x128xf32>
    %555 = arith.mulf %554, %544 : vector<16x128xf32>
    %556 = arith.addf %552, %555 : vector<16x128xf32>
    %557 = arith.mulf %556, %551 : vector<16x128xf32>
    %cst_53 = arith.constant dense<0.000000e+00> : vector<128xf32>
    %558 = vector.multi_reduction <add>, %557, %cst_53 [0] : vector<16x128xf32> to vector<128xf32>
    %559 = vector.shape_cast %558 : vector<128xf32> to vector<1x128xf32>
    %560 = tpu.concatenate %377, %403, %429, %455, %481, %507, %533, %559 in 0 : vector<1x128xf32>, vector<1x128xf32>, vector<1x128xf32>, vector<1x128xf32>, vector<1x128xf32>, vector<1x128xf32>, vector<1x128xf32>, vector<1x128xf32> -> vector<8x128xf32>
    %561 = vector.extract_strided_slice %135 {offsets = [16, 0], sizes = [1, 128], strides = [1, 1]} : vector<64x128xf32> to vector<1x128xf32>
    %562 = vector.broadcast %561 : vector<1x128xf32> to vector<16x128xf32>
    %563 = arith.mulf %562, %1 : vector<16x128xf32>
    %564 = math.exp %563 : vector<16x128xf32>
    %565 = vector.extract_strided_slice %137 {offsets = [0, 16], sizes = [16, 1], strides = [1, 1]} : vector<64x64xf32> to vector<16x1xf32>
    %566 = vector.extract_strided_slice %137 {offsets = [32, 16], sizes = [16, 1], strides = [1, 1]} : vector<64x64xf32> to vector<16x1xf32>
    %567 = vector.shape_cast %565 : vector<16x1xf32> to vector<16x1xf32>
    %568 = vector.broadcast %567 : vector<16x1xf32> to vector<16x128xf32>
    %569 = vector.shape_cast %566 : vector<16x1xf32> to vector<16x1xf32>
    %570 = vector.broadcast %569 : vector<16x1xf32> to vector<16x128xf32>
    %571 = arith.select %141, %568, %570 : vector<16x128xi1>, vector<16x128xf32>
    %572 = vector.extract_strided_slice %137 {offsets = [16, 16], sizes = [16, 1], strides = [1, 1]} : vector<64x64xf32> to vector<16x1xf32>
    %573 = vector.extract_strided_slice %137 {offsets = [48, 16], sizes = [16, 1], strides = [1, 1]} : vector<64x64xf32> to vector<16x1xf32>
    %574 = vector.shape_cast %572 : vector<16x1xf32> to vector<16x1xf32>
    %575 = vector.broadcast %574 : vector<16x1xf32> to vector<16x128xf32>
    %576 = vector.shape_cast %573 : vector<16x1xf32> to vector<16x1xf32>
    %577 = vector.broadcast %576 : vector<16x1xf32> to vector<16x128xf32>
    %578 = arith.select %141, %575, %577 : vector<16x128xi1>, vector<16x128xf32>
    %579 = arith.mulf %564, %556 : vector<16x128xf32>
    %580 = vector.extract_strided_slice %138 {offsets = [16, 0], sizes = [1, 128], strides = [1, 1]} : vector<64x128xf32> to vector<1x128xf32>
    %581 = vector.broadcast %580 : vector<1x128xf32> to vector<16x128xf32>
    %582 = arith.mulf %581, %571 : vector<16x128xf32>
    %583 = arith.addf %579, %582 : vector<16x128xf32>
    %584 = arith.mulf %583, %578 : vector<16x128xf32>
    %cst_54 = arith.constant dense<0.000000e+00> : vector<128xf32>
    %585 = vector.multi_reduction <add>, %584, %cst_54 [0] : vector<16x128xf32> to vector<128xf32>
    %586 = vector.shape_cast %585 : vector<128xf32> to vector<1x128xf32>
    %587 = vector.extract_strided_slice %135 {offsets = [17, 0], sizes = [1, 128], strides = [1, 1]} : vector<64x128xf32> to vector<1x128xf32>
    %588 = vector.broadcast %587 : vector<1x128xf32> to vector<16x128xf32>
    %589 = arith.mulf %588, %1 : vector<16x128xf32>
    %590 = math.exp %589 : vector<16x128xf32>
    %591 = vector.extract_strided_slice %137 {offsets = [0, 17], sizes = [16, 1], strides = [1, 1]} : vector<64x64xf32> to vector<16x1xf32>
    %592 = vector.extract_strided_slice %137 {offsets = [32, 17], sizes = [16, 1], strides = [1, 1]} : vector<64x64xf32> to vector<16x1xf32>
    %593 = vector.shape_cast %591 : vector<16x1xf32> to vector<16x1xf32>
    %594 = vector.broadcast %593 : vector<16x1xf32> to vector<16x128xf32>
    %595 = vector.shape_cast %592 : vector<16x1xf32> to vector<16x1xf32>
    %596 = vector.broadcast %595 : vector<16x1xf32> to vector<16x128xf32>
    %597 = arith.select %141, %594, %596 : vector<16x128xi1>, vector<16x128xf32>
    %598 = vector.extract_strided_slice %137 {offsets = [16, 17], sizes = [16, 1], strides = [1, 1]} : vector<64x64xf32> to vector<16x1xf32>
    %599 = vector.extract_strided_slice %137 {offsets = [48, 17], sizes = [16, 1], strides = [1, 1]} : vector<64x64xf32> to vector<16x1xf32>
    %600 = vector.shape_cast %598 : vector<16x1xf32> to vector<16x1xf32>
    %601 = vector.broadcast %600 : vector<16x1xf32> to vector<16x128xf32>
    %602 = vector.shape_cast %599 : vector<16x1xf32> to vector<16x1xf32>
    %603 = vector.broadcast %602 : vector<16x1xf32> to vector<16x128xf32>
    %604 = arith.select %141, %601, %603 : vector<16x128xi1>, vector<16x128xf32>
    %605 = arith.mulf %590, %583 : vector<16x128xf32>
    %606 = vector.extract_strided_slice %138 {offsets = [17, 0], sizes = [1, 128], strides = [1, 1]} : vector<64x128xf32> to vector<1x128xf32>
    %607 = vector.broadcast %606 : vector<1x128xf32> to vector<16x128xf32>
    %608 = arith.mulf %607, %597 : vector<16x128xf32>
    %609 = arith.addf %605, %608 : vector<16x128xf32>
    %610 = arith.mulf %609, %604 : vector<16x128xf32>
    %cst_55 = arith.constant dense<0.000000e+00> : vector<128xf32>
    %611 = vector.multi_reduction <add>, %610, %cst_55 [0] : vector<16x128xf32> to vector<128xf32>
    %612 = vector.shape_cast %611 : vector<128xf32> to vector<1x128xf32>
    %613 = vector.extract_strided_slice %135 {offsets = [18, 0], sizes = [1, 128], strides = [1, 1]} : vector<64x128xf32> to vector<1x128xf32>
    %614 = vector.broadcast %613 : vector<1x128xf32> to vector<16x128xf32>
    %615 = arith.mulf %614, %1 : vector<16x128xf32>
    %616 = math.exp %615 : vector<16x128xf32>
    %617 = vector.extract_strided_slice %137 {offsets = [0, 18], sizes = [16, 1], strides = [1, 1]} : vector<64x64xf32> to vector<16x1xf32>
    %618 = vector.extract_strided_slice %137 {offsets = [32, 18], sizes = [16, 1], strides = [1, 1]} : vector<64x64xf32> to vector<16x1xf32>
    %619 = vector.shape_cast %617 : vector<16x1xf32> to vector<16x1xf32>
    %620 = vector.broadcast %619 : vector<16x1xf32> to vector<16x128xf32>
    %621 = vector.shape_cast %618 : vector<16x1xf32> to vector<16x1xf32>
    %622 = vector.broadcast %621 : vector<16x1xf32> to vector<16x128xf32>
    %623 = arith.select %141, %620, %622 : vector<16x128xi1>, vector<16x128xf32>
    %624 = vector.extract_strided_slice %137 {offsets = [16, 18], sizes = [16, 1], strides = [1, 1]} : vector<64x64xf32> to vector<16x1xf32>
    %625 = vector.extract_strided_slice %137 {offsets = [48, 18], sizes = [16, 1], strides = [1, 1]} : vector<64x64xf32> to vector<16x1xf32>
    %626 = vector.shape_cast %624 : vector<16x1xf32> to vector<16x1xf32>
    %627 = vector.broadcast %626 : vector<16x1xf32> to vector<16x128xf32>
    %628 = vector.shape_cast %625 : vector<16x1xf32> to vector<16x1xf32>
    %629 = vector.broadcast %628 : vector<16x1xf32> to vector<16x128xf32>
    %630 = arith.select %141, %627, %629 : vector<16x128xi1>, vector<16x128xf32>
    %631 = arith.mulf %616, %609 : vector<16x128xf32>
    %632 = vector.extract_strided_slice %138 {offsets = [18, 0], sizes = [1, 128], strides = [1, 1]} : vector<64x128xf32> to vector<1x128xf32>
    %633 = vector.broadcast %632 : vector<1x128xf32> to vector<16x128xf32>
    %634 = arith.mulf %633, %623 : vector<16x128xf32>
    %635 = arith.addf %631, %634 : vector<16x128xf32>
    %636 = arith.mulf %635, %630 : vector<16x128xf32>
    %cst_56 = arith.constant dense<0.000000e+00> : vector<128xf32>
    %637 = vector.multi_reduction <add>, %636, %cst_56 [0] : vector<16x128xf32> to vector<128xf32>
    %638 = vector.shape_cast %637 : vector<128xf32> to vector<1x128xf32>
    %639 = vector.extract_strided_slice %135 {offsets = [19, 0], sizes = [1, 128], strides = [1, 1]} : vector<64x128xf32> to vector<1x128xf32>
    %640 = vector.broadcast %639 : vector<1x128xf32> to vector<16x128xf32>
    %641 = arith.mulf %640, %1 : vector<16x128xf32>
    %642 = math.exp %641 : vector<16x128xf32>
    %643 = vector.extract_strided_slice %137 {offsets = [0, 19], sizes = [16, 1], strides = [1, 1]} : vector<64x64xf32> to vector<16x1xf32>
    %644 = vector.extract_strided_slice %137 {offsets = [32, 19], sizes = [16, 1], strides = [1, 1]} : vector<64x64xf32> to vector<16x1xf32>
    %645 = vector.shape_cast %643 : vector<16x1xf32> to vector<16x1xf32>
    %646 = vector.broadcast %645 : vector<16x1xf32> to vector<16x128xf32>
    %647 = vector.shape_cast %644 : vector<16x1xf32> to vector<16x1xf32>
    %648 = vector.broadcast %647 : vector<16x1xf32> to vector<16x128xf32>
    %649 = arith.select %141, %646, %648 : vector<16x128xi1>, vector<16x128xf32>
    %650 = vector.extract_strided_slice %137 {offsets = [16, 19], sizes = [16, 1], strides = [1, 1]} : vector<64x64xf32> to vector<16x1xf32>
    %651 = vector.extract_strided_slice %137 {offsets = [48, 19], sizes = [16, 1], strides = [1, 1]} : vector<64x64xf32> to vector<16x1xf32>
    %652 = vector.shape_cast %650 : vector<16x1xf32> to vector<16x1xf32>
    %653 = vector.broadcast %652 : vector<16x1xf32> to vector<16x128xf32>
    %654 = vector.shape_cast %651 : vector<16x1xf32> to vector<16x1xf32>
    %655 = vector.broadcast %654 : vector<16x1xf32> to vector<16x128xf32>
    %656 = arith.select %141, %653, %655 : vector<16x128xi1>, vector<16x128xf32>
    %657 = arith.mulf %642, %635 : vector<16x128xf32>
    %658 = vector.extract_strided_slice %138 {offsets = [19, 0], sizes = [1, 128], strides = [1, 1]} : vector<64x128xf32> to vector<1x128xf32>
    %659 = vector.broadcast %658 : vector<1x128xf32> to vector<16x128xf32>
    %660 = arith.mulf %659, %649 : vector<16x128xf32>
    %661 = arith.addf %657, %660 : vector<16x128xf32>
    %662 = arith.mulf %661, %656 : vector<16x128xf32>
    %cst_57 = arith.constant dense<0.000000e+00> : vector<128xf32>
    %663 = vector.multi_reduction <add>, %662, %cst_57 [0] : vector<16x128xf32> to vector<128xf32>
    %664 = vector.shape_cast %663 : vector<128xf32> to vector<1x128xf32>
    %665 = vector.extract_strided_slice %135 {offsets = [20, 0], sizes = [1, 128], strides = [1, 1]} : vector<64x128xf32> to vector<1x128xf32>
    %666 = vector.broadcast %665 : vector<1x128xf32> to vector<16x128xf32>
    %667 = arith.mulf %666, %1 : vector<16x128xf32>
    %668 = math.exp %667 : vector<16x128xf32>
    %669 = vector.extract_strided_slice %137 {offsets = [0, 20], sizes = [16, 1], strides = [1, 1]} : vector<64x64xf32> to vector<16x1xf32>
    %670 = vector.extract_strided_slice %137 {offsets = [32, 20], sizes = [16, 1], strides = [1, 1]} : vector<64x64xf32> to vector<16x1xf32>
    %671 = vector.shape_cast %669 : vector<16x1xf32> to vector<16x1xf32>
    %672 = vector.broadcast %671 : vector<16x1xf32> to vector<16x128xf32>
    %673 = vector.shape_cast %670 : vector<16x1xf32> to vector<16x1xf32>
    %674 = vector.broadcast %673 : vector<16x1xf32> to vector<16x128xf32>
    %675 = arith.select %141, %672, %674 : vector<16x128xi1>, vector<16x128xf32>
    %676 = vector.extract_strided_slice %137 {offsets = [16, 20], sizes = [16, 1], strides = [1, 1]} : vector<64x64xf32> to vector<16x1xf32>
    %677 = vector.extract_strided_slice %137 {offsets = [48, 20], sizes = [16, 1], strides = [1, 1]} : vector<64x64xf32> to vector<16x1xf32>
    %678 = vector.shape_cast %676 : vector<16x1xf32> to vector<16x1xf32>
    %679 = vector.broadcast %678 : vector<16x1xf32> to vector<16x128xf32>
    %680 = vector.shape_cast %677 : vector<16x1xf32> to vector<16x1xf32>
    %681 = vector.broadcast %680 : vector<16x1xf32> to vector<16x128xf32>
    %682 = arith.select %141, %679, %681 : vector<16x128xi1>, vector<16x128xf32>
    %683 = arith.mulf %668, %661 : vector<16x128xf32>
    %684 = vector.extract_strided_slice %138 {offsets = [20, 0], sizes = [1, 128], strides = [1, 1]} : vector<64x128xf32> to vector<1x128xf32>
    %685 = vector.broadcast %684 : vector<1x128xf32> to vector<16x128xf32>
    %686 = arith.mulf %685, %675 : vector<16x128xf32>
    %687 = arith.addf %683, %686 : vector<16x128xf32>
    %688 = arith.mulf %687, %682 : vector<16x128xf32>
    %cst_58 = arith.constant dense<0.000000e+00> : vector<128xf32>
    %689 = vector.multi_reduction <add>, %688, %cst_58 [0] : vector<16x128xf32> to vector<128xf32>
    %690 = vector.shape_cast %689 : vector<128xf32> to vector<1x128xf32>
    %691 = vector.extract_strided_slice %135 {offsets = [21, 0], sizes = [1, 128], strides = [1, 1]} : vector<64x128xf32> to vector<1x128xf32>
    %692 = vector.broadcast %691 : vector<1x128xf32> to vector<16x128xf32>
    %693 = arith.mulf %692, %1 : vector<16x128xf32>
    %694 = math.exp %693 : vector<16x128xf32>
    %695 = vector.extract_strided_slice %137 {offsets = [0, 21], sizes = [16, 1], strides = [1, 1]} : vector<64x64xf32> to vector<16x1xf32>
    %696 = vector.extract_strided_slice %137 {offsets = [32, 21], sizes = [16, 1], strides = [1, 1]} : vector<64x64xf32> to vector<16x1xf32>
    %697 = vector.shape_cast %695 : vector<16x1xf32> to vector<16x1xf32>
    %698 = vector.broadcast %697 : vector<16x1xf32> to vector<16x128xf32>
    %699 = vector.shape_cast %696 : vector<16x1xf32> to vector<16x1xf32>
    %700 = vector.broadcast %699 : vector<16x1xf32> to vector<16x128xf32>
    %701 = arith.select %141, %698, %700 : vector<16x128xi1>, vector<16x128xf32>
    %702 = vector.extract_strided_slice %137 {offsets = [16, 21], sizes = [16, 1], strides = [1, 1]} : vector<64x64xf32> to vector<16x1xf32>
    %703 = vector.extract_strided_slice %137 {offsets = [48, 21], sizes = [16, 1], strides = [1, 1]} : vector<64x64xf32> to vector<16x1xf32>
    %704 = vector.shape_cast %702 : vector<16x1xf32> to vector<16x1xf32>
    %705 = vector.broadcast %704 : vector<16x1xf32> to vector<16x128xf32>
    %706 = vector.shape_cast %703 : vector<16x1xf32> to vector<16x1xf32>
    %707 = vector.broadcast %706 : vector<16x1xf32> to vector<16x128xf32>
    %708 = arith.select %141, %705, %707 : vector<16x128xi1>, vector<16x128xf32>
    %709 = arith.mulf %694, %687 : vector<16x128xf32>
    %710 = vector.extract_strided_slice %138 {offsets = [21, 0], sizes = [1, 128], strides = [1, 1]} : vector<64x128xf32> to vector<1x128xf32>
    %711 = vector.broadcast %710 : vector<1x128xf32> to vector<16x128xf32>
    %712 = arith.mulf %711, %701 : vector<16x128xf32>
    %713 = arith.addf %709, %712 : vector<16x128xf32>
    %714 = arith.mulf %713, %708 : vector<16x128xf32>
    %cst_59 = arith.constant dense<0.000000e+00> : vector<128xf32>
    %715 = vector.multi_reduction <add>, %714, %cst_59 [0] : vector<16x128xf32> to vector<128xf32>
    %716 = vector.shape_cast %715 : vector<128xf32> to vector<1x128xf32>
    %717 = vector.extract_strided_slice %135 {offsets = [22, 0], sizes = [1, 128], strides = [1, 1]} : vector<64x128xf32> to vector<1x128xf32>
    %718 = vector.broadcast %717 : vector<1x128xf32> to vector<16x128xf32>
    %719 = arith.mulf %718, %1 : vector<16x128xf32>
    %720 = math.exp %719 : vector<16x128xf32>
    %721 = vector.extract_strided_slice %137 {offsets = [0, 22], sizes = [16, 1], strides = [1, 1]} : vector<64x64xf32> to vector<16x1xf32>
    %722 = vector.extract_strided_slice %137 {offsets = [32, 22], sizes = [16, 1], strides = [1, 1]} : vector<64x64xf32> to vector<16x1xf32>
    %723 = vector.shape_cast %721 : vector<16x1xf32> to vector<16x1xf32>
    %724 = vector.broadcast %723 : vector<16x1xf32> to vector<16x128xf32>
    %725 = vector.shape_cast %722 : vector<16x1xf32> to vector<16x1xf32>
    %726 = vector.broadcast %725 : vector<16x1xf32> to vector<16x128xf32>
    %727 = arith.select %141, %724, %726 : vector<16x128xi1>, vector<16x128xf32>
    %728 = vector.extract_strided_slice %137 {offsets = [16, 22], sizes = [16, 1], strides = [1, 1]} : vector<64x64xf32> to vector<16x1xf32>
    %729 = vector.extract_strided_slice %137 {offsets = [48, 22], sizes = [16, 1], strides = [1, 1]} : vector<64x64xf32> to vector<16x1xf32>
    %730 = vector.shape_cast %728 : vector<16x1xf32> to vector<16x1xf32>
    %731 = vector.broadcast %730 : vector<16x1xf32> to vector<16x128xf32>
    %732 = vector.shape_cast %729 : vector<16x1xf32> to vector<16x1xf32>
    %733 = vector.broadcast %732 : vector<16x1xf32> to vector<16x128xf32>
    %734 = arith.select %141, %731, %733 : vector<16x128xi1>, vector<16x128xf32>
    %735 = arith.mulf %720, %713 : vector<16x128xf32>
    %736 = vector.extract_strided_slice %138 {offsets = [22, 0], sizes = [1, 128], strides = [1, 1]} : vector<64x128xf32> to vector<1x128xf32>
    %737 = vector.broadcast %736 : vector<1x128xf32> to vector<16x128xf32>
    %738 = arith.mulf %737, %727 : vector<16x128xf32>
    %739 = arith.addf %735, %738 : vector<16x128xf32>
    %740 = arith.mulf %739, %734 : vector<16x128xf32>
    %cst_60 = arith.constant dense<0.000000e+00> : vector<128xf32>
    %741 = vector.multi_reduction <add>, %740, %cst_60 [0] : vector<16x128xf32> to vector<128xf32>
    %742 = vector.shape_cast %741 : vector<128xf32> to vector<1x128xf32>
    %743 = vector.extract_strided_slice %135 {offsets = [23, 0], sizes = [1, 128], strides = [1, 1]} : vector<64x128xf32> to vector<1x128xf32>
    %744 = vector.broadcast %743 : vector<1x128xf32> to vector<16x128xf32>
    %745 = arith.mulf %744, %1 : vector<16x128xf32>
    %746 = math.exp %745 : vector<16x128xf32>
    %747 = vector.extract_strided_slice %137 {offsets = [0, 23], sizes = [16, 1], strides = [1, 1]} : vector<64x64xf32> to vector<16x1xf32>
    %748 = vector.extract_strided_slice %137 {offsets = [32, 23], sizes = [16, 1], strides = [1, 1]} : vector<64x64xf32> to vector<16x1xf32>
    %749 = vector.shape_cast %747 : vector<16x1xf32> to vector<16x1xf32>
    %750 = vector.broadcast %749 : vector<16x1xf32> to vector<16x128xf32>
    %751 = vector.shape_cast %748 : vector<16x1xf32> to vector<16x1xf32>
    %752 = vector.broadcast %751 : vector<16x1xf32> to vector<16x128xf32>
    %753 = arith.select %141, %750, %752 : vector<16x128xi1>, vector<16x128xf32>
    %754 = vector.extract_strided_slice %137 {offsets = [16, 23], sizes = [16, 1], strides = [1, 1]} : vector<64x64xf32> to vector<16x1xf32>
    %755 = vector.extract_strided_slice %137 {offsets = [48, 23], sizes = [16, 1], strides = [1, 1]} : vector<64x64xf32> to vector<16x1xf32>
    %756 = vector.shape_cast %754 : vector<16x1xf32> to vector<16x1xf32>
    %757 = vector.broadcast %756 : vector<16x1xf32> to vector<16x128xf32>
    %758 = vector.shape_cast %755 : vector<16x1xf32> to vector<16x1xf32>
    %759 = vector.broadcast %758 : vector<16x1xf32> to vector<16x128xf32>
    %760 = arith.select %141, %757, %759 : vector<16x128xi1>, vector<16x128xf32>
    %761 = arith.mulf %746, %739 : vector<16x128xf32>
    %762 = vector.extract_strided_slice %138 {offsets = [23, 0], sizes = [1, 128], strides = [1, 1]} : vector<64x128xf32> to vector<1x128xf32>
    %763 = vector.broadcast %762 : vector<1x128xf32> to vector<16x128xf32>
    %764 = arith.mulf %763, %753 : vector<16x128xf32>
    %765 = arith.addf %761, %764 : vector<16x128xf32>
    %766 = arith.mulf %765, %760 : vector<16x128xf32>
    %cst_61 = arith.constant dense<0.000000e+00> : vector<128xf32>
    %767 = vector.multi_reduction <add>, %766, %cst_61 [0] : vector<16x128xf32> to vector<128xf32>
    %768 = vector.shape_cast %767 : vector<128xf32> to vector<1x128xf32>
    %769 = tpu.concatenate %586, %612, %638, %664, %690, %716, %742, %768 in 0 : vector<1x128xf32>, vector<1x128xf32>, vector<1x128xf32>, vector<1x128xf32>, vector<1x128xf32>, vector<1x128xf32>, vector<1x128xf32>, vector<1x128xf32> -> vector<8x128xf32>
    %770 = vector.extract_strided_slice %135 {offsets = [24, 0], sizes = [1, 128], strides = [1, 1]} : vector<64x128xf32> to vector<1x128xf32>
    %771 = vector.broadcast %770 : vector<1x128xf32> to vector<16x128xf32>
    %772 = arith.mulf %771, %1 : vector<16x128xf32>
    %773 = math.exp %772 : vector<16x128xf32>
    %774 = vector.extract_strided_slice %137 {offsets = [0, 24], sizes = [16, 1], strides = [1, 1]} : vector<64x64xf32> to vector<16x1xf32>
    %775 = vector.extract_strided_slice %137 {offsets = [32, 24], sizes = [16, 1], strides = [1, 1]} : vector<64x64xf32> to vector<16x1xf32>
    %776 = vector.shape_cast %774 : vector<16x1xf32> to vector<16x1xf32>
    %777 = vector.broadcast %776 : vector<16x1xf32> to vector<16x128xf32>
    %778 = vector.shape_cast %775 : vector<16x1xf32> to vector<16x1xf32>
    %779 = vector.broadcast %778 : vector<16x1xf32> to vector<16x128xf32>
    %780 = arith.select %141, %777, %779 : vector<16x128xi1>, vector<16x128xf32>
    %781 = vector.extract_strided_slice %137 {offsets = [16, 24], sizes = [16, 1], strides = [1, 1]} : vector<64x64xf32> to vector<16x1xf32>
    %782 = vector.extract_strided_slice %137 {offsets = [48, 24], sizes = [16, 1], strides = [1, 1]} : vector<64x64xf32> to vector<16x1xf32>
    %783 = vector.shape_cast %781 : vector<16x1xf32> to vector<16x1xf32>
    %784 = vector.broadcast %783 : vector<16x1xf32> to vector<16x128xf32>
    %785 = vector.shape_cast %782 : vector<16x1xf32> to vector<16x1xf32>
    %786 = vector.broadcast %785 : vector<16x1xf32> to vector<16x128xf32>
    %787 = arith.select %141, %784, %786 : vector<16x128xi1>, vector<16x128xf32>
    %788 = arith.mulf %773, %765 : vector<16x128xf32>
    %789 = vector.extract_strided_slice %138 {offsets = [24, 0], sizes = [1, 128], strides = [1, 1]} : vector<64x128xf32> to vector<1x128xf32>
    %790 = vector.broadcast %789 : vector<1x128xf32> to vector<16x128xf32>
    %791 = arith.mulf %790, %780 : vector<16x128xf32>
    %792 = arith.addf %788, %791 : vector<16x128xf32>
    %793 = arith.mulf %792, %787 : vector<16x128xf32>
    %cst_62 = arith.constant dense<0.000000e+00> : vector<128xf32>
    %794 = vector.multi_reduction <add>, %793, %cst_62 [0] : vector<16x128xf32> to vector<128xf32>
    %795 = vector.shape_cast %794 : vector<128xf32> to vector<1x128xf32>
    %796 = vector.extract_strided_slice %135 {offsets = [25, 0], sizes = [1, 128], strides = [1, 1]} : vector<64x128xf32> to vector<1x128xf32>
    %797 = vector.broadcast %796 : vector<1x128xf32> to vector<16x128xf32>
    %798 = arith.mulf %797, %1 : vector<16x128xf32>
    %799 = math.exp %798 : vector<16x128xf32>
    %800 = vector.extract_strided_slice %137 {offsets = [0, 25], sizes = [16, 1], strides = [1, 1]} : vector<64x64xf32> to vector<16x1xf32>
    %801 = vector.extract_strided_slice %137 {offsets = [32, 25], sizes = [16, 1], strides = [1, 1]} : vector<64x64xf32> to vector<16x1xf32>
    %802 = vector.shape_cast %800 : vector<16x1xf32> to vector<16x1xf32>
    %803 = vector.broadcast %802 : vector<16x1xf32> to vector<16x128xf32>
    %804 = vector.shape_cast %801 : vector<16x1xf32> to vector<16x1xf32>
    %805 = vector.broadcast %804 : vector<16x1xf32> to vector<16x128xf32>
    %806 = arith.select %141, %803, %805 : vector<16x128xi1>, vector<16x128xf32>
    %807 = vector.extract_strided_slice %137 {offsets = [16, 25], sizes = [16, 1], strides = [1, 1]} : vector<64x64xf32> to vector<16x1xf32>
    %808 = vector.extract_strided_slice %137 {offsets = [48, 25], sizes = [16, 1], strides = [1, 1]} : vector<64x64xf32> to vector<16x1xf32>
    %809 = vector.shape_cast %807 : vector<16x1xf32> to vector<16x1xf32>
    %810 = vector.broadcast %809 : vector<16x1xf32> to vector<16x128xf32>
    %811 = vector.shape_cast %808 : vector<16x1xf32> to vector<16x1xf32>
    %812 = vector.broadcast %811 : vector<16x1xf32> to vector<16x128xf32>
    %813 = arith.select %141, %810, %812 : vector<16x128xi1>, vector<16x128xf32>
    %814 = arith.mulf %799, %792 : vector<16x128xf32>
    %815 = vector.extract_strided_slice %138 {offsets = [25, 0], sizes = [1, 128], strides = [1, 1]} : vector<64x128xf32> to vector<1x128xf32>
    %816 = vector.broadcast %815 : vector<1x128xf32> to vector<16x128xf32>
    %817 = arith.mulf %816, %806 : vector<16x128xf32>
    %818 = arith.addf %814, %817 : vector<16x128xf32>
    %819 = arith.mulf %818, %813 : vector<16x128xf32>
    %cst_63 = arith.constant dense<0.000000e+00> : vector<128xf32>
    %820 = vector.multi_reduction <add>, %819, %cst_63 [0] : vector<16x128xf32> to vector<128xf32>
    %821 = vector.shape_cast %820 : vector<128xf32> to vector<1x128xf32>
    %822 = vector.extract_strided_slice %135 {offsets = [26, 0], sizes = [1, 128], strides = [1, 1]} : vector<64x128xf32> to vector<1x128xf32>
    %823 = vector.broadcast %822 : vector<1x128xf32> to vector<16x128xf32>
    %824 = arith.mulf %823, %1 : vector<16x128xf32>
    %825 = math.exp %824 : vector<16x128xf32>
    %826 = vector.extract_strided_slice %137 {offsets = [0, 26], sizes = [16, 1], strides = [1, 1]} : vector<64x64xf32> to vector<16x1xf32>
    %827 = vector.extract_strided_slice %137 {offsets = [32, 26], sizes = [16, 1], strides = [1, 1]} : vector<64x64xf32> to vector<16x1xf32>
    %828 = vector.shape_cast %826 : vector<16x1xf32> to vector<16x1xf32>
    %829 = vector.broadcast %828 : vector<16x1xf32> to vector<16x128xf32>
    %830 = vector.shape_cast %827 : vector<16x1xf32> to vector<16x1xf32>
    %831 = vector.broadcast %830 : vector<16x1xf32> to vector<16x128xf32>
    %832 = arith.select %141, %829, %831 : vector<16x128xi1>, vector<16x128xf32>
    %833 = vector.extract_strided_slice %137 {offsets = [16, 26], sizes = [16, 1], strides = [1, 1]} : vector<64x64xf32> to vector<16x1xf32>
    %834 = vector.extract_strided_slice %137 {offsets = [48, 26], sizes = [16, 1], strides = [1, 1]} : vector<64x64xf32> to vector<16x1xf32>
    %835 = vector.shape_cast %833 : vector<16x1xf32> to vector<16x1xf32>
    %836 = vector.broadcast %835 : vector<16x1xf32> to vector<16x128xf32>
    %837 = vector.shape_cast %834 : vector<16x1xf32> to vector<16x1xf32>
    %838 = vector.broadcast %837 : vector<16x1xf32> to vector<16x128xf32>
    %839 = arith.select %141, %836, %838 : vector<16x128xi1>, vector<16x128xf32>
    %840 = arith.mulf %825, %818 : vector<16x128xf32>
    %841 = vector.extract_strided_slice %138 {offsets = [26, 0], sizes = [1, 128], strides = [1, 1]} : vector<64x128xf32> to vector<1x128xf32>
    %842 = vector.broadcast %841 : vector<1x128xf32> to vector<16x128xf32>
    %843 = arith.mulf %842, %832 : vector<16x128xf32>
    %844 = arith.addf %840, %843 : vector<16x128xf32>
    %845 = arith.mulf %844, %839 : vector<16x128xf32>
    %cst_64 = arith.constant dense<0.000000e+00> : vector<128xf32>
    %846 = vector.multi_reduction <add>, %845, %cst_64 [0] : vector<16x128xf32> to vector<128xf32>
    %847 = vector.shape_cast %846 : vector<128xf32> to vector<1x128xf32>
    %848 = vector.extract_strided_slice %135 {offsets = [27, 0], sizes = [1, 128], strides = [1, 1]} : vector<64x128xf32> to vector<1x128xf32>
    %849 = vector.broadcast %848 : vector<1x128xf32> to vector<16x128xf32>
    %850 = arith.mulf %849, %1 : vector<16x128xf32>
    %851 = math.exp %850 : vector<16x128xf32>
    %852 = vector.extract_strided_slice %137 {offsets = [0, 27], sizes = [16, 1], strides = [1, 1]} : vector<64x64xf32> to vector<16x1xf32>
    %853 = vector.extract_strided_slice %137 {offsets = [32, 27], sizes = [16, 1], strides = [1, 1]} : vector<64x64xf32> to vector<16x1xf32>
    %854 = vector.shape_cast %852 : vector<16x1xf32> to vector<16x1xf32>
    %855 = vector.broadcast %854 : vector<16x1xf32> to vector<16x128xf32>
    %856 = vector.shape_cast %853 : vector<16x1xf32> to vector<16x1xf32>
    %857 = vector.broadcast %856 : vector<16x1xf32> to vector<16x128xf32>
    %858 = arith.select %141, %855, %857 : vector<16x128xi1>, vector<16x128xf32>
    %859 = vector.extract_strided_slice %137 {offsets = [16, 27], sizes = [16, 1], strides = [1, 1]} : vector<64x64xf32> to vector<16x1xf32>
    %860 = vector.extract_strided_slice %137 {offsets = [48, 27], sizes = [16, 1], strides = [1, 1]} : vector<64x64xf32> to vector<16x1xf32>
    %861 = vector.shape_cast %859 : vector<16x1xf32> to vector<16x1xf32>
    %862 = vector.broadcast %861 : vector<16x1xf32> to vector<16x128xf32>
    %863 = vector.shape_cast %860 : vector<16x1xf32> to vector<16x1xf32>
    %864 = vector.broadcast %863 : vector<16x1xf32> to vector<16x128xf32>
    %865 = arith.select %141, %862, %864 : vector<16x128xi1>, vector<16x128xf32>
    %866 = arith.mulf %851, %844 : vector<16x128xf32>
    %867 = vector.extract_strided_slice %138 {offsets = [27, 0], sizes = [1, 128], strides = [1, 1]} : vector<64x128xf32> to vector<1x128xf32>
    %868 = vector.broadcast %867 : vector<1x128xf32> to vector<16x128xf32>
    %869 = arith.mulf %868, %858 : vector<16x128xf32>
    %870 = arith.addf %866, %869 : vector<16x128xf32>
    %871 = arith.mulf %870, %865 : vector<16x128xf32>
    %cst_65 = arith.constant dense<0.000000e+00> : vector<128xf32>
    %872 = vector.multi_reduction <add>, %871, %cst_65 [0] : vector<16x128xf32> to vector<128xf32>
    %873 = vector.shape_cast %872 : vector<128xf32> to vector<1x128xf32>
    %874 = vector.extract_strided_slice %135 {offsets = [28, 0], sizes = [1, 128], strides = [1, 1]} : vector<64x128xf32> to vector<1x128xf32>
    %875 = vector.broadcast %874 : vector<1x128xf32> to vector<16x128xf32>
    %876 = arith.mulf %875, %1 : vector<16x128xf32>
    %877 = math.exp %876 : vector<16x128xf32>
    %878 = vector.extract_strided_slice %137 {offsets = [0, 28], sizes = [16, 1], strides = [1, 1]} : vector<64x64xf32> to vector<16x1xf32>
    %879 = vector.extract_strided_slice %137 {offsets = [32, 28], sizes = [16, 1], strides = [1, 1]} : vector<64x64xf32> to vector<16x1xf32>
    %880 = vector.shape_cast %878 : vector<16x1xf32> to vector<16x1xf32>
    %881 = vector.broadcast %880 : vector<16x1xf32> to vector<16x128xf32>
    %882 = vector.shape_cast %879 : vector<16x1xf32> to vector<16x1xf32>
    %883 = vector.broadcast %882 : vector<16x1xf32> to vector<16x128xf32>
    %884 = arith.select %141, %881, %883 : vector<16x128xi1>, vector<16x128xf32>
    %885 = vector.extract_strided_slice %137 {offsets = [16, 28], sizes = [16, 1], strides = [1, 1]} : vector<64x64xf32> to vector<16x1xf32>
    %886 = vector.extract_strided_slice %137 {offsets = [48, 28], sizes = [16, 1], strides = [1, 1]} : vector<64x64xf32> to vector<16x1xf32>
    %887 = vector.shape_cast %885 : vector<16x1xf32> to vector<16x1xf32>
    %888 = vector.broadcast %887 : vector<16x1xf32> to vector<16x128xf32>
    %889 = vector.shape_cast %886 : vector<16x1xf32> to vector<16x1xf32>
    %890 = vector.broadcast %889 : vector<16x1xf32> to vector<16x128xf32>
    %891 = arith.select %141, %888, %890 : vector<16x128xi1>, vector<16x128xf32>
    %892 = arith.mulf %877, %870 : vector<16x128xf32>
    %893 = vector.extract_strided_slice %138 {offsets = [28, 0], sizes = [1, 128], strides = [1, 1]} : vector<64x128xf32> to vector<1x128xf32>
    %894 = vector.broadcast %893 : vector<1x128xf32> to vector<16x128xf32>
    %895 = arith.mulf %894, %884 : vector<16x128xf32>
    %896 = arith.addf %892, %895 : vector<16x128xf32>
    %897 = arith.mulf %896, %891 : vector<16x128xf32>
    %cst_66 = arith.constant dense<0.000000e+00> : vector<128xf32>
    %898 = vector.multi_reduction <add>, %897, %cst_66 [0] : vector<16x128xf32> to vector<128xf32>
    %899 = vector.shape_cast %898 : vector<128xf32> to vector<1x128xf32>
    %900 = vector.extract_strided_slice %135 {offsets = [29, 0], sizes = [1, 128], strides = [1, 1]} : vector<64x128xf32> to vector<1x128xf32>
    %901 = vector.broadcast %900 : vector<1x128xf32> to vector<16x128xf32>
    %902 = arith.mulf %901, %1 : vector<16x128xf32>
    %903 = math.exp %902 : vector<16x128xf32>
    %904 = vector.extract_strided_slice %137 {offsets = [0, 29], sizes = [16, 1], strides = [1, 1]} : vector<64x64xf32> to vector<16x1xf32>
    %905 = vector.extract_strided_slice %137 {offsets = [32, 29], sizes = [16, 1], strides = [1, 1]} : vector<64x64xf32> to vector<16x1xf32>
    %906 = vector.shape_cast %904 : vector<16x1xf32> to vector<16x1xf32>
    %907 = vector.broadcast %906 : vector<16x1xf32> to vector<16x128xf32>
    %908 = vector.shape_cast %905 : vector<16x1xf32> to vector<16x1xf32>
    %909 = vector.broadcast %908 : vector<16x1xf32> to vector<16x128xf32>
    %910 = arith.select %141, %907, %909 : vector<16x128xi1>, vector<16x128xf32>
    %911 = vector.extract_strided_slice %137 {offsets = [16, 29], sizes = [16, 1], strides = [1, 1]} : vector<64x64xf32> to vector<16x1xf32>
    %912 = vector.extract_strided_slice %137 {offsets = [48, 29], sizes = [16, 1], strides = [1, 1]} : vector<64x64xf32> to vector<16x1xf32>
    %913 = vector.shape_cast %911 : vector<16x1xf32> to vector<16x1xf32>
    %914 = vector.broadcast %913 : vector<16x1xf32> to vector<16x128xf32>
    %915 = vector.shape_cast %912 : vector<16x1xf32> to vector<16x1xf32>
    %916 = vector.broadcast %915 : vector<16x1xf32> to vector<16x128xf32>
    %917 = arith.select %141, %914, %916 : vector<16x128xi1>, vector<16x128xf32>
    %918 = arith.mulf %903, %896 : vector<16x128xf32>
    %919 = vector.extract_strided_slice %138 {offsets = [29, 0], sizes = [1, 128], strides = [1, 1]} : vector<64x128xf32> to vector<1x128xf32>
    %920 = vector.broadcast %919 : vector<1x128xf32> to vector<16x128xf32>
    %921 = arith.mulf %920, %910 : vector<16x128xf32>
    %922 = arith.addf %918, %921 : vector<16x128xf32>
    %923 = arith.mulf %922, %917 : vector<16x128xf32>
    %cst_67 = arith.constant dense<0.000000e+00> : vector<128xf32>
    %924 = vector.multi_reduction <add>, %923, %cst_67 [0] : vector<16x128xf32> to vector<128xf32>
    %925 = vector.shape_cast %924 : vector<128xf32> to vector<1x128xf32>
    %926 = vector.extract_strided_slice %135 {offsets = [30, 0], sizes = [1, 128], strides = [1, 1]} : vector<64x128xf32> to vector<1x128xf32>
    %927 = vector.broadcast %926 : vector<1x128xf32> to vector<16x128xf32>
    %928 = arith.mulf %927, %1 : vector<16x128xf32>
    %929 = math.exp %928 : vector<16x128xf32>
    %930 = vector.extract_strided_slice %137 {offsets = [0, 30], sizes = [16, 1], strides = [1, 1]} : vector<64x64xf32> to vector<16x1xf32>
    %931 = vector.extract_strided_slice %137 {offsets = [32, 30], sizes = [16, 1], strides = [1, 1]} : vector<64x64xf32> to vector<16x1xf32>
    %932 = vector.shape_cast %930 : vector<16x1xf32> to vector<16x1xf32>
    %933 = vector.broadcast %932 : vector<16x1xf32> to vector<16x128xf32>
    %934 = vector.shape_cast %931 : vector<16x1xf32> to vector<16x1xf32>
    %935 = vector.broadcast %934 : vector<16x1xf32> to vector<16x128xf32>
    %936 = arith.select %141, %933, %935 : vector<16x128xi1>, vector<16x128xf32>
    %937 = vector.extract_strided_slice %137 {offsets = [16, 30], sizes = [16, 1], strides = [1, 1]} : vector<64x64xf32> to vector<16x1xf32>
    %938 = vector.extract_strided_slice %137 {offsets = [48, 30], sizes = [16, 1], strides = [1, 1]} : vector<64x64xf32> to vector<16x1xf32>
    %939 = vector.shape_cast %937 : vector<16x1xf32> to vector<16x1xf32>
    %940 = vector.broadcast %939 : vector<16x1xf32> to vector<16x128xf32>
    %941 = vector.shape_cast %938 : vector<16x1xf32> to vector<16x1xf32>
    %942 = vector.broadcast %941 : vector<16x1xf32> to vector<16x128xf32>
    %943 = arith.select %141, %940, %942 : vector<16x128xi1>, vector<16x128xf32>
    %944 = arith.mulf %929, %922 : vector<16x128xf32>
    %945 = vector.extract_strided_slice %138 {offsets = [30, 0], sizes = [1, 128], strides = [1, 1]} : vector<64x128xf32> to vector<1x128xf32>
    %946 = vector.broadcast %945 : vector<1x128xf32> to vector<16x128xf32>
    %947 = arith.mulf %946, %936 : vector<16x128xf32>
    %948 = arith.addf %944, %947 : vector<16x128xf32>
    %949 = arith.mulf %948, %943 : vector<16x128xf32>
    %cst_68 = arith.constant dense<0.000000e+00> : vector<128xf32>
    %950 = vector.multi_reduction <add>, %949, %cst_68 [0] : vector<16x128xf32> to vector<128xf32>
    %951 = vector.shape_cast %950 : vector<128xf32> to vector<1x128xf32>
    %952 = vector.extract_strided_slice %135 {offsets = [31, 0], sizes = [1, 128], strides = [1, 1]} : vector<64x128xf32> to vector<1x128xf32>
    %953 = vector.broadcast %952 : vector<1x128xf32> to vector<16x128xf32>
    %954 = arith.mulf %953, %1 : vector<16x128xf32>
    %955 = math.exp %954 : vector<16x128xf32>
    %956 = vector.extract_strided_slice %137 {offsets = [0, 31], sizes = [16, 1], strides = [1, 1]} : vector<64x64xf32> to vector<16x1xf32>
    %957 = vector.extract_strided_slice %137 {offsets = [32, 31], sizes = [16, 1], strides = [1, 1]} : vector<64x64xf32> to vector<16x1xf32>
    %958 = vector.shape_cast %956 : vector<16x1xf32> to vector<16x1xf32>
    %959 = vector.broadcast %958 : vector<16x1xf32> to vector<16x128xf32>
    %960 = vector.shape_cast %957 : vector<16x1xf32> to vector<16x1xf32>
    %961 = vector.broadcast %960 : vector<16x1xf32> to vector<16x128xf32>
    %962 = arith.select %141, %959, %961 : vector<16x128xi1>, vector<16x128xf32>
    %963 = vector.extract_strided_slice %137 {offsets = [16, 31], sizes = [16, 1], strides = [1, 1]} : vector<64x64xf32> to vector<16x1xf32>
    %964 = vector.extract_strided_slice %137 {offsets = [48, 31], sizes = [16, 1], strides = [1, 1]} : vector<64x64xf32> to vector<16x1xf32>
    %965 = vector.shape_cast %963 : vector<16x1xf32> to vector<16x1xf32>
    %966 = vector.broadcast %965 : vector<16x1xf32> to vector<16x128xf32>
    %967 = vector.shape_cast %964 : vector<16x1xf32> to vector<16x1xf32>
    %968 = vector.broadcast %967 : vector<16x1xf32> to vector<16x128xf32>
    %969 = arith.select %141, %966, %968 : vector<16x128xi1>, vector<16x128xf32>
    %970 = arith.mulf %955, %948 : vector<16x128xf32>
    %971 = vector.extract_strided_slice %138 {offsets = [31, 0], sizes = [1, 128], strides = [1, 1]} : vector<64x128xf32> to vector<1x128xf32>
    %972 = vector.broadcast %971 : vector<1x128xf32> to vector<16x128xf32>
    %973 = arith.mulf %972, %962 : vector<16x128xf32>
    %974 = arith.addf %970, %973 : vector<16x128xf32>
    %975 = arith.mulf %974, %969 : vector<16x128xf32>
    %cst_69 = arith.constant dense<0.000000e+00> : vector<128xf32>
    %976 = vector.multi_reduction <add>, %975, %cst_69 [0] : vector<16x128xf32> to vector<128xf32>
    %977 = vector.shape_cast %976 : vector<128xf32> to vector<1x128xf32>
    %978 = tpu.concatenate %795, %821, %847, %873, %899, %925, %951, %977 in 0 : vector<1x128xf32>, vector<1x128xf32>, vector<1x128xf32>, vector<1x128xf32>, vector<1x128xf32>, vector<1x128xf32>, vector<1x128xf32>, vector<1x128xf32> -> vector<8x128xf32>
    %979 = vector.extract_strided_slice %135 {offsets = [32, 0], sizes = [1, 128], strides = [1, 1]} : vector<64x128xf32> to vector<1x128xf32>
    %980 = vector.broadcast %979 : vector<1x128xf32> to vector<16x128xf32>
    %981 = arith.mulf %980, %1 : vector<16x128xf32>
    %982 = math.exp %981 : vector<16x128xf32>
    %983 = vector.extract_strided_slice %137 {offsets = [0, 32], sizes = [16, 1], strides = [1, 1]} : vector<64x64xf32> to vector<16x1xf32>
    %984 = vector.extract_strided_slice %137 {offsets = [32, 32], sizes = [16, 1], strides = [1, 1]} : vector<64x64xf32> to vector<16x1xf32>
    %985 = vector.shape_cast %983 : vector<16x1xf32> to vector<16x1xf32>
    %986 = vector.broadcast %985 : vector<16x1xf32> to vector<16x128xf32>
    %987 = vector.shape_cast %984 : vector<16x1xf32> to vector<16x1xf32>
    %988 = vector.broadcast %987 : vector<16x1xf32> to vector<16x128xf32>
    %989 = arith.select %141, %986, %988 : vector<16x128xi1>, vector<16x128xf32>
    %990 = vector.extract_strided_slice %137 {offsets = [16, 32], sizes = [16, 1], strides = [1, 1]} : vector<64x64xf32> to vector<16x1xf32>
    %991 = vector.extract_strided_slice %137 {offsets = [48, 32], sizes = [16, 1], strides = [1, 1]} : vector<64x64xf32> to vector<16x1xf32>
    %992 = vector.shape_cast %990 : vector<16x1xf32> to vector<16x1xf32>
    %993 = vector.broadcast %992 : vector<16x1xf32> to vector<16x128xf32>
    %994 = vector.shape_cast %991 : vector<16x1xf32> to vector<16x1xf32>
    %995 = vector.broadcast %994 : vector<16x1xf32> to vector<16x128xf32>
    %996 = arith.select %141, %993, %995 : vector<16x128xi1>, vector<16x128xf32>
    %997 = arith.mulf %982, %974 : vector<16x128xf32>
    %998 = vector.extract_strided_slice %138 {offsets = [32, 0], sizes = [1, 128], strides = [1, 1]} : vector<64x128xf32> to vector<1x128xf32>
    %999 = vector.broadcast %998 : vector<1x128xf32> to vector<16x128xf32>
    %1000 = arith.mulf %999, %989 : vector<16x128xf32>
    %1001 = arith.addf %997, %1000 : vector<16x128xf32>
    %1002 = arith.mulf %1001, %996 : vector<16x128xf32>
    %cst_70 = arith.constant dense<0.000000e+00> : vector<128xf32>
    %1003 = vector.multi_reduction <add>, %1002, %cst_70 [0] : vector<16x128xf32> to vector<128xf32>
    %1004 = vector.shape_cast %1003 : vector<128xf32> to vector<1x128xf32>
    %1005 = vector.extract_strided_slice %135 {offsets = [33, 0], sizes = [1, 128], strides = [1, 1]} : vector<64x128xf32> to vector<1x128xf32>
    %1006 = vector.broadcast %1005 : vector<1x128xf32> to vector<16x128xf32>
    %1007 = arith.mulf %1006, %1 : vector<16x128xf32>
    %1008 = math.exp %1007 : vector<16x128xf32>
    %1009 = vector.extract_strided_slice %137 {offsets = [0, 33], sizes = [16, 1], strides = [1, 1]} : vector<64x64xf32> to vector<16x1xf32>
    %1010 = vector.extract_strided_slice %137 {offsets = [32, 33], sizes = [16, 1], strides = [1, 1]} : vector<64x64xf32> to vector<16x1xf32>
    %1011 = vector.shape_cast %1009 : vector<16x1xf32> to vector<16x1xf32>
    %1012 = vector.broadcast %1011 : vector<16x1xf32> to vector<16x128xf32>
    %1013 = vector.shape_cast %1010 : vector<16x1xf32> to vector<16x1xf32>
    %1014 = vector.broadcast %1013 : vector<16x1xf32> to vector<16x128xf32>
    %1015 = arith.select %141, %1012, %1014 : vector<16x128xi1>, vector<16x128xf32>
    %1016 = vector.extract_strided_slice %137 {offsets = [16, 33], sizes = [16, 1], strides = [1, 1]} : vector<64x64xf32> to vector<16x1xf32>
    %1017 = vector.extract_strided_slice %137 {offsets = [48, 33], sizes = [16, 1], strides = [1, 1]} : vector<64x64xf32> to vector<16x1xf32>
    %1018 = vector.shape_cast %1016 : vector<16x1xf32> to vector<16x1xf32>
    %1019 = vector.broadcast %1018 : vector<16x1xf32> to vector<16x128xf32>
    %1020 = vector.shape_cast %1017 : vector<16x1xf32> to vector<16x1xf32>
    %1021 = vector.broadcast %1020 : vector<16x1xf32> to vector<16x128xf32>
    %1022 = arith.select %141, %1019, %1021 : vector<16x128xi1>, vector<16x128xf32>
    %1023 = arith.mulf %1008, %1001 : vector<16x128xf32>
    %1024 = vector.extract_strided_slice %138 {offsets = [33, 0], sizes = [1, 128], strides = [1, 1]} : vector<64x128xf32> to vector<1x128xf32>
    %1025 = vector.broadcast %1024 : vector<1x128xf32> to vector<16x128xf32>
    %1026 = arith.mulf %1025, %1015 : vector<16x128xf32>
    %1027 = arith.addf %1023, %1026 : vector<16x128xf32>
    %1028 = arith.mulf %1027, %1022 : vector<16x128xf32>
    %cst_71 = arith.constant dense<0.000000e+00> : vector<128xf32>
    %1029 = vector.multi_reduction <add>, %1028, %cst_71 [0] : vector<16x128xf32> to vector<128xf32>
    %1030 = vector.shape_cast %1029 : vector<128xf32> to vector<1x128xf32>
    %1031 = vector.extract_strided_slice %135 {offsets = [34, 0], sizes = [1, 128], strides = [1, 1]} : vector<64x128xf32> to vector<1x128xf32>
    %1032 = vector.broadcast %1031 : vector<1x128xf32> to vector<16x128xf32>
    %1033 = arith.mulf %1032, %1 : vector<16x128xf32>
    %1034 = math.exp %1033 : vector<16x128xf32>
    %1035 = vector.extract_strided_slice %137 {offsets = [0, 34], sizes = [16, 1], strides = [1, 1]} : vector<64x64xf32> to vector<16x1xf32>
    %1036 = vector.extract_strided_slice %137 {offsets = [32, 34], sizes = [16, 1], strides = [1, 1]} : vector<64x64xf32> to vector<16x1xf32>
    %1037 = vector.shape_cast %1035 : vector<16x1xf32> to vector<16x1xf32>
    %1038 = vector.broadcast %1037 : vector<16x1xf32> to vector<16x128xf32>
    %1039 = vector.shape_cast %1036 : vector<16x1xf32> to vector<16x1xf32>
    %1040 = vector.broadcast %1039 : vector<16x1xf32> to vector<16x128xf32>
    %1041 = arith.select %141, %1038, %1040 : vector<16x128xi1>, vector<16x128xf32>
    %1042 = vector.extract_strided_slice %137 {offsets = [16, 34], sizes = [16, 1], strides = [1, 1]} : vector<64x64xf32> to vector<16x1xf32>
    %1043 = vector.extract_strided_slice %137 {offsets = [48, 34], sizes = [16, 1], strides = [1, 1]} : vector<64x64xf32> to vector<16x1xf32>
    %1044 = vector.shape_cast %1042 : vector<16x1xf32> to vector<16x1xf32>
    %1045 = vector.broadcast %1044 : vector<16x1xf32> to vector<16x128xf32>
    %1046 = vector.shape_cast %1043 : vector<16x1xf32> to vector<16x1xf32>
    %1047 = vector.broadcast %1046 : vector<16x1xf32> to vector<16x128xf32>
    %1048 = arith.select %141, %1045, %1047 : vector<16x128xi1>, vector<16x128xf32>
    %1049 = arith.mulf %1034, %1027 : vector<16x128xf32>
    %1050 = vector.extract_strided_slice %138 {offsets = [34, 0], sizes = [1, 128], strides = [1, 1]} : vector<64x128xf32> to vector<1x128xf32>
    %1051 = vector.broadcast %1050 : vector<1x128xf32> to vector<16x128xf32>
    %1052 = arith.mulf %1051, %1041 : vector<16x128xf32>
    %1053 = arith.addf %1049, %1052 : vector<16x128xf32>
    %1054 = arith.mulf %1053, %1048 : vector<16x128xf32>
    %cst_72 = arith.constant dense<0.000000e+00> : vector<128xf32>
    %1055 = vector.multi_reduction <add>, %1054, %cst_72 [0] : vector<16x128xf32> to vector<128xf32>
    %1056 = vector.shape_cast %1055 : vector<128xf32> to vector<1x128xf32>
    %1057 = vector.extract_strided_slice %135 {offsets = [35, 0], sizes = [1, 128], strides = [1, 1]} : vector<64x128xf32> to vector<1x128xf32>
    %1058 = vector.broadcast %1057 : vector<1x128xf32> to vector<16x128xf32>
    %1059 = arith.mulf %1058, %1 : vector<16x128xf32>
    %1060 = math.exp %1059 : vector<16x128xf32>
    %1061 = vector.extract_strided_slice %137 {offsets = [0, 35], sizes = [16, 1], strides = [1, 1]} : vector<64x64xf32> to vector<16x1xf32>
    %1062 = vector.extract_strided_slice %137 {offsets = [32, 35], sizes = [16, 1], strides = [1, 1]} : vector<64x64xf32> to vector<16x1xf32>
    %1063 = vector.shape_cast %1061 : vector<16x1xf32> to vector<16x1xf32>
    %1064 = vector.broadcast %1063 : vector<16x1xf32> to vector<16x128xf32>
    %1065 = vector.shape_cast %1062 : vector<16x1xf32> to vector<16x1xf32>
    %1066 = vector.broadcast %1065 : vector<16x1xf32> to vector<16x128xf32>
    %1067 = arith.select %141, %1064, %1066 : vector<16x128xi1>, vector<16x128xf32>
    %1068 = vector.extract_strided_slice %137 {offsets = [16, 35], sizes = [16, 1], strides = [1, 1]} : vector<64x64xf32> to vector<16x1xf32>
    %1069 = vector.extract_strided_slice %137 {offsets = [48, 35], sizes = [16, 1], strides = [1, 1]} : vector<64x64xf32> to vector<16x1xf32>
    %1070 = vector.shape_cast %1068 : vector<16x1xf32> to vector<16x1xf32>
    %1071 = vector.broadcast %1070 : vector<16x1xf32> to vector<16x128xf32>
    %1072 = vector.shape_cast %1069 : vector<16x1xf32> to vector<16x1xf32>
    %1073 = vector.broadcast %1072 : vector<16x1xf32> to vector<16x128xf32>
    %1074 = arith.select %141, %1071, %1073 : vector<16x128xi1>, vector<16x128xf32>
    %1075 = arith.mulf %1060, %1053 : vector<16x128xf32>
    %1076 = vector.extract_strided_slice %138 {offsets = [35, 0], sizes = [1, 128], strides = [1, 1]} : vector<64x128xf32> to vector<1x128xf32>
    %1077 = vector.broadcast %1076 : vector<1x128xf32> to vector<16x128xf32>
    %1078 = arith.mulf %1077, %1067 : vector<16x128xf32>
    %1079 = arith.addf %1075, %1078 : vector<16x128xf32>
    %1080 = arith.mulf %1079, %1074 : vector<16x128xf32>
    %cst_73 = arith.constant dense<0.000000e+00> : vector<128xf32>
    %1081 = vector.multi_reduction <add>, %1080, %cst_73 [0] : vector<16x128xf32> to vector<128xf32>
    %1082 = vector.shape_cast %1081 : vector<128xf32> to vector<1x128xf32>
    %1083 = vector.extract_strided_slice %135 {offsets = [36, 0], sizes = [1, 128], strides = [1, 1]} : vector<64x128xf32> to vector<1x128xf32>
    %1084 = vector.broadcast %1083 : vector<1x128xf32> to vector<16x128xf32>
    %1085 = arith.mulf %1084, %1 : vector<16x128xf32>
    %1086 = math.exp %1085 : vector<16x128xf32>
    %1087 = vector.extract_strided_slice %137 {offsets = [0, 36], sizes = [16, 1], strides = [1, 1]} : vector<64x64xf32> to vector<16x1xf32>
    %1088 = vector.extract_strided_slice %137 {offsets = [32, 36], sizes = [16, 1], strides = [1, 1]} : vector<64x64xf32> to vector<16x1xf32>
    %1089 = vector.shape_cast %1087 : vector<16x1xf32> to vector<16x1xf32>
    %1090 = vector.broadcast %1089 : vector<16x1xf32> to vector<16x128xf32>
    %1091 = vector.shape_cast %1088 : vector<16x1xf32> to vector<16x1xf32>
    %1092 = vector.broadcast %1091 : vector<16x1xf32> to vector<16x128xf32>
    %1093 = arith.select %141, %1090, %1092 : vector<16x128xi1>, vector<16x128xf32>
    %1094 = vector.extract_strided_slice %137 {offsets = [16, 36], sizes = [16, 1], strides = [1, 1]} : vector<64x64xf32> to vector<16x1xf32>
    %1095 = vector.extract_strided_slice %137 {offsets = [48, 36], sizes = [16, 1], strides = [1, 1]} : vector<64x64xf32> to vector<16x1xf32>
    %1096 = vector.shape_cast %1094 : vector<16x1xf32> to vector<16x1xf32>
    %1097 = vector.broadcast %1096 : vector<16x1xf32> to vector<16x128xf32>
    %1098 = vector.shape_cast %1095 : vector<16x1xf32> to vector<16x1xf32>
    %1099 = vector.broadcast %1098 : vector<16x1xf32> to vector<16x128xf32>
    %1100 = arith.select %141, %1097, %1099 : vector<16x128xi1>, vector<16x128xf32>
    %1101 = arith.mulf %1086, %1079 : vector<16x128xf32>
    %1102 = vector.extract_strided_slice %138 {offsets = [36, 0], sizes = [1, 128], strides = [1, 1]} : vector<64x128xf32> to vector<1x128xf32>
    %1103 = vector.broadcast %1102 : vector<1x128xf32> to vector<16x128xf32>
    %1104 = arith.mulf %1103, %1093 : vector<16x128xf32>
    %1105 = arith.addf %1101, %1104 : vector<16x128xf32>
    %1106 = arith.mulf %1105, %1100 : vector<16x128xf32>
    %cst_74 = arith.constant dense<0.000000e+00> : vector<128xf32>
    %1107 = vector.multi_reduction <add>, %1106, %cst_74 [0] : vector<16x128xf32> to vector<128xf32>
    %1108 = vector.shape_cast %1107 : vector<128xf32> to vector<1x128xf32>
    %1109 = vector.extract_strided_slice %135 {offsets = [37, 0], sizes = [1, 128], strides = [1, 1]} : vector<64x128xf32> to vector<1x128xf32>
    %1110 = vector.broadcast %1109 : vector<1x128xf32> to vector<16x128xf32>
    %1111 = arith.mulf %1110, %1 : vector<16x128xf32>
    %1112 = math.exp %1111 : vector<16x128xf32>
    %1113 = vector.extract_strided_slice %137 {offsets = [0, 37], sizes = [16, 1], strides = [1, 1]} : vector<64x64xf32> to vector<16x1xf32>
    %1114 = vector.extract_strided_slice %137 {offsets = [32, 37], sizes = [16, 1], strides = [1, 1]} : vector<64x64xf32> to vector<16x1xf32>
    %1115 = vector.shape_cast %1113 : vector<16x1xf32> to vector<16x1xf32>
    %1116 = vector.broadcast %1115 : vector<16x1xf32> to vector<16x128xf32>
    %1117 = vector.shape_cast %1114 : vector<16x1xf32> to vector<16x1xf32>
    %1118 = vector.broadcast %1117 : vector<16x1xf32> to vector<16x128xf32>
    %1119 = arith.select %141, %1116, %1118 : vector<16x128xi1>, vector<16x128xf32>
    %1120 = vector.extract_strided_slice %137 {offsets = [16, 37], sizes = [16, 1], strides = [1, 1]} : vector<64x64xf32> to vector<16x1xf32>
    %1121 = vector.extract_strided_slice %137 {offsets = [48, 37], sizes = [16, 1], strides = [1, 1]} : vector<64x64xf32> to vector<16x1xf32>
    %1122 = vector.shape_cast %1120 : vector<16x1xf32> to vector<16x1xf32>
    %1123 = vector.broadcast %1122 : vector<16x1xf32> to vector<16x128xf32>
    %1124 = vector.shape_cast %1121 : vector<16x1xf32> to vector<16x1xf32>
    %1125 = vector.broadcast %1124 : vector<16x1xf32> to vector<16x128xf32>
    %1126 = arith.select %141, %1123, %1125 : vector<16x128xi1>, vector<16x128xf32>
    %1127 = arith.mulf %1112, %1105 : vector<16x128xf32>
    %1128 = vector.extract_strided_slice %138 {offsets = [37, 0], sizes = [1, 128], strides = [1, 1]} : vector<64x128xf32> to vector<1x128xf32>
    %1129 = vector.broadcast %1128 : vector<1x128xf32> to vector<16x128xf32>
    %1130 = arith.mulf %1129, %1119 : vector<16x128xf32>
    %1131 = arith.addf %1127, %1130 : vector<16x128xf32>
    %1132 = arith.mulf %1131, %1126 : vector<16x128xf32>
    %cst_75 = arith.constant dense<0.000000e+00> : vector<128xf32>
    %1133 = vector.multi_reduction <add>, %1132, %cst_75 [0] : vector<16x128xf32> to vector<128xf32>
    %1134 = vector.shape_cast %1133 : vector<128xf32> to vector<1x128xf32>
    %1135 = vector.extract_strided_slice %135 {offsets = [38, 0], sizes = [1, 128], strides = [1, 1]} : vector<64x128xf32> to vector<1x128xf32>
    %1136 = vector.broadcast %1135 : vector<1x128xf32> to vector<16x128xf32>
    %1137 = arith.mulf %1136, %1 : vector<16x128xf32>
    %1138 = math.exp %1137 : vector<16x128xf32>
    %1139 = vector.extract_strided_slice %137 {offsets = [0, 38], sizes = [16, 1], strides = [1, 1]} : vector<64x64xf32> to vector<16x1xf32>
    %1140 = vector.extract_strided_slice %137 {offsets = [32, 38], sizes = [16, 1], strides = [1, 1]} : vector<64x64xf32> to vector<16x1xf32>
    %1141 = vector.shape_cast %1139 : vector<16x1xf32> to vector<16x1xf32>
    %1142 = vector.broadcast %1141 : vector<16x1xf32> to vector<16x128xf32>
    %1143 = vector.shape_cast %1140 : vector<16x1xf32> to vector<16x1xf32>
    %1144 = vector.broadcast %1143 : vector<16x1xf32> to vector<16x128xf32>
    %1145 = arith.select %141, %1142, %1144 : vector<16x128xi1>, vector<16x128xf32>
    %1146 = vector.extract_strided_slice %137 {offsets = [16, 38], sizes = [16, 1], strides = [1, 1]} : vector<64x64xf32> to vector<16x1xf32>
    %1147 = vector.extract_strided_slice %137 {offsets = [48, 38], sizes = [16, 1], strides = [1, 1]} : vector<64x64xf32> to vector<16x1xf32>
    %1148 = vector.shape_cast %1146 : vector<16x1xf32> to vector<16x1xf32>
    %1149 = vector.broadcast %1148 : vector<16x1xf32> to vector<16x128xf32>
    %1150 = vector.shape_cast %1147 : vector<16x1xf32> to vector<16x1xf32>
    %1151 = vector.broadcast %1150 : vector<16x1xf32> to vector<16x128xf32>
    %1152 = arith.select %141, %1149, %1151 : vector<16x128xi1>, vector<16x128xf32>
    %1153 = arith.mulf %1138, %1131 : vector<16x128xf32>
    %1154 = vector.extract_strided_slice %138 {offsets = [38, 0], sizes = [1, 128], strides = [1, 1]} : vector<64x128xf32> to vector<1x128xf32>
    %1155 = vector.broadcast %1154 : vector<1x128xf32> to vector<16x128xf32>
    %1156 = arith.mulf %1155, %1145 : vector<16x128xf32>
    %1157 = arith.addf %1153, %1156 : vector<16x128xf32>
    %1158 = arith.mulf %1157, %1152 : vector<16x128xf32>
    %cst_76 = arith.constant dense<0.000000e+00> : vector<128xf32>
    %1159 = vector.multi_reduction <add>, %1158, %cst_76 [0] : vector<16x128xf32> to vector<128xf32>
    %1160 = vector.shape_cast %1159 : vector<128xf32> to vector<1x128xf32>
    %1161 = vector.extract_strided_slice %135 {offsets = [39, 0], sizes = [1, 128], strides = [1, 1]} : vector<64x128xf32> to vector<1x128xf32>
    %1162 = vector.broadcast %1161 : vector<1x128xf32> to vector<16x128xf32>
    %1163 = arith.mulf %1162, %1 : vector<16x128xf32>
    %1164 = math.exp %1163 : vector<16x128xf32>
    %1165 = vector.extract_strided_slice %137 {offsets = [0, 39], sizes = [16, 1], strides = [1, 1]} : vector<64x64xf32> to vector<16x1xf32>
    %1166 = vector.extract_strided_slice %137 {offsets = [32, 39], sizes = [16, 1], strides = [1, 1]} : vector<64x64xf32> to vector<16x1xf32>
    %1167 = vector.shape_cast %1165 : vector<16x1xf32> to vector<16x1xf32>
    %1168 = vector.broadcast %1167 : vector<16x1xf32> to vector<16x128xf32>
    %1169 = vector.shape_cast %1166 : vector<16x1xf32> to vector<16x1xf32>
    %1170 = vector.broadcast %1169 : vector<16x1xf32> to vector<16x128xf32>
    %1171 = arith.select %141, %1168, %1170 : vector<16x128xi1>, vector<16x128xf32>
    %1172 = vector.extract_strided_slice %137 {offsets = [16, 39], sizes = [16, 1], strides = [1, 1]} : vector<64x64xf32> to vector<16x1xf32>
    %1173 = vector.extract_strided_slice %137 {offsets = [48, 39], sizes = [16, 1], strides = [1, 1]} : vector<64x64xf32> to vector<16x1xf32>
    %1174 = vector.shape_cast %1172 : vector<16x1xf32> to vector<16x1xf32>
    %1175 = vector.broadcast %1174 : vector<16x1xf32> to vector<16x128xf32>
    %1176 = vector.shape_cast %1173 : vector<16x1xf32> to vector<16x1xf32>
    %1177 = vector.broadcast %1176 : vector<16x1xf32> to vector<16x128xf32>
    %1178 = arith.select %141, %1175, %1177 : vector<16x128xi1>, vector<16x128xf32>
    %1179 = arith.mulf %1164, %1157 : vector<16x128xf32>
    %1180 = vector.extract_strided_slice %138 {offsets = [39, 0], sizes = [1, 128], strides = [1, 1]} : vector<64x128xf32> to vector<1x128xf32>
    %1181 = vector.broadcast %1180 : vector<1x128xf32> to vector<16x128xf32>
    %1182 = arith.mulf %1181, %1171 : vector<16x128xf32>
    %1183 = arith.addf %1179, %1182 : vector<16x128xf32>
    %1184 = arith.mulf %1183, %1178 : vector<16x128xf32>
    %cst_77 = arith.constant dense<0.000000e+00> : vector<128xf32>
    %1185 = vector.multi_reduction <add>, %1184, %cst_77 [0] : vector<16x128xf32> to vector<128xf32>
    %1186 = vector.shape_cast %1185 : vector<128xf32> to vector<1x128xf32>
    %1187 = tpu.concatenate %1004, %1030, %1056, %1082, %1108, %1134, %1160, %1186 in 0 : vector<1x128xf32>, vector<1x128xf32>, vector<1x128xf32>, vector<1x128xf32>, vector<1x128xf32>, vector<1x128xf32>, vector<1x128xf32>, vector<1x128xf32> -> vector<8x128xf32>
    %1188 = vector.extract_strided_slice %135 {offsets = [40, 0], sizes = [1, 128], strides = [1, 1]} : vector<64x128xf32> to vector<1x128xf32>
    %1189 = vector.broadcast %1188 : vector<1x128xf32> to vector<16x128xf32>
    %1190 = arith.mulf %1189, %1 : vector<16x128xf32>
    %1191 = math.exp %1190 : vector<16x128xf32>
    %1192 = vector.extract_strided_slice %137 {offsets = [0, 40], sizes = [16, 1], strides = [1, 1]} : vector<64x64xf32> to vector<16x1xf32>
    %1193 = vector.extract_strided_slice %137 {offsets = [32, 40], sizes = [16, 1], strides = [1, 1]} : vector<64x64xf32> to vector<16x1xf32>
    %1194 = vector.shape_cast %1192 : vector<16x1xf32> to vector<16x1xf32>
    %1195 = vector.broadcast %1194 : vector<16x1xf32> to vector<16x128xf32>
    %1196 = vector.shape_cast %1193 : vector<16x1xf32> to vector<16x1xf32>
    %1197 = vector.broadcast %1196 : vector<16x1xf32> to vector<16x128xf32>
    %1198 = arith.select %141, %1195, %1197 : vector<16x128xi1>, vector<16x128xf32>
    %1199 = vector.extract_strided_slice %137 {offsets = [16, 40], sizes = [16, 1], strides = [1, 1]} : vector<64x64xf32> to vector<16x1xf32>
    %1200 = vector.extract_strided_slice %137 {offsets = [48, 40], sizes = [16, 1], strides = [1, 1]} : vector<64x64xf32> to vector<16x1xf32>
    %1201 = vector.shape_cast %1199 : vector<16x1xf32> to vector<16x1xf32>
    %1202 = vector.broadcast %1201 : vector<16x1xf32> to vector<16x128xf32>
    %1203 = vector.shape_cast %1200 : vector<16x1xf32> to vector<16x1xf32>
    %1204 = vector.broadcast %1203 : vector<16x1xf32> to vector<16x128xf32>
    %1205 = arith.select %141, %1202, %1204 : vector<16x128xi1>, vector<16x128xf32>
    %1206 = arith.mulf %1191, %1183 : vector<16x128xf32>
    %1207 = vector.extract_strided_slice %138 {offsets = [40, 0], sizes = [1, 128], strides = [1, 1]} : vector<64x128xf32> to vector<1x128xf32>
    %1208 = vector.broadcast %1207 : vector<1x128xf32> to vector<16x128xf32>
    %1209 = arith.mulf %1208, %1198 : vector<16x128xf32>
    %1210 = arith.addf %1206, %1209 : vector<16x128xf32>
    %1211 = arith.mulf %1210, %1205 : vector<16x128xf32>
    %cst_78 = arith.constant dense<0.000000e+00> : vector<128xf32>
    %1212 = vector.multi_reduction <add>, %1211, %cst_78 [0] : vector<16x128xf32> to vector<128xf32>
    %1213 = vector.shape_cast %1212 : vector<128xf32> to vector<1x128xf32>
    %1214 = vector.extract_strided_slice %135 {offsets = [41, 0], sizes = [1, 128], strides = [1, 1]} : vector<64x128xf32> to vector<1x128xf32>
    %1215 = vector.broadcast %1214 : vector<1x128xf32> to vector<16x128xf32>
    %1216 = arith.mulf %1215, %1 : vector<16x128xf32>
    %1217 = math.exp %1216 : vector<16x128xf32>
    %1218 = vector.extract_strided_slice %137 {offsets = [0, 41], sizes = [16, 1], strides = [1, 1]} : vector<64x64xf32> to vector<16x1xf32>
    %1219 = vector.extract_strided_slice %137 {offsets = [32, 41], sizes = [16, 1], strides = [1, 1]} : vector<64x64xf32> to vector<16x1xf32>
    %1220 = vector.shape_cast %1218 : vector<16x1xf32> to vector<16x1xf32>
    %1221 = vector.broadcast %1220 : vector<16x1xf32> to vector<16x128xf32>
    %1222 = vector.shape_cast %1219 : vector<16x1xf32> to vector<16x1xf32>
    %1223 = vector.broadcast %1222 : vector<16x1xf32> to vector<16x128xf32>
    %1224 = arith.select %141, %1221, %1223 : vector<16x128xi1>, vector<16x128xf32>
    %1225 = vector.extract_strided_slice %137 {offsets = [16, 41], sizes = [16, 1], strides = [1, 1]} : vector<64x64xf32> to vector<16x1xf32>
    %1226 = vector.extract_strided_slice %137 {offsets = [48, 41], sizes = [16, 1], strides = [1, 1]} : vector<64x64xf32> to vector<16x1xf32>
    %1227 = vector.shape_cast %1225 : vector<16x1xf32> to vector<16x1xf32>
    %1228 = vector.broadcast %1227 : vector<16x1xf32> to vector<16x128xf32>
    %1229 = vector.shape_cast %1226 : vector<16x1xf32> to vector<16x1xf32>
    %1230 = vector.broadcast %1229 : vector<16x1xf32> to vector<16x128xf32>
    %1231 = arith.select %141, %1228, %1230 : vector<16x128xi1>, vector<16x128xf32>
    %1232 = arith.mulf %1217, %1210 : vector<16x128xf32>
    %1233 = vector.extract_strided_slice %138 {offsets = [41, 0], sizes = [1, 128], strides = [1, 1]} : vector<64x128xf32> to vector<1x128xf32>
    %1234 = vector.broadcast %1233 : vector<1x128xf32> to vector<16x128xf32>
    %1235 = arith.mulf %1234, %1224 : vector<16x128xf32>
    %1236 = arith.addf %1232, %1235 : vector<16x128xf32>
    %1237 = arith.mulf %1236, %1231 : vector<16x128xf32>
    %cst_79 = arith.constant dense<0.000000e+00> : vector<128xf32>
    %1238 = vector.multi_reduction <add>, %1237, %cst_79 [0] : vector<16x128xf32> to vector<128xf32>
    %1239 = vector.shape_cast %1238 : vector<128xf32> to vector<1x128xf32>
    %1240 = vector.extract_strided_slice %135 {offsets = [42, 0], sizes = [1, 128], strides = [1, 1]} : vector<64x128xf32> to vector<1x128xf32>
    %1241 = vector.broadcast %1240 : vector<1x128xf32> to vector<16x128xf32>
    %1242 = arith.mulf %1241, %1 : vector<16x128xf32>
    %1243 = math.exp %1242 : vector<16x128xf32>
    %1244 = vector.extract_strided_slice %137 {offsets = [0, 42], sizes = [16, 1], strides = [1, 1]} : vector<64x64xf32> to vector<16x1xf32>
    %1245 = vector.extract_strided_slice %137 {offsets = [32, 42], sizes = [16, 1], strides = [1, 1]} : vector<64x64xf32> to vector<16x1xf32>
    %1246 = vector.shape_cast %1244 : vector<16x1xf32> to vector<16x1xf32>
    %1247 = vector.broadcast %1246 : vector<16x1xf32> to vector<16x128xf32>
    %1248 = vector.shape_cast %1245 : vector<16x1xf32> to vector<16x1xf32>
    %1249 = vector.broadcast %1248 : vector<16x1xf32> to vector<16x128xf32>
    %1250 = arith.select %141, %1247, %1249 : vector<16x128xi1>, vector<16x128xf32>
    %1251 = vector.extract_strided_slice %137 {offsets = [16, 42], sizes = [16, 1], strides = [1, 1]} : vector<64x64xf32> to vector<16x1xf32>
    %1252 = vector.extract_strided_slice %137 {offsets = [48, 42], sizes = [16, 1], strides = [1, 1]} : vector<64x64xf32> to vector<16x1xf32>
    %1253 = vector.shape_cast %1251 : vector<16x1xf32> to vector<16x1xf32>
    %1254 = vector.broadcast %1253 : vector<16x1xf32> to vector<16x128xf32>
    %1255 = vector.shape_cast %1252 : vector<16x1xf32> to vector<16x1xf32>
    %1256 = vector.broadcast %1255 : vector<16x1xf32> to vector<16x128xf32>
    %1257 = arith.select %141, %1254, %1256 : vector<16x128xi1>, vector<16x128xf32>
    %1258 = arith.mulf %1243, %1236 : vector<16x128xf32>
    %1259 = vector.extract_strided_slice %138 {offsets = [42, 0], sizes = [1, 128], strides = [1, 1]} : vector<64x128xf32> to vector<1x128xf32>
    %1260 = vector.broadcast %1259 : vector<1x128xf32> to vector<16x128xf32>
    %1261 = arith.mulf %1260, %1250 : vector<16x128xf32>
    %1262 = arith.addf %1258, %1261 : vector<16x128xf32>
    %1263 = arith.mulf %1262, %1257 : vector<16x128xf32>
    %cst_80 = arith.constant dense<0.000000e+00> : vector<128xf32>
    %1264 = vector.multi_reduction <add>, %1263, %cst_80 [0] : vector<16x128xf32> to vector<128xf32>
    %1265 = vector.shape_cast %1264 : vector<128xf32> to vector<1x128xf32>
    %1266 = vector.extract_strided_slice %135 {offsets = [43, 0], sizes = [1, 128], strides = [1, 1]} : vector<64x128xf32> to vector<1x128xf32>
    %1267 = vector.broadcast %1266 : vector<1x128xf32> to vector<16x128xf32>
    %1268 = arith.mulf %1267, %1 : vector<16x128xf32>
    %1269 = math.exp %1268 : vector<16x128xf32>
    %1270 = vector.extract_strided_slice %137 {offsets = [0, 43], sizes = [16, 1], strides = [1, 1]} : vector<64x64xf32> to vector<16x1xf32>
    %1271 = vector.extract_strided_slice %137 {offsets = [32, 43], sizes = [16, 1], strides = [1, 1]} : vector<64x64xf32> to vector<16x1xf32>
    %1272 = vector.shape_cast %1270 : vector<16x1xf32> to vector<16x1xf32>
    %1273 = vector.broadcast %1272 : vector<16x1xf32> to vector<16x128xf32>
    %1274 = vector.shape_cast %1271 : vector<16x1xf32> to vector<16x1xf32>
    %1275 = vector.broadcast %1274 : vector<16x1xf32> to vector<16x128xf32>
    %1276 = arith.select %141, %1273, %1275 : vector<16x128xi1>, vector<16x128xf32>
    %1277 = vector.extract_strided_slice %137 {offsets = [16, 43], sizes = [16, 1], strides = [1, 1]} : vector<64x64xf32> to vector<16x1xf32>
    %1278 = vector.extract_strided_slice %137 {offsets = [48, 43], sizes = [16, 1], strides = [1, 1]} : vector<64x64xf32> to vector<16x1xf32>
    %1279 = vector.shape_cast %1277 : vector<16x1xf32> to vector<16x1xf32>
    %1280 = vector.broadcast %1279 : vector<16x1xf32> to vector<16x128xf32>
    %1281 = vector.shape_cast %1278 : vector<16x1xf32> to vector<16x1xf32>
    %1282 = vector.broadcast %1281 : vector<16x1xf32> to vector<16x128xf32>
    %1283 = arith.select %141, %1280, %1282 : vector<16x128xi1>, vector<16x128xf32>
    %1284 = arith.mulf %1269, %1262 : vector<16x128xf32>
    %1285 = vector.extract_strided_slice %138 {offsets = [43, 0], sizes = [1, 128], strides = [1, 1]} : vector<64x128xf32> to vector<1x128xf32>
    %1286 = vector.broadcast %1285 : vector<1x128xf32> to vector<16x128xf32>
    %1287 = arith.mulf %1286, %1276 : vector<16x128xf32>
    %1288 = arith.addf %1284, %1287 : vector<16x128xf32>
    %1289 = arith.mulf %1288, %1283 : vector<16x128xf32>
    %cst_81 = arith.constant dense<0.000000e+00> : vector<128xf32>
    %1290 = vector.multi_reduction <add>, %1289, %cst_81 [0] : vector<16x128xf32> to vector<128xf32>
    %1291 = vector.shape_cast %1290 : vector<128xf32> to vector<1x128xf32>
    %1292 = vector.extract_strided_slice %135 {offsets = [44, 0], sizes = [1, 128], strides = [1, 1]} : vector<64x128xf32> to vector<1x128xf32>
    %1293 = vector.broadcast %1292 : vector<1x128xf32> to vector<16x128xf32>
    %1294 = arith.mulf %1293, %1 : vector<16x128xf32>
    %1295 = math.exp %1294 : vector<16x128xf32>
    %1296 = vector.extract_strided_slice %137 {offsets = [0, 44], sizes = [16, 1], strides = [1, 1]} : vector<64x64xf32> to vector<16x1xf32>
    %1297 = vector.extract_strided_slice %137 {offsets = [32, 44], sizes = [16, 1], strides = [1, 1]} : vector<64x64xf32> to vector<16x1xf32>
    %1298 = vector.shape_cast %1296 : vector<16x1xf32> to vector<16x1xf32>
    %1299 = vector.broadcast %1298 : vector<16x1xf32> to vector<16x128xf32>
    %1300 = vector.shape_cast %1297 : vector<16x1xf32> to vector<16x1xf32>
    %1301 = vector.broadcast %1300 : vector<16x1xf32> to vector<16x128xf32>
    %1302 = arith.select %141, %1299, %1301 : vector<16x128xi1>, vector<16x128xf32>
    %1303 = vector.extract_strided_slice %137 {offsets = [16, 44], sizes = [16, 1], strides = [1, 1]} : vector<64x64xf32> to vector<16x1xf32>
    %1304 = vector.extract_strided_slice %137 {offsets = [48, 44], sizes = [16, 1], strides = [1, 1]} : vector<64x64xf32> to vector<16x1xf32>
    %1305 = vector.shape_cast %1303 : vector<16x1xf32> to vector<16x1xf32>
    %1306 = vector.broadcast %1305 : vector<16x1xf32> to vector<16x128xf32>
    %1307 = vector.shape_cast %1304 : vector<16x1xf32> to vector<16x1xf32>
    %1308 = vector.broadcast %1307 : vector<16x1xf32> to vector<16x128xf32>
    %1309 = arith.select %141, %1306, %1308 : vector<16x128xi1>, vector<16x128xf32>
    %1310 = arith.mulf %1295, %1288 : vector<16x128xf32>
    %1311 = vector.extract_strided_slice %138 {offsets = [44, 0], sizes = [1, 128], strides = [1, 1]} : vector<64x128xf32> to vector<1x128xf32>
    %1312 = vector.broadcast %1311 : vector<1x128xf32> to vector<16x128xf32>
    %1313 = arith.mulf %1312, %1302 : vector<16x128xf32>
    %1314 = arith.addf %1310, %1313 : vector<16x128xf32>
    %1315 = arith.mulf %1314, %1309 : vector<16x128xf32>
    %cst_82 = arith.constant dense<0.000000e+00> : vector<128xf32>
    %1316 = vector.multi_reduction <add>, %1315, %cst_82 [0] : vector<16x128xf32> to vector<128xf32>
    %1317 = vector.shape_cast %1316 : vector<128xf32> to vector<1x128xf32>
    %1318 = vector.extract_strided_slice %135 {offsets = [45, 0], sizes = [1, 128], strides = [1, 1]} : vector<64x128xf32> to vector<1x128xf32>
    %1319 = vector.broadcast %1318 : vector<1x128xf32> to vector<16x128xf32>
    %1320 = arith.mulf %1319, %1 : vector<16x128xf32>
    %1321 = math.exp %1320 : vector<16x128xf32>
    %1322 = vector.extract_strided_slice %137 {offsets = [0, 45], sizes = [16, 1], strides = [1, 1]} : vector<64x64xf32> to vector<16x1xf32>
    %1323 = vector.extract_strided_slice %137 {offsets = [32, 45], sizes = [16, 1], strides = [1, 1]} : vector<64x64xf32> to vector<16x1xf32>
    %1324 = vector.shape_cast %1322 : vector<16x1xf32> to vector<16x1xf32>
    %1325 = vector.broadcast %1324 : vector<16x1xf32> to vector<16x128xf32>
    %1326 = vector.shape_cast %1323 : vector<16x1xf32> to vector<16x1xf32>
    %1327 = vector.broadcast %1326 : vector<16x1xf32> to vector<16x128xf32>
    %1328 = arith.select %141, %1325, %1327 : vector<16x128xi1>, vector<16x128xf32>
    %1329 = vector.extract_strided_slice %137 {offsets = [16, 45], sizes = [16, 1], strides = [1, 1]} : vector<64x64xf32> to vector<16x1xf32>
    %1330 = vector.extract_strided_slice %137 {offsets = [48, 45], sizes = [16, 1], strides = [1, 1]} : vector<64x64xf32> to vector<16x1xf32>
    %1331 = vector.shape_cast %1329 : vector<16x1xf32> to vector<16x1xf32>
    %1332 = vector.broadcast %1331 : vector<16x1xf32> to vector<16x128xf32>
    %1333 = vector.shape_cast %1330 : vector<16x1xf32> to vector<16x1xf32>
    %1334 = vector.broadcast %1333 : vector<16x1xf32> to vector<16x128xf32>
    %1335 = arith.select %141, %1332, %1334 : vector<16x128xi1>, vector<16x128xf32>
    %1336 = arith.mulf %1321, %1314 : vector<16x128xf32>
    %1337 = vector.extract_strided_slice %138 {offsets = [45, 0], sizes = [1, 128], strides = [1, 1]} : vector<64x128xf32> to vector<1x128xf32>
    %1338 = vector.broadcast %1337 : vector<1x128xf32> to vector<16x128xf32>
    %1339 = arith.mulf %1338, %1328 : vector<16x128xf32>
    %1340 = arith.addf %1336, %1339 : vector<16x128xf32>
    %1341 = arith.mulf %1340, %1335 : vector<16x128xf32>
    %cst_83 = arith.constant dense<0.000000e+00> : vector<128xf32>
    %1342 = vector.multi_reduction <add>, %1341, %cst_83 [0] : vector<16x128xf32> to vector<128xf32>
    %1343 = vector.shape_cast %1342 : vector<128xf32> to vector<1x128xf32>
    %1344 = vector.extract_strided_slice %135 {offsets = [46, 0], sizes = [1, 128], strides = [1, 1]} : vector<64x128xf32> to vector<1x128xf32>
    %1345 = vector.broadcast %1344 : vector<1x128xf32> to vector<16x128xf32>
    %1346 = arith.mulf %1345, %1 : vector<16x128xf32>
    %1347 = math.exp %1346 : vector<16x128xf32>
    %1348 = vector.extract_strided_slice %137 {offsets = [0, 46], sizes = [16, 1], strides = [1, 1]} : vector<64x64xf32> to vector<16x1xf32>
    %1349 = vector.extract_strided_slice %137 {offsets = [32, 46], sizes = [16, 1], strides = [1, 1]} : vector<64x64xf32> to vector<16x1xf32>
    %1350 = vector.shape_cast %1348 : vector<16x1xf32> to vector<16x1xf32>
    %1351 = vector.broadcast %1350 : vector<16x1xf32> to vector<16x128xf32>
    %1352 = vector.shape_cast %1349 : vector<16x1xf32> to vector<16x1xf32>
    %1353 = vector.broadcast %1352 : vector<16x1xf32> to vector<16x128xf32>
    %1354 = arith.select %141, %1351, %1353 : vector<16x128xi1>, vector<16x128xf32>
    %1355 = vector.extract_strided_slice %137 {offsets = [16, 46], sizes = [16, 1], strides = [1, 1]} : vector<64x64xf32> to vector<16x1xf32>
    %1356 = vector.extract_strided_slice %137 {offsets = [48, 46], sizes = [16, 1], strides = [1, 1]} : vector<64x64xf32> to vector<16x1xf32>
    %1357 = vector.shape_cast %1355 : vector<16x1xf32> to vector<16x1xf32>
    %1358 = vector.broadcast %1357 : vector<16x1xf32> to vector<16x128xf32>
    %1359 = vector.shape_cast %1356 : vector<16x1xf32> to vector<16x1xf32>
    %1360 = vector.broadcast %1359 : vector<16x1xf32> to vector<16x128xf32>
    %1361 = arith.select %141, %1358, %1360 : vector<16x128xi1>, vector<16x128xf32>
    %1362 = arith.mulf %1347, %1340 : vector<16x128xf32>
    %1363 = vector.extract_strided_slice %138 {offsets = [46, 0], sizes = [1, 128], strides = [1, 1]} : vector<64x128xf32> to vector<1x128xf32>
    %1364 = vector.broadcast %1363 : vector<1x128xf32> to vector<16x128xf32>
    %1365 = arith.mulf %1364, %1354 : vector<16x128xf32>
    %1366 = arith.addf %1362, %1365 : vector<16x128xf32>
    %1367 = arith.mulf %1366, %1361 : vector<16x128xf32>
    %cst_84 = arith.constant dense<0.000000e+00> : vector<128xf32>
    %1368 = vector.multi_reduction <add>, %1367, %cst_84 [0] : vector<16x128xf32> to vector<128xf32>
    %1369 = vector.shape_cast %1368 : vector<128xf32> to vector<1x128xf32>
    %1370 = vector.extract_strided_slice %135 {offsets = [47, 0], sizes = [1, 128], strides = [1, 1]} : vector<64x128xf32> to vector<1x128xf32>
    %1371 = vector.broadcast %1370 : vector<1x128xf32> to vector<16x128xf32>
    %1372 = arith.mulf %1371, %1 : vector<16x128xf32>
    %1373 = math.exp %1372 : vector<16x128xf32>
    %1374 = vector.extract_strided_slice %137 {offsets = [0, 47], sizes = [16, 1], strides = [1, 1]} : vector<64x64xf32> to vector<16x1xf32>
    %1375 = vector.extract_strided_slice %137 {offsets = [32, 47], sizes = [16, 1], strides = [1, 1]} : vector<64x64xf32> to vector<16x1xf32>
    %1376 = vector.shape_cast %1374 : vector<16x1xf32> to vector<16x1xf32>
    %1377 = vector.broadcast %1376 : vector<16x1xf32> to vector<16x128xf32>
    %1378 = vector.shape_cast %1375 : vector<16x1xf32> to vector<16x1xf32>
    %1379 = vector.broadcast %1378 : vector<16x1xf32> to vector<16x128xf32>
    %1380 = arith.select %141, %1377, %1379 : vector<16x128xi1>, vector<16x128xf32>
    %1381 = vector.extract_strided_slice %137 {offsets = [16, 47], sizes = [16, 1], strides = [1, 1]} : vector<64x64xf32> to vector<16x1xf32>
    %1382 = vector.extract_strided_slice %137 {offsets = [48, 47], sizes = [16, 1], strides = [1, 1]} : vector<64x64xf32> to vector<16x1xf32>
    %1383 = vector.shape_cast %1381 : vector<16x1xf32> to vector<16x1xf32>
    %1384 = vector.broadcast %1383 : vector<16x1xf32> to vector<16x128xf32>
    %1385 = vector.shape_cast %1382 : vector<16x1xf32> to vector<16x1xf32>
    %1386 = vector.broadcast %1385 : vector<16x1xf32> to vector<16x128xf32>
    %1387 = arith.select %141, %1384, %1386 : vector<16x128xi1>, vector<16x128xf32>
    %1388 = arith.mulf %1373, %1366 : vector<16x128xf32>
    %1389 = vector.extract_strided_slice %138 {offsets = [47, 0], sizes = [1, 128], strides = [1, 1]} : vector<64x128xf32> to vector<1x128xf32>
    %1390 = vector.broadcast %1389 : vector<1x128xf32> to vector<16x128xf32>
    %1391 = arith.mulf %1390, %1380 : vector<16x128xf32>
    %1392 = arith.addf %1388, %1391 : vector<16x128xf32>
    %1393 = arith.mulf %1392, %1387 : vector<16x128xf32>
    %cst_85 = arith.constant dense<0.000000e+00> : vector<128xf32>
    %1394 = vector.multi_reduction <add>, %1393, %cst_85 [0] : vector<16x128xf32> to vector<128xf32>
    %1395 = vector.shape_cast %1394 : vector<128xf32> to vector<1x128xf32>
    %1396 = tpu.concatenate %1213, %1239, %1265, %1291, %1317, %1343, %1369, %1395 in 0 : vector<1x128xf32>, vector<1x128xf32>, vector<1x128xf32>, vector<1x128xf32>, vector<1x128xf32>, vector<1x128xf32>, vector<1x128xf32>, vector<1x128xf32> -> vector<8x128xf32>
    %1397 = vector.extract_strided_slice %135 {offsets = [48, 0], sizes = [1, 128], strides = [1, 1]} : vector<64x128xf32> to vector<1x128xf32>
    %1398 = vector.broadcast %1397 : vector<1x128xf32> to vector<16x128xf32>
    %1399 = arith.mulf %1398, %1 : vector<16x128xf32>
    %1400 = math.exp %1399 : vector<16x128xf32>
    %1401 = vector.extract_strided_slice %137 {offsets = [0, 48], sizes = [16, 1], strides = [1, 1]} : vector<64x64xf32> to vector<16x1xf32>
    %1402 = vector.extract_strided_slice %137 {offsets = [32, 48], sizes = [16, 1], strides = [1, 1]} : vector<64x64xf32> to vector<16x1xf32>
    %1403 = vector.shape_cast %1401 : vector<16x1xf32> to vector<16x1xf32>
    %1404 = vector.broadcast %1403 : vector<16x1xf32> to vector<16x128xf32>
    %1405 = vector.shape_cast %1402 : vector<16x1xf32> to vector<16x1xf32>
    %1406 = vector.broadcast %1405 : vector<16x1xf32> to vector<16x128xf32>
    %1407 = arith.select %141, %1404, %1406 : vector<16x128xi1>, vector<16x128xf32>
    %1408 = vector.extract_strided_slice %137 {offsets = [16, 48], sizes = [16, 1], strides = [1, 1]} : vector<64x64xf32> to vector<16x1xf32>
    %1409 = vector.extract_strided_slice %137 {offsets = [48, 48], sizes = [16, 1], strides = [1, 1]} : vector<64x64xf32> to vector<16x1xf32>
    %1410 = vector.shape_cast %1408 : vector<16x1xf32> to vector<16x1xf32>
    %1411 = vector.broadcast %1410 : vector<16x1xf32> to vector<16x128xf32>
    %1412 = vector.shape_cast %1409 : vector<16x1xf32> to vector<16x1xf32>
    %1413 = vector.broadcast %1412 : vector<16x1xf32> to vector<16x128xf32>
    %1414 = arith.select %141, %1411, %1413 : vector<16x128xi1>, vector<16x128xf32>
    %1415 = arith.mulf %1400, %1392 : vector<16x128xf32>
    %1416 = vector.extract_strided_slice %138 {offsets = [48, 0], sizes = [1, 128], strides = [1, 1]} : vector<64x128xf32> to vector<1x128xf32>
    %1417 = vector.broadcast %1416 : vector<1x128xf32> to vector<16x128xf32>
    %1418 = arith.mulf %1417, %1407 : vector<16x128xf32>
    %1419 = arith.addf %1415, %1418 : vector<16x128xf32>
    %1420 = arith.mulf %1419, %1414 : vector<16x128xf32>
    %cst_86 = arith.constant dense<0.000000e+00> : vector<128xf32>
    %1421 = vector.multi_reduction <add>, %1420, %cst_86 [0] : vector<16x128xf32> to vector<128xf32>
    %1422 = vector.shape_cast %1421 : vector<128xf32> to vector<1x128xf32>
    %1423 = vector.extract_strided_slice %135 {offsets = [49, 0], sizes = [1, 128], strides = [1, 1]} : vector<64x128xf32> to vector<1x128xf32>
    %1424 = vector.broadcast %1423 : vector<1x128xf32> to vector<16x128xf32>
    %1425 = arith.mulf %1424, %1 : vector<16x128xf32>
    %1426 = math.exp %1425 : vector<16x128xf32>
    %1427 = vector.extract_strided_slice %137 {offsets = [0, 49], sizes = [16, 1], strides = [1, 1]} : vector<64x64xf32> to vector<16x1xf32>
    %1428 = vector.extract_strided_slice %137 {offsets = [32, 49], sizes = [16, 1], strides = [1, 1]} : vector<64x64xf32> to vector<16x1xf32>
    %1429 = vector.shape_cast %1427 : vector<16x1xf32> to vector<16x1xf32>
    %1430 = vector.broadcast %1429 : vector<16x1xf32> to vector<16x128xf32>
    %1431 = vector.shape_cast %1428 : vector<16x1xf32> to vector<16x1xf32>
    %1432 = vector.broadcast %1431 : vector<16x1xf32> to vector<16x128xf32>
    %1433 = arith.select %141, %1430, %1432 : vector<16x128xi1>, vector<16x128xf32>
    %1434 = vector.extract_strided_slice %137 {offsets = [16, 49], sizes = [16, 1], strides = [1, 1]} : vector<64x64xf32> to vector<16x1xf32>
    %1435 = vector.extract_strided_slice %137 {offsets = [48, 49], sizes = [16, 1], strides = [1, 1]} : vector<64x64xf32> to vector<16x1xf32>
    %1436 = vector.shape_cast %1434 : vector<16x1xf32> to vector<16x1xf32>
    %1437 = vector.broadcast %1436 : vector<16x1xf32> to vector<16x128xf32>
    %1438 = vector.shape_cast %1435 : vector<16x1xf32> to vector<16x1xf32>
    %1439 = vector.broadcast %1438 : vector<16x1xf32> to vector<16x128xf32>
    %1440 = arith.select %141, %1437, %1439 : vector<16x128xi1>, vector<16x128xf32>
    %1441 = arith.mulf %1426, %1419 : vector<16x128xf32>
    %1442 = vector.extract_strided_slice %138 {offsets = [49, 0], sizes = [1, 128], strides = [1, 1]} : vector<64x128xf32> to vector<1x128xf32>
    %1443 = vector.broadcast %1442 : vector<1x128xf32> to vector<16x128xf32>
    %1444 = arith.mulf %1443, %1433 : vector<16x128xf32>
    %1445 = arith.addf %1441, %1444 : vector<16x128xf32>
    %1446 = arith.mulf %1445, %1440 : vector<16x128xf32>
    %cst_87 = arith.constant dense<0.000000e+00> : vector<128xf32>
    %1447 = vector.multi_reduction <add>, %1446, %cst_87 [0] : vector<16x128xf32> to vector<128xf32>
    %1448 = vector.shape_cast %1447 : vector<128xf32> to vector<1x128xf32>
    %1449 = vector.extract_strided_slice %135 {offsets = [50, 0], sizes = [1, 128], strides = [1, 1]} : vector<64x128xf32> to vector<1x128xf32>
    %1450 = vector.broadcast %1449 : vector<1x128xf32> to vector<16x128xf32>
    %1451 = arith.mulf %1450, %1 : vector<16x128xf32>
    %1452 = math.exp %1451 : vector<16x128xf32>
    %1453 = vector.extract_strided_slice %137 {offsets = [0, 50], sizes = [16, 1], strides = [1, 1]} : vector<64x64xf32> to vector<16x1xf32>
    %1454 = vector.extract_strided_slice %137 {offsets = [32, 50], sizes = [16, 1], strides = [1, 1]} : vector<64x64xf32> to vector<16x1xf32>
    %1455 = vector.shape_cast %1453 : vector<16x1xf32> to vector<16x1xf32>
    %1456 = vector.broadcast %1455 : vector<16x1xf32> to vector<16x128xf32>
    %1457 = vector.shape_cast %1454 : vector<16x1xf32> to vector<16x1xf32>
    %1458 = vector.broadcast %1457 : vector<16x1xf32> to vector<16x128xf32>
    %1459 = arith.select %141, %1456, %1458 : vector<16x128xi1>, vector<16x128xf32>
    %1460 = vector.extract_strided_slice %137 {offsets = [16, 50], sizes = [16, 1], strides = [1, 1]} : vector<64x64xf32> to vector<16x1xf32>
    %1461 = vector.extract_strided_slice %137 {offsets = [48, 50], sizes = [16, 1], strides = [1, 1]} : vector<64x64xf32> to vector<16x1xf32>
    %1462 = vector.shape_cast %1460 : vector<16x1xf32> to vector<16x1xf32>
    %1463 = vector.broadcast %1462 : vector<16x1xf32> to vector<16x128xf32>
    %1464 = vector.shape_cast %1461 : vector<16x1xf32> to vector<16x1xf32>
    %1465 = vector.broadcast %1464 : vector<16x1xf32> to vector<16x128xf32>
    %1466 = arith.select %141, %1463, %1465 : vector<16x128xi1>, vector<16x128xf32>
    %1467 = arith.mulf %1452, %1445 : vector<16x128xf32>
    %1468 = vector.extract_strided_slice %138 {offsets = [50, 0], sizes = [1, 128], strides = [1, 1]} : vector<64x128xf32> to vector<1x128xf32>
    %1469 = vector.broadcast %1468 : vector<1x128xf32> to vector<16x128xf32>
    %1470 = arith.mulf %1469, %1459 : vector<16x128xf32>
    %1471 = arith.addf %1467, %1470 : vector<16x128xf32>
    %1472 = arith.mulf %1471, %1466 : vector<16x128xf32>
    %cst_88 = arith.constant dense<0.000000e+00> : vector<128xf32>
    %1473 = vector.multi_reduction <add>, %1472, %cst_88 [0] : vector<16x128xf32> to vector<128xf32>
    %1474 = vector.shape_cast %1473 : vector<128xf32> to vector<1x128xf32>
    %1475 = vector.extract_strided_slice %135 {offsets = [51, 0], sizes = [1, 128], strides = [1, 1]} : vector<64x128xf32> to vector<1x128xf32>
    %1476 = vector.broadcast %1475 : vector<1x128xf32> to vector<16x128xf32>
    %1477 = arith.mulf %1476, %1 : vector<16x128xf32>
    %1478 = math.exp %1477 : vector<16x128xf32>
    %1479 = vector.extract_strided_slice %137 {offsets = [0, 51], sizes = [16, 1], strides = [1, 1]} : vector<64x64xf32> to vector<16x1xf32>
    %1480 = vector.extract_strided_slice %137 {offsets = [32, 51], sizes = [16, 1], strides = [1, 1]} : vector<64x64xf32> to vector<16x1xf32>
    %1481 = vector.shape_cast %1479 : vector<16x1xf32> to vector<16x1xf32>
    %1482 = vector.broadcast %1481 : vector<16x1xf32> to vector<16x128xf32>
    %1483 = vector.shape_cast %1480 : vector<16x1xf32> to vector<16x1xf32>
    %1484 = vector.broadcast %1483 : vector<16x1xf32> to vector<16x128xf32>
    %1485 = arith.select %141, %1482, %1484 : vector<16x128xi1>, vector<16x128xf32>
    %1486 = vector.extract_strided_slice %137 {offsets = [16, 51], sizes = [16, 1], strides = [1, 1]} : vector<64x64xf32> to vector<16x1xf32>
    %1487 = vector.extract_strided_slice %137 {offsets = [48, 51], sizes = [16, 1], strides = [1, 1]} : vector<64x64xf32> to vector<16x1xf32>
    %1488 = vector.shape_cast %1486 : vector<16x1xf32> to vector<16x1xf32>
    %1489 = vector.broadcast %1488 : vector<16x1xf32> to vector<16x128xf32>
    %1490 = vector.shape_cast %1487 : vector<16x1xf32> to vector<16x1xf32>
    %1491 = vector.broadcast %1490 : vector<16x1xf32> to vector<16x128xf32>
    %1492 = arith.select %141, %1489, %1491 : vector<16x128xi1>, vector<16x128xf32>
    %1493 = arith.mulf %1478, %1471 : vector<16x128xf32>
    %1494 = vector.extract_strided_slice %138 {offsets = [51, 0], sizes = [1, 128], strides = [1, 1]} : vector<64x128xf32> to vector<1x128xf32>
    %1495 = vector.broadcast %1494 : vector<1x128xf32> to vector<16x128xf32>
    %1496 = arith.mulf %1495, %1485 : vector<16x128xf32>
    %1497 = arith.addf %1493, %1496 : vector<16x128xf32>
    %1498 = arith.mulf %1497, %1492 : vector<16x128xf32>
    %cst_89 = arith.constant dense<0.000000e+00> : vector<128xf32>
    %1499 = vector.multi_reduction <add>, %1498, %cst_89 [0] : vector<16x128xf32> to vector<128xf32>
    %1500 = vector.shape_cast %1499 : vector<128xf32> to vector<1x128xf32>
    %1501 = vector.extract_strided_slice %135 {offsets = [52, 0], sizes = [1, 128], strides = [1, 1]} : vector<64x128xf32> to vector<1x128xf32>
    %1502 = vector.broadcast %1501 : vector<1x128xf32> to vector<16x128xf32>
    %1503 = arith.mulf %1502, %1 : vector<16x128xf32>
    %1504 = math.exp %1503 : vector<16x128xf32>
    %1505 = vector.extract_strided_slice %137 {offsets = [0, 52], sizes = [16, 1], strides = [1, 1]} : vector<64x64xf32> to vector<16x1xf32>
    %1506 = vector.extract_strided_slice %137 {offsets = [32, 52], sizes = [16, 1], strides = [1, 1]} : vector<64x64xf32> to vector<16x1xf32>
    %1507 = vector.shape_cast %1505 : vector<16x1xf32> to vector<16x1xf32>
    %1508 = vector.broadcast %1507 : vector<16x1xf32> to vector<16x128xf32>
    %1509 = vector.shape_cast %1506 : vector<16x1xf32> to vector<16x1xf32>
    %1510 = vector.broadcast %1509 : vector<16x1xf32> to vector<16x128xf32>
    %1511 = arith.select %141, %1508, %1510 : vector<16x128xi1>, vector<16x128xf32>
    %1512 = vector.extract_strided_slice %137 {offsets = [16, 52], sizes = [16, 1], strides = [1, 1]} : vector<64x64xf32> to vector<16x1xf32>
    %1513 = vector.extract_strided_slice %137 {offsets = [48, 52], sizes = [16, 1], strides = [1, 1]} : vector<64x64xf32> to vector<16x1xf32>
    %1514 = vector.shape_cast %1512 : vector<16x1xf32> to vector<16x1xf32>
    %1515 = vector.broadcast %1514 : vector<16x1xf32> to vector<16x128xf32>
    %1516 = vector.shape_cast %1513 : vector<16x1xf32> to vector<16x1xf32>
    %1517 = vector.broadcast %1516 : vector<16x1xf32> to vector<16x128xf32>
    %1518 = arith.select %141, %1515, %1517 : vector<16x128xi1>, vector<16x128xf32>
    %1519 = arith.mulf %1504, %1497 : vector<16x128xf32>
    %1520 = vector.extract_strided_slice %138 {offsets = [52, 0], sizes = [1, 128], strides = [1, 1]} : vector<64x128xf32> to vector<1x128xf32>
    %1521 = vector.broadcast %1520 : vector<1x128xf32> to vector<16x128xf32>
    %1522 = arith.mulf %1521, %1511 : vector<16x128xf32>
    %1523 = arith.addf %1519, %1522 : vector<16x128xf32>
    %1524 = arith.mulf %1523, %1518 : vector<16x128xf32>
    %cst_90 = arith.constant dense<0.000000e+00> : vector<128xf32>
    %1525 = vector.multi_reduction <add>, %1524, %cst_90 [0] : vector<16x128xf32> to vector<128xf32>
    %1526 = vector.shape_cast %1525 : vector<128xf32> to vector<1x128xf32>
    %1527 = vector.extract_strided_slice %135 {offsets = [53, 0], sizes = [1, 128], strides = [1, 1]} : vector<64x128xf32> to vector<1x128xf32>
    %1528 = vector.broadcast %1527 : vector<1x128xf32> to vector<16x128xf32>
    %1529 = arith.mulf %1528, %1 : vector<16x128xf32>
    %1530 = math.exp %1529 : vector<16x128xf32>
    %1531 = vector.extract_strided_slice %137 {offsets = [0, 53], sizes = [16, 1], strides = [1, 1]} : vector<64x64xf32> to vector<16x1xf32>
    %1532 = vector.extract_strided_slice %137 {offsets = [32, 53], sizes = [16, 1], strides = [1, 1]} : vector<64x64xf32> to vector<16x1xf32>
    %1533 = vector.shape_cast %1531 : vector<16x1xf32> to vector<16x1xf32>
    %1534 = vector.broadcast %1533 : vector<16x1xf32> to vector<16x128xf32>
    %1535 = vector.shape_cast %1532 : vector<16x1xf32> to vector<16x1xf32>
    %1536 = vector.broadcast %1535 : vector<16x1xf32> to vector<16x128xf32>
    %1537 = arith.select %141, %1534, %1536 : vector<16x128xi1>, vector<16x128xf32>
    %1538 = vector.extract_strided_slice %137 {offsets = [16, 53], sizes = [16, 1], strides = [1, 1]} : vector<64x64xf32> to vector<16x1xf32>
    %1539 = vector.extract_strided_slice %137 {offsets = [48, 53], sizes = [16, 1], strides = [1, 1]} : vector<64x64xf32> to vector<16x1xf32>
    %1540 = vector.shape_cast %1538 : vector<16x1xf32> to vector<16x1xf32>
    %1541 = vector.broadcast %1540 : vector<16x1xf32> to vector<16x128xf32>
    %1542 = vector.shape_cast %1539 : vector<16x1xf32> to vector<16x1xf32>
    %1543 = vector.broadcast %1542 : vector<16x1xf32> to vector<16x128xf32>
    %1544 = arith.select %141, %1541, %1543 : vector<16x128xi1>, vector<16x128xf32>
    %1545 = arith.mulf %1530, %1523 : vector<16x128xf32>
    %1546 = vector.extract_strided_slice %138 {offsets = [53, 0], sizes = [1, 128], strides = [1, 1]} : vector<64x128xf32> to vector<1x128xf32>
    %1547 = vector.broadcast %1546 : vector<1x128xf32> to vector<16x128xf32>
    %1548 = arith.mulf %1547, %1537 : vector<16x128xf32>
    %1549 = arith.addf %1545, %1548 : vector<16x128xf32>
    %1550 = arith.mulf %1549, %1544 : vector<16x128xf32>
    %cst_91 = arith.constant dense<0.000000e+00> : vector<128xf32>
    %1551 = vector.multi_reduction <add>, %1550, %cst_91 [0] : vector<16x128xf32> to vector<128xf32>
    %1552 = vector.shape_cast %1551 : vector<128xf32> to vector<1x128xf32>
    %1553 = vector.extract_strided_slice %135 {offsets = [54, 0], sizes = [1, 128], strides = [1, 1]} : vector<64x128xf32> to vector<1x128xf32>
    %1554 = vector.broadcast %1553 : vector<1x128xf32> to vector<16x128xf32>
    %1555 = arith.mulf %1554, %1 : vector<16x128xf32>
    %1556 = math.exp %1555 : vector<16x128xf32>
    %1557 = vector.extract_strided_slice %137 {offsets = [0, 54], sizes = [16, 1], strides = [1, 1]} : vector<64x64xf32> to vector<16x1xf32>
    %1558 = vector.extract_strided_slice %137 {offsets = [32, 54], sizes = [16, 1], strides = [1, 1]} : vector<64x64xf32> to vector<16x1xf32>
    %1559 = vector.shape_cast %1557 : vector<16x1xf32> to vector<16x1xf32>
    %1560 = vector.broadcast %1559 : vector<16x1xf32> to vector<16x128xf32>
    %1561 = vector.shape_cast %1558 : vector<16x1xf32> to vector<16x1xf32>
    %1562 = vector.broadcast %1561 : vector<16x1xf32> to vector<16x128xf32>
    %1563 = arith.select %141, %1560, %1562 : vector<16x128xi1>, vector<16x128xf32>
    %1564 = vector.extract_strided_slice %137 {offsets = [16, 54], sizes = [16, 1], strides = [1, 1]} : vector<64x64xf32> to vector<16x1xf32>
    %1565 = vector.extract_strided_slice %137 {offsets = [48, 54], sizes = [16, 1], strides = [1, 1]} : vector<64x64xf32> to vector<16x1xf32>
    %1566 = vector.shape_cast %1564 : vector<16x1xf32> to vector<16x1xf32>
    %1567 = vector.broadcast %1566 : vector<16x1xf32> to vector<16x128xf32>
    %1568 = vector.shape_cast %1565 : vector<16x1xf32> to vector<16x1xf32>
    %1569 = vector.broadcast %1568 : vector<16x1xf32> to vector<16x128xf32>
    %1570 = arith.select %141, %1567, %1569 : vector<16x128xi1>, vector<16x128xf32>
    %1571 = arith.mulf %1556, %1549 : vector<16x128xf32>
    %1572 = vector.extract_strided_slice %138 {offsets = [54, 0], sizes = [1, 128], strides = [1, 1]} : vector<64x128xf32> to vector<1x128xf32>
    %1573 = vector.broadcast %1572 : vector<1x128xf32> to vector<16x128xf32>
    %1574 = arith.mulf %1573, %1563 : vector<16x128xf32>
    %1575 = arith.addf %1571, %1574 : vector<16x128xf32>
    %1576 = arith.mulf %1575, %1570 : vector<16x128xf32>
    %cst_92 = arith.constant dense<0.000000e+00> : vector<128xf32>
    %1577 = vector.multi_reduction <add>, %1576, %cst_92 [0] : vector<16x128xf32> to vector<128xf32>
    %1578 = vector.shape_cast %1577 : vector<128xf32> to vector<1x128xf32>
    %1579 = vector.extract_strided_slice %135 {offsets = [55, 0], sizes = [1, 128], strides = [1, 1]} : vector<64x128xf32> to vector<1x128xf32>
    %1580 = vector.broadcast %1579 : vector<1x128xf32> to vector<16x128xf32>
    %1581 = arith.mulf %1580, %1 : vector<16x128xf32>
    %1582 = math.exp %1581 : vector<16x128xf32>
    %1583 = vector.extract_strided_slice %137 {offsets = [0, 55], sizes = [16, 1], strides = [1, 1]} : vector<64x64xf32> to vector<16x1xf32>
    %1584 = vector.extract_strided_slice %137 {offsets = [32, 55], sizes = [16, 1], strides = [1, 1]} : vector<64x64xf32> to vector<16x1xf32>
    %1585 = vector.shape_cast %1583 : vector<16x1xf32> to vector<16x1xf32>
    %1586 = vector.broadcast %1585 : vector<16x1xf32> to vector<16x128xf32>
    %1587 = vector.shape_cast %1584 : vector<16x1xf32> to vector<16x1xf32>
    %1588 = vector.broadcast %1587 : vector<16x1xf32> to vector<16x128xf32>
    %1589 = arith.select %141, %1586, %1588 : vector<16x128xi1>, vector<16x128xf32>
    %1590 = vector.extract_strided_slice %137 {offsets = [16, 55], sizes = [16, 1], strides = [1, 1]} : vector<64x64xf32> to vector<16x1xf32>
    %1591 = vector.extract_strided_slice %137 {offsets = [48, 55], sizes = [16, 1], strides = [1, 1]} : vector<64x64xf32> to vector<16x1xf32>
    %1592 = vector.shape_cast %1590 : vector<16x1xf32> to vector<16x1xf32>
    %1593 = vector.broadcast %1592 : vector<16x1xf32> to vector<16x128xf32>
    %1594 = vector.shape_cast %1591 : vector<16x1xf32> to vector<16x1xf32>
    %1595 = vector.broadcast %1594 : vector<16x1xf32> to vector<16x128xf32>
    %1596 = arith.select %141, %1593, %1595 : vector<16x128xi1>, vector<16x128xf32>
    %1597 = arith.mulf %1582, %1575 : vector<16x128xf32>
    %1598 = vector.extract_strided_slice %138 {offsets = [55, 0], sizes = [1, 128], strides = [1, 1]} : vector<64x128xf32> to vector<1x128xf32>
    %1599 = vector.broadcast %1598 : vector<1x128xf32> to vector<16x128xf32>
    %1600 = arith.mulf %1599, %1589 : vector<16x128xf32>
    %1601 = arith.addf %1597, %1600 : vector<16x128xf32>
    %1602 = arith.mulf %1601, %1596 : vector<16x128xf32>
    %cst_93 = arith.constant dense<0.000000e+00> : vector<128xf32>
    %1603 = vector.multi_reduction <add>, %1602, %cst_93 [0] : vector<16x128xf32> to vector<128xf32>
    %1604 = vector.shape_cast %1603 : vector<128xf32> to vector<1x128xf32>
    %1605 = tpu.concatenate %1422, %1448, %1474, %1500, %1526, %1552, %1578, %1604 in 0 : vector<1x128xf32>, vector<1x128xf32>, vector<1x128xf32>, vector<1x128xf32>, vector<1x128xf32>, vector<1x128xf32>, vector<1x128xf32>, vector<1x128xf32> -> vector<8x128xf32>
    %1606 = vector.extract_strided_slice %135 {offsets = [56, 0], sizes = [1, 128], strides = [1, 1]} : vector<64x128xf32> to vector<1x128xf32>
    %1607 = vector.broadcast %1606 : vector<1x128xf32> to vector<16x128xf32>
    %1608 = arith.mulf %1607, %1 : vector<16x128xf32>
    %1609 = math.exp %1608 : vector<16x128xf32>
    %1610 = vector.extract_strided_slice %137 {offsets = [0, 56], sizes = [16, 1], strides = [1, 1]} : vector<64x64xf32> to vector<16x1xf32>
    %1611 = vector.extract_strided_slice %137 {offsets = [32, 56], sizes = [16, 1], strides = [1, 1]} : vector<64x64xf32> to vector<16x1xf32>
    %1612 = vector.shape_cast %1610 : vector<16x1xf32> to vector<16x1xf32>
    %1613 = vector.broadcast %1612 : vector<16x1xf32> to vector<16x128xf32>
    %1614 = vector.shape_cast %1611 : vector<16x1xf32> to vector<16x1xf32>
    %1615 = vector.broadcast %1614 : vector<16x1xf32> to vector<16x128xf32>
    %1616 = arith.select %141, %1613, %1615 : vector<16x128xi1>, vector<16x128xf32>
    %1617 = vector.extract_strided_slice %137 {offsets = [16, 56], sizes = [16, 1], strides = [1, 1]} : vector<64x64xf32> to vector<16x1xf32>
    %1618 = vector.extract_strided_slice %137 {offsets = [48, 56], sizes = [16, 1], strides = [1, 1]} : vector<64x64xf32> to vector<16x1xf32>
    %1619 = vector.shape_cast %1617 : vector<16x1xf32> to vector<16x1xf32>
    %1620 = vector.broadcast %1619 : vector<16x1xf32> to vector<16x128xf32>
    %1621 = vector.shape_cast %1618 : vector<16x1xf32> to vector<16x1xf32>
    %1622 = vector.broadcast %1621 : vector<16x1xf32> to vector<16x128xf32>
    %1623 = arith.select %141, %1620, %1622 : vector<16x128xi1>, vector<16x128xf32>
    %1624 = arith.mulf %1609, %1601 : vector<16x128xf32>
    %1625 = vector.extract_strided_slice %138 {offsets = [56, 0], sizes = [1, 128], strides = [1, 1]} : vector<64x128xf32> to vector<1x128xf32>
    %1626 = vector.broadcast %1625 : vector<1x128xf32> to vector<16x128xf32>
    %1627 = arith.mulf %1626, %1616 : vector<16x128xf32>
    %1628 = arith.addf %1624, %1627 : vector<16x128xf32>
    %1629 = arith.mulf %1628, %1623 : vector<16x128xf32>
    %cst_94 = arith.constant dense<0.000000e+00> : vector<128xf32>
    %1630 = vector.multi_reduction <add>, %1629, %cst_94 [0] : vector<16x128xf32> to vector<128xf32>
    %1631 = vector.shape_cast %1630 : vector<128xf32> to vector<1x128xf32>
    %1632 = vector.extract_strided_slice %135 {offsets = [57, 0], sizes = [1, 128], strides = [1, 1]} : vector<64x128xf32> to vector<1x128xf32>
    %1633 = vector.broadcast %1632 : vector<1x128xf32> to vector<16x128xf32>
    %1634 = arith.mulf %1633, %1 : vector<16x128xf32>
    %1635 = math.exp %1634 : vector<16x128xf32>
    %1636 = vector.extract_strided_slice %137 {offsets = [0, 57], sizes = [16, 1], strides = [1, 1]} : vector<64x64xf32> to vector<16x1xf32>
    %1637 = vector.extract_strided_slice %137 {offsets = [32, 57], sizes = [16, 1], strides = [1, 1]} : vector<64x64xf32> to vector<16x1xf32>
    %1638 = vector.shape_cast %1636 : vector<16x1xf32> to vector<16x1xf32>
    %1639 = vector.broadcast %1638 : vector<16x1xf32> to vector<16x128xf32>
    %1640 = vector.shape_cast %1637 : vector<16x1xf32> to vector<16x1xf32>
    %1641 = vector.broadcast %1640 : vector<16x1xf32> to vector<16x128xf32>
    %1642 = arith.select %141, %1639, %1641 : vector<16x128xi1>, vector<16x128xf32>
    %1643 = vector.extract_strided_slice %137 {offsets = [16, 57], sizes = [16, 1], strides = [1, 1]} : vector<64x64xf32> to vector<16x1xf32>
    %1644 = vector.extract_strided_slice %137 {offsets = [48, 57], sizes = [16, 1], strides = [1, 1]} : vector<64x64xf32> to vector<16x1xf32>
    %1645 = vector.shape_cast %1643 : vector<16x1xf32> to vector<16x1xf32>
    %1646 = vector.broadcast %1645 : vector<16x1xf32> to vector<16x128xf32>
    %1647 = vector.shape_cast %1644 : vector<16x1xf32> to vector<16x1xf32>
    %1648 = vector.broadcast %1647 : vector<16x1xf32> to vector<16x128xf32>
    %1649 = arith.select %141, %1646, %1648 : vector<16x128xi1>, vector<16x128xf32>
    %1650 = arith.mulf %1635, %1628 : vector<16x128xf32>
    %1651 = vector.extract_strided_slice %138 {offsets = [57, 0], sizes = [1, 128], strides = [1, 1]} : vector<64x128xf32> to vector<1x128xf32>
    %1652 = vector.broadcast %1651 : vector<1x128xf32> to vector<16x128xf32>
    %1653 = arith.mulf %1652, %1642 : vector<16x128xf32>
    %1654 = arith.addf %1650, %1653 : vector<16x128xf32>
    %1655 = arith.mulf %1654, %1649 : vector<16x128xf32>
    %cst_95 = arith.constant dense<0.000000e+00> : vector<128xf32>
    %1656 = vector.multi_reduction <add>, %1655, %cst_95 [0] : vector<16x128xf32> to vector<128xf32>
    %1657 = vector.shape_cast %1656 : vector<128xf32> to vector<1x128xf32>
    %1658 = vector.extract_strided_slice %135 {offsets = [58, 0], sizes = [1, 128], strides = [1, 1]} : vector<64x128xf32> to vector<1x128xf32>
    %1659 = vector.broadcast %1658 : vector<1x128xf32> to vector<16x128xf32>
    %1660 = arith.mulf %1659, %1 : vector<16x128xf32>
    %1661 = math.exp %1660 : vector<16x128xf32>
    %1662 = vector.extract_strided_slice %137 {offsets = [0, 58], sizes = [16, 1], strides = [1, 1]} : vector<64x64xf32> to vector<16x1xf32>
    %1663 = vector.extract_strided_slice %137 {offsets = [32, 58], sizes = [16, 1], strides = [1, 1]} : vector<64x64xf32> to vector<16x1xf32>
    %1664 = vector.shape_cast %1662 : vector<16x1xf32> to vector<16x1xf32>
    %1665 = vector.broadcast %1664 : vector<16x1xf32> to vector<16x128xf32>
    %1666 = vector.shape_cast %1663 : vector<16x1xf32> to vector<16x1xf32>
    %1667 = vector.broadcast %1666 : vector<16x1xf32> to vector<16x128xf32>
    %1668 = arith.select %141, %1665, %1667 : vector<16x128xi1>, vector<16x128xf32>
    %1669 = vector.extract_strided_slice %137 {offsets = [16, 58], sizes = [16, 1], strides = [1, 1]} : vector<64x64xf32> to vector<16x1xf32>
    %1670 = vector.extract_strided_slice %137 {offsets = [48, 58], sizes = [16, 1], strides = [1, 1]} : vector<64x64xf32> to vector<16x1xf32>
    %1671 = vector.shape_cast %1669 : vector<16x1xf32> to vector<16x1xf32>
    %1672 = vector.broadcast %1671 : vector<16x1xf32> to vector<16x128xf32>
    %1673 = vector.shape_cast %1670 : vector<16x1xf32> to vector<16x1xf32>
    %1674 = vector.broadcast %1673 : vector<16x1xf32> to vector<16x128xf32>
    %1675 = arith.select %141, %1672, %1674 : vector<16x128xi1>, vector<16x128xf32>
    %1676 = arith.mulf %1661, %1654 : vector<16x128xf32>
    %1677 = vector.extract_strided_slice %138 {offsets = [58, 0], sizes = [1, 128], strides = [1, 1]} : vector<64x128xf32> to vector<1x128xf32>
    %1678 = vector.broadcast %1677 : vector<1x128xf32> to vector<16x128xf32>
    %1679 = arith.mulf %1678, %1668 : vector<16x128xf32>
    %1680 = arith.addf %1676, %1679 : vector<16x128xf32>
    %1681 = arith.mulf %1680, %1675 : vector<16x128xf32>
    %cst_96 = arith.constant dense<0.000000e+00> : vector<128xf32>
    %1682 = vector.multi_reduction <add>, %1681, %cst_96 [0] : vector<16x128xf32> to vector<128xf32>
    %1683 = vector.shape_cast %1682 : vector<128xf32> to vector<1x128xf32>
    %1684 = vector.extract_strided_slice %135 {offsets = [59, 0], sizes = [1, 128], strides = [1, 1]} : vector<64x128xf32> to vector<1x128xf32>
    %1685 = vector.broadcast %1684 : vector<1x128xf32> to vector<16x128xf32>
    %1686 = arith.mulf %1685, %1 : vector<16x128xf32>
    %1687 = math.exp %1686 : vector<16x128xf32>
    %1688 = vector.extract_strided_slice %137 {offsets = [0, 59], sizes = [16, 1], strides = [1, 1]} : vector<64x64xf32> to vector<16x1xf32>
    %1689 = vector.extract_strided_slice %137 {offsets = [32, 59], sizes = [16, 1], strides = [1, 1]} : vector<64x64xf32> to vector<16x1xf32>
    %1690 = vector.shape_cast %1688 : vector<16x1xf32> to vector<16x1xf32>
    %1691 = vector.broadcast %1690 : vector<16x1xf32> to vector<16x128xf32>
    %1692 = vector.shape_cast %1689 : vector<16x1xf32> to vector<16x1xf32>
    %1693 = vector.broadcast %1692 : vector<16x1xf32> to vector<16x128xf32>
    %1694 = arith.select %141, %1691, %1693 : vector<16x128xi1>, vector<16x128xf32>
    %1695 = vector.extract_strided_slice %137 {offsets = [16, 59], sizes = [16, 1], strides = [1, 1]} : vector<64x64xf32> to vector<16x1xf32>
    %1696 = vector.extract_strided_slice %137 {offsets = [48, 59], sizes = [16, 1], strides = [1, 1]} : vector<64x64xf32> to vector<16x1xf32>
    %1697 = vector.shape_cast %1695 : vector<16x1xf32> to vector<16x1xf32>
    %1698 = vector.broadcast %1697 : vector<16x1xf32> to vector<16x128xf32>
    %1699 = vector.shape_cast %1696 : vector<16x1xf32> to vector<16x1xf32>
    %1700 = vector.broadcast %1699 : vector<16x1xf32> to vector<16x128xf32>
    %1701 = arith.select %141, %1698, %1700 : vector<16x128xi1>, vector<16x128xf32>
    %1702 = arith.mulf %1687, %1680 : vector<16x128xf32>
    %1703 = vector.extract_strided_slice %138 {offsets = [59, 0], sizes = [1, 128], strides = [1, 1]} : vector<64x128xf32> to vector<1x128xf32>
    %1704 = vector.broadcast %1703 : vector<1x128xf32> to vector<16x128xf32>
    %1705 = arith.mulf %1704, %1694 : vector<16x128xf32>
    %1706 = arith.addf %1702, %1705 : vector<16x128xf32>
    %1707 = arith.mulf %1706, %1701 : vector<16x128xf32>
    %cst_97 = arith.constant dense<0.000000e+00> : vector<128xf32>
    %1708 = vector.multi_reduction <add>, %1707, %cst_97 [0] : vector<16x128xf32> to vector<128xf32>
    %1709 = vector.shape_cast %1708 : vector<128xf32> to vector<1x128xf32>
    %1710 = vector.extract_strided_slice %135 {offsets = [60, 0], sizes = [1, 128], strides = [1, 1]} : vector<64x128xf32> to vector<1x128xf32>
    %1711 = vector.broadcast %1710 : vector<1x128xf32> to vector<16x128xf32>
    %1712 = arith.mulf %1711, %1 : vector<16x128xf32>
    %1713 = math.exp %1712 : vector<16x128xf32>
    %1714 = vector.extract_strided_slice %137 {offsets = [0, 60], sizes = [16, 1], strides = [1, 1]} : vector<64x64xf32> to vector<16x1xf32>
    %1715 = vector.extract_strided_slice %137 {offsets = [32, 60], sizes = [16, 1], strides = [1, 1]} : vector<64x64xf32> to vector<16x1xf32>
    %1716 = vector.shape_cast %1714 : vector<16x1xf32> to vector<16x1xf32>
    %1717 = vector.broadcast %1716 : vector<16x1xf32> to vector<16x128xf32>
    %1718 = vector.shape_cast %1715 : vector<16x1xf32> to vector<16x1xf32>
    %1719 = vector.broadcast %1718 : vector<16x1xf32> to vector<16x128xf32>
    %1720 = arith.select %141, %1717, %1719 : vector<16x128xi1>, vector<16x128xf32>
    %1721 = vector.extract_strided_slice %137 {offsets = [16, 60], sizes = [16, 1], strides = [1, 1]} : vector<64x64xf32> to vector<16x1xf32>
    %1722 = vector.extract_strided_slice %137 {offsets = [48, 60], sizes = [16, 1], strides = [1, 1]} : vector<64x64xf32> to vector<16x1xf32>
    %1723 = vector.shape_cast %1721 : vector<16x1xf32> to vector<16x1xf32>
    %1724 = vector.broadcast %1723 : vector<16x1xf32> to vector<16x128xf32>
    %1725 = vector.shape_cast %1722 : vector<16x1xf32> to vector<16x1xf32>
    %1726 = vector.broadcast %1725 : vector<16x1xf32> to vector<16x128xf32>
    %1727 = arith.select %141, %1724, %1726 : vector<16x128xi1>, vector<16x128xf32>
    %1728 = arith.mulf %1713, %1706 : vector<16x128xf32>
    %1729 = vector.extract_strided_slice %138 {offsets = [60, 0], sizes = [1, 128], strides = [1, 1]} : vector<64x128xf32> to vector<1x128xf32>
    %1730 = vector.broadcast %1729 : vector<1x128xf32> to vector<16x128xf32>
    %1731 = arith.mulf %1730, %1720 : vector<16x128xf32>
    %1732 = arith.addf %1728, %1731 : vector<16x128xf32>
    %1733 = arith.mulf %1732, %1727 : vector<16x128xf32>
    %cst_98 = arith.constant dense<0.000000e+00> : vector<128xf32>
    %1734 = vector.multi_reduction <add>, %1733, %cst_98 [0] : vector<16x128xf32> to vector<128xf32>
    %1735 = vector.shape_cast %1734 : vector<128xf32> to vector<1x128xf32>
    %1736 = vector.extract_strided_slice %135 {offsets = [61, 0], sizes = [1, 128], strides = [1, 1]} : vector<64x128xf32> to vector<1x128xf32>
    %1737 = vector.broadcast %1736 : vector<1x128xf32> to vector<16x128xf32>
    %1738 = arith.mulf %1737, %1 : vector<16x128xf32>
    %1739 = math.exp %1738 : vector<16x128xf32>
    %1740 = vector.extract_strided_slice %137 {offsets = [0, 61], sizes = [16, 1], strides = [1, 1]} : vector<64x64xf32> to vector<16x1xf32>
    %1741 = vector.extract_strided_slice %137 {offsets = [32, 61], sizes = [16, 1], strides = [1, 1]} : vector<64x64xf32> to vector<16x1xf32>
    %1742 = vector.shape_cast %1740 : vector<16x1xf32> to vector<16x1xf32>
    %1743 = vector.broadcast %1742 : vector<16x1xf32> to vector<16x128xf32>
    %1744 = vector.shape_cast %1741 : vector<16x1xf32> to vector<16x1xf32>
    %1745 = vector.broadcast %1744 : vector<16x1xf32> to vector<16x128xf32>
    %1746 = arith.select %141, %1743, %1745 : vector<16x128xi1>, vector<16x128xf32>
    %1747 = vector.extract_strided_slice %137 {offsets = [16, 61], sizes = [16, 1], strides = [1, 1]} : vector<64x64xf32> to vector<16x1xf32>
    %1748 = vector.extract_strided_slice %137 {offsets = [48, 61], sizes = [16, 1], strides = [1, 1]} : vector<64x64xf32> to vector<16x1xf32>
    %1749 = vector.shape_cast %1747 : vector<16x1xf32> to vector<16x1xf32>
    %1750 = vector.broadcast %1749 : vector<16x1xf32> to vector<16x128xf32>
    %1751 = vector.shape_cast %1748 : vector<16x1xf32> to vector<16x1xf32>
    %1752 = vector.broadcast %1751 : vector<16x1xf32> to vector<16x128xf32>
    %1753 = arith.select %141, %1750, %1752 : vector<16x128xi1>, vector<16x128xf32>
    %1754 = arith.mulf %1739, %1732 : vector<16x128xf32>
    %1755 = vector.extract_strided_slice %138 {offsets = [61, 0], sizes = [1, 128], strides = [1, 1]} : vector<64x128xf32> to vector<1x128xf32>
    %1756 = vector.broadcast %1755 : vector<1x128xf32> to vector<16x128xf32>
    %1757 = arith.mulf %1756, %1746 : vector<16x128xf32>
    %1758 = arith.addf %1754, %1757 : vector<16x128xf32>
    %1759 = arith.mulf %1758, %1753 : vector<16x128xf32>
    %cst_99 = arith.constant dense<0.000000e+00> : vector<128xf32>
    %1760 = vector.multi_reduction <add>, %1759, %cst_99 [0] : vector<16x128xf32> to vector<128xf32>
    %1761 = vector.shape_cast %1760 : vector<128xf32> to vector<1x128xf32>
    %1762 = vector.extract_strided_slice %135 {offsets = [62, 0], sizes = [1, 128], strides = [1, 1]} : vector<64x128xf32> to vector<1x128xf32>
    %1763 = vector.broadcast %1762 : vector<1x128xf32> to vector<16x128xf32>
    %1764 = arith.mulf %1763, %1 : vector<16x128xf32>
    %1765 = math.exp %1764 : vector<16x128xf32>
    %1766 = vector.extract_strided_slice %137 {offsets = [0, 62], sizes = [16, 1], strides = [1, 1]} : vector<64x64xf32> to vector<16x1xf32>
    %1767 = vector.extract_strided_slice %137 {offsets = [32, 62], sizes = [16, 1], strides = [1, 1]} : vector<64x64xf32> to vector<16x1xf32>
    %1768 = vector.shape_cast %1766 : vector<16x1xf32> to vector<16x1xf32>
    %1769 = vector.broadcast %1768 : vector<16x1xf32> to vector<16x128xf32>
    %1770 = vector.shape_cast %1767 : vector<16x1xf32> to vector<16x1xf32>
    %1771 = vector.broadcast %1770 : vector<16x1xf32> to vector<16x128xf32>
    %1772 = arith.select %141, %1769, %1771 : vector<16x128xi1>, vector<16x128xf32>
    %1773 = vector.extract_strided_slice %137 {offsets = [16, 62], sizes = [16, 1], strides = [1, 1]} : vector<64x64xf32> to vector<16x1xf32>
    %1774 = vector.extract_strided_slice %137 {offsets = [48, 62], sizes = [16, 1], strides = [1, 1]} : vector<64x64xf32> to vector<16x1xf32>
    %1775 = vector.shape_cast %1773 : vector<16x1xf32> to vector<16x1xf32>
    %1776 = vector.broadcast %1775 : vector<16x1xf32> to vector<16x128xf32>
    %1777 = vector.shape_cast %1774 : vector<16x1xf32> to vector<16x1xf32>
    %1778 = vector.broadcast %1777 : vector<16x1xf32> to vector<16x128xf32>
    %1779 = arith.select %141, %1776, %1778 : vector<16x128xi1>, vector<16x128xf32>
    %1780 = arith.mulf %1765, %1758 : vector<16x128xf32>
    %1781 = vector.extract_strided_slice %138 {offsets = [62, 0], sizes = [1, 128], strides = [1, 1]} : vector<64x128xf32> to vector<1x128xf32>
    %1782 = vector.broadcast %1781 : vector<1x128xf32> to vector<16x128xf32>
    %1783 = arith.mulf %1782, %1772 : vector<16x128xf32>
    %1784 = arith.addf %1780, %1783 : vector<16x128xf32>
    %1785 = arith.mulf %1784, %1779 : vector<16x128xf32>
    %cst_100 = arith.constant dense<0.000000e+00> : vector<128xf32>
    %1786 = vector.multi_reduction <add>, %1785, %cst_100 [0] : vector<16x128xf32> to vector<128xf32>
    %1787 = vector.shape_cast %1786 : vector<128xf32> to vector<1x128xf32>
    %1788 = vector.extract_strided_slice %135 {offsets = [63, 0], sizes = [1, 128], strides = [1, 1]} : vector<64x128xf32> to vector<1x128xf32>
    %1789 = vector.broadcast %1788 : vector<1x128xf32> to vector<16x128xf32>
    %1790 = arith.mulf %1789, %1 : vector<16x128xf32>
    %1791 = math.exp %1790 : vector<16x128xf32>
    %1792 = vector.extract_strided_slice %137 {offsets = [0, 63], sizes = [16, 1], strides = [1, 1]} : vector<64x64xf32> to vector<16x1xf32>
    %1793 = vector.extract_strided_slice %137 {offsets = [32, 63], sizes = [16, 1], strides = [1, 1]} : vector<64x64xf32> to vector<16x1xf32>
    %1794 = vector.shape_cast %1792 : vector<16x1xf32> to vector<16x1xf32>
    %1795 = vector.broadcast %1794 : vector<16x1xf32> to vector<16x128xf32>
    %1796 = vector.shape_cast %1793 : vector<16x1xf32> to vector<16x1xf32>
    %1797 = vector.broadcast %1796 : vector<16x1xf32> to vector<16x128xf32>
    %1798 = arith.select %141, %1795, %1797 : vector<16x128xi1>, vector<16x128xf32>
    %1799 = vector.extract_strided_slice %137 {offsets = [16, 63], sizes = [16, 1], strides = [1, 1]} : vector<64x64xf32> to vector<16x1xf32>
    %1800 = vector.extract_strided_slice %137 {offsets = [48, 63], sizes = [16, 1], strides = [1, 1]} : vector<64x64xf32> to vector<16x1xf32>
    %1801 = vector.shape_cast %1799 : vector<16x1xf32> to vector<16x1xf32>
    %1802 = vector.broadcast %1801 : vector<16x1xf32> to vector<16x128xf32>
    %1803 = vector.shape_cast %1800 : vector<16x1xf32> to vector<16x1xf32>
    %1804 = vector.broadcast %1803 : vector<16x1xf32> to vector<16x128xf32>
    %1805 = arith.select %141, %1802, %1804 : vector<16x128xi1>, vector<16x128xf32>
    %1806 = arith.mulf %1791, %1784 : vector<16x128xf32>
    %1807 = vector.extract_strided_slice %138 {offsets = [63, 0], sizes = [1, 128], strides = [1, 1]} : vector<64x128xf32> to vector<1x128xf32>
    %1808 = vector.broadcast %1807 : vector<1x128xf32> to vector<16x128xf32>
    %1809 = arith.mulf %1808, %1798 : vector<16x128xf32>
    %1810 = arith.addf %1806, %1809 : vector<16x128xf32>
    %1811 = arith.mulf %1810, %1805 : vector<16x128xf32>
    %cst_101 = arith.constant dense<0.000000e+00> : vector<128xf32>
    %1812 = vector.multi_reduction <add>, %1811, %cst_101 [0] : vector<16x128xf32> to vector<128xf32>
    %1813 = vector.shape_cast %1812 : vector<128xf32> to vector<1x128xf32>
    %1814 = tpu.concatenate %1631, %1657, %1683, %1709, %1735, %1761, %1787, %1813 in 0 : vector<1x128xf32>, vector<1x128xf32>, vector<1x128xf32>, vector<1x128xf32>, vector<1x128xf32>, vector<1x128xf32>, vector<1x128xf32>, vector<1x128xf32> -> vector<8x128xf32>
    %1815 = tpu.concatenate %351, %560, %769, %978, %1187, %1396, %1605, %1814 in 0 : vector<8x128xf32>, vector<8x128xf32>, vector<8x128xf32>, vector<8x128xf32>, vector<8x128xf32>, vector<8x128xf32>, vector<8x128xf32>, vector<8x128xf32> -> vector<64x128xf32>
    %1816 = vector.broadcast %5 : vector<1x128xf32> to vector<64x128xf32>
    %1817 = arith.mulf %1816, %116 : vector<64x128xf32>
    %1818 = arith.addf %1815, %1817 : vector<64x128xf32>
    %1819 = arith.negf %71 : vector<64x128xf32>
    %1820 = math.exp %1819 : vector<64x128xf32>
    %cst_102 = arith.constant 1.000000e+00 : f32
    %1821 = vector.broadcast %cst_102 : f32 to vector<64x128xf32>
    %1822 = arith.addf %1821, %1820 : vector<64x128xf32>
    %1823 = arith.divf %1821, %1822 : vector<64x128xf32>
    %1824 = arith.mulf %71, %1823 : vector<64x128xf32>
    %1825 = arith.mulf %1818, %1824 : vector<64x128xf32>
    %1826 = arith.truncf %1825 : vector<64x128xf32> to vector<64x128xbf16>
    %c0_103 = arith.constant 0 : index
    %c0_104 = arith.constant 0 : index
    %1827 = vector.load %arg9[%c0_103, %c0_104] : memref<128x64xbf16, #tpu.memory_space<vmem>>, vector<128x64xbf16>
    %cst_105 = arith.constant dense<0.000000e+00> : vector<64x64xf32>
    %1828 = tpu.matmul %1826, %1827, %cst_105 {dimension_numbers = #tpu.dot_dimension_numbers<[1], [0], [0], [1], [0, 0, 1, 1], [], []>} : vector<64x128xbf16>, vector<128x64xbf16>, vector<64x64xf32> -> vector<64x64xf32>
    %1829 = tpu.concatenate %1828, %17 in 1 : vector<64x64xf32>, vector<64x64xf32> -> vector<64x128xf32>
    %c0_106 = arith.constant 0 : index
    %c0_107 = arith.constant 0 : index
    %c0_108 = arith.constant 0 : index
    %1830 = vector.load %arg10[%c0_106, %c0_107, %c0_108] : memref<1x64x128xf32, #tpu.memory_space<vmem>>, vector<1x64x128xf32>
    %1831 = vector.shape_cast %1830 : vector<1x64x128xf32> to vector<64x128xf32>
    %1832 = vector.shape_cast %1829 : vector<64x128xf32> to vector<1x64x128xf32>
    tpu.vector_store %arg10[%c0_106, %c0_107, %c0_108], %1832 {strides = array<i32>} : memref<1x64x128xf32, #tpu.memory_space<vmem>>, vector<1x64x128xf32>,
    return
  }
  func.func @transform_0(%arg0: i32) -> (i32, i32, i32) {
    %c0_i32 = arith.constant 0 : i32
    %c0_i32_0 = arith.constant 0 : i32
    %c0_i32_1 = arith.constant 0 : i32
    return %arg0, %c0_i32, %c0_i32_0 : i32, i32, i32
  }
  func.func @transform_1(%arg0: i32) -> (i32, i32, i32) {
    %c0_i32 = arith.constant 0 : i32
    %c0_i32_0 = arith.constant 0 : i32
    %c0_i32_1 = arith.constant 0 : i32
    return %arg0, %c0_i32, %c0_i32_0 : i32, i32, i32
  }
  func.func @transform_2(%arg0: i32) -> (i32, i32, i32) {
    %c0_i32 = arith.constant 0 : i32
    %c0_i32_0 = arith.constant 0 : i32
    %c0_i32_1 = arith.constant 0 : i32
    return %arg0, %c0_i32, %c0_i32_0 : i32, i32, i32
  }
  func.func @transform_3(%arg0: i32) -> (i32, i32, i32) {
    %c0_i32 = arith.constant 0 : i32
    %c0_i32_0 = arith.constant 0 : i32
    %c0_i32_1 = arith.constant 0 : i32
    return %arg0, %c0_i32, %c0_i32_0 : i32, i32, i32
  }
  func.func @transform_4(%arg0: i32) -> (i32, i32) {
    %c0_i32 = arith.constant 0 : i32
    %c0_i32_0 = arith.constant 0 : i32
    %c0_i32_1 = arith.constant 0 : i32
    return %c0_i32, %c0_i32_0 : i32, i32
  }
  func.func @transform_5(%arg0: i32) -> (i32, i32) {
    %c0_i32 = arith.constant 0 : i32
    %c0_i32_0 = arith.constant 0 : i32
    %c0_i32_1 = arith.constant 0 : i32
    return %c0_i32, %c0_i32_0 : i32, i32
  }
  func.func @transform_6(%arg0: i32) -> (i32, i32) {
    %c0_i32 = arith.constant 0 : i32
    %c0_i32_0 = arith.constant 0 : i32
    %c0_i32_1 = arith.constant 0 : i32
    return %c0_i32, %c0_i32_0 : i32, i32
  }
  func.func @transform_7(%arg0: i32) -> (i32, i32) {
    %c0_i32 = arith.constant 0 : i32
    %c0_i32_0 = arith.constant 0 : i32
    %c0_i32_1 = arith.constant 0 : i32
    return %c0_i32, %c0_i32_0 : i32, i32
  }
  func.func @transform_8(%arg0: i32) -> (i32, i32) {
    %c0_i32 = arith.constant 0 : i32
    %c0_i32_0 = arith.constant 0 : i32
    %c0_i32_1 = arith.constant 0 : i32
    return %c0_i32, %c0_i32_0 : i32, i32
  }
  func.func @transform_9(%arg0: i32) -> (i32, i32, i32) {
    %c0_i32 = arith.constant 0 : i32
    %c0_i32_0 = arith.constant 0 : i32
    %c0_i32_1 = arith.constant 0 : i32
    return %arg0, %c0_i32, %c0_i32_0 : i32, i32, i32
  }
}

</mosaic_0001>

<llo_original>
// kernel: token_swap_mamba.1
$region0: #{token_swap_mamba.1}
  #allocation0 [shape = 'u32[]', space=smem, size = 0x4, offset = 0x4, fixed_abs, tag = 'smem constant byte address 0x4 - core index']
  #allocation1 [shape = 'u32[144,128]{1,0:T(1,128)}', space=vmem, size = 0x12000, scoped, tag = 'internal scratch']
  %s0 = inlined_call_operand.vmem [shape: f32[2,64,32], index: 0, kind: input, shape index: {}]
  %s1 = inlined_call_operand.vmem [shape: f32[2,64,32], index: 1, kind: input, shape index: {}]
  %s2 = inlined_call_operand.vmem [shape: f32[2,64,32], index: 2, kind: input, shape index: {}]
  %s3 = inlined_call_operand.vmem [shape: f32[2,64,32], index: 3, kind: input, shape index: {}]
  %s4 = inlined_call_operand.vmem [shape: f32[24,128], index: 4, kind: input, shape index: {}]
  %s5 = inlined_call_operand.vmem [shape: bf16[64,256], index: 5, kind: input, shape index: {}]
  %s6 = inlined_call_operand.vmem [shape: bf16[128,128], index: 6, kind: input, shape index: {}]
  %s7 = inlined_call_operand.vmem [shape: bf16[64,128], index: 7, kind: input, shape index: {}]
  %s8 = inlined_call_operand.vmem [shape: bf16[128,64], index: 8, kind: input, shape index: {}]
  %s9 = inlined_call_operand.vmem [shape: f32[2,64,128], index: 9, kind: output, shape index: {}]
  %s10 = sld [smem:[#allocation0]]
  $region69: #{token_swap_mamba.1} parent=0
    _
  %s12 = ssub.s32 1, %s10
  %s13 = scalar_select 0, %s12, %s10
  loop: start=0, step=1, limit=4
  $region2: #{token_swap_mamba.1} parent=0 // loop_pre_header
    _
  $region3: #{token_swap_mamba.1} parent=0 // loop_header
    %s15 = sphi 0, %s19
    %p16 = scmp.ge.s32.totalorder %s15, 4
    %s25 = sphi 0, %s27
    %s28 = sphi 0, %s25
    %s29 = sphi 0, %s28
    %s45 = sphi 0, %s29
    %s51 = sphi 0, %s53
    %s54 = sphi 0, %s51
    %s55 = sphi 0, %s54
    %s71 = sphi 0, %s55
    %s77 = sphi 0, %s79
    %s80 = sphi 0, %s77
    %s81 = sphi 0, %s80
    %s97 = sphi 0, %s81
    %s103 = sphi 0, %s105
    %s106 = sphi 0, %s103
    %s107 = sphi 0, %s106
    %s123 = sphi 0, %s107
    %s127 = sphi 0, %s127
    %s129 = sphi 0, %s127
    %s130 = sphi 0, %s129
    %s144 = sphi 0, %s130
    %s148 = sphi 0, %s148
    %s150 = sphi 0, %s148
    %s151 = sphi 0, %s150
    %s165 = sphi 0, %s151
    %s169 = sphi 0, %s169
    %s171 = sphi 0, %s169
    %s172 = sphi 0, %s171
    %s186 = sphi 0, %s172
    %s190 = sphi 0, %s190
    %s192 = sphi 0, %s190
    %s193 = sphi 0, %s192
    %s207 = sphi 0, %s193
    %s211 = sphi 0, %s211
    %s213 = sphi 0, %s211
    %s214 = sphi 0, %s213
    %s228 = sphi 0, %s214
    %s234 = sphi 0, %s236
    %s237 = sphi 0, %s234
    %s238 = sphi 0, %s237
    %s254 = sphi 0, %s238
  $region4: #{token_swap_mamba.1} parent=0 // loop_header_branch
    %18 = sbr.rel (%p16) target = $region8
  $region5: #{token_swap_mamba.1} parent=0 // loop_body
    %s20 = ssub.s32 %s15, 1
    %s21 = ssub.s32 %s15, 2
    %s22 = sadd.s32 %s15, 1
    %s23 = ssub.s32 %s15, %s22
    %p24 = scmp.eq.s32.totalorder %s23, 0
    %s26 = sadd.s32 %s25, 1
    %s27 = scalar_select %p24, %s25, %s26
    %p30 = pneg %p24
    %p31 = scmp.eq.s32.totalorder %s15, 1
    %p32 = por %p30, %p31
    %p33 = scmp.ne.s32.totalorder %s25, %s28
    %p34 = scmp.eq.s32.totalorder %s15, 0
    %p35 = por %p33, %p34
    %p36 = scmp.ne.s32.totalorder %s25, %s28
    %p37 = scmp.eq.s32.totalorder %s20, 1
    %p38 = por %p36, %p37
    %p39 = scmp.ne.s32.totalorder %s28, %s29
    %p40 = scmp.eq.s32.totalorder %s20, 0
    %p41 = por %p39, %p40
    %p42 = scmp.ne.s32.totalorder %s28, %s29
    %p43 = scmp.eq.s32.totalorder %s21, 1
    %p44 = por %p42, %p43
    %p46 = scmp.ne.s32.totalorder %s29, %s45
    %p47 = scmp.eq.s32.totalorder %s21, 0
    %p48 = por %p46, %p47
    %s49 = ssub.s32 %s15, %s22
    %p50 = scmp.eq.s32.totalorder %s49, 0
    %s52 = sadd.s32 %s51, 1
    %s53 = scalar_select %p50, %s51, %s52
    %p56 = pneg %p50
    %p57 = scmp.eq.s32.totalorder %s15, 1
    %p58 = por %p56, %p57
    %p59 = scmp.ne.s32.totalorder %s51, %s54
    %p60 = scmp.eq.s32.totalorder %s15, 0
    %p61 = por %p59, %p60
    %p62 = scmp.ne.s32.totalorder %s51, %s54
    %p63 = scmp.eq.s32.totalorder %s20, 1
    %p64 = por %p62, %p63
    %p65 = scmp.ne.s32.totalorder %s54, %s55
    %p66 = scmp.eq.s32.totalorder %s20, 0
    %p67 = por %p65, %p66
    %p68 = scmp.ne.s32.totalorder %s54, %s55
    %p69 = scmp.eq.s32.totalorder %s21, 1
    %p70 = por %p68, %p69
    %p72 = scmp.ne.s32.totalorder %s55, %s71
    %p73 = scmp.eq.s32.totalorder %s21, 0
    %p74 = por %p72, %p73
    %s75 = ssub.s32 %s15, %s22
    %p76 = scmp.eq.s32.totalorder %s75, 0
    %s78 = sadd.s32 %s77, 1
    %s79 = scalar_select %p76, %s77, %s78
    %p82 = pneg %p76
    %p83 = scmp.eq.s32.totalorder %s15, 1
    %p84 = por %p82, %p83
    %p85 = scmp.ne.s32.totalorder %s77, %s80
    %p86 = scmp.eq.s32.totalorder %s15, 0
    %p87 = por %p85, %p86
    %p88 = scmp.ne.s32.totalorder %s77, %s80
    %p89 = scmp.eq.s32.totalorder %s20, 1
    %p90 = por %p88, %p89
    %p91 = scmp.ne.s32.totalorder %s80, %s81
    %p92 = scmp.eq.s32.totalorder %s20, 0
    %p93 = por %p91, %p92
    %p94 = scmp.ne.s32.totalorder %s80, %s81
    %p95 = scmp.eq.s32.totalorder %s21, 1
    %p96 = por %p94, %p95
    %p98 = scmp.ne.s32.totalorder %s81, %s97
    %p99 = scmp.eq.s32.totalorder %s21, 0
    %p100 = por %p98, %p99
    %s101 = ssub.s32 %s15, %s22
    %p102 = scmp.eq.s32.totalorder %s101, 0
    %s104 = sadd.s32 %s103, 1
    %s105 = scalar_select %p102, %s103, %s104
    %p108 = pneg %p102
    %p109 = scmp.eq.s32.totalorder %s15, 1
    %p110 = por %p108, %p109
    %p111 = scmp.ne.s32.totalorder %s103, %s106
    %p112 = scmp.eq.s32.totalorder %s15, 0
    %p113 = por %p111, %p112
    %p114 = scmp.ne.s32.totalorder %s103, %s106
    %p115 = scmp.eq.s32.totalorder %s20, 1
    %p116 = por %p114, %p115
    %p117 = scmp.ne.s32.totalorder %s106, %s107
    %p118 = scmp.eq.s32.totalorder %s20, 0
    %p119 = por %p117, %p118
    %p120 = scmp.ne.s32.totalorder %s106, %s107
    %p121 = scmp.eq.s32.totalorder %s21, 1
    %p122 = por %p120, %p121
    %p124 = scmp.ne.s32.totalorder %s107, %s123
    %p125 = scmp.eq.s32.totalorder %s21, 0
    %p126 = por %p124, %p125
    %s128 = sadd.s32 %s127, 1
    %p131 = scmp.eq.s32.totalorder %s15, 1
    %p132 = scmp.ne.s32.totalorder %s127, %s129
    %p133 = scmp.eq.s32.totalorder %s15, 0
    %p134 = por %p132, %p133
    %p135 = scmp.ne.s32.totalorder %s127, %s129
    %p136 = scmp.eq.s32.totalorder %s20, 1
    %p137 = por %p135, %p136
    %p138 = scmp.ne.s32.totalorder %s129, %s130
    %p139 = scmp.eq.s32.totalorder %s20, 0
    %p140 = por %p138, %p139
    %p141 = scmp.ne.s32.totalorder %s129, %s130
    %p142 = scmp.eq.s32.totalorder %s21, 1
    %p143 = por %p141, %p142
    %p145 = scmp.ne.s32.totalorder %s130, %s144
    %p146 = scmp.eq.s32.totalorder %s21, 0
    %p147 = por %p145, %p146
    %s149 = sadd.s32 %s148, 1
    %p152 = scmp.eq.s32.totalorder %s15, 1
    %p153 = scmp.ne.s32.totalorder %s148, %s150
    %p154 = scmp.eq.s32.totalorder %s15, 0
    %p155 = por %p153, %p154
    %p156 = scmp.ne.s32.totalorder %s148, %s150
    %p157 = scmp.eq.s32.totalorder %s20, 1
    %p158 = por %p156, %p157
    %p159 = scmp.ne.s32.totalorder %s150, %s151
    %p160 = scmp.eq.s32.totalorder %s20, 0
    %p161 = por %p159, %p160
    %p162 = scmp.ne.s32.totalorder %s150, %s151
    %p163 = scmp.eq.s32.totalorder %s21, 1
    %p164 = por %p162, %p163
    %p166 = scmp.ne.s32.totalorder %s151, %s165
    %p167 = scmp.eq.s32.totalorder %s21, 0
    %p168 = por %p166, %p167
    %s170 = sadd.s32 %s169, 1
    %p173 = scmp.eq.s32.totalorder %s15, 1
    %p174 = scmp.ne.s32.totalorder %s169, %s171
    %p175 = scmp.eq.s32.totalorder %s15, 0
    %p176 = por %p174, %p175
    %p177 = scmp.ne.s32.totalorder %s169, %s171
    %p178 = scmp.eq.s32.totalorder %s20, 1
    %p179 = por %p177, %p178
    %p180 = scmp.ne.s32.totalorder %s171, %s172
    %p181 = scmp.eq.s32.totalorder %s20, 0
    %p182 = por %p180, %p181
    %p183 = scmp.ne.s32.totalorder %s171, %s172
    %p184 = scmp.eq.s32.totalorder %s21, 1
    %p185 = por %p183, %p184
    %p187 = scmp.ne.s32.totalorder %s172, %s186
    %p188 = scmp.eq.s32.totalorder %s21, 0
    %p189 = por %p187, %p188
    %s191 = sadd.s32 %s190, 1
    %p194 = scmp.eq.s32.totalorder %s15, 1
    %p195 = scmp.ne.s32.totalorder %s190, %s192
    %p196 = scmp.eq.s32.totalorder %s15, 0
    %p197 = por %p195, %p196
    %p198 = scmp.ne.s32.totalorder %s190, %s192
    %p199 = scmp.eq.s32.totalorder %s20, 1
    %p200 = por %p198, %p199
    %p201 = scmp.ne.s32.totalorder %s192, %s193
    %p202 = scmp.eq.s32.totalorder %s20, 0
    %p203 = por %p201, %p202
    %p204 = scmp.ne.s32.totalorder %s192, %s193
    %p205 = scmp.eq.s32.totalorder %s21, 1
    %p206 = por %p204, %p205
    %p208 = scmp.ne.s32.totalorder %s193, %s207
    %p209 = scmp.eq.s32.totalorder %s21, 0
    %p210 = por %p208, %p209
    %s212 = sadd.s32 %s211, 1
    %p215 = scmp.eq.s32.totalorder %s15, 1
    %p216 = scmp.ne.s32.totalorder %s211, %s213
    %p217 = scmp.eq.s32.totalorder %s15, 0
    %p218 = por %p216, %p217
    %p219 = scmp.ne.s32.totalorder %s211, %s213
    %p220 = scmp.eq.s32.totalorder %s20, 1
    %p221 = por %p219, %p220
    %p222 = scmp.ne.s32.totalorder %s213, %s214
    %p223 = scmp.eq.s32.totalorder %s20, 0
    %p224 = por %p222, %p223
    %p225 = scmp.ne.s32.totalorder %s213, %s214
    %p226 = scmp.eq.s32.totalorder %s21, 1
    %p227 = por %p225, %p226
    %p229 = scmp.ne.s32.totalorder %s214, %s228
    %p230 = scmp.eq.s32.totalorder %s21, 0
    %p231 = por %p229, %p230
    %s232 = ssub.s32 %s15, %s22
    %p233 = scmp.eq.s32.totalorder %s232, 0
    %s235 = sadd.s32 %s234, 1
    %s236 = scalar_select %p233, %s234, %s235
    %p239 = pneg %p233
    %p240 = scmp.eq.s32.totalorder %s15, 1
    %p241 = por %p239, %p240
    %p242 = scmp.ne.s32.totalorder %s234, %s237
    %p243 = scmp.eq.s32.totalorder %s15, 0
    %p244 = por %p242, %p243
    %p245 = scmp.ne.s32.totalorder %s234, %s237
    %p246 = scmp.eq.s32.totalorder %s20, 1
    %p247 = por %p245, %p246
    %p248 = scmp.ne.s32.totalorder %s237, %s238
    %p249 = scmp.eq.s32.totalorder %s20, 0
    %p250 = por %p248, %p249
    %p251 = scmp.ne.s32.totalorder %s237, %s238
    %p252 = scmp.eq.s32.totalorder %s21, 1
    %p253 = por %p251, %p252
    %p255 = scmp.ne.s32.totalorder %s238, %s254
    %p256 = scmp.eq.s32.totalorder %s21, 0
    %p257 = por %p255, %p256
    %p258 = scmp.le.s32.totalorder 1, %s15
    %p259 = scmp.lt.s32.totalorder %s15, 3
    %p260 = pnand %p258, %p259
    %p261 = pneg %p260
    // Predicated region
    $region9: #{token_swap_mamba.1} parent=5 // pred_check
      _
    $region10: #{token_swap_mamba.1} parent=5 // pred_check_branch
      %263 = sbr.rel (%p260) target = $region12
    $region11: #{token_swap_mamba.1} parent=5 // pred_region
      %s264 = ssub.s32 %s15, 1
      // Predicated region
      $region13: #{token_swap_mamba.1} parent=11 // pred_check
        %p265 = pneg %p140
      $region14: #{token_swap_mamba.1} parent=11 // pred_check_branch
        %267 = sbr.rel (%p265) target = $region16
      $region15: #{token_swap_mamba.1} parent=11 // pred_region
        _
      $region16: #{token_swap_mamba.1} parent=11 // pred_fallthru
        _
      // Predicated region
      $region17: #{token_swap_mamba.1} parent=11 // pred_check
        %p268 = pneg %p161
      $region18: #{token_swap_mamba.1} parent=11 // pred_check_branch
        %270 = sbr.rel (%p268) target = $region20
      $region19: #{token_swap_mamba.1} parent=11 // pred_region
        _
      $region20: #{token_swap_mamba.1} parent=11 // pred_fallthru
        _
      // Predicated region
      $region21: #{token_swap_mamba.1} parent=11 // pred_check
        %p271 = pneg %p182
      $region22: #{token_swap_mamba.1} parent=11 // pred_check_branch
        %273 = sbr.rel (%p271) target = $region24
      $region23: #{token_swap_mamba.1} parent=11 // pred_region
        _
      $region24: #{token_swap_mamba.1} parent=11 // pred_fallthru
        _
      // Predicated region
      $region25: #{token_swap_mamba.1} parent=11 // pred_check
        %p274 = pneg %p203
      $region26: #{token_swap_mamba.1} parent=11 // pred_check_branch
        %276 = sbr.rel (%p274) target = $region28
      $region27: #{token_swap_mamba.1} parent=11 // pred_region
        _
      $region28: #{token_swap_mamba.1} parent=11 // pred_fallthru
        _
      // Predicated region
      $region29: #{token_swap_mamba.1} parent=11 // pred_check
        %p277 = pneg %p224
      $region30: #{token_swap_mamba.1} parent=11 // pred_check_branch
        %279 = sbr.rel (%p277) target = $region32
      $region31: #{token_swap_mamba.1} parent=11 // pred_region
        _
      $region32: #{token_swap_mamba.1} parent=11 // pred_fallthru
        _
    $region12: #{token_swap_mamba.1} parent=5 // pred_fallthru
      _
    %p280 = scmp.lt.s32.totalorder %s15, 2
    // Predicated region
    $region33: #{token_swap_mamba.1} parent=5 // pred_check
      %p281 = pneg %p280
    $region34: #{token_swap_mamba.1} parent=5 // pred_check_branch
      %283 = sbr.rel (%p281) target = $region36
    $region35: #{token_swap_mamba.1} parent=5 // pred_region
      // Predicated region
      $region37: #{token_swap_mamba.1} parent=35 // pred_check
        %p284 = pneg %p35
      $region38: #{token_swap_mamba.1} parent=35 // pred_check_branch
        %286 = sbr.rel (%p284) target = $region40
      $region39: #{token_swap_mamba.1} parent=35 // pred_region
        %p287 = scmp.lt.s32.totalorder %s15, 1
        %s288 = scalar_select %p287, %s15, 1
        %s289 = smul.addr %s288, 8
        %s290 = smul.addr %s289, 8
        %s291 = scalar_lea.vmem %s0, %s290
      $region40: #{token_swap_mamba.1} parent=35 // pred_fallthru
        _
      // Predicated region
      $region41: #{token_swap_mamba.1} parent=35 // pred_check
        %p292 = pneg %p61
      $region42: #{token_swap_mamba.1} parent=35 // pred_check_branch
        %294 = sbr.rel (%p292) target = $region44
      $region43: #{token_swap_mamba.1} parent=35 // pred_region
        %p295 = scmp.lt.s32.totalorder %s15, 1
        %s296 = scalar_select %p295, %s15, 1
        %s297 = smul.addr %s296, 8
        %s298 = smul.addr %s297, 8
        %s299 = scalar_lea.vmem %s1, %s298
      $region44: #{token_swap_mamba.1} parent=35 // pred_fallthru
        _
      // Predicated region
      $region45: #{token_swap_mamba.1} parent=35 // pred_check
        %p300 = pneg %p87
      $region46: #{token_swap_mamba.1} parent=35 // pred_check_branch
        %302 = sbr.rel (%p300) target = $region48
      $region47: #{token_swap_mamba.1} parent=35 // pred_region
        %p303 = scmp.lt.s32.totalorder %s15, 1
        %s304 = scalar_select %p303, %s15, 1
        %s305 = smul.addr %s304, 8
        %s306 = smul.addr %s305, 8
        %s307 = scalar_lea.vmem %s2, %s306
      $region48: #{token_swap_mamba.1} parent=35 // pred_fallthru
        _
      // Predicated region
      $region49: #{token_swap_mamba.1} parent=35 // pred_check
        %p308 = pneg %p113
      $region50: #{token_swap_mamba.1} parent=35 // pred_check_branch
        %310 = sbr.rel (%p308) target = $region52
      $region51: #{token_swap_mamba.1} parent=35 // pred_region
        %p311 = scmp.lt.s32.totalorder %s15, 1
        %s312 = scalar_select %p311, %s15, 1
        %s313 = smul.addr %s312, 8
        %s314 = smul.addr %s313, 8
        %s315 = scalar_lea.vmem %s3, %s314
      $region52: #{token_swap_mamba.1} parent=35 // pred_fallthru
        _
    $region36: #{token_swap_mamba.1} parent=5 // pred_fallthru
      _
    %p316 = scmp.le.s32.totalorder 1, %s15
    %p317 = scmp.lt.s32.totalorder %s15, 3
    %p318 = pnand %p316, %p317
    %p319 = pneg %p318
    // Predicated region
    $region53: #{token_swap_mamba.1} parent=5 // pred_check
      _
    $region54: #{token_swap_mamba.1} parent=5 // pred_check_branch
      %321 = sbr.rel (%p318) target = $region56
    $region55: #{token_swap_mamba.1} parent=5 // pred_region
      %s322 = ssub.s32 %s15, 1
      %p323 = scmp.lt.s32.totalorder %s20, 1
      %s324 = scalar_select %p323, %s20, 1
      %s325 = smul.addr %s324, 8
      %s326 = smul.addr %s325, 8
      %s327 = scalar_lea.vmem %s0, %s326
      %p328 = pneg %p41
      %p329 = pneg %p38
      %p330 = scmp.lt.s32.totalorder %s20, 1
      %s331 = scalar_select %p330, %s20, 1
      %s332 = smul.addr %s331, 8
      %s333 = smul.addr %s332, 8
      %s334 = scalar_lea.vmem %s1, %s333
      %p335 = pneg %p67
      %p336 = pneg %p64
      %p337 = scmp.lt.s32.totalorder %s20, 1
      %s338 = scalar_select %p337, %s20, 1
      %s339 = smul.addr %s338, 8
      %s340 = smul.addr %s339, 8
      %s341 = scalar_lea.vmem %s2, %s340
      %p342 = pneg %p93
      %p343 = pneg %p90
      %p344 = scmp.lt.s32.totalorder %s20, 1
      %s345 = scalar_select %p344, %s20, 1
      %s346 = smul.addr %s345, 8
      %s347 = smul.addr %s346, 8
      %s348 = scalar_lea.vmem %s3, %s347
      %p349 = pneg %p119
      %p350 = pneg %p116
      %p351 = pneg %p140
      %p352 = pneg %p137
      %p353 = pneg %p161
      %p354 = pneg %p158
      %p355 = pneg %p182
      %p356 = pneg %p179
      %p357 = pneg %p203
      %p358 = pneg %p200
      %p359 = pneg %p224
      %p360 = pneg %p221
      %p361 = pneg %p250
      %p362 = pneg %p247
      %p363 = scmp.lt.s32.totalorder %s20, 1
      %s364 = scalar_select %p363, %s20, 1
      %s365 = smul.addr %s364, 8
      %s366 = smul.addr %s365, 8
      %s367 = scalar_lea.vmem %s9, %s366
      %p368 = scmp.lt.s32.totalorder %s20, 1
      %s369 = scalar_select %p368, %s20, 1
      %s370 = smul.addr %s369, 8
      %s371 = smul.addr %s370, 8
      %s372 = scalar_lea.vmem %s0, %s371
      %p373 = scmp.lt.s32.totalorder %s20, 1
      %s374 = scalar_select %p373, %s20, 1
      %s375 = smul.addr %s374, 8
      %s376 = smul.addr %s375, 8
      %s377 = scalar_lea.vmem %s1, %s376
      %p378 = scmp.lt.s32.totalorder %s20, 1
      %s379 = scalar_select %p378, %s20, 1
      %s380 = smul.addr %s379, 8
      %s381 = smul.addr %s380, 8
      %s382 = scalar_lea.vmem %s2, %s381
      %p383 = scmp.lt.s32.totalorder %s20, 1
      %s384 = scalar_select %p383, %s20, 1
      %s385 = smul.addr %s384, 8
      %s386 = smul.addr %s385, 8
      %s387 = scalar_lea.vmem %s3, %s386
      %p388 = scmp.lt.s32.totalorder %s20, 1
      %s389 = scalar_select %p388, %s20, 1
      %s390 = smul.addr %s389, 8
      %s391 = smul.addr %s390, 8
      %s392 = scalar_lea.vmem %s9, %s391
      %v394 = vld [vmem:[%s4] sm:$0xff]
      %v395 = vld [vmem:[%s4 + $0x8] sm:$0xff]
      %v396 = vld [vmem:[%s4 + $0x10] sm:$0xff]
      %v397 = vld [vmem:[%s372] sm:$0xff]
      %v398 = vld [vmem:[%s372 + $0x8] sm:$0xff]
      %v399 = vld [vmem:[%s372 + $0x10] sm:$0xff]
      %v400 = vld [vmem:[%s372 + $0x18] sm:$0xff]
      %v401 = vld [vmem:[%s372 + $0x20] sm:$0xff]
      %v402 = vld [vmem:[%s372 + $0x28] sm:$0xff]
      %v403 = vld [vmem:[%s372 + $0x30] sm:$0xff]
      %v404 = vld [vmem:[%s372 + $0x38] sm:$0xff]
      %v405 = vld [vmem:[%s382] sm:$0xff]
      %v406 = vld [vmem:[%s382 + $0x8] sm:$0xff]
      %v407 = vld [vmem:[%s382 + $0x10] sm:$0xff]
      %v408 = vld [vmem:[%s382 + $0x18] sm:$0xff]
      %v409 = vld [vmem:[%s382 + $0x20] sm:$0xff]
      %v410 = vld [vmem:[%s382 + $0x28] sm:$0xff]
      %v411 = vld [vmem:[%s382 + $0x30] sm:$0xff]
      %v412 = vld [vmem:[%s382 + $0x38] sm:$0xff]
      %v413 = vadd.f32 %v397, %v405
      %v414 = vadd.f32 %v398, %v406
      %v415 = vadd.f32 %v399, %v407
      %v416 = vadd.f32 %v400, %v408
      %v417 = vadd.f32 %v401, %v409
      %v418 = vadd.f32 %v402, %v410
      %v419 = vadd.f32 %v403, %v411
      %v420 = vadd.f32 %v404, %v412
      %v421 = vld [vmem:[%s377] sm:$0xff]
      %v422 = vld [vmem:[%s377 + $0x8] sm:$0xff]
      %v423 = vld [vmem:[%s377 + $0x10] sm:$0xff]
      %v424 = vld [vmem:[%s377 + $0x18] sm:$0xff]
      %v425 = vld [vmem:[%s377 + $0x20] sm:$0xff]
      %v426 = vld [vmem:[%s377 + $0x28] sm:$0xff]
      %v427 = vld [vmem:[%s377 + $0x30] sm:$0xff]
      %v428 = vld [vmem:[%s377 + $0x38] sm:$0xff]
      %v429 = vld [vmem:[%s387] sm:$0xff]
      %v430 = vld [vmem:[%s387 + $0x8] sm:$0xff]
      %v431 = vld [vmem:[%s387 + $0x10] sm:$0xff]
      %v432 = vld [vmem:[%s387 + $0x18] sm:$0xff]
      %v433 = vld [vmem:[%s387 + $0x20] sm:$0xff]
      %v434 = vld [vmem:[%s387 + $0x28] sm:$0xff]
      %v435 = vld [vmem:[%s387 + $0x30] sm:$0xff]
      %v436 = vld [vmem:[%s387 + $0x38] sm:$0xff]
      %v437 = vadd.f32 %v421, %v429
      %v438 = vadd.f32 %v422, %v430
      %v439 = vadd.f32 %v423, %v431
      %v440 = vadd.f32 %v424, %v432
      %v441 = vadd.f32 %v425, %v433
      %v442 = vadd.f32 %v426, %v434
      %v443 = vadd.f32 %v427, %v435
      %v444 = vadd.f32 %v428, %v436
      %453 = vrot.lane.b32.xlu0 %v437, 32
      %v454 = vpop.permute.xlu0 %453
      %455 = vrot.lane.b32.xlu0 %v438, 32
      %v456 = vpop.permute.xlu0 %455
      %457 = vrot.lane.b32.xlu0 %v439, 32
      %v458 = vpop.permute.xlu0 %457
      %459 = vrot.lane.b32.xlu0 %v440, 32
      %v460 = vpop.permute.xlu0 %459
      %461 = vrot.lane.b32.xlu0 %v441, 32
      %v462 = vpop.permute.xlu0 %461
      %463 = vrot.lane.b32.xlu0 %v442, 32
      %v464 = vpop.permute.xlu0 %463
      %465 = vrot.lane.b32.xlu0 %v443, 32
      %v466 = vpop.permute.xlu0 %465
      %467 = vrot.lane.b32.xlu0 %v444, 32
      %v468 = vpop.permute.xlu0 %467
      %vm477 = vcmask 261120
      %v478 = vsel %vm477, %v413, %v454
      %v479 = vsel %vm477, %v414, %v456
      %v480 = vsel %vm477, %v415, %v458
      %v481 = vsel %vm477, %v416, %v460
      %v482 = vsel %vm477, %v417, %v462
      %v483 = vsel %vm477, %v418, %v464
      %v484 = vsel %vm477, %v419, %v466
      %v485 = vsel %vm477, %v420, %v468
      %v486 = vsel %vm477, %v413, 0.0
      %487 = vadd.xlane.f32.xlu0 %v486
      %v488 = vpop.xlane.xlu0 %487
      %v489 = vsel %vm477, %v414, 0.0
      %490 = vadd.xlane.f32.xlu0 %v489
      %v491 = vpop.xlane.xlu0 %490
      %v492 = vsel %vm477, %v415, 0.0
      %493 = vadd.xlane.f32.xlu0 %v492
      %v494 = vpop.xlane.xlu0 %493
      %v495 = vsel %vm477, %v416, 0.0
      %496 = vadd.xlane.f32.xlu0 %v495
      %v497 = vpop.xlane.xlu0 %496
      %v498 = vsel %vm477, %v417, 0.0
      %499 = vadd.xlane.f32.xlu0 %v498
      %v500 = vpop.xlane.xlu0 %499
      %v501 = vsel %vm477, %v418, 0.0
      %502 = vadd.xlane.f32.xlu0 %v501
      %v503 = vpop.xlane.xlu0 %502
      %v504 = vsel %vm477, %v419, 0.0
      %505 = vadd.xlane.f32.xlu0 %v504
      %v506 = vpop.xlane.xlu0 %505
      %v507 = vsel %vm477, %v420, 0.0
      %508 = vadd.xlane.f32.xlu0 %v507
      %v509 = vpop.xlane.xlu0 %508
      %v510 = vrcp.pop 32.0
      %v511 = vmul.f32 %v488, %v510
      %v512 = vmul.f32 %v491, %v510
      %v513 = vmul.f32 %v494, %v510
      %v514 = vmul.f32 %v497, %v510
      %v515 = vmul.f32 %v500, %v510
      %v516 = vmul.f32 %v503, %v510
      %v517 = vmul.f32 %v506, %v510
      %v518 = vmul.f32 %v509, %v510
      %v519 = vsub.f32 %v413, %v511
      %v520 = vsub.f32 %v414, %v512
      %v521 = vsub.f32 %v415, %v513
      %v522 = vsub.f32 %v416, %v514
      %v523 = vsub.f32 %v417, %v515
      %v524 = vsub.f32 %v418, %v516
      %v525 = vsub.f32 %v419, %v517
      %v526 = vsub.f32 %v420, %v518
      %v527 = vmul.f32 %v519, %v519
      %v528 = vmul.f32 %v520, %v520
      %v529 = vmul.f32 %v521, %v521
      %v530 = vmul.f32 %v522, %v522
      %v531 = vmul.f32 %v523, %v523
      %v532 = vmul.f32 %v524, %v524
      %v533 = vmul.f32 %v525, %v525
      %v534 = vmul.f32 %v526, %v526
      %v535 = vsel %vm477, %v527, 0.0
      %536 = vadd.xlane.f32.xlu0 %v535
      %v537 = vpop.xlane.xlu0 %536
      %v538 = vsel %vm477, %v528, 0.0
      %539 = vadd.xlane.f32.xlu0 %v538
      %v540 = vpop.xlane.xlu0 %539
      %v541 = vsel %vm477, %v529, 0.0
      %542 = vadd.xlane.f32.xlu0 %v541
      %v543 = vpop.xlane.xlu0 %542
      %v544 = vsel %vm477, %v530, 0.0
      %545 = vadd.xlane.f32.xlu0 %v544
      %v546 = vpop.xlane.xlu0 %545
      %v547 = vsel %vm477, %v531, 0.0
      %548 = vadd.xlane.f32.xlu0 %v547
      %v549 = vpop.xlane.xlu0 %548
      %v550 = vsel %vm477, %v532, 0.0
      %551 = vadd.xlane.f32.xlu0 %v550
      %v552 = vpop.xlane.xlu0 %551
      %v553 = vsel %vm477, %v533, 0.0
      %554 = vadd.xlane.f32.xlu0 %v553
      %v555 = vpop.xlane.xlu0 %554
      %v556 = vsel %vm477, %v534, 0.0
      %557 = vadd.xlane.f32.xlu0 %v556
      %v558 = vpop.xlane.xlu0 %557
      %v559 = vmul.f32 %v537, %v510
      %v560 = vmul.f32 %v540, %v510
      %v561 = vmul.f32 %v543, %v510
      %v562 = vmul.f32 %v546, %v510
      %v563 = vmul.f32 %v549, %v510
      %v564 = vmul.f32 %v552, %v510
      %v565 = vmul.f32 %v555, %v510
      %v566 = vmul.f32 %v558, %v510
      %v567 = vadd.f32 %v559, 1e-05
      %v568 = vadd.f32 %v560, 1e-05
      %v569 = vadd.f32 %v561, 1e-05
      %v570 = vadd.f32 %v562, 1e-05
      %v571 = vadd.f32 %v563, 1e-05
      %v572 = vadd.f32 %v564, 1e-05
      %v573 = vadd.f32 %v565, 1e-05
      %v574 = vadd.f32 %v566, 1e-05
      %v575 = vrsqrt.pop %v567
      %v576 = vmul.f32 %v567, %v575
      %vm577 = vcmp.eq.f32.partialorder %v567, inf
      %v578 = vsel %vm577, %v567, %v576
      %vm579 = vcmp.eq.f32.partialorder %v567, 0.0
      %v580 = vand.u32 %v567, 2147483648
      %v581 = vsel %vm579, %v580, %v578
      %v582 = vrsqrt.pop %v568
      %v583 = vmul.f32 %v568, %v582
      %vm584 = vcmp.eq.f32.partialorder %v568, inf
      %v585 = vsel %vm584, %v568, %v583
      %vm586 = vcmp.eq.f32.partialorder %v568, 0.0
      %v587 = vand.u32 %v568, 2147483648
      %v588 = vsel %vm586, %v587, %v585
      %v589 = vrsqrt.pop %v569
      %v590 = vmul.f32 %v569, %v589
      %vm591 = vcmp.eq.f32.partialorder %v569, inf
      %v592 = vsel %vm591, %v569, %v590
      %vm593 = vcmp.eq.f32.partialorder %v569, 0.0
      %v594 = vand.u32 %v569, 2147483648
      %v595 = vsel %vm593, %v594, %v592
      %v596 = vrsqrt.pop %v570
      %v597 = vmul.f32 %v570, %v596
      %vm598 = vcmp.eq.f32.partialorder %v570, inf
      %v599 = vsel %vm598, %v570, %v597
      %vm600 = vcmp.eq.f32.partialorder %v570, 0.0
      %v601 = vand.u32 %v570, 2147483648
      %v602 = vsel %vm600, %v601, %v599
      %v603 = vrsqrt.pop %v571
      %v604 = vmul.f32 %v571, %v603
      %vm605 = vcmp.eq.f32.partialorder %v571, inf
      %v606 = vsel %vm605, %v571, %v604
      %vm607 = vcmp.eq.f32.partialorder %v571, 0.0
      %v608 = vand.u32 %v571, 2147483648
      %v609 = vsel %vm607, %v608, %v606
      %v610 = vrsqrt.pop %v572
      %v611 = vmul.f32 %v572, %v610
      %vm612 = vcmp.eq.f32.partialorder %v572, inf
      %v613 = vsel %vm612, %v572, %v611
      %vm614 = vcmp.eq.f32.partialorder %v572, 0.0
      %v615 = vand.u32 %v572, 2147483648
      %v616 = vsel %vm614, %v615, %v613
      %v617 = vrsqrt.pop %v573
      %v618 = vmul.f32 %v573, %v617
      %vm619 = vcmp.eq.f32.partialorder %v573, inf
      %v620 = vsel %vm619, %v573, %v618
      %vm621 = vcmp.eq.f32.partialorder %v573, 0.0
      %v622 = vand.u32 %v573, 2147483648
      %v623 = vsel %vm621, %v622, %v620
      %v624 = vrsqrt.pop %v574
      %v625 = vmul.f32 %v574, %v624
      %vm626 = vcmp.eq.f32.partialorder %v574, inf
      %v627 = vsel %vm626, %v574, %v625
      %vm628 = vcmp.eq.f32.partialorder %v574, 0.0
      %v629 = vand.u32 %v574, 2147483648
      %v630 = vsel %vm628, %v629, %v627
      %v631 = vrcp.pop %v581
      %v632 = vmul.f32 %v519, %v631
      %v633 = vrcp.pop %v588
      %v634 = vmul.f32 %v520, %v633
      %v635 = vrcp.pop %v595
      %v636 = vmul.f32 %v521, %v635
      %v637 = vrcp.pop %v602
      %v638 = vmul.f32 %v522, %v637
      %v639 = vrcp.pop %v609
      %v640 = vmul.f32 %v523, %v639
      %v641 = vrcp.pop %v616
      %v642 = vmul.f32 %v524, %v641
      %v643 = vrcp.pop %v623
      %v644 = vmul.f32 %v525, %v643
      %v645 = vrcp.pop %v630
      %v646 = vmul.f32 %v526, %v645
      %v647 = vlaneseq
      %v648 = vshrl.u32 %v647, 7
      %v649 = vsub.s32 7, %v648
      %v650 = vrot.slane %v396, %v649
      %v651 = vmul.f32 %v632, %v650
      %v652 = vmul.f32 %v634, %v650
      %v653 = vmul.f32 %v636, %v650
      %v654 = vmul.f32 %v638, %v650
      %v655 = vmul.f32 %v640, %v650
      %v656 = vmul.f32 %v642, %v650
      %v657 = vmul.f32 %v644, %v650
      %v658 = vmul.f32 %v646, %v650
      %660 = vrot.lane.b32.xlu0 %v650, 64
      %v661 = vpop.permute.xlu0 %660
      %v663 = vadd.f32 %v651, %v661
      %v664 = vadd.f32 %v652, %v661
      %v665 = vadd.f32 %v653, %v661
      %v666 = vadd.f32 %v654, %v661
      %v667 = vadd.f32 %v655, %v661
      %v668 = vadd.f32 %v656, %v661
      %v669 = vadd.f32 %v657, %v661
      %v670 = vadd.f32 %v658, %v661
      %v671 = vsel %vm477, %v437, 0.0
      %672 = vadd.xlane.f32.xlu0 %v671
      %v673 = vpop.xlane.xlu0 %672
      %v674 = vsel %vm477, %v438, 0.0
      %675 = vadd.xlane.f32.xlu0 %v674
      %v676 = vpop.xlane.xlu0 %675
      %v677 = vsel %vm477, %v439, 0.0
      %678 = vadd.xlane.f32.xlu0 %v677
      %v679 = vpop.xlane.xlu0 %678
      %v680 = vsel %vm477, %v440, 0.0
      %681 = vadd.xlane.f32.xlu0 %v680
      %v682 = vpop.xlane.xlu0 %681
      %v683 = vsel %vm477, %v441, 0.0
      %684 = vadd.xlane.f32.xlu0 %v683
      %v685 = vpop.xlane.xlu0 %684
      %v686 = vsel %vm477, %v442, 0.0
      %687 = vadd.xlane.f32.xlu0 %v686
      %v688 = vpop.xlane.xlu0 %687
      %v689 = vsel %vm477, %v443, 0.0
      %690 = vadd.xlane.f32.xlu0 %v689
      %v691 = vpop.xlane.xlu0 %690
      %v692 = vsel %vm477, %v444, 0.0
      %693 = vadd.xlane.f32.xlu0 %v692
      %v694 = vpop.xlane.xlu0 %693
      %v695 = vmul.f32 %v673, %v510
      %v696 = vmul.f32 %v676, %v510
      %v697 = vmul.f32 %v679, %v510
      %v698 = vmul.f32 %v682, %v510
      %v699 = vmul.f32 %v685, %v510
      %v700 = vmul.f32 %v688, %v510
      %v701 = vmul.f32 %v691, %v510
      %v702 = vmul.f32 %v694, %v510
      %v703 = vsub.f32 %v437, %v695
      %v704 = vsub.f32 %v438, %v696
      %v705 = vsub.f32 %v439, %v697
      %v706 = vsub.f32 %v440, %v698
      %v707 = vsub.f32 %v441, %v699
      %v708 = vsub.f32 %v442, %v700
      %v709 = vsub.f32 %v443, %v701
      %v710 = vsub.f32 %v444, %v702
      %v711 = vmul.f32 %v703, %v703
      %v712 = vmul.f32 %v704, %v704
      %v713 = vmul.f32 %v705, %v705
      %v714 = vmul.f32 %v706, %v706
      %v715 = vmul.f32 %v707, %v707
      %v716 = vmul.f32 %v708, %v708
      %v717 = vmul.f32 %v709, %v709
      %v718 = vmul.f32 %v710, %v710
      %v719 = vsel %vm477, %v711, 0.0
      %720 = vadd.xlane.f32.xlu0 %v719
      %v721 = vpop.xlane.xlu0 %720
      %v722 = vsel %vm477, %v712, 0.0
      %723 = vadd.xlane.f32.xlu0 %v722
      %v724 = vpop.xlane.xlu0 %723
      %v725 = vsel %vm477, %v713, 0.0
      %726 = vadd.xlane.f32.xlu0 %v725
      %v727 = vpop.xlane.xlu0 %726
      %v728 = vsel %vm477, %v714, 0.0
      %729 = vadd.xlane.f32.xlu0 %v728
      %v730 = vpop.xlane.xlu0 %729
      %v731 = vsel %vm477, %v715, 0.0
      %732 = vadd.xlane.f32.xlu0 %v731
      %v733 = vpop.xlane.xlu0 %732
      %v734 = vsel %vm477, %v716, 0.0
      %735 = vadd.xlane.f32.xlu0 %v734
      %v736 = vpop.xlane.xlu0 %735
      %v737 = vsel %vm477, %v717, 0.0
      %738 = vadd.xlane.f32.xlu0 %v737
      %v739 = vpop.xlane.xlu0 %738
      %v740 = vsel %vm477, %v718, 0.0
      %741 = vadd.xlane.f32.xlu0 %v740
      %v742 = vpop.xlane.xlu0 %741
      %v743 = vmul.f32 %v721, %v510
      %v744 = vmul.f32 %v724, %v510
      %v745 = vmul.f32 %v727, %v510
      %v746 = vmul.f32 %v730, %v510
      %v747 = vmul.f32 %v733, %v510
      %v748 = vmul.f32 %v736, %v510
      %v749 = vmul.f32 %v739, %v510
      %v750 = vmul.f32 %v742, %v510
      %v751 = vadd.f32 %v743, 1e-05
      %v752 = vadd.f32 %v744, 1e-05
      %v753 = vadd.f32 %v745, 1e-05
      %v754 = vadd.f32 %v746, 1e-05
      %v755 = vadd.f32 %v747, 1e-05
      %v756 = vadd.f32 %v748, 1e-05
      %v757 = vadd.f32 %v749, 1e-05
      %v758 = vadd.f32 %v750, 1e-05
      %v759 = vrsqrt.pop %v751
      %v760 = vmul.f32 %v751, %v759
      %vm761 = vcmp.eq.f32.partialorder %v751, inf
      %v762 = vsel %vm761, %v751, %v760
      %vm763 = vcmp.eq.f32.partialorder %v751, 0.0
      %v764 = vand.u32 %v751, 2147483648
      %v765 = vsel %vm763, %v764, %v762
      %v766 = vrsqrt.pop %v752
      %v767 = vmul.f32 %v752, %v766
      %vm768 = vcmp.eq.f32.partialorder %v752, inf
      %v769 = vsel %vm768, %v752, %v767
      %vm770 = vcmp.eq.f32.partialorder %v752, 0.0
      %v771 = vand.u32 %v752, 2147483648
      %v772 = vsel %vm770, %v771, %v769
      %v773 = vrsqrt.pop %v753
      %v774 = vmul.f32 %v753, %v773
      %vm775 = vcmp.eq.f32.partialorder %v753, inf
      %v776 = vsel %vm775, %v753, %v774
      %vm777 = vcmp.eq.f32.partialorder %v753, 0.0
      %v778 = vand.u32 %v753, 2147483648
      %v779 = vsel %vm777, %v778, %v776
      %v780 = vrsqrt.pop %v754
      %v781 = vmul.f32 %v754, %v780
      %vm782 = vcmp.eq.f32.partialorder %v754, inf
      %v783 = vsel %vm782, %v754, %v781
      %vm784 = vcmp.eq.f32.partialorder %v754, 0.0
      %v785 = vand.u32 %v754, 2147483648
      %v786 = vsel %vm784, %v785, %v783
      %v787 = vrsqrt.pop %v755
      %v788 = vmul.f32 %v755, %v787
      %vm789 = vcmp.eq.f32.partialorder %v755, inf
      %v790 = vsel %vm789, %v755, %v788
      %vm791 = vcmp.eq.f32.partialorder %v755, 0.0
      %v792 = vand.u32 %v755, 2147483648
      %v793 = vsel %vm791, %v792, %v790
      %v794 = vrsqrt.pop %v756
      %v795 = vmul.f32 %v756, %v794
      %vm796 = vcmp.eq.f32.partialorder %v756, inf
      %v797 = vsel %vm796, %v756, %v795
      %vm798 = vcmp.eq.f32.partialorder %v756, 0.0
      %v799 = vand.u32 %v756, 2147483648
      %v800 = vsel %vm798, %v799, %v797
      %v801 = vrsqrt.pop %v757
      %v802 = vmul.f32 %v757, %v801
      %vm803 = vcmp.eq.f32.partialorder %v757, inf
      %v804 = vsel %vm803, %v757, %v802
      %vm805 = vcmp.eq.f32.partialorder %v757, 0.0
      %v806 = vand.u32 %v757, 2147483648
      %v807 = vsel %vm805, %v806, %v804
      %v808 = vrsqrt.pop %v758
      %v809 = vmul.f32 %v758, %v808
      %vm810 = vcmp.eq.f32.partialorder %v758, inf
      %v811 = vsel %vm810, %v758, %v809
      %vm812 = vcmp.eq.f32.partialorder %v758, 0.0
      %v813 = vand.u32 %v758, 2147483648
      %v814 = vsel %vm812, %v813, %v811
      %v815 = vrcp.pop %v765
      %v816 = vmul.f32 %v703, %v815
      %v817 = vrcp.pop %v772
      %v818 = vmul.f32 %v704, %v817
      %v819 = vrcp.pop %v779
      %v820 = vmul.f32 %v705, %v819
      %v821 = vrcp.pop %v786
      %v822 = vmul.f32 %v706, %v821
      %v823 = vrcp.pop %v793
      %v824 = vmul.f32 %v707, %v823
      %v825 = vrcp.pop %v800
      %v826 = vmul.f32 %v708, %v825
      %v827 = vrcp.pop %v807
      %v828 = vmul.f32 %v709, %v827
      %v829 = vrcp.pop %v814
      %v830 = vmul.f32 %v710, %v829
      %831 = vrot.lane.b32.xlu0 %v650, 96
      %v832 = vpop.permute.xlu0 %831
      %v834 = vmul.f32 %v816, %v832
      %v835 = vmul.f32 %v818, %v832
      %v836 = vmul.f32 %v820, %v832
      %v837 = vmul.f32 %v822, %v832
      %v838 = vmul.f32 %v824, %v832
      %v839 = vmul.f32 %v826, %v832
      %v840 = vmul.f32 %v828, %v832
      %v841 = vmul.f32 %v830, %v832
      %842 = vrot.lane.b32.xlu0 %v650, 32
      %v843 = vpop.permute.xlu0 %842
      %v845 = vadd.f32 %v834, %v843
      %v846 = vadd.f32 %v835, %v843
      %v847 = vadd.f32 %v836, %v843
      %v848 = vadd.f32 %v837, %v843
      %v849 = vadd.f32 %v838, %v843
      %v850 = vadd.f32 %v839, %v843
      %v851 = vadd.f32 %v840, %v843
      %v852 = vadd.f32 %v841, %v843
      %861 = vrot.lane.b32.xlu0 %v845, 32
      %v862 = vpop.permute.xlu0 %861
      %863 = vrot.lane.b32.xlu0 %v846, 32
      %v864 = vpop.permute.xlu0 %863
      %865 = vrot.lane.b32.xlu0 %v847, 32
      %v866 = vpop.permute.xlu0 %865
      %867 = vrot.lane.b32.xlu0 %v848, 32
      %v868 = vpop.permute.xlu0 %867
      %869 = vrot.lane.b32.xlu0 %v849, 32
      %v870 = vpop.permute.xlu0 %869
      %871 = vrot.lane.b32.xlu0 %v850, 32
      %v872 = vpop.permute.xlu0 %871
      %873 = vrot.lane.b32.xlu0 %v851, 32
      %v874 = vpop.permute.xlu0 %873
      %875 = vrot.lane.b32.xlu0 %v852, 32
      %v876 = vpop.permute.xlu0 %875
      %v885 = vsel %vm477, %v663, %v862
      %v886 = vsel %vm477, %v664, %v864
      %v887 = vsel %vm477, %v665, %v866
      %v888 = vsel %vm477, %v666, %v868
      %v889 = vsel %vm477, %v667, %v870
      %v890 = vsel %vm477, %v668, %v872
      %v891 = vsel %vm477, %v669, %v874
      %v892 = vsel %vm477, %v670, %v876
      %v893 = vpack.c.bf16 %v886, %v885
      %v894 = vpack.c.bf16 %v888, %v887
      %v895 = vpack.c.bf16 %v890, %v889
      %v896 = vpack.c.bf16 %v892, %v891
      %v897 = vld [vmem:[%s5] sm:$0xff]
      %v898 = vld [vmem:[%s5 + $0x8] sm:$0xff]
      %v899 = vld [vmem:[%s5 + $0x10] sm:$0xff]
      %v900 = vld [vmem:[%s5 + $0x18] sm:$0xff]
      %v901 = vld [vmem:[%s5 + $0x20] sm:$0xff]
      %v902 = vld [vmem:[%s5 + $0x28] sm:$0xff]
      %v903 = vld [vmem:[%s5 + $0x30] sm:$0xff]
      %v904 = vld [vmem:[%s5 + $0x38] sm:$0xff]
      %v913 = vunpack.c.l.b16 %v897
      %v914 = vunpack.c.h.b16 %v897
      %v915 = vunpack.c.l.b16 %v898
      %v916 = vunpack.c.h.b16 %v898
      %v917 = vunpack.c.l.b16 %v899
      %v918 = vunpack.c.h.b16 %v899
      %v919 = vunpack.c.l.b16 %v900
      %v920 = vunpack.c.h.b16 %v900
      %v921 = vunpack.c.l.b16 %v901
      %v922 = vunpack.c.h.b16 %v901
      %v923 = vunpack.c.l.b16 %v902
      %v924 = vunpack.c.h.b16 %v902
      %v925 = vunpack.c.l.b16 %v903
      %v926 = vunpack.c.h.b16 %v903
      %v927 = vunpack.c.l.b16 %v904
      %v928 = vunpack.c.h.b16 %v904
      %v929 = vpack.c.b16 %v915, %v913
      %v930 = vpack.c.b16 %v916, %v914
      %v931 = vpack.c.b16 %v919, %v917
      %v932 = vpack.c.b16 %v920, %v918
      %v933 = vpack.c.b16 %v923, %v921
      %v934 = vpack.c.b16 %v924, %v922
      %v935 = vpack.c.b16 %v927, %v925
      %v936 = vpack.c.b16 %v928, %v926
      %vm945 = vcmask 523264
      %v947 = vsel %vm945, %v893, 0
      %v950 = vsel %vm945, %v894, 0
      %v953 = vsel %vm945, %v895, 0
      %v956 = vsel %vm945, %v896, 0
      %958 = vmatprep.subr.bf16.mxu0 %v930
      %959 = vmatpush1.bf16.msra.mxu0 %v929
      %960 = vmatprep.subr.bf16.mxu0 %v932
      %961 = vmatpush1.bf16.msra.mxu0 %v931
      %962 = vmatprep.subr.bf16.mxu0 %v934
      %963 = vmatpush1.bf16.msra.mxu0 %v933
      %964 = vmatprep.subr.bf16.mxu0 %v936
      %965 = vmatpush1.bf16.msra.mxu0 %v935
      %966 = vmatprep.subr.bf16.mxu0 0
      %967 = vmatpush1.bf16.msra.mxu0 0
      %968 = vmatprep.subr.bf16.mxu0 0
      %969 = vmatpush1.bf16.msra.mxu0 0
      %970 = vmatprep.subr.bf16.mxu0 0
      %971 = vmatpush1.bf16.msra.mxu0 0
      %972 = vmatprep.subr.bf16.mxu0 0
      %973 = vmatpush1.bf16.msra.mxu0 0
      %974 = vmatprep.subr.bf16.mxu0 0
      %975 = vmatpush1.bf16.msra.mxu0 0
      %976 = vmatprep.subr.bf16.mxu0 0
      %977 = vmatpush1.bf16.msra.mxu0 0
      %978 = vmatprep.subr.bf16.mxu0 0
      %979 = vmatpush1.bf16.msra.mxu0 0
      %980 = vmatprep.subr.bf16.mxu0 0
      %981 = vmatpush1.bf16.msra.mxu0 0
      %982 = vmatprep.subr.bf16.mxu0 0
      %983 = vmatpush1.bf16.msra.mxu0 0
      %984 = vmatprep.subr.bf16.mxu0 0
      %985 = vmatpush1.bf16.msra.mxu0 0
      %986 = vmatprep.subr.bf16.mxu0 0
      %987 = vmatpush1.bf16.msra.mxu0 0
      %988 = vmatprep.subr.bf16.mxu0 0
      %989 = vmatpush1.bf16.msra.mxu0 0
      %990 = vmatprep.mubr.bf16.mxu0 0
      %991 = vmatmul.mubr.bf16.gmra.mrb[0].mxu0 %v947
      %v992 = vpop.f32.mrb[0].mxu0
      %v993 = vadd.f32 0.0, %v992
      %v994 = vpop.f32.mrb[0].mxu0
      %v995 = vadd.f32 0.0, %v994
      %v996 = vpop.f32.mrb[0].mxu0
      %v997 = vadd.f32 0.0, %v996
      %v998 = vpop.f32.mrb[0].mxu0
      %v999 = vadd.f32 0.0, %v998
      %1000 = vmatprep.mubr.bf16.mxu0 0
      %1001 = vmatmul.mubr.bf16.gmra.mrb[0].mxu0 %v950
      %v1002 = vpop.f32.mrb[0].mxu0
      %v1003 = vadd.f32 0.0, %v1002
      %v1004 = vpop.f32.mrb[0].mxu0
      %v1005 = vadd.f32 0.0, %v1004
      %v1006 = vpop.f32.mrb[0].mxu0
      %v1007 = vadd.f32 0.0, %v1006
      %v1008 = vpop.f32.mrb[0].mxu0
      %v1009 = vadd.f32 0.0, %v1008
      %1010 = vmatprep.mubr.bf16.mxu0 0
      %1011 = vmatmul.mubr.bf16.gmra.mrb[0].mxu0 %v953
      %v1012 = vpop.f32.mrb[0].mxu0
      %v1013 = vadd.f32 0.0, %v1012
      %v1014 = vpop.f32.mrb[0].mxu0
      %v1015 = vadd.f32 0.0, %v1014
      %v1016 = vpop.f32.mrb[0].mxu0
      %v1017 = vadd.f32 0.0, %v1016
      %v1018 = vpop.f32.mrb[0].mxu0
      %v1019 = vadd.f32 0.0, %v1018
      %1020 = vmatprep.mubr.bf16.mxu0 0
      %1021 = vmatmul.mubr.bf16.gmra.mrb[0].mxu0 %v956
      %v1022 = vpop.f32.mrb[0].mxu0
      %v1023 = vadd.f32 0.0, %v1022
      %v1024 = vpop.f32.mrb[0].mxu0
      %v1025 = vadd.f32 0.0, %v1024
      %v1026 = vpop.f32.mrb[0].mxu0
      %v1027 = vadd.f32 0.0, %v1026
      %v1028 = vpop.f32.mrb[0].mxu0
      %v1029 = vadd.f32 0.0, %v1028
      %1030 = vdwg.mxu0
      %v1031 = vlaneseq
      %v1032 = vshrl.u32 %v1031, 7
      %v1033 = vadd.s32 %v1032, 8
      %v1034 = vadd.s32 %v1032, 16
      %v1035 = vadd.s32 %v1032, 24
      %v1036 = vadd.s32 %v1032, 32
      %v1037 = vadd.s32 %v1032, 40
      %v1038 = vadd.s32 %v1032, 48
      %v1039 = vadd.s32 %v1032, 56
      %v1040 = vlaneseq
      %v1041 = vshrl.u32 %v1040, 7
      %v1042 = vsub.s32 3, %v1041
      %v1043 = vrot.slane %v396, %v1042
      %v1044 = vmul.f32 %v993, %v1043
      %v1045 = vmul.f32 %v997, %v1043
      %v1046 = vmul.f32 %v1003, %v1043
      %v1047 = vmul.f32 %v1007, %v1043
      %v1048 = vmul.f32 %v1013, %v1043
      %v1049 = vmul.f32 %v1017, %v1043
      %v1050 = vmul.f32 %v1023, %v1043
      %v1051 = vmul.f32 %v1027, %v1043
      %vm1052 = vcmp.ge.s32.totalorder %v1032, 3
      %vm1053 = vcmp.ge.s32.totalorder %v1033, 3
      %vm1054 = vcmp.ge.s32.totalorder %v1034, 3
      %vm1055 = vcmp.ge.s32.totalorder %v1035, 3
      %vm1056 = vcmp.ge.s32.totalorder %v1036, 3
      %vm1057 = vcmp.ge.s32.totalorder %v1037, 3
      %vm1058 = vcmp.ge.s32.totalorder %v1038, 3
      %vm1059 = vcmp.ge.s32.totalorder %v1039, 3
      %v1061 = vrot.slane %v1027, 5
      %vm1070 = vcmask 1042432
      %v1071 = vrot.slane %v993, 5
      %v1072 = vrot.slane %v997, 5
      %v1073 = vsel %vm1070, %v1071, %v1072
      %v1074 = vrot.slane %v1003, 5
      %v1075 = vsel %vm1070, %v1072, %v1074
      %v1076 = vrot.slane %v1007, 5
      %v1077 = vsel %vm1070, %v1074, %v1076
      %v1078 = vrot.slane %v1013, 5
      %v1079 = vsel %vm1070, %v1076, %v1078
      %v1080 = vrot.slane %v1017, 5
      %v1081 = vsel %vm1070, %v1078, %v1080
      %v1082 = vrot.slane %v1023, 5
      %v1083 = vsel %vm1070, %v1080, %v1082
      %v1084 = vsel %vm1070, %v1082, %v1061
      %v1093 = vsel %vm1070, %v1061, %v1071
      %v1094 = vsel %vm1052, %v1093, 0.0
      %v1095 = vsel %vm1053, %v1073, 0.0
      %v1096 = vsel %vm1054, %v1075, 0.0
      %v1097 = vsel %vm1055, %v1077, 0.0
      %v1098 = vsel %vm1056, %v1079, 0.0
      %v1099 = vsel %vm1057, %v1081, 0.0
      %v1100 = vsel %vm1058, %v1083, 0.0
      %v1101 = vsel %vm1059, %v1084, 0.0
      %v1102 = vlaneseq
      %v1103 = vshrl.u32 %v1102, 7
      %v1104 = vsub.s32 0, %v1103
      %v1105 = vrot.slane %v396, %v1104
      %v1106 = vmul.f32 %v1094, %v1105
      %v1107 = vmul.f32 %v1095, %v1105
      %v1108 = vmul.f32 %v1096, %v1105
      %v1109 = vmul.f32 %v1097, %v1105
      %v1110 = vmul.f32 %v1098, %v1105
      %v1111 = vmul.f32 %v1099, %v1105
      %v1112 = vmul.f32 %v1100, %v1105
      %v1113 = vmul.f32 %v1101, %v1105
      %v1114 = vadd.f32 %v1044, %v1106
      %v1115 = vadd.f32 %v1045, %v1107
      %v1116 = vadd.f32 %v1046, %v1108
      %v1117 = vadd.f32 %v1047, %v1109
      %v1118 = vadd.f32 %v1048, %v1110
      %v1119 = vadd.f32 %v1049, %v1111
      %v1120 = vadd.f32 %v1050, %v1112
      %v1121 = vadd.f32 %v1051, %v1113
      %vm1122 = vcmp.ge.s32.totalorder %v1032, 2
      %vm1123 = vcmp.ge.s32.totalorder %v1033, 2
      %vm1124 = vcmp.ge.s32.totalorder %v1034, 2
      %vm1125 = vcmp.ge.s32.totalorder %v1035, 2
      %vm1126 = vcmp.ge.s32.totalorder %v1036, 2
      %vm1127 = vcmp.ge.s32.totalorder %v1037, 2
      %vm1128 = vcmp.ge.s32.totalorder %v1038, 2
      %vm1129 = vcmp.ge.s32.totalorder %v1039, 2
      %v1130 = vrot.slane %v1027, 6
      %vm1132 = vcmask 1041408
      %v1133 = vrot.slane %v993, 6
      %v1134 = vrot.slane %v997, 6
      %v1135 = vsel %vm1132, %v1133, %v1134
      %v1136 = vrot.slane %v1003, 6
      %v1137 = vsel %vm1132, %v1134, %v1136
      %v1138 = vrot.slane %v1007, 6
      %v1139 = vsel %vm1132, %v1136, %v1138
      %v1140 = vrot.slane %v1013, 6
      %v1141 = vsel %vm1132, %v1138, %v1140
      %v1142 = vrot.slane %v1017, 6
      %v1143 = vsel %vm1132, %v1140, %v1142
      %v1144 = vrot.slane %v1023, 6
      %v1145 = vsel %vm1132, %v1142, %v1144
      %v1146 = vsel %vm1132, %v1144, %v1130
      %v1155 = vsel %vm1132, %v1130, %v1133
      %v1156 = vsel %vm1122, %v1155, 0.0
      %v1157 = vsel %vm1123, %v1135, 0.0
      %v1158 = vsel %vm1124, %v1137, 0.0
      %v1159 = vsel %vm1125, %v1139, 0.0
      %v1160 = vsel %vm1126, %v1141, 0.0
      %v1161 = vsel %vm1127, %v1143, 0.0
      %v1162 = vsel %vm1128, %v1145, 0.0
      %v1163 = vsel %vm1129, %v1146, 0.0
      %v1164 = vlaneseq
      %v1165 = vshrl.u32 %v1164, 7
      %v1166 = vsub.s32 1, %v1165
      %v1167 = vrot.slane %v396, %v1166
      %v1168 = vmul.f32 %v1156, %v1167
      %v1169 = vmul.f32 %v1157, %v1167
      %v1170 = vmul.f32 %v1158, %v1167
      %v1171 = vmul.f32 %v1159, %v1167
      %v1172 = vmul.f32 %v1160, %v1167
      %v1173 = vmul.f32 %v1161, %v1167
      %v1174 = vmul.f32 %v1162, %v1167
      %v1175 = vmul.f32 %v1163, %v1167
      %v1176 = vadd.f32 %v1114, %v1168
      %v1177 = vadd.f32 %v1115, %v1169
      %v1178 = vadd.f32 %v1116, %v1170
      %v1179 = vadd.f32 %v1117, %v1171
      %v1180 = vadd.f32 %v1118, %v1172
      %v1181 = vadd.f32 %v1119, %v1173
      %v1182 = vadd.f32 %v1120, %v1174
      %v1183 = vadd.f32 %v1121, %v1175
      %vm1184 = vcmp.ge.s32.totalorder %v1032, 1
      %vm1185 = vcmp.ge.s32.totalorder %v1033, 1
      %vm1186 = vcmp.ge.s32.totalorder %v1034, 1
      %vm1187 = vcmp.ge.s32.totalorder %v1035, 1
      %vm1188 = vcmp.ge.s32.totalorder %v1036, 1
      %vm1189 = vcmp.ge.s32.totalorder %v1037, 1
      %vm1190 = vcmp.ge.s32.totalorder %v1038, 1
      %vm1191 = vcmp.ge.s32.totalorder %v1039, 1
      %v1192 = vrot.slane %v1027, 7
      %vm1194 = vcmask 1040384
      %v1195 = vrot.slane %v993, 7
      %v1196 = vrot.slane %v997, 7
      %v1197 = vsel %vm1194, %v1195, %v1196
      %v1198 = vrot.slane %v1003, 7
      %v1199 = vsel %vm1194, %v1196, %v1198
      %v1200 = vrot.slane %v1007, 7
      %v1201 = vsel %vm1194, %v1198, %v1200
      %v1202 = vrot.slane %v1013, 7
      %v1203 = vsel %vm1194, %v1200, %v1202
      %v1204 = vrot.slane %v1017, 7
      %v1205 = vsel %vm1194, %v1202, %v1204
      %v1206 = vrot.slane %v1023, 7
      %v1207 = vsel %vm1194, %v1204, %v1206
      %v1208 = vsel %vm1194, %v1206, %v1192
      %v1217 = vsel %vm1194, %v1192, %v1195
      %v1218 = vsel %vm1184, %v1217, 0.0
      %v1219 = vsel %vm1185, %v1197, 0.0
      %v1220 = vsel %vm1186, %v1199, 0.0
      %v1221 = vsel %vm1187, %v1201, 0.0
      %v1222 = vsel %vm1188, %v1203, 0.0
      %v1223 = vsel %vm1189, %v1205, 0.0
      %v1224 = vsel %vm1190, %v1207, 0.0
      %v1225 = vsel %vm1191, %v1208, 0.0
      %v1226 = vlaneseq
      %v1227 = vshrl.u32 %v1226, 7
      %v1228 = vsub.s32 2, %v1227
      %v1229 = vrot.slane %v396, %v1228
      %v1230 = vmul.f32 %v1218, %v1229
      %v1231 = vmul.f32 %v1219, %v1229
      %v1232 = vmul.f32 %v1220, %v1229
      %v1233 = vmul.f32 %v1221, %v1229
      %v1234 = vmul.f32 %v1222, %v1229
      %v1235 = vmul.f32 %v1223, %v1229
      %v1236 = vmul.f32 %v1224, %v1229
      %v1237 = vmul.f32 %v1225, %v1229
      %v1238 = vadd.f32 %v1176, %v1230
      %v1239 = vadd.f32 %v1177, %v1231
      %v1240 = vadd.f32 %v1178, %v1232
      %v1241 = vadd.f32 %v1179, %v1233
      %v1242 = vadd.f32 %v1180, %v1234
      %v1243 = vadd.f32 %v1181, %v1235
      %v1244 = vadd.f32 %v1182, %v1236
      %v1245 = vadd.f32 %v1183, %v1237
      %v1246 = vlaneseq
      %v1247 = vshrl.u32 %v1246, 7
      %v1248 = vsub.s32 4, %v1247
      %v1249 = vrot.slane %v396, %v1248
      %v1250 = vadd.f32 %v1238, %v1249
      %v1251 = vadd.f32 %v1239, %v1249
      %v1252 = vadd.f32 %v1240, %v1249
      %v1253 = vadd.f32 %v1241, %v1249
      %v1254 = vadd.f32 %v1242, %v1249
      %v1255 = vadd.f32 %v1243, %v1249
      %v1256 = vadd.f32 %v1244, %v1249
      %v1257 = vadd.f32 %v1245, %v1249
      %v1258 = vxor.u32 %v1250, 2147483648
      %v1259 = vxor.u32 %v1251, 2147483648
      %v1260 = vxor.u32 %v1252, 2147483648
      %v1261 = vxor.u32 %v1253, 2147483648
      %v1262 = vxor.u32 %v1254, 2147483648
      %v1263 = vxor.u32 %v1255, 2147483648
      %v1264 = vxor.u32 %v1256, 2147483648
      %v1265 = vxor.u32 %v1257, 2147483648
      %v1266 = vmul.f32 %v1258, 1.442695
      %v1267 = vpow.pop %v1266
      %v1268 = vmul.f32 %v1259, 1.442695
      %v1269 = vpow.pop %v1268
      %v1270 = vmul.f32 %v1260, 1.442695
      %v1271 = vpow.pop %v1270
      %v1272 = vmul.f32 %v1261, 1.442695
      %v1273 = vpow.pop %v1272
      %v1274 = vmul.f32 %v1262, 1.442695
      %v1275 = vpow.pop %v1274
      %v1276 = vmul.f32 %v1263, 1.442695
      %v1277 = vpow.pop %v1276
      %v1278 = vmul.f32 %v1264, 1.442695
      %v1279 = vpow.pop %v1278
      %v1280 = vmul.f32 %v1265, 1.442695
      %v1281 = vpow.pop %v1280
      %v1282 = vadd.f32 %v1267, 1.0
      %v1283 = vadd.f32 %v1269, 1.0
      %v1284 = vadd.f32 %v1271, 1.0
      %v1285 = vadd.f32 %v1273, 1.0
      %v1286 = vadd.f32 %v1275, 1.0
      %v1287 = vadd.f32 %v1277, 1.0
      %v1288 = vadd.f32 %v1279, 1.0
      %v1289 = vadd.f32 %v1281, 1.0
      %v1290 = vrcp.pop %v1282
      %v1291 = vmul.f32 1.0, %v1290
      %v1292 = vrcp.pop %v1283
      %v1293 = vmul.f32 1.0, %v1292
      %v1294 = vrcp.pop %v1284
      %v1295 = vmul.f32 1.0, %v1294
      %v1296 = vrcp.pop %v1285
      %v1297 = vmul.f32 1.0, %v1296
      %v1298 = vrcp.pop %v1286
      %v1299 = vmul.f32 1.0, %v1298
      %v1300 = vrcp.pop %v1287
      %v1301 = vmul.f32 1.0, %v1300
      %v1302 = vrcp.pop %v1288
      %v1303 = vmul.f32 1.0, %v1302
      %v1304 = vrcp.pop %v1289
      %v1305 = vmul.f32 1.0, %v1304
      %v1306 = vmul.f32 %v1250, %v1291
      %v1307 = vmul.f32 %v1251, %v1293
      %v1308 = vmul.f32 %v1252, %v1295
      %v1309 = vmul.f32 %v1253, %v1297
      %v1310 = vmul.f32 %v1254, %v1299
      %v1311 = vmul.f32 %v1255, %v1301
      %v1312 = vmul.f32 %v1256, %v1303
      %v1313 = vmul.f32 %v1257, %v1305
      %v1314 = vpack.c.bf16 %v1307, %v1306
      %v1315 = vpack.c.bf16 %v1309, %v1308
      %v1316 = vpack.c.bf16 %v1311, %v1310
      %v1317 = vpack.c.bf16 %v1313, %v1312
      %v1318 = vld [vmem:[%s6] sm:$0xf]
      %v1319 = vld [vmem:[%s6 + $0x4] sm:$0xf]
      %v1320 = vld [vmem:[%s6 + $0x8] sm:$0xf]
      %v1321 = vld [vmem:[%s6 + $0xc] sm:$0xf]
      %v1322 = vld [vmem:[%s6 + $0x10] sm:$0xf]
      %v1323 = vld [vmem:[%s6 + $0x14] sm:$0xf]
      %v1324 = vld [vmem:[%s6 + $0x18] sm:$0xf]
      %v1325 = vld [vmem:[%s6 + $0x1c] sm:$0xf]
      %v1326 = vld [vmem:[%s6 + $0x20] sm:$0xf]
      %v1327 = vld [vmem:[%s6 + $0x24] sm:$0xf]
      %v1328 = vld [vmem:[%s6 + $0x28] sm:$0xf]
      %v1329 = vld [vmem:[%s6 + $0x2c] sm:$0xf]
      %v1330 = vld [vmem:[%s6 + $0x30] sm:$0xf]
      %v1331 = vld [vmem:[%s6 + $0x34] sm:$0xf]
      %v1332 = vld [vmem:[%s6 + $0x38] sm:$0xf]
      %v1333 = vld [vmem:[%s6 + $0x3c] sm:$0xf]
      %v1334 = vlaneseq
      %v1335 = vshrl.u32 %v1334, 7
      %v1336 = vsub.s32 5, %v1335
      %v1337 = vrot.slane %v396, %v1336
      %v1354 = vunpack.c.l.b16 %v1318
      %v1355 = vunpack.c.l.b16 %v1319
      %v1356 = vunpack.c.l.b16 %v1320
      %v1357 = vunpack.c.l.b16 %v1321
      %v1358 = vunpack.c.l.b16 %v1322
      %v1359 = vunpack.c.l.b16 %v1323
      %v1360 = vunpack.c.l.b16 %v1324
      %v1361 = vunpack.c.l.b16 %v1325
      %v1362 = vunpack.c.l.b16 %v1326
      %v1363 = vunpack.c.l.b16 %v1327
      %v1364 = vunpack.c.l.b16 %v1328
      %v1365 = vunpack.c.l.b16 %v1329
      %v1366 = vunpack.c.l.b16 %v1330
      %v1367 = vunpack.c.l.b16 %v1331
      %v1368 = vunpack.c.l.b16 %v1332
      %v1369 = vunpack.c.l.b16 %v1333
      %v1370 = vpack.c.b16 %v1355, %v1354
      %v1371 = vpack.c.b16 %v1357, %v1356
      %v1372 = vpack.c.b16 %v1359, %v1358
      %v1373 = vpack.c.b16 %v1361, %v1360
      %v1374 = vpack.c.b16 %v1363, %v1362
      %v1375 = vpack.c.b16 %v1365, %v1364
      %v1376 = vpack.c.b16 %v1367, %v1366
      %v1377 = vpack.c.b16 %v1369, %v1368
      %1386 = vmatprep.subr.bf16.mxu0 0
      %1387 = vmatpush1.bf16.msra.mxu0 %v1370
      %1388 = vmatprep.subr.bf16.mxu0 0
      %1389 = vmatpush1.bf16.msra.mxu0 %v1371
      %1390 = vmatprep.subr.bf16.mxu0 0
      %1391 = vmatpush1.bf16.msra.mxu0 %v1372
      %1392 = vmatprep.subr.bf16.mxu0 0
      %1393 = vmatpush1.bf16.msra.mxu0 %v1373
      %1394 = vmatprep.subr.bf16.mxu0 0
      %1395 = vmatpush1.bf16.msra.mxu0 %v1374
      %1396 = vmatprep.subr.bf16.mxu0 0
      %1397 = vmatpush1.bf16.msra.mxu0 %v1375
      %1398 = vmatprep.subr.bf16.mxu0 0
      %1399 = vmatpush1.bf16.msra.mxu0 %v1376
      %1400 = vmatprep.subr.bf16.mxu0 0
      %1401 = vmatpush1.bf16.msra.mxu0 %v1377
      %1402 = vmatprep.subr.bf16.mxu0 0
      %1403 = vmatpush1.bf16.msra.mxu0 0
      %1404 = vmatprep.subr.bf16.mxu0 0
      %1405 = vmatpush1.bf16.msra.mxu0 0
      %1406 = vmatprep.subr.bf16.mxu0 0
      %1407 = vmatpush1.bf16.msra.mxu0 0
      %1408 = vmatprep.subr.bf16.mxu0 0
      %1409 = vmatpush1.bf16.msra.mxu0 0
      %1410 = vmatprep.subr.bf16.mxu0 0
      %1411 = vmatpush1.bf16.msra.mxu0 0
      %1412 = vmatprep.subr.bf16.mxu0 0
      %1413 = vmatpush1.bf16.msra.mxu0 0
      %1414 = vmatprep.subr.bf16.mxu0 0
      %1415 = vmatpush1.bf16.msra.mxu0 0
      %1416 = vmatprep.subr.bf16.mxu0 0
      %1417 = vmatpush1.bf16.msra.mxu0 0
      %1418 = vmatprep.mubr.bf16.mxu0 0
      %1419 = vmatmul.mubr.bf16.gmra.mrb[0].mxu0 %v1314
      %v1420 = vpop.f32.mrb[0].mxu0
      %v1421 = vadd.f32 %v1337, %v1420
      %v1422 = vpop.f32.mrb[0].mxu0
      %v1423 = vpop.f32.mrb[0].mxu0
      %v1424 = vadd.f32 %v1337, %v1423
      %v1425 = vpop.f32.mrb[0].mxu0
      %1426 = vmatprep.mubr.bf16.mxu0 0
      %1427 = vmatmul.mubr.bf16.gmra.mrb[0].mxu0 %v1315
      %v1428 = vpop.f32.mrb[0].mxu0
      %v1429 = vadd.f32 %v1337, %v1428
      %v1430 = vpop.f32.mrb[0].mxu0
      %v1431 = vpop.f32.mrb[0].mxu0
      %v1432 = vadd.f32 %v1337, %v1431
      %v1433 = vpop.f32.mrb[0].mxu0
      %1434 = vmatprep.mubr.bf16.mxu0 0
      %1435 = vmatmul.mubr.bf16.gmra.mrb[0].mxu0 %v1316
      %v1436 = vpop.f32.mrb[0].mxu0
      %v1437 = vadd.f32 %v1337, %v1436
      %v1438 = vpop.f32.mrb[0].mxu0
      %v1439 = vpop.f32.mrb[0].mxu0
      %v1440 = vadd.f32 %v1337, %v1439
      %v1441 = vpop.f32.mrb[0].mxu0
      %1442 = vmatprep.mubr.bf16.mxu0 0
      %1443 = vmatmul.mubr.bf16.gmra.mrb[0].mxu0 %v1317
      %v1444 = vpop.f32.mrb[0].mxu0
      %v1445 = vadd.f32 %v1337, %v1444
      %v1446 = vpop.f32.mrb[0].mxu0
      %v1447 = vpop.f32.mrb[0].mxu0
      %v1448 = vadd.f32 %v1337, %v1447
      %v1449 = vpop.f32.mrb[0].mxu0
      %1450 = vdwg.mxu0
      %v1451 = vmax.f32 %v1421, 0.0
      %v1452 = vmax.f32 %v1424, 0.0
      %v1453 = vmax.f32 %v1429, 0.0
      %v1454 = vmax.f32 %v1432, 0.0
      %v1455 = vmax.f32 %v1437, 0.0
      %v1456 = vmax.f32 %v1440, 0.0
      %v1457 = vmax.f32 %v1445, 0.0
      %v1458 = vmax.f32 %v1448, 0.0
      %vm1459 = vcmp.ne.f32.partialorder %v1421, %v1421
      %vm1460 = vcmp.ne.f32.partialorder %v1424, %v1424
      %vm1461 = vcmp.ne.f32.partialorder %v1429, %v1429
      %vm1462 = vcmp.ne.f32.partialorder %v1432, %v1432
      %vm1463 = vcmp.ne.f32.partialorder %v1437, %v1437
      %vm1464 = vcmp.ne.f32.partialorder %v1440, %v1440
      %vm1465 = vcmp.ne.f32.partialorder %v1445, %v1445
      %vm1466 = vcmp.ne.f32.partialorder %v1448, %v1448
      %v1467 = vadd.f32 %v1421, 0.0
      %v1468 = vadd.f32 %v1424, 0.0
      %v1469 = vadd.f32 %v1429, 0.0
      %v1470 = vadd.f32 %v1432, 0.0
      %v1471 = vadd.f32 %v1437, 0.0
      %v1472 = vadd.f32 %v1440, 0.0
      %v1473 = vadd.f32 %v1445, 0.0
      %v1474 = vadd.f32 %v1448, 0.0
      %v1475 = vand.u32 2147483647, %v1421
      %v1476 = vand.u32 2147483647, %v1424
      %v1477 = vand.u32 2147483647, %v1429
      %v1478 = vand.u32 2147483647, %v1432
      %v1479 = vand.u32 2147483647, %v1437
      %v1480 = vand.u32 2147483647, %v1440
      %v1481 = vand.u32 2147483647, %v1445
      %v1482 = vand.u32 2147483647, %v1448
      %v1483 = vsub.f32 0.0, %v1475
      %v1484 = vsub.f32 0.0, %v1476
      %v1485 = vsub.f32 0.0, %v1477
      %v1486 = vsub.f32 0.0, %v1478
      %v1487 = vsub.f32 0.0, %v1479
      %v1488 = vsub.f32 0.0, %v1480
      %v1489 = vsub.f32 0.0, %v1481
      %v1490 = vsub.f32 0.0, %v1482
      %v1491 = vmul.f32 %v1483, 1.442695
      %v1492 = vpow.pop %v1491
      %v1493 = vmul.f32 %v1484, 1.442695
      %v1494 = vpow.pop %v1493
      %v1495 = vmul.f32 %v1485, 1.442695
      %v1496 = vpow.pop %v1495
      %v1497 = vmul.f32 %v1486, 1.442695
      %v1498 = vpow.pop %v1497
      %v1499 = vmul.f32 %v1487, 1.442695
      %v1500 = vpow.pop %v1499
      %v1501 = vmul.f32 %v1488, 1.442695
      %v1502 = vpow.pop %v1501
      %v1503 = vmul.f32 %v1489, 1.442695
      %v1504 = vpow.pop %v1503
      %v1505 = vmul.f32 %v1490, 1.442695
      %v1506 = vpow.pop %v1505
      %v1507 = vadd.f32 %v1492, 1.0
      %v1508 = vlog2.pop %v1507
      %v1509 = vmul.f32 %v1508, 0.6931472
      %v1510 = vmul.f32 -0.5, %v1492
      %v1511 = vadd.f32 %v1510, 1.0
      %v1512 = vmul.f32 %v1511, %v1492
      %v1513 = vand.u32 2147483647, %v1492
      %vm1514 = vcmp.lt.f32.partialorder %v1513, 0.0004427343
      %v1515 = vsel %vm1514, %v1512, %v1509
      %v1516 = vadd.f32 %v1494, 1.0
      %v1517 = vlog2.pop %v1516
      %v1518 = vmul.f32 %v1517, 0.6931472
      %v1519 = vmul.f32 -0.5, %v1494
      %v1520 = vadd.f32 %v1519, 1.0
      %v1521 = vmul.f32 %v1520, %v1494
      %v1522 = vand.u32 2147483647, %v1494
      %vm1523 = vcmp.lt.f32.partialorder %v1522, 0.0004427343
      %v1524 = vsel %vm1523, %v1521, %v1518
      %v1525 = vadd.f32 %v1496, 1.0
      %v1526 = vlog2.pop %v1525
      %v1527 = vmul.f32 %v1526, 0.6931472
      %v1528 = vmul.f32 -0.5, %v1496
      %v1529 = vadd.f32 %v1528, 1.0
      %v1530 = vmul.f32 %v1529, %v1496
      %v1531 = vand.u32 2147483647, %v1496
      %vm1532 = vcmp.lt.f32.partialorder %v1531, 0.0004427343
      %v1533 = vsel %vm1532, %v1530, %v1527
      %v1534 = vadd.f32 %v1498, 1.0
      %v1535 = vlog2.pop %v1534
      %v1536 = vmul.f32 %v1535, 0.6931472
      %v1537 = vmul.f32 -0.5, %v1498
      %v1538 = vadd.f32 %v1537, 1.0
      %v1539 = vmul.f32 %v1538, %v1498
      %v1540 = vand.u32 2147483647, %v1498
      %vm1541 = vcmp.lt.f32.partialorder %v1540, 0.0004427343
      %v1542 = vsel %vm1541, %v1539, %v1536
      %v1543 = vadd.f32 %v1500, 1.0
      %v1544 = vlog2.pop %v1543
      %v1545 = vmul.f32 %v1544, 0.6931472
      %v1546 = vmul.f32 -0.5, %v1500
      %v1547 = vadd.f32 %v1546, 1.0
      %v1548 = vmul.f32 %v1547, %v1500
      %v1549 = vand.u32 2147483647, %v1500
      %vm1550 = vcmp.lt.f32.partialorder %v1549, 0.0004427343
      %v1551 = vsel %vm1550, %v1548, %v1545
      %v1552 = vadd.f32 %v1502, 1.0
      %v1553 = vlog2.pop %v1552
      %v1554 = vmul.f32 %v1553, 0.6931472
      %v1555 = vmul.f32 -0.5, %v1502
      %v1556 = vadd.f32 %v1555, 1.0
      %v1557 = vmul.f32 %v1556, %v1502
      %v1558 = vand.u32 2147483647, %v1502
      %vm1559 = vcmp.lt.f32.partialorder %v1558, 0.0004427343
      %v1560 = vsel %vm1559, %v1557, %v1554
      %v1561 = vadd.f32 %v1504, 1.0
      %v1562 = vlog2.pop %v1561
      %v1563 = vmul.f32 %v1562, 0.6931472
      %v1564 = vmul.f32 -0.5, %v1504
      %v1565 = vadd.f32 %v1564, 1.0
      %v1566 = vmul.f32 %v1565, %v1504
      %v1567 = vand.u32 2147483647, %v1504
      %vm1568 = vcmp.lt.f32.partialorder %v1567, 0.0004427343
      %v1569 = vsel %vm1568, %v1566, %v1563
      %v1570 = vadd.f32 %v1506, 1.0
      %v1571 = vlog2.pop %v1570
      %v1572 = vmul.f32 %v1571, 0.6931472
      %v1573 = vmul.f32 -0.5, %v1506
      %v1574 = vadd.f32 %v1573, 1.0
      %v1575 = vmul.f32 %v1574, %v1506
      %v1576 = vand.u32 2147483647, %v1506
      %vm1577 = vcmp.lt.f32.partialorder %v1576, 0.0004427343
      %v1578 = vsel %vm1577, %v1575, %v1572
      %v1579 = vadd.f32 %v1451, %v1515
      %v1580 = vadd.f32 %v1452, %v1524
      %v1581 = vadd.f32 %v1453, %v1533
      %v1582 = vadd.f32 %v1454, %v1542
      %v1583 = vadd.f32 %v1455, %v1551
      %v1584 = vadd.f32 %v1456, %v1560
      %v1585 = vadd.f32 %v1457, %v1569
      %v1586 = vadd.f32 %v1458, %v1578
      %v1587 = vsel %vm1459, %v1467, %v1579
      %v1588 = vsel %vm1460, %v1468, %v1580
      %v1589 = vsel %vm1461, %v1469, %v1581
      %v1590 = vsel %vm1462, %v1470, %v1582
      %v1591 = vsel %vm1463, %v1471, %v1583
      %v1592 = vsel %vm1464, %v1472, %v1584
      %v1593 = vsel %vm1465, %v1473, %v1585
      %v1594 = vsel %vm1466, %v1474, %v1586
      %v1595 = vld [vmem:[%s7] sm:$0xf]
      %v1596 = vld [vmem:[%s7 + $0x4] sm:$0xf]
      %v1597 = vld [vmem:[%s7 + $0x8] sm:$0xf]
      %v1598 = vld [vmem:[%s7 + $0xc] sm:$0xf]
      %v1599 = vld [vmem:[%s7 + $0x10] sm:$0xf]
      %v1600 = vld [vmem:[%s7 + $0x14] sm:$0xf]
      %v1601 = vld [vmem:[%s7 + $0x18] sm:$0xf]
      %v1602 = vld [vmem:[%s7 + $0x1c] sm:$0xf]
      %v1611 = vunpack.c.l.b16 %v1595
      %v1612 = vunpack.c.l.b16 %v1596
      %v1613 = vunpack.c.l.b16 %v1597
      %v1614 = vunpack.c.l.b16 %v1598
      %v1615 = vunpack.c.l.b16 %v1599
      %v1616 = vunpack.c.l.b16 %v1600
      %v1617 = vunpack.c.l.b16 %v1601
      %v1618 = vunpack.c.l.b16 %v1602
      %v1619 = vpack.c.b16 %v1612, %v1611
      %v1620 = vpack.c.b16 %v1614, %v1613
      %v1621 = vpack.c.b16 %v1616, %v1615
      %v1622 = vpack.c.b16 %v1618, %v1617
      %1627 = vmatprep.subr.bf16.mxu0 0
      %1628 = vmatpush1.bf16.xpose.msra.mxu0 %v1314
      %1629 = vmatprep.subr.bf16.mxu0 0
      %1630 = vmatpush1.bf16.xpose.msra.mxu0 %v1315
      %1631 = vmatprep.subr.bf16.mxu0 0
      %1632 = vmatpush1.bf16.xpose.msra.mxu0 %v1316
      %1633 = vmatprep.subr.bf16.mxu0 0
      %1634 = vmatpush1.bf16.xpose.msra.mxu0 %v1317
      %1635 = vmatprep.subr.bf16.mxu0 0
      %1636 = vmatpush1.bf16.xpose.msra.mxu0 0
      %1637 = vmatprep.subr.bf16.mxu0 0
      %1638 = vmatpush1.bf16.xpose.msra.mxu0 0
      %1639 = vmatprep.subr.bf16.mxu0 0
      %1640 = vmatpush1.bf16.xpose.msra.mxu0 0
      %1641 = vmatprep.subr.bf16.mxu0 0
      %1642 = vmatpush1.bf16.xpose.msra.mxu0 0
      %1643 = vmatprep.subr.bf16.mxu0 0
      %1644 = vmatpush1.bf16.xpose.msra.mxu0 0
      %1645 = vmatprep.subr.bf16.mxu0 0
      %1646 = vmatpush1.bf16.xpose.msra.mxu0 0
      %1647 = vmatprep.subr.bf16.mxu0 0
      %1648 = vmatpush1.bf16.xpose.msra.mxu0 0
      %1649 = vmatprep.subr.bf16.mxu0 0
      %1650 = vmatpush1.bf16.xpose.msra.mxu0 0
      %1651 = vmatprep.subr.bf16.mxu0 0
      %1652 = vmatpush1.bf16.xpose.msra.mxu0 0
      %1653 = vmatprep.subr.bf16.mxu0 0
      %1654 = vmatpush1.bf16.xpose.msra.mxu0 0
      %1655 = vmatprep.subr.bf16.mxu0 0
      %1656 = vmatpush1.bf16.xpose.msra.mxu0 0
      %1657 = vmatprep.subr.bf16.mxu0 0
      %1658 = vmatpush1.bf16.xpose.msra.mxu0 0
      %1659 = vmatprep.mubr.bf16.mxu0 0
      %1660 = vmatmul.mubr.bf16.gmra.mrb[0].mxu0 %v1619
      %v1661 = vpop.f32.mrb[0].mxu0
      %v1662 = vadd.f32 0.0, %v1661
      %v1663 = vpop.f32.mrb[0].mxu0
      %v1664 = vpop.f32.mrb[0].mxu0
      %v1665 = vadd.f32 0.0, %v1664
      %v1666 = vpop.f32.mrb[0].mxu0
      %1667 = vmatprep.mubr.bf16.mxu0 0
      %1668 = vmatmul.mubr.bf16.gmra.mrb[0].mxu0 %v1620
      %v1669 = vpop.f32.mrb[0].mxu0
      %v1670 = vadd.f32 0.0, %v1669
      %v1671 = vpop.f32.mrb[0].mxu0
      %v1672 = vpop.f32.mrb[0].mxu0
      %v1673 = vadd.f32 0.0, %v1672
      %v1674 = vpop.f32.mrb[0].mxu0
      %1675 = vmatprep.mubr.bf16.mxu0 0
      %1676 = vmatmul.mubr.bf16.gmra.mrb[0].mxu0 %v1621
      %v1677 = vpop.f32.mrb[0].mxu0
      %v1678 = vadd.f32 0.0, %v1677
      %v1679 = vpop.f32.mrb[0].mxu0
      %v1680 = vpop.f32.mrb[0].mxu0
      %v1681 = vadd.f32 0.0, %v1680
      %v1682 = vpop.f32.mrb[0].mxu0
      %1683 = vmatprep.mubr.bf16.mxu0 0
      %1684 = vmatmul.mubr.bf16.gmra.mrb[0].mxu0 %v1622
      %v1685 = vpop.f32.mrb[0].mxu0
      %v1686 = vadd.f32 0.0, %v1685
      %v1687 = vpop.f32.mrb[0].mxu0
      %v1688 = vpop.f32.mrb[0].mxu0
      %v1689 = vadd.f32 0.0, %v1688
      %v1690 = vpop.f32.mrb[0].mxu0
      %1691 = vdwg.mxu0
      %v1692 = vmul.f32 %v1587, %v1306
      %v1693 = vmul.f32 %v1588, %v1307
      %v1694 = vmul.f32 %v1589, %v1308
      %v1695 = vmul.f32 %v1590, %v1309
      %v1696 = vmul.f32 %v1591, %v1310
      %v1697 = vmul.f32 %v1592, %v1311
      %v1698 = vmul.f32 %v1593, %v1312
      %v1699 = vmul.f32 %v1594, %v1313
      %v1700 = vlaneseq
      %v1701 = vand.u32 %v1700, 127
      %vm1702 = vcmp.lt.s32.totalorder %v1701, 64
      %v1703 = vlaneseq
      %v1704 = vshrl.u32 %v1703, 7
      %v1705 = vsub.s32 0, %v1704
      %v1706 = vrot.slane %v1587, %v1705
      %v1707 = vmul.f32 %v1706, %v394
      %v1708 = vmul.f32 %v1706, %v395
      %v1709 = vmul.f32 %v1707, 1.442695
      %v1710 = vpow.pop %v1709
      %v1711 = vmul.f32 %v1708, 1.442695
      %v1712 = vpow.pop %v1711
      %1714 = vset.pattern.permute.xlu0 0
      %1715 = vperm.xlu0 %1714, %v1662
      %v1716 = vpop.permute.xlu0 %1715
      %1719 = vset.pattern.permute.xlu0 0
      %1720 = vperm.xlu0 %1719, %v1665
      %v1721 = vpop.permute.xlu0 %1720
      %1724 = vset.pattern.permute.xlu0 0
      %1725 = vperm.xlu0 %1724, %v1678
      %v1726 = vpop.permute.xlu0 %1725
      %1729 = vset.pattern.permute.xlu0 0
      %1730 = vperm.xlu0 %1729, %v1681
      %v1731 = vpop.permute.xlu0 %1730
      %v1733 = vsel %vm1702, %v1716, %v1726
      %v1734 = vsel %vm1702, %v1721, %v1731
      %1736 = vset.pattern.permute.xlu0 0
      %1737 = vperm.xlu0 %1736, %v1670
      %v1738 = vpop.permute.xlu0 %1737
      %1741 = vset.pattern.permute.xlu0 0
      %1742 = vperm.xlu0 %1741, %v1673
      %v1743 = vpop.permute.xlu0 %1742
      %1746 = vset.pattern.permute.xlu0 0
      %1747 = vperm.xlu0 %1746, %v1686
      %v1748 = vpop.permute.xlu0 %1747
      %1751 = vset.pattern.permute.xlu0 0
      %1752 = vperm.xlu0 %1751, %v1689
      %v1753 = vpop.permute.xlu0 %1752
      %v1755 = vsel %vm1702, %v1738, %v1748
      %v1756 = vsel %vm1702, %v1743, %v1753
      %v1757 = vmul.f32 %v1710, 0.0
      %v1758 = vmul.f32 %v1712, 0.0
      %v1759 = vlaneseq
      %v1760 = vshrl.u32 %v1759, 7
      %v1761 = vsub.s32 0, %v1760
      %v1762 = vrot.slane %v1692, %v1761
      %v1763 = vmul.f32 %v1762, %v1733
      %v1764 = vmul.f32 %v1762, %v1734
      %v1765 = vadd.f32 %v1757, %v1763
      %v1766 = vadd.f32 %v1758, %v1764
      %v1767 = vmul.f32 %v1765, %v1755
      %v1768 = vmul.f32 %v1766, %v1756
      %v1769 = vadd.f32 %v1767, %v1768
      %v1770 = vrot.slane %v1769, 4
      %v1771 = vadd.f32 %v1769, %v1770
      %v1772 = vrot.slane %v1771, 2
      %v1773 = vadd.f32 %v1771, %v1772
      %v1774 = vrot.slane %v1773, 1
      %v1775 = vadd.f32 %v1773, %v1774
      %v1776 = vlaneseq
      %v1777 = vshrl.u32 %v1776, 7
      %v1778 = vsub.s32 1, %v1777
      %v1779 = vrot.slane %v1587, %v1778
      %v1780 = vmul.f32 %v1779, %v394
      %v1781 = vmul.f32 %v1779, %v395
      %v1782 = vmul.f32 %v1780, 1.442695
      %v1783 = vpow.pop %v1782
      %v1784 = vmul.f32 %v1781, 1.442695
      %v1785 = vpow.pop %v1784
      %1786 = vset.pattern.permute.xlu0 1
      %1787 = vperm.xlu0 %1786, %v1662
      %v1788 = vpop.permute.xlu0 %1787
      %1790 = vset.pattern.permute.xlu0 1
      %1791 = vperm.xlu0 %1790, %v1665
      %v1792 = vpop.permute.xlu0 %1791
      %1794 = vset.pattern.permute.xlu0 1
      %1795 = vperm.xlu0 %1794, %v1678
      %v1796 = vpop.permute.xlu0 %1795
      %1798 = vset.pattern.permute.xlu0 1
      %1799 = vperm.xlu0 %1798, %v1681
      %v1800 = vpop.permute.xlu0 %1799
      %v1802 = vsel %vm1702, %v1788, %v1796
      %v1803 = vsel %vm1702, %v1792, %v1800
      %1804 = vset.pattern.permute.xlu0 1
      %1805 = vperm.xlu0 %1804, %v1670
      %v1806 = vpop.permute.xlu0 %1805
      %1808 = vset.pattern.permute.xlu0 1
      %1809 = vperm.xlu0 %1808, %v1673
      %v1810 = vpop.permute.xlu0 %1809
      %1812 = vset.pattern.permute.xlu0 1
      %1813 = vperm.xlu0 %1812, %v1686
      %v1814 = vpop.permute.xlu0 %1813
      %1816 = vset.pattern.permute.xlu0 1
      %1817 = vperm.xlu0 %1816, %v1689
      %v1818 = vpop.permute.xlu0 %1817
      %v1820 = vsel %vm1702, %v1806, %v1814
      %v1821 = vsel %vm1702, %v1810, %v1818
      %v1822 = vmul.f32 %v1783, %v1765
      %v1823 = vmul.f32 %v1785, %v1766
      %v1824 = vlaneseq
      %v1825 = vshrl.u32 %v1824, 7
      %v1826 = vsub.s32 1, %v1825
      %v1827 = vrot.slane %v1692, %v1826
      %v1828 = vmul.f32 %v1827, %v1802
      %v1829 = vmul.f32 %v1827, %v1803
      %v1830 = vadd.f32 %v1822, %v1828
      %v1831 = vadd.f32 %v1823, %v1829
      %v1832 = vmul.f32 %v1830, %v1820
      %v1833 = vmul.f32 %v1831, %v1821
      %v1834 = vadd.f32 %v1832, %v1833
      %v1835 = vrot.slane %v1834, 4
      %v1836 = vadd.f32 %v1834, %v1835
      %v1837 = vrot.slane %v1836, 2
      %v1838 = vadd.f32 %v1836, %v1837
      %v1839 = vrot.slane %v1838, 1
      %v1840 = vadd.f32 %v1838, %v1839
      %v1841 = vlaneseq
      %v1842 = vshrl.u32 %v1841, 7
      %v1843 = vsub.s32 2, %v1842
      %v1844 = vrot.slane %v1587, %v1843
      %v1845 = vmul.f32 %v1844, %v394
      %v1846 = vmul.f32 %v1844, %v395
      %v1847 = vmul.f32 %v1845, 1.442695
      %v1848 = vpow.pop %v1847
      %v1849 = vmul.f32 %v1846, 1.442695
      %v1850 = vpow.pop %v1849
      %1851 = vset.pattern.permute.xlu0 2
      %1852 = vperm.xlu0 %1851, %v1662
      %v1853 = vpop.permute.xlu0 %1852
      %1855 = vset.pattern.permute.xlu0 2
      %1856 = vperm.xlu0 %1855, %v1665
      %v1857 = vpop.permute.xlu0 %1856
      %1859 = vset.pattern.permute.xlu0 2
      %1860 = vperm.xlu0 %1859, %v1678
      %v1861 = vpop.permute.xlu0 %1860
      %1863 = vset.pattern.permute.xlu0 2
      %1864 = vperm.xlu0 %1863, %v1681
      %v1865 = vpop.permute.xlu0 %1864
      %v1867 = vsel %vm1702, %v1853, %v1861
      %v1868 = vsel %vm1702, %v1857, %v1865
      %1869 = vset.pattern.permute.xlu0 2
      %1870 = vperm.xlu0 %1869, %v1670
      %v1871 = vpop.permute.xlu0 %1870
      %1873 = vset.pattern.permute.xlu0 2
      %1874 = vperm.xlu0 %1873, %v1673
      %v1875 = vpop.permute.xlu0 %1874
      %1877 = vset.pattern.permute.xlu0 2
      %1878 = vperm.xlu0 %1877, %v1686
      %v1879 = vpop.permute.xlu0 %1878
      %1881 = vset.pattern.permute.xlu0 2
      %1882 = vperm.xlu0 %1881, %v1689
      %v1883 = vpop.permute.xlu0 %1882
      %v1885 = vsel %vm1702, %v1871, %v1879
      %v1886 = vsel %vm1702, %v1875, %v1883
      %v1887 = vmul.f32 %v1848, %v1830
      %v1888 = vmul.f32 %v1850, %v1831
      %v1889 = vlaneseq
      %v1890 = vshrl.u32 %v1889, 7
      %v1891 = vsub.s32 2, %v1890
      %v1892 = vrot.slane %v1692, %v1891
      %v1893 = vmul.f32 %v1892, %v1867
      %v1894 = vmul.f32 %v1892, %v1868
      %v1895 = vadd.f32 %v1887, %v1893
      %v1896 = vadd.f32 %v1888, %v1894
      %v1897 = vmul.f32 %v1895, %v1885
      %v1898 = vmul.f32 %v1896, %v1886
      %v1899 = vadd.f32 %v1897, %v1898
      %v1900 = vrot.slane %v1899, 4
      %v1901 = vadd.f32 %v1899, %v1900
      %v1902 = vrot.slane %v1901, 2
      %v1903 = vadd.f32 %v1901, %v1902
      %v1904 = vrot.slane %v1903, 1
      %v1905 = vadd.f32 %v1903, %v1904
      %v1906 = vlaneseq
      %v1907 = vshrl.u32 %v1906, 7
      %v1908 = vsub.s32 3, %v1907
      %v1909 = vrot.slane %v1587, %v1908
      %v1910 = vmul.f32 %v1909, %v394
      %v1911 = vmul.f32 %v1909, %v395
      %v1912 = vmul.f32 %v1910, 1.442695
      %v1913 = vpow.pop %v1912
      %v1914 = vmul.f32 %v1911, 1.442695
      %v1915 = vpow.pop %v1914
      %1916 = vset.pattern.permute.xlu0 3
      %1917 = vperm.xlu0 %1916, %v1662
      %v1918 = vpop.permute.xlu0 %1917
      %1920 = vset.pattern.permute.xlu0 3
      %1921 = vperm.xlu0 %1920, %v1665
      %v1922 = vpop.permute.xlu0 %1921
      %1924 = vset.pattern.permute.xlu0 3
      %1925 = vperm.xlu0 %1924, %v1678
      %v1926 = vpop.permute.xlu0 %1925
      %1928 = vset.pattern.permute.xlu0 3
      %1929 = vperm.xlu0 %1928, %v1681
      %v1930 = vpop.permute.xlu0 %1929
      %v1932 = vsel %vm1702, %v1918, %v1926
      %v1933 = vsel %vm1702, %v1922, %v1930
      %1934 = vset.pattern.permute.xlu0 3
      %1935 = vperm.xlu0 %1934, %v1670
      %v1936 = vpop.permute.xlu0 %1935
      %1938 = vset.pattern.permute.xlu0 3
      %1939 = vperm.xlu0 %1938, %v1673
      %v1940 = vpop.permute.xlu0 %1939
      %1942 = vset.pattern.permute.xlu0 3
      %1943 = vperm.xlu0 %1942, %v1686
      %v1944 = vpop.permute.xlu0 %1943
      %1946 = vset.pattern.permute.xlu0 3
      %1947 = vperm.xlu0 %1946, %v1689
      %v1948 = vpop.permute.xlu0 %1947
      %v1950 = vsel %vm1702, %v1936, %v1944
      %v1951 = vsel %vm1702, %v1940, %v1948
      %v1952 = vmul.f32 %v1913, %v1895
      %v1953 = vmul.f32 %v1915, %v1896
      %v1954 = vlaneseq
      %v1955 = vshrl.u32 %v1954, 7
      %v1956 = vsub.s32 3, %v1955
      %v1957 = vrot.slane %v1692, %v1956
      %v1958 = vmul.f32 %v1957, %v1932
      %v1959 = vmul.f32 %v1957, %v1933
      %v1960 = vadd.f32 %v1952, %v1958
      %v1961 = vadd.f32 %v1953, %v1959
      %v1962 = vmul.f32 %v1960, %v1950
      %v1963 = vmul.f32 %v1961, %v1951
      %v1964 = vadd.f32 %v1962, %v1963
      %v1965 = vrot.slane %v1964, 4
      %v1966 = vadd.f32 %v1964, %v1965
      %v1967 = vrot.slane %v1966, 2
      %v1968 = vadd.f32 %v1966, %v1967
      %v1969 = vrot.slane %v1968, 1
      %v1970 = vadd.f32 %v1968, %v1969
      %v1971 = vlaneseq
      %v1972 = vshrl.u32 %v1971, 7
      %v1973 = vsub.s32 4, %v1972
      %v1974 = vrot.slane %v1587, %v1973
      %v1975 = vmul.f32 %v1974, %v394
      %v1976 = vmul.f32 %v1974, %v395
      %v1977 = vmul.f32 %v1975, 1.442695
      %v1978 = vpow.pop %v1977
      %v1979 = vmul.f32 %v1976, 1.442695
      %v1980 = vpow.pop %v1979
      %1981 = vset.pattern.permute.xlu0 4
      %1982 = vperm.xlu0 %1981, %v1662
      %v1983 = vpop.permute.xlu0 %1982
      %1985 = vset.pattern.permute.xlu0 4
      %1986 = vperm.xlu0 %1985, %v1665
      %v1987 = vpop.permute.xlu0 %1986
      %1989 = vset.pattern.permute.xlu0 4
      %1990 = vperm.xlu0 %1989, %v1678
      %v1991 = vpop.permute.xlu0 %1990
      %1993 = vset.pattern.permute.xlu0 4
      %1994 = vperm.xlu0 %1993, %v1681
      %v1995 = vpop.permute.xlu0 %1994
      %v1997 = vsel %vm1702, %v1983, %v1991
      %v1998 = vsel %vm1702, %v1987, %v1995
      %1999 = vset.pattern.permute.xlu0 4
      %2000 = vperm.xlu0 %1999, %v1670
      %v2001 = vpop.permute.xlu0 %2000
      %2003 = vset.pattern.permute.xlu0 4
      %2004 = vperm.xlu0 %2003, %v1673
      %v2005 = vpop.permute.xlu0 %2004
      %2007 = vset.pattern.permute.xlu0 4
      %2008 = vperm.xlu0 %2007, %v1686
      %v2009 = vpop.permute.xlu0 %2008
      %2011 = vset.pattern.permute.xlu0 4
      %2012 = vperm.xlu0 %2011, %v1689
      %v2013 = vpop.permute.xlu0 %2012
      %v2015 = vsel %vm1702, %v2001, %v2009
      %v2016 = vsel %vm1702, %v2005, %v2013
      %v2017 = vmul.f32 %v1978, %v1960
      %v2018 = vmul.f32 %v1980, %v1961
      %v2019 = vlaneseq
      %v2020 = vshrl.u32 %v2019, 7
      %v2021 = vsub.s32 4, %v2020
      %v2022 = vrot.slane %v1692, %v2021
      %v2023 = vmul.f32 %v2022, %v1997
      %v2024 = vmul.f32 %v2022, %v1998
      %v2025 = vadd.f32 %v2017, %v2023
      %v2026 = vadd.f32 %v2018, %v2024
      %v2027 = vmul.f32 %v2025, %v2015
      %v2028 = vmul.f32 %v2026, %v2016
      %v2029 = vadd.f32 %v2027, %v2028
      %v2030 = vrot.slane %v2029, 4
      %v2031 = vadd.f32 %v2029, %v2030
      %v2032 = vrot.slane %v2031, 2
      %v2033 = vadd.f32 %v2031, %v2032
      %v2034 = vrot.slane %v2033, 1
      %v2035 = vadd.f32 %v2033, %v2034
      %v2036 = vlaneseq
      %v2037 = vshrl.u32 %v2036, 7
      %v2038 = vsub.s32 5, %v2037
      %v2039 = vrot.slane %v1587, %v2038
      %v2040 = vmul.f32 %v2039, %v394
      %v2041 = vmul.f32 %v2039, %v395
      %v2042 = vmul.f32 %v2040, 1.442695
      %v2043 = vpow.pop %v2042
      %v2044 = vmul.f32 %v2041, 1.442695
      %v2045 = vpow.pop %v2044
      %2046 = vset.pattern.permute.xlu0 5
      %2047 = vperm.xlu0 %2046, %v1662
      %v2048 = vpop.permute.xlu0 %2047
      %2050 = vset.pattern.permute.xlu0 5
      %2051 = vperm.xlu0 %2050, %v1665
      %v2052 = vpop.permute.xlu0 %2051
      %2054 = vset.pattern.permute.xlu0 5
      %2055 = vperm.xlu0 %2054, %v1678
      %v2056 = vpop.permute.xlu0 %2055
      %2058 = vset.pattern.permute.xlu0 5
      %2059 = vperm.xlu0 %2058, %v1681
      %v2060 = vpop.permute.xlu0 %2059
      %v2062 = vsel %vm1702, %v2048, %v2056
      %v2063 = vsel %vm1702, %v2052, %v2060
      %2064 = vset.pattern.permute.xlu0 5
      %2065 = vperm.xlu0 %2064, %v1670
      %v2066 = vpop.permute.xlu0 %2065
      %2068 = vset.pattern.permute.xlu0 5
      %2069 = vperm.xlu0 %2068, %v1673
      %v2070 = vpop.permute.xlu0 %2069
      %2072 = vset.pattern.permute.xlu0 5
      %2073 = vperm.xlu0 %2072, %v1686
      %v2074 = vpop.permute.xlu0 %2073
      %2076 = vset.pattern.permute.xlu0 5
      %2077 = vperm.xlu0 %2076, %v1689
      %v2078 = vpop.permute.xlu0 %2077
      %v2080 = vsel %vm1702, %v2066, %v2074
      %v2081 = vsel %vm1702, %v2070, %v2078
      %v2082 = vmul.f32 %v2043, %v2025
      %v2083 = vmul.f32 %v2045, %v2026
      %v2084 = vlaneseq
      %v2085 = vshrl.u32 %v2084, 7
      %v2086 = vsub.s32 5, %v2085
      %v2087 = vrot.slane %v1692, %v2086
      %v2088 = vmul.f32 %v2087, %v2062
      %v2089 = vmul.f32 %v2087, %v2063
      %v2090 = vadd.f32 %v2082, %v2088
      %v2091 = vadd.f32 %v2083, %v2089
      %v2092 = vmul.f32 %v2090, %v2080
      %v2093 = vmul.f32 %v2091, %v2081
      %v2094 = vadd.f32 %v2092, %v2093
      %v2095 = vrot.slane %v2094, 4
      %v2096 = vadd.f32 %v2094, %v2095
      %v2097 = vrot.slane %v2096, 2
      %v2098 = vadd.f32 %v2096, %v2097
      %v2099 = vrot.slane %v2098, 1
      %v2100 = vadd.f32 %v2098, %v2099
      %v2101 = vlaneseq
      %v2102 = vshrl.u32 %v2101, 7
      %v2103 = vsub.s32 6, %v2102
      %v2104 = vrot.slane %v1587, %v2103
      %v2105 = vmul.f32 %v2104, %v394
      %v2106 = vmul.f32 %v2104, %v395
      %v2107 = vmul.f32 %v2105, 1.442695
      %v2108 = vpow.pop %v2107
      %v2109 = vmul.f32 %v2106, 1.442695
      %v2110 = vpow.pop %v2109
      %2111 = vset.pattern.permute.xlu0 6
      %2112 = vperm.xlu0 %2111, %v1662
      %v2113 = vpop.permute.xlu0 %2112
      %2115 = vset.pattern.permute.xlu0 6
      %2116 = vperm.xlu0 %2115, %v1665
      %v2117 = vpop.permute.xlu0 %2116
      %2119 = vset.pattern.permute.xlu0 6
      %2120 = vperm.xlu0 %2119, %v1678
      %v2121 = vpop.permute.xlu0 %2120
      %2123 = vset.pattern.permute.xlu0 6
      %2124 = vperm.xlu0 %2123, %v1681
      %v2125 = vpop.permute.xlu0 %2124
      %v2127 = vsel %vm1702, %v2113, %v2121
      %v2128 = vsel %vm1702, %v2117, %v2125
      %2129 = vset.pattern.permute.xlu0 6
      %2130 = vperm.xlu0 %2129, %v1670
      %v2131 = vpop.permute.xlu0 %2130
      %2133 = vset.pattern.permute.xlu0 6
      %2134 = vperm.xlu0 %2133, %v1673
      %v2135 = vpop.permute.xlu0 %2134
      %2137 = vset.pattern.permute.xlu0 6
      %2138 = vperm.xlu0 %2137, %v1686
      %v2139 = vpop.permute.xlu0 %2138
      %2141 = vset.pattern.permute.xlu0 6
      %2142 = vperm.xlu0 %2141, %v1689
      %v2143 = vpop.permute.xlu0 %2142
      %v2145 = vsel %vm1702, %v2131, %v2139
      %v2146 = vsel %vm1702, %v2135, %v2143
      %v2147 = vmul.f32 %v2108, %v2090
      %v2148 = vmul.f32 %v2110, %v2091
      %v2149 = vlaneseq
      %v2150 = vshrl.u32 %v2149, 7
      %v2151 = vsub.s32 6, %v2150
      %v2152 = vrot.slane %v1692, %v2151
      %v2153 = vmul.f32 %v2152, %v2127
      %v2154 = vmul.f32 %v2152, %v2128
      %v2155 = vadd.f32 %v2147, %v2153
      %v2156 = vadd.f32 %v2148, %v2154
      %v2157 = vmul.f32 %v2155, %v2145
      %v2158 = vmul.f32 %v2156, %v2146
      %v2159 = vadd.f32 %v2157, %v2158
      %v2160 = vrot.slane %v2159, 4
      %v2161 = vadd.f32 %v2159, %v2160
      %v2162 = vrot.slane %v2161, 2
      %v2163 = vadd.f32 %v2161, %v2162
      %v2164 = vrot.slane %v2163, 1
      %v2165 = vadd.f32 %v2163, %v2164
      %v2166 = vlaneseq
      %v2167 = vshrl.u32 %v2166, 7
      %v2168 = vsub.s32 7, %v2167
      %v2169 = vrot.slane %v1587, %v2168
      %v2170 = vmul.f32 %v2169, %v394
      %v2171 = vmul.f32 %v2169, %v395
      %v2172 = vmul.f32 %v2170, 1.442695
      %v2173 = vpow.pop %v2172
      %v2174 = vmul.f32 %v2171, 1.442695
      %v2175 = vpow.pop %v2174
      %2176 = vset.pattern.permute.xlu0 7
      %2177 = vperm.xlu0 %2176, %v1662
      %v2178 = vpop.permute.xlu0 %2177
      %2180 = vset.pattern.permute.xlu0 7
      %2181 = vperm.xlu0 %2180, %v1665
      %v2182 = vpop.permute.xlu0 %2181
      %2184 = vset.pattern.permute.xlu0 7
      %2185 = vperm.xlu0 %2184, %v1678
      %v2186 = vpop.permute.xlu0 %2185
      %2188 = vset.pattern.permute.xlu0 7
      %2189 = vperm.xlu0 %2188, %v1681
      %v2190 = vpop.permute.xlu0 %2189
      %v2192 = vsel %vm1702, %v2178, %v2186
      %v2193 = vsel %vm1702, %v2182, %v2190
      %2194 = vset.pattern.permute.xlu0 7
      %2195 = vperm.xlu0 %2194, %v1670
      %v2196 = vpop.permute.xlu0 %2195
      %2198 = vset.pattern.permute.xlu0 7
      %2199 = vperm.xlu0 %2198, %v1673
      %v2200 = vpop.permute.xlu0 %2199
      %2202 = vset.pattern.permute.xlu0 7
      %2203 = vperm.xlu0 %2202, %v1686
      %v2204 = vpop.permute.xlu0 %2203
      %2206 = vset.pattern.permute.xlu0 7
      %2207 = vperm.xlu0 %2206, %v1689
      %v2208 = vpop.permute.xlu0 %2207
      %v2210 = vsel %vm1702, %v2196, %v2204
      %v2211 = vsel %vm1702, %v2200, %v2208
      %v2212 = vmul.f32 %v2173, %v2155
      %v2213 = vmul.f32 %v2175, %v2156
      %v2214 = vlaneseq
      %v2215 = vshrl.u32 %v2214, 7
      %v2216 = vsub.s32 7, %v2215
      %v2217 = vrot.slane %v1692, %v2216
      %v2218 = vmul.f32 %v2217, %v2192
      %v2219 = vmul.f32 %v2217, %v2193
      %v2220 = vadd.f32 %v2212, %v2218
      %v2221 = vadd.f32 %v2213, %v2219
      %v2222 = vmul.f32 %v2220, %v2210
      %v2223 = vmul.f32 %v2221, %v2211
      %v2224 = vadd.f32 %v2222, %v2223
      %v2225 = vrot.slane %v2224, 4
      %v2226 = vadd.f32 %v2224, %v2225
      %v2227 = vrot.slane %v2226, 2
      %v2228 = vadd.f32 %v2226, %v2227
      %v2229 = vrot.slane %v2228, 1
      %v2230 = vadd.f32 %v2228, %v2229
      %v2231 = vsel %vm1194, %v1775, %v1840
      %v2232 = vsel %vm1132, %v2231, %v1905
      %v2233 = vsel %vm1070, %v2232, %v1970
      %vm2234 = vcmask 1043456
      %v2235 = vsel %vm2234, %v2233, %v2035
      %vm2236 = vcmask 1044480
      %v2237 = vsel %vm2236, %v2235, %v2100
      %vm2238 = vcmask 1045504
      %v2239 = vsel %vm2238, %v2237, %v2165
      %vm2240 = vcmask 1046528
      %v2241 = vsel %vm2240, %v2239, %v2230
      %v2242 = vlaneseq
      %v2243 = vshrl.u32 %v2242, 7
      %v2244 = vsub.s32 0, %v2243
      %v2245 = vrot.slane %v1588, %v2244
      %v2246 = vmul.f32 %v2245, %v394
      %v2247 = vmul.f32 %v2245, %v395
      %v2248 = vmul.f32 %v2246, 1.442695
      %v2249 = vpow.pop %v2248
      %v2250 = vmul.f32 %v2247, 1.442695
      %v2251 = vpow.pop %v2250
      %2252 = vset.pattern.permute.xlu0 8
      %2253 = vperm.xlu0 %2252, %v1662
      %v2254 = vpop.permute.xlu0 %2253
      %2256 = vset.pattern.permute.xlu0 8
      %2257 = vperm.xlu0 %2256, %v1665
      %v2258 = vpop.permute.xlu0 %2257
      %2260 = vset.pattern.permute.xlu0 8
      %2261 = vperm.xlu0 %2260, %v1678
      %v2262 = vpop.permute.xlu0 %2261
      %2264 = vset.pattern.permute.xlu0 8
      %2265 = vperm.xlu0 %2264, %v1681
      %v2266 = vpop.permute.xlu0 %2265
      %v2268 = vsel %vm1702, %v2254, %v2262
      %v2269 = vsel %vm1702, %v2258, %v2266
      %2270 = vset.pattern.permute.xlu0 8
      %2271 = vperm.xlu0 %2270, %v1670
      %v2272 = vpop.permute.xlu0 %2271
      %2274 = vset.pattern.permute.xlu0 8
      %2275 = vperm.xlu0 %2274, %v1673
      %v2276 = vpop.permute.xlu0 %2275
      %2278 = vset.pattern.permute.xlu0 8
      %2279 = vperm.xlu0 %2278, %v1686
      %v2280 = vpop.permute.xlu0 %2279
      %2282 = vset.pattern.permute.xlu0 8
      %2283 = vperm.xlu0 %2282, %v1689
      %v2284 = vpop.permute.xlu0 %2283
      %v2286 = vsel %vm1702, %v2272, %v2280
      %v2287 = vsel %vm1702, %v2276, %v2284
      %v2288 = vmul.f32 %v2249, %v2220
      %v2289 = vmul.f32 %v2251, %v2221
      %v2290 = vlaneseq
      %v2291 = vshrl.u32 %v2290, 7
      %v2292 = vsub.s32 0, %v2291
      %v2293 = vrot.slane %v1693, %v2292
      %v2294 = vmul.f32 %v2293, %v2268
      %v2295 = vmul.f32 %v2293, %v2269
      %v2296 = vadd.f32 %v2288, %v2294
      %v2297 = vadd.f32 %v2289, %v2295
      %v2298 = vmul.f32 %v2296, %v2286
      %v2299 = vmul.f32 %v2297, %v2287
      %v2300 = vadd.f32 %v2298, %v2299
      %v2301 = vrot.slane %v2300, 4
      %v2302 = vadd.f32 %v2300, %v2301
      %v2303 = vrot.slane %v2302, 2
      %v2304 = vadd.f32 %v2302, %v2303
      %v2305 = vrot.slane %v2304, 1
      %v2306 = vadd.f32 %v2304, %v2305
      %v2307 = vlaneseq
      %v2308 = vshrl.u32 %v2307, 7
      %v2309 = vsub.s32 1, %v2308
      %v2310 = vrot.slane %v1588, %v2309
      %v2311 = vmul.f32 %v2310, %v394
      %v2312 = vmul.f32 %v2310, %v395
      %v2313 = vmul.f32 %v2311, 1.442695
      %v2314 = vpow.pop %v2313
      %v2315 = vmul.f32 %v2312, 1.442695
      %v2316 = vpow.pop %v2315
      %2317 = vset.pattern.permute.xlu0 9
      %2318 = vperm.xlu0 %2317, %v1662
      %v2319 = vpop.permute.xlu0 %2318
      %2321 = vset.pattern.permute.xlu0 9
      %2322 = vperm.xlu0 %2321, %v1665
      %v2323 = vpop.permute.xlu0 %2322
      %2325 = vset.pattern.permute.xlu0 9
      %2326 = vperm.xlu0 %2325, %v1678
      %v2327 = vpop.permute.xlu0 %2326
      %2329 = vset.pattern.permute.xlu0 9
      %2330 = vperm.xlu0 %2329, %v1681
      %v2331 = vpop.permute.xlu0 %2330
      %v2333 = vsel %vm1702, %v2319, %v2327
      %v2334 = vsel %vm1702, %v2323, %v2331
      %2335 = vset.pattern.permute.xlu0 9
      %2336 = vperm.xlu0 %2335, %v1670
      %v2337 = vpop.permute.xlu0 %2336
      %2339 = vset.pattern.permute.xlu0 9
      %2340 = vperm.xlu0 %2339, %v1673
      %v2341 = vpop.permute.xlu0 %2340
      %2343 = vset.pattern.permute.xlu0 9
      %2344 = vperm.xlu0 %2343, %v1686
      %v2345 = vpop.permute.xlu0 %2344
      %2347 = vset.pattern.permute.xlu0 9
      %2348 = vperm.xlu0 %2347, %v1689
      %v2349 = vpop.permute.xlu0 %2348
      %v2351 = vsel %vm1702, %v2337, %v2345
      %v2352 = vsel %vm1702, %v2341, %v2349
      %v2353 = vmul.f32 %v2314, %v2296
      %v2354 = vmul.f32 %v2316, %v2297
      %v2355 = vlaneseq
      %v2356 = vshrl.u32 %v2355, 7
      %v2357 = vsub.s32 1, %v2356
      %v2358 = vrot.slane %v1693, %v2357
      %v2359 = vmul.f32 %v2358, %v2333
      %v2360 = vmul.f32 %v2358, %v2334
      %v2361 = vadd.f32 %v2353, %v2359
      %v2362 = vadd.f32 %v2354, %v2360
      %v2363 = vmul.f32 %v2361, %v2351
      %v2364 = vmul.f32 %v2362, %v2352
      %v2365 = vadd.f32 %v2363, %v2364
      %v2366 = vrot.slane %v2365, 4
      %v2367 = vadd.f32 %v2365, %v2366
      %v2368 = vrot.slane %v2367, 2
      %v2369 = vadd.f32 %v2367, %v2368
      %v2370 = vrot.slane %v2369, 1
      %v2371 = vadd.f32 %v2369, %v2370
      %v2372 = vlaneseq
      %v2373 = vshrl.u32 %v2372, 7
      %v2374 = vsub.s32 2, %v2373
      %v2375 = vrot.slane %v1588, %v2374
      %v2376 = vmul.f32 %v2375, %v394
      %v2377 = vmul.f32 %v2375, %v395
      %v2378 = vmul.f32 %v2376, 1.442695
      %v2379 = vpow.pop %v2378
      %v2380 = vmul.f32 %v2377, 1.442695
      %v2381 = vpow.pop %v2380
      %2382 = vset.pattern.permute.xlu0 10
      %2383 = vperm.xlu0 %2382, %v1662
      %v2384 = vpop.permute.xlu0 %2383
      %2386 = vset.pattern.permute.xlu0 10
      %2387 = vperm.xlu0 %2386, %v1665
      %v2388 = vpop.permute.xlu0 %2387
      %2390 = vset.pattern.permute.xlu0 10
      %2391 = vperm.xlu0 %2390, %v1678
      %v2392 = vpop.permute.xlu0 %2391
      %2394 = vset.pattern.permute.xlu0 10
      %2395 = vperm.xlu0 %2394, %v1681
      %v2396 = vpop.permute.xlu0 %2395
      %v2398 = vsel %vm1702, %v2384, %v2392
      %v2399 = vsel %vm1702, %v2388, %v2396
      %2400 = vset.pattern.permute.xlu0 10
      %2401 = vperm.xlu0 %2400, %v1670
      %v2402 = vpop.permute.xlu0 %2401
      %2404 = vset.pattern.permute.xlu0 10
      %2405 = vperm.xlu0 %2404, %v1673
      %v2406 = vpop.permute.xlu0 %2405
      %2408 = vset.pattern.permute.xlu0 10
      %2409 = vperm.xlu0 %2408, %v1686
      %v2410 = vpop.permute.xlu0 %2409
      %2412 = vset.pattern.permute.xlu0 10
      %2413 = vperm.xlu0 %2412, %v1689
      %v2414 = vpop.permute.xlu0 %2413
      %v2416 = vsel %vm1702, %v2402, %v2410
      %v2417 = vsel %vm1702, %v2406, %v2414
      %v2418 = vmul.f32 %v2379, %v2361
      %v2419 = vmul.f32 %v2381, %v2362
      %v2420 = vlaneseq
      %v2421 = vshrl.u32 %v2420, 7
      %v2422 = vsub.s32 2, %v2421
      %v2423 = vrot.slane %v1693, %v2422
      %v2424 = vmul.f32 %v2423, %v2398
      %v2425 = vmul.f32 %v2423, %v2399
      %v2426 = vadd.f32 %v2418, %v2424
      %v2427 = vadd.f32 %v2419, %v2425
      %v2428 = vmul.f32 %v2426, %v2416
      %v2429 = vmul.f32 %v2427, %v2417
      %v2430 = vadd.f32 %v2428, %v2429
      %v2431 = vrot.slane %v2430, 4
      %v2432 = vadd.f32 %v2430, %v2431
      %v2433 = vrot.slane %v2432, 2
      %v2434 = vadd.f32 %v2432, %v2433
      %v2435 = vrot.slane %v2434, 1
      %v2436 = vadd.f32 %v2434, %v2435
      %v2437 = vlaneseq
      %v2438 = vshrl.u32 %v2437, 7
      %v2439 = vsub.s32 3, %v2438
      %v2440 = vrot.slane %v1588, %v2439
      %v2441 = vmul.f32 %v2440, %v394
      %v2442 = vmul.f32 %v2440, %v395
      %v2443 = vmul.f32 %v2441, 1.442695
      %v2444 = vpow.pop %v2443
      %v2445 = vmul.f32 %v2442, 1.442695
      %v2446 = vpow.pop %v2445
      %2447 = vset.pattern.permute.xlu0 11
      %2448 = vperm.xlu0 %2447, %v1662
      %v2449 = vpop.permute.xlu0 %2448
      %2451 = vset.pattern.permute.xlu0 11
      %2452 = vperm.xlu0 %2451, %v1665
      %v2453 = vpop.permute.xlu0 %2452
      %2455 = vset.pattern.permute.xlu0 11
      %2456 = vperm.xlu0 %2455, %v1678
      %v2457 = vpop.permute.xlu0 %2456
      %2459 = vset.pattern.permute.xlu0 11
      %2460 = vperm.xlu0 %2459, %v1681
      %v2461 = vpop.permute.xlu0 %2460
      %v2463 = vsel %vm1702, %v2449, %v2457
      %v2464 = vsel %vm1702, %v2453, %v2461
      %2465 = vset.pattern.permute.xlu0 11
      %2466 = vperm.xlu0 %2465, %v1670
      %v2467 = vpop.permute.xlu0 %2466
      %2469 = vset.pattern.permute.xlu0 11
      %2470 = vperm.xlu0 %2469, %v1673
      %v2471 = vpop.permute.xlu0 %2470
      %2473 = vset.pattern.permute.xlu0 11
      %2474 = vperm.xlu0 %2473, %v1686
      %v2475 = vpop.permute.xlu0 %2474
      %2477 = vset.pattern.permute.xlu0 11
      %2478 = vperm.xlu0 %2477, %v1689
      %v2479 = vpop.permute.xlu0 %2478
      %v2481 = vsel %vm1702, %v2467, %v2475
      %v2482 = vsel %vm1702, %v2471, %v2479
      %v2483 = vmul.f32 %v2444, %v2426
      %v2484 = vmul.f32 %v2446, %v2427
      %v2485 = vlaneseq
      %v2486 = vshrl.u32 %v2485, 7
      %v2487 = vsub.s32 3, %v2486
      %v2488 = vrot.slane %v1693, %v2487
      %v2489 = vmul.f32 %v2488, %v2463
      %v2490 = vmul.f32 %v2488, %v2464
      %v2491 = vadd.f32 %v2483, %v2489
      %v2492 = vadd.f32 %v2484, %v2490
      %v2493 = vmul.f32 %v2491, %v2481
      %v2494 = vmul.f32 %v2492, %v2482
      %v2495 = vadd.f32 %v2493, %v2494
      %v2496 = vrot.slane %v2495, 4
      %v2497 = vadd.f32 %v2495, %v2496
      %v2498 = vrot.slane %v2497, 2
      %v2499 = vadd.f32 %v2497, %v2498
      %v2500 = vrot.slane %v2499, 1
      %v2501 = vadd.f32 %v2499, %v2500
      %v2502 = vlaneseq
      %v2503 = vshrl.u32 %v2502, 7
      %v2504 = vsub.s32 4, %v2503
      %v2505 = vrot.slane %v1588, %v2504
      %v2506 = vmul.f32 %v2505, %v394
      %v2507 = vmul.f32 %v2505, %v395
      %v2508 = vmul.f32 %v2506, 1.442695
      %v2509 = vpow.pop %v2508
      %v2510 = vmul.f32 %v2507, 1.442695
      %v2511 = vpow.pop %v2510
      %2512 = vset.pattern.permute.xlu0 12
      %2513 = vperm.xlu0 %2512, %v1662
      %v2514 = vpop.permute.xlu0 %2513
      %2516 = vset.pattern.permute.xlu0 12
      %2517 = vperm.xlu0 %2516, %v1665
      %v2518 = vpop.permute.xlu0 %2517
      %2520 = vset.pattern.permute.xlu0 12
      %2521 = vperm.xlu0 %2520, %v1678
      %v2522 = vpop.permute.xlu0 %2521
      %2524 = vset.pattern.permute.xlu0 12
      %2525 = vperm.xlu0 %2524, %v1681
      %v2526 = vpop.permute.xlu0 %2525
      %v2528 = vsel %vm1702, %v2514, %v2522
      %v2529 = vsel %vm1702, %v2518, %v2526
      %2530 = vset.pattern.permute.xlu0 12
      %2531 = vperm.xlu0 %2530, %v1670
      %v2532 = vpop.permute.xlu0 %2531
      %2534 = vset.pattern.permute.xlu0 12
      %2535 = vperm.xlu0 %2534, %v1673
      %v2536 = vpop.permute.xlu0 %2535
      %2538 = vset.pattern.permute.xlu0 12
      %2539 = vperm.xlu0 %2538, %v1686
      %v2540 = vpop.permute.xlu0 %2539
      %2542 = vset.pattern.permute.xlu0 12
      %2543 = vperm.xlu0 %2542, %v1689
      %v2544 = vpop.permute.xlu0 %2543
      %v2546 = vsel %vm1702, %v2532, %v2540
      %v2547 = vsel %vm1702, %v2536, %v2544
      %v2548 = vmul.f32 %v2509, %v2491
      %v2549 = vmul.f32 %v2511, %v2492
      %v2550 = vlaneseq
      %v2551 = vshrl.u32 %v2550, 7
      %v2552 = vsub.s32 4, %v2551
      %v2553 = vrot.slane %v1693, %v2552
      %v2554 = vmul.f32 %v2553, %v2528
      %v2555 = vmul.f32 %v2553, %v2529
      %v2556 = vadd.f32 %v2548, %v2554
      %v2557 = vadd.f32 %v2549, %v2555
      %v2558 = vmul.f32 %v2556, %v2546
      %v2559 = vmul.f32 %v2557, %v2547
      %v2560 = vadd.f32 %v2558, %v2559
      %v2561 = vrot.slane %v2560, 4
      %v2562 = vadd.f32 %v2560, %v2561
      %v2563 = vrot.slane %v2562, 2
      %v2564 = vadd.f32 %v2562, %v2563
      %v2565 = vrot.slane %v2564, 1
      %v2566 = vadd.f32 %v2564, %v2565
      %v2567 = vlaneseq
      %v2568 = vshrl.u32 %v2567, 7
      %v2569 = vsub.s32 5, %v2568
      %v2570 = vrot.slane %v1588, %v2569
      %v2571 = vmul.f32 %v2570, %v394
      %v2572 = vmul.f32 %v2570, %v395
      %v2573 = vmul.f32 %v2571, 1.442695
      %v2574 = vpow.pop %v2573
      %v2575 = vmul.f32 %v2572, 1.442695
      %v2576 = vpow.pop %v2575
      %2577 = vset.pattern.permute.xlu0 13
      %2578 = vperm.xlu0 %2577, %v1662
      %v2579 = vpop.permute.xlu0 %2578
      %2581 = vset.pattern.permute.xlu0 13
      %2582 = vperm.xlu0 %2581, %v1665
      %v2583 = vpop.permute.xlu0 %2582
      %2585 = vset.pattern.permute.xlu0 13
      %2586 = vperm.xlu0 %2585, %v1678
      %v2587 = vpop.permute.xlu0 %2586
      %2589 = vset.pattern.permute.xlu0 13
      %2590 = vperm.xlu0 %2589, %v1681
      %v2591 = vpop.permute.xlu0 %2590
      %v2593 = vsel %vm1702, %v2579, %v2587
      %v2594 = vsel %vm1702, %v2583, %v2591
      %2595 = vset.pattern.permute.xlu0 13
      %2596 = vperm.xlu0 %2595, %v1670
      %v2597 = vpop.permute.xlu0 %2596
      %2599 = vset.pattern.permute.xlu0 13
      %2600 = vperm.xlu0 %2599, %v1673
      %v2601 = vpop.permute.xlu0 %2600
      %2603 = vset.pattern.permute.xlu0 13
      %2604 = vperm.xlu0 %2603, %v1686
      %v2605 = vpop.permute.xlu0 %2604
      %2607 = vset.pattern.permute.xlu0 13
      %2608 = vperm.xlu0 %2607, %v1689
      %v2609 = vpop.permute.xlu0 %2608
      %v2611 = vsel %vm1702, %v2597, %v2605
      %v2612 = vsel %vm1702, %v2601, %v2609
      %v2613 = vmul.f32 %v2574, %v2556
      %v2614 = vmul.f32 %v2576, %v2557
      %v2615 = vlaneseq
      %v2616 = vshrl.u32 %v2615, 7
      %v2617 = vsub.s32 5, %v2616
      %v2618 = vrot.slane %v1693, %v2617
      %v2619 = vmul.f32 %v2618, %v2593
      %v2620 = vmul.f32 %v2618, %v2594
      %v2621 = vadd.f32 %v2613, %v2619
      %v2622 = vadd.f32 %v2614, %v2620
      %v2623 = vmul.f32 %v2621, %v2611
      %v2624 = vmul.f32 %v2622, %v2612
      %v2625 = vadd.f32 %v2623, %v2624
      %v2626 = vrot.slane %v2625, 4
      %v2627 = vadd.f32 %v2625, %v2626
      %v2628 = vrot.slane %v2627, 2
      %v2629 = vadd.f32 %v2627, %v2628
      %v2630 = vrot.slane %v2629, 1
      %v2631 = vadd.f32 %v2629, %v2630
      %v2632 = vlaneseq
      %v2633 = vshrl.u32 %v2632, 7
      %v2634 = vsub.s32 6, %v2633
      %v2635 = vrot.slane %v1588, %v2634
      %v2636 = vmul.f32 %v2635, %v394
      %v2637 = vmul.f32 %v2635, %v395
      %v2638 = vmul.f32 %v2636, 1.442695
      %v2639 = vpow.pop %v2638
      %v2640 = vmul.f32 %v2637, 1.442695
      %v2641 = vpow.pop %v2640
      %2642 = vset.pattern.permute.xlu0 14
      %2643 = vperm.xlu0 %2642, %v1662
      %v2644 = vpop.permute.xlu0 %2643
      %2646 = vset.pattern.permute.xlu0 14
      %2647 = vperm.xlu0 %2646, %v1665
      %v2648 = vpop.permute.xlu0 %2647
      %2650 = vset.pattern.permute.xlu0 14
      %2651 = vperm.xlu0 %2650, %v1678
      %v2652 = vpop.permute.xlu0 %2651
      %2654 = vset.pattern.permute.xlu0 14
      %2655 = vperm.xlu0 %2654, %v1681
      %v2656 = vpop.permute.xlu0 %2655
      %v2658 = vsel %vm1702, %v2644, %v2652
      %v2659 = vsel %vm1702, %v2648, %v2656
      %2660 = vset.pattern.permute.xlu0 14
      %2661 = vperm.xlu0 %2660, %v1670
      %v2662 = vpop.permute.xlu0 %2661
      %2664 = vset.pattern.permute.xlu0 14
      %2665 = vperm.xlu0 %2664, %v1673
      %v2666 = vpop.permute.xlu0 %2665
      %2668 = vset.pattern.permute.xlu0 14
      %2669 = vperm.xlu0 %2668, %v1686
      %v2670 = vpop.permute.xlu0 %2669
      %2672 = vset.pattern.permute.xlu0 14
      %2673 = vperm.xlu0 %2672, %v1689
      %v2674 = vpop.permute.xlu0 %2673
      %v2676 = vsel %vm1702, %v2662, %v2670
      %v2677 = vsel %vm1702, %v2666, %v2674
      %v2678 = vmul.f32 %v2639, %v2621
      %v2679 = vmul.f32 %v2641, %v2622
      %v2680 = vlaneseq
      %v2681 = vshrl.u32 %v2680, 7
      %v2682 = vsub.s32 6, %v2681
      %v2683 = vrot.slane %v1693, %v2682
      %v2684 = vmul.f32 %v2683, %v2658
      %v2685 = vmul.f32 %v2683, %v2659
      %v2686 = vadd.f32 %v2678, %v2684
      %v2687 = vadd.f32 %v2679, %v2685
      %v2688 = vmul.f32 %v2686, %v2676
      %v2689 = vmul.f32 %v2687, %v2677
      %v2690 = vadd.f32 %v2688, %v2689
      %v2691 = vrot.slane %v2690, 4
      %v2692 = vadd.f32 %v2690, %v2691
      %v2693 = vrot.slane %v2692, 2
      %v2694 = vadd.f32 %v2692, %v2693
      %v2695 = vrot.slane %v2694, 1
      %v2696 = vadd.f32 %v2694, %v2695
      %v2697 = vlaneseq
      %v2698 = vshrl.u32 %v2697, 7
      %v2699 = vsub.s32 7, %v2698
      %v2700 = vrot.slane %v1588, %v2699
      %v2701 = vmul.f32 %v2700, %v394
      %v2702 = vmul.f32 %v2700, %v395
      %v2703 = vmul.f32 %v2701, 1.442695
      %v2704 = vpow.pop %v2703
      %v2705 = vmul.f32 %v2702, 1.442695
      %v2706 = vpow.pop %v2705
      %2707 = vset.pattern.permute.xlu0 15
      %2708 = vperm.xlu0 %2707, %v1662
      %v2709 = vpop.permute.xlu0 %2708
      %2711 = vset.pattern.permute.xlu0 15
      %2712 = vperm.xlu0 %2711, %v1665
      %v2713 = vpop.permute.xlu0 %2712
      %2715 = vset.pattern.permute.xlu0 15
      %2716 = vperm.xlu0 %2715, %v1678
      %v2717 = vpop.permute.xlu0 %2716
      %2719 = vset.pattern.permute.xlu0 15
      %2720 = vperm.xlu0 %2719, %v1681
      %v2721 = vpop.permute.xlu0 %2720
      %v2723 = vsel %vm1702, %v2709, %v2717
      %v2724 = vsel %vm1702, %v2713, %v2721
      %2725 = vset.pattern.permute.xlu0 15
      %2726 = vperm.xlu0 %2725, %v1670
      %v2727 = vpop.permute.xlu0 %2726
      %2729 = vset.pattern.permute.xlu0 15
      %2730 = vperm.xlu0 %2729, %v1673
      %v2731 = vpop.permute.xlu0 %2730
      %2733 = vset.pattern.permute.xlu0 15
      %2734 = vperm.xlu0 %2733, %v1686
      %v2735 = vpop.permute.xlu0 %2734
      %2737 = vset.pattern.permute.xlu0 15
      %2738 = vperm.xlu0 %2737, %v1689
      %v2739 = vpop.permute.xlu0 %2738
      %v2741 = vsel %vm1702, %v2727, %v2735
      %v2742 = vsel %vm1702, %v2731, %v2739
      %v2743 = vmul.f32 %v2704, %v2686
      %v2744 = vmul.f32 %v2706, %v2687
      %v2745 = vlaneseq
      %v2746 = vshrl.u32 %v2745, 7
      %v2747 = vsub.s32 7, %v2746
      %v2748 = vrot.slane %v1693, %v2747
      %v2749 = vmul.f32 %v2748, %v2723
      %v2750 = vmul.f32 %v2748, %v2724
      %v2751 = vadd.f32 %v2743, %v2749
      %v2752 = vadd.f32 %v2744, %v2750
      %v2753 = vmul.f32 %v2751, %v2741
      %v2754 = vmul.f32 %v2752, %v2742
      %v2755 = vadd.f32 %v2753, %v2754
      %v2756 = vrot.slane %v2755, 4
      %v2757 = vadd.f32 %v2755, %v2756
      %v2758 = vrot.slane %v2757, 2
      %v2759 = vadd.f32 %v2757, %v2758
      %v2760 = vrot.slane %v2759, 1
      %v2761 = vadd.f32 %v2759, %v2760
      %v2762 = vsel %vm1194, %v2306, %v2371
      %v2763 = vsel %vm1132, %v2762, %v2436
      %v2764 = vsel %vm1070, %v2763, %v2501
      %v2765 = vsel %vm2234, %v2764, %v2566
      %v2766 = vsel %vm2236, %v2765, %v2631
      %v2767 = vsel %vm2238, %v2766, %v2696
      %v2768 = vsel %vm2240, %v2767, %v2761
      %v2769 = vlaneseq
      %v2770 = vshrl.u32 %v2769, 7
      %v2771 = vsub.s32 0, %v2770
      %v2772 = vrot.slane %v1589, %v2771
      %v2773 = vmul.f32 %v2772, %v394
      %v2774 = vmul.f32 %v2772, %v395
      %v2775 = vmul.f32 %v2773, 1.442695
      %v2776 = vpow.pop %v2775
      %v2777 = vmul.f32 %v2774, 1.442695
      %v2778 = vpow.pop %v2777
      %2779 = vset.pattern.permute.xlu0 16
      %2780 = vperm.xlu0 %2779, %v1662
      %v2781 = vpop.permute.xlu0 %2780
      %2783 = vset.pattern.permute.xlu0 16
      %2784 = vperm.xlu0 %2783, %v1665
      %v2785 = vpop.permute.xlu0 %2784
      %2787 = vset.pattern.permute.xlu0 16
      %2788 = vperm.xlu0 %2787, %v1678
      %v2789 = vpop.permute.xlu0 %2788
      %2791 = vset.pattern.permute.xlu0 16
      %2792 = vperm.xlu0 %2791, %v1681
      %v2793 = vpop.permute.xlu0 %2792
      %v2795 = vsel %vm1702, %v2781, %v2789
      %v2796 = vsel %vm1702, %v2785, %v2793
      %2797 = vset.pattern.permute.xlu0 16
      %2798 = vperm.xlu0 %2797, %v1670
      %v2799 = vpop.permute.xlu0 %2798
      %2801 = vset.pattern.permute.xlu0 16
      %2802 = vperm.xlu0 %2801, %v1673
      %v2803 = vpop.permute.xlu0 %2802
      %2805 = vset.pattern.permute.xlu0 16
      %2806 = vperm.xlu0 %2805, %v1686
      %v2807 = vpop.permute.xlu0 %2806
      %2809 = vset.pattern.permute.xlu0 16
      %2810 = vperm.xlu0 %2809, %v1689
      %v2811 = vpop.permute.xlu0 %2810
      %v2813 = vsel %vm1702, %v2799, %v2807
      %v2814 = vsel %vm1702, %v2803, %v2811
      %v2815 = vmul.f32 %v2776, %v2751
      %v2816 = vmul.f32 %v2778, %v2752
      %v2817 = vlaneseq
      %v2818 = vshrl.u32 %v2817, 7
      %v2819 = vsub.s32 0, %v2818
      %v2820 = vrot.slane %v1694, %v2819
      %v2821 = vmul.f32 %v2820, %v2795
      %v2822 = vmul.f32 %v2820, %v2796
      %v2823 = vadd.f32 %v2815, %v2821
      %v2824 = vadd.f32 %v2816, %v2822
      %v2825 = vmul.f32 %v2823, %v2813
      %v2826 = vmul.f32 %v2824, %v2814
      %v2827 = vadd.f32 %v2825, %v2826
      %v2828 = vrot.slane %v2827, 4
      %v2829 = vadd.f32 %v2827, %v2828
      %v2830 = vrot.slane %v2829, 2
      %v2831 = vadd.f32 %v2829, %v2830
      %v2832 = vrot.slane %v2831, 1
      %v2833 = vadd.f32 %v2831, %v2832
      %v2834 = vlaneseq
      %v2835 = vshrl.u32 %v2834, 7
      %v2836 = vsub.s32 1, %v2835
      %v2837 = vrot.slane %v1589, %v2836
      %v2838 = vmul.f32 %v2837, %v394
      %v2839 = vmul.f32 %v2837, %v395
      %v2840 = vmul.f32 %v2838, 1.442695
      %v2841 = vpow.pop %v2840
      %v2842 = vmul.f32 %v2839, 1.442695
      %v2843 = vpow.pop %v2842
      %2844 = vset.pattern.permute.xlu0 17
      %2845 = vperm.xlu0 %2844, %v1662
      %v2846 = vpop.permute.xlu0 %2845
      %2848 = vset.pattern.permute.xlu0 17
      %2849 = vperm.xlu0 %2848, %v1665
      %v2850 = vpop.permute.xlu0 %2849
      %2852 = vset.pattern.permute.xlu0 17
      %2853 = vperm.xlu0 %2852, %v1678
      %v2854 = vpop.permute.xlu0 %2853
      %2856 = vset.pattern.permute.xlu0 17
      %2857 = vperm.xlu0 %2856, %v1681
      %v2858 = vpop.permute.xlu0 %2857
      %v2860 = vsel %vm1702, %v2846, %v2854
      %v2861 = vsel %vm1702, %v2850, %v2858
      %2862 = vset.pattern.permute.xlu0 17
      %2863 = vperm.xlu0 %2862, %v1670
      %v2864 = vpop.permute.xlu0 %2863
      %2866 = vset.pattern.permute.xlu0 17
      %2867 = vperm.xlu0 %2866, %v1673
      %v2868 = vpop.permute.xlu0 %2867
      %2870 = vset.pattern.permute.xlu0 17
      %2871 = vperm.xlu0 %2870, %v1686
      %v2872 = vpop.permute.xlu0 %2871
      %2874 = vset.pattern.permute.xlu0 17
      %2875 = vperm.xlu0 %2874, %v1689
      %v2876 = vpop.permute.xlu0 %2875
      %v2878 = vsel %vm1702, %v2864, %v2872
      %v2879 = vsel %vm1702, %v2868, %v2876
      %v2880 = vmul.f32 %v2841, %v2823
      %v2881 = vmul.f32 %v2843, %v2824
      %v2882 = vlaneseq
      %v2883 = vshrl.u32 %v2882, 7
      %v2884 = vsub.s32 1, %v2883
      %v2885 = vrot.slane %v1694, %v2884
      %v2886 = vmul.f32 %v2885, %v2860
      %v2887 = vmul.f32 %v2885, %v2861
      %v2888 = vadd.f32 %v2880, %v2886
      %v2889 = vadd.f32 %v2881, %v2887
      %v2890 = vmul.f32 %v2888, %v2878
      %v2891 = vmul.f32 %v2889, %v2879
      %v2892 = vadd.f32 %v2890, %v2891
      %v2893 = vrot.slane %v2892, 4
      %v2894 = vadd.f32 %v2892, %v2893
      %v2895 = vrot.slane %v2894, 2
      %v2896 = vadd.f32 %v2894, %v2895
      %v2897 = vrot.slane %v2896, 1
      %v2898 = vadd.f32 %v2896, %v2897
      %v2899 = vlaneseq
      %v2900 = vshrl.u32 %v2899, 7
      %v2901 = vsub.s32 2, %v2900
      %v2902 = vrot.slane %v1589, %v2901
      %v2903 = vmul.f32 %v2902, %v394
      %v2904 = vmul.f32 %v2902, %v395
      %v2905 = vmul.f32 %v2903, 1.442695
      %v2906 = vpow.pop %v2905
      %v2907 = vmul.f32 %v2904, 1.442695
      %v2908 = vpow.pop %v2907
      %2909 = vset.pattern.permute.xlu0 18
      %2910 = vperm.xlu0 %2909, %v1662
      %v2911 = vpop.permute.xlu0 %2910
      %2913 = vset.pattern.permute.xlu0 18
      %2914 = vperm.xlu0 %2913, %v1665
      %v2915 = vpop.permute.xlu0 %2914
      %2917 = vset.pattern.permute.xlu0 18
      %2918 = vperm.xlu0 %2917, %v1678
      %v2919 = vpop.permute.xlu0 %2918
      %2921 = vset.pattern.permute.xlu0 18
      %2922 = vperm.xlu0 %2921, %v1681
      %v2923 = vpop.permute.xlu0 %2922
      %v2925 = vsel %vm1702, %v2911, %v2919
      %v2926 = vsel %vm1702, %v2915, %v2923
      %2927 = vset.pattern.permute.xlu0 18
      %2928 = vperm.xlu0 %2927, %v1670
      %v2929 = vpop.permute.xlu0 %2928
      %2931 = vset.pattern.permute.xlu0 18
      %2932 = vperm.xlu0 %2931, %v1673
      %v2933 = vpop.permute.xlu0 %2932
      %2935 = vset.pattern.permute.xlu0 18
      %2936 = vperm.xlu0 %2935, %v1686
      %v2937 = vpop.permute.xlu0 %2936
      %2939 = vset.pattern.permute.xlu0 18
      %2940 = vperm.xlu0 %2939, %v1689
      %v2941 = vpop.permute.xlu0 %2940
      %v2943 = vsel %vm1702, %v2929, %v2937
      %v2944 = vsel %vm1702, %v2933, %v2941
      %v2945 = vmul.f32 %v2906, %v2888
      %v2946 = vmul.f32 %v2908, %v2889
      %v2947 = vlaneseq
      %v2948 = vshrl.u32 %v2947, 7
      %v2949 = vsub.s32 2, %v2948
      %v2950 = vrot.slane %v1694, %v2949
      %v2951 = vmul.f32 %v2950, %v2925
      %v2952 = vmul.f32 %v2950, %v2926
      %v2953 = vadd.f32 %v2945, %v2951
      %v2954 = vadd.f32 %v2946, %v2952
      %v2955 = vmul.f32 %v2953, %v2943
      %v2956 = vmul.f32 %v2954, %v2944
      %v2957 = vadd.f32 %v2955, %v2956
      %v2958 = vrot.slane %v2957, 4
      %v2959 = vadd.f32 %v2957, %v2958
      %v2960 = vrot.slane %v2959, 2
      %v2961 = vadd.f32 %v2959, %v2960
      %v2962 = vrot.slane %v2961, 1
      %v2963 = vadd.f32 %v2961, %v2962
      %v2964 = vlaneseq
      %v2965 = vshrl.u32 %v2964, 7
      %v2966 = vsub.s32 3, %v2965
      %v2967 = vrot.slane %v1589, %v2966
      %v2968 = vmul.f32 %v2967, %v394
      %v2969 = vmul.f32 %v2967, %v395
      %v2970 = vmul.f32 %v2968, 1.442695
      %v2971 = vpow.pop %v2970
      %v2972 = vmul.f32 %v2969, 1.442695
      %v2973 = vpow.pop %v2972
      %2974 = vset.pattern.permute.xlu0 19
      %2975 = vperm.xlu0 %2974, %v1662
      %v2976 = vpop.permute.xlu0 %2975
      %2978 = vset.pattern.permute.xlu0 19
      %2979 = vperm.xlu0 %2978, %v1665
      %v2980 = vpop.permute.xlu0 %2979
      %2982 = vset.pattern.permute.xlu0 19
      %2983 = vperm.xlu0 %2982, %v1678
      %v2984 = vpop.permute.xlu0 %2983
      %2986 = vset.pattern.permute.xlu0 19
      %2987 = vperm.xlu0 %2986, %v1681
      %v2988 = vpop.permute.xlu0 %2987
      %v2990 = vsel %vm1702, %v2976, %v2984
      %v2991 = vsel %vm1702, %v2980, %v2988
      %2992 = vset.pattern.permute.xlu0 19
      %2993 = vperm.xlu0 %2992, %v1670
      %v2994 = vpop.permute.xlu0 %2993
      %2996 = vset.pattern.permute.xlu0 19
      %2997 = vperm.xlu0 %2996, %v1673
      %v2998 = vpop.permute.xlu0 %2997
      %3000 = vset.pattern.permute.xlu0 19
      %3001 = vperm.xlu0 %3000, %v1686
      %v3002 = vpop.permute.xlu0 %3001
      %3004 = vset.pattern.permute.xlu0 19
      %3005 = vperm.xlu0 %3004, %v1689
      %v3006 = vpop.permute.xlu0 %3005
      %v3008 = vsel %vm1702, %v2994, %v3002
      %v3009 = vsel %vm1702, %v2998, %v3006
      %v3010 = vmul.f32 %v2971, %v2953
      %v3011 = vmul.f32 %v2973, %v2954
      %v3012 = vlaneseq
      %v3013 = vshrl.u32 %v3012, 7
      %v3014 = vsub.s32 3, %v3013
      %v3015 = vrot.slane %v1694, %v3014
      %v3016 = vmul.f32 %v3015, %v2990
      %v3017 = vmul.f32 %v3015, %v2991
      %v3018 = vadd.f32 %v3010, %v3016
      %v3019 = vadd.f32 %v3011, %v3017
      %v3020 = vmul.f32 %v3018, %v3008
      %v3021 = vmul.f32 %v3019, %v3009
      %v3022 = vadd.f32 %v3020, %v3021
      %v3023 = vrot.slane %v3022, 4
      %v3024 = vadd.f32 %v3022, %v3023
      %v3025 = vrot.slane %v3024, 2
      %v3026 = vadd.f32 %v3024, %v3025
      %v3027 = vrot.slane %v3026, 1
      %v3028 = vadd.f32 %v3026, %v3027
      %v3029 = vlaneseq
      %v3030 = vshrl.u32 %v3029, 7
      %v3031 = vsub.s32 4, %v3030
      %v3032 = vrot.slane %v1589, %v3031
      %v3033 = vmul.f32 %v3032, %v394
      %v3034 = vmul.f32 %v3032, %v395
      %v3035 = vmul.f32 %v3033, 1.442695
      %v3036 = vpow.pop %v3035
      %v3037 = vmul.f32 %v3034, 1.442695
      %v3038 = vpow.pop %v3037
      %3039 = vset.pattern.permute.xlu0 20
      %3040 = vperm.xlu0 %3039, %v1662
      %v3041 = vpop.permute.xlu0 %3040
      %3043 = vset.pattern.permute.xlu0 20
      %3044 = vperm.xlu0 %3043, %v1665
      %v3045 = vpop.permute.xlu0 %3044
      %3047 = vset.pattern.permute.xlu0 20
      %3048 = vperm.xlu0 %3047, %v1678
      %v3049 = vpop.permute.xlu0 %3048
      %3051 = vset.pattern.permute.xlu0 20
      %3052 = vperm.xlu0 %3051, %v1681
      %v3053 = vpop.permute.xlu0 %3052
      %v3055 = vsel %vm1702, %v3041, %v3049
      %v3056 = vsel %vm1702, %v3045, %v3053
      %3057 = vset.pattern.permute.xlu0 20
      %3058 = vperm.xlu0 %3057, %v1670
      %v3059 = vpop.permute.xlu0 %3058
      %3061 = vset.pattern.permute.xlu0 20
      %3062 = vperm.xlu0 %3061, %v1673
      %v3063 = vpop.permute.xlu0 %3062
      %3065 = vset.pattern.permute.xlu0 20
      %3066 = vperm.xlu0 %3065, %v1686
      %v3067 = vpop.permute.xlu0 %3066
      %3069 = vset.pattern.permute.xlu0 20
      %3070 = vperm.xlu0 %3069, %v1689
      %v3071 = vpop.permute.xlu0 %3070
      %v3073 = vsel %vm1702, %v3059, %v3067
      %v3074 = vsel %vm1702, %v3063, %v3071
      %v3075 = vmul.f32 %v3036, %v3018
      %v3076 = vmul.f32 %v3038, %v3019
      %v3077 = vlaneseq
      %v3078 = vshrl.u32 %v3077, 7
      %v3079 = vsub.s32 4, %v3078
      %v3080 = vrot.slane %v1694, %v3079
      %v3081 = vmul.f32 %v3080, %v3055
      %v3082 = vmul.f32 %v3080, %v3056
      %v3083 = vadd.f32 %v3075, %v3081
      %v3084 = vadd.f32 %v3076, %v3082
      %v3085 = vmul.f32 %v3083, %v3073
      %v3086 = vmul.f32 %v3084, %v3074
      %v3087 = vadd.f32 %v3085, %v3086
      %v3088 = vrot.slane %v3087, 4
      %v3089 = vadd.f32 %v3087, %v3088
      %v3090 = vrot.slane %v3089, 2
      %v3091 = vadd.f32 %v3089, %v3090
      %v3092 = vrot.slane %v3091, 1
      %v3093 = vadd.f32 %v3091, %v3092
      %v3094 = vlaneseq
      %v3095 = vshrl.u32 %v3094, 7
      %v3096 = vsub.s32 5, %v3095
      %v3097 = vrot.slane %v1589, %v3096
      %v3098 = vmul.f32 %v3097, %v394
      %v3099 = vmul.f32 %v3097, %v395
      %v3100 = vmul.f32 %v3098, 1.442695
      %v3101 = vpow.pop %v3100
      %v3102 = vmul.f32 %v3099, 1.442695
      %v3103 = vpow.pop %v3102
      %3104 = vset.pattern.permute.xlu0 21
      %3105 = vperm.xlu0 %3104, %v1662
      %v3106 = vpop.permute.xlu0 %3105
      %3108 = vset.pattern.permute.xlu0 21
      %3109 = vperm.xlu0 %3108, %v1665
      %v3110 = vpop.permute.xlu0 %3109
      %3112 = vset.pattern.permute.xlu0 21
      %3113 = vperm.xlu0 %3112, %v1678
      %v3114 = vpop.permute.xlu0 %3113
      %3116 = vset.pattern.permute.xlu0 21
      %3117 = vperm.xlu0 %3116, %v1681
      %v3118 = vpop.permute.xlu0 %3117
      %v3120 = vsel %vm1702, %v3106, %v3114
      %v3121 = vsel %vm1702, %v3110, %v3118
      %3122 = vset.pattern.permute.xlu0 21
      %3123 = vperm.xlu0 %3122, %v1670
      %v3124 = vpop.permute.xlu0 %3123
      %3126 = vset.pattern.permute.xlu0 21
      %3127 = vperm.xlu0 %3126, %v1673
      %v3128 = vpop.permute.xlu0 %3127
      %3130 = vset.pattern.permute.xlu0 21
      %3131 = vperm.xlu0 %3130, %v1686
      %v3132 = vpop.permute.xlu0 %3131
      %3134 = vset.pattern.permute.xlu0 21
      %3135 = vperm.xlu0 %3134, %v1689
      %v3136 = vpop.permute.xlu0 %3135
      %v3138 = vsel %vm1702, %v3124, %v3132
      %v3139 = vsel %vm1702, %v3128, %v3136
      %v3140 = vmul.f32 %v3101, %v3083
      %v3141 = vmul.f32 %v3103, %v3084
      %v3142 = vlaneseq
      %v3143 = vshrl.u32 %v3142, 7
      %v3144 = vsub.s32 5, %v3143
      %v3145 = vrot.slane %v1694, %v3144
      %v3146 = vmul.f32 %v3145, %v3120
      %v3147 = vmul.f32 %v3145, %v3121
      %v3148 = vadd.f32 %v3140, %v3146
      %v3149 = vadd.f32 %v3141, %v3147
      %v3150 = vmul.f32 %v3148, %v3138
      %v3151 = vmul.f32 %v3149, %v3139
      %v3152 = vadd.f32 %v3150, %v3151
      %v3153 = vrot.slane %v3152, 4
      %v3154 = vadd.f32 %v3152, %v3153
      %v3155 = vrot.slane %v3154, 2
      %v3156 = vadd.f32 %v3154, %v3155
      %v3157 = vrot.slane %v3156, 1
      %v3158 = vadd.f32 %v3156, %v3157
      %v3159 = vlaneseq
      %v3160 = vshrl.u32 %v3159, 7
      %v3161 = vsub.s32 6, %v3160
      %v3162 = vrot.slane %v1589, %v3161
      %v3163 = vmul.f32 %v3162, %v394
      %v3164 = vmul.f32 %v3162, %v395
      %v3165 = vmul.f32 %v3163, 1.442695
      %v3166 = vpow.pop %v3165
      %v3167 = vmul.f32 %v3164, 1.442695
      %v3168 = vpow.pop %v3167
      %3169 = vset.pattern.permute.xlu0 22
      %3170 = vperm.xlu0 %3169, %v1662
      %v3171 = vpop.permute.xlu0 %3170
      %3173 = vset.pattern.permute.xlu0 22
      %3174 = vperm.xlu0 %3173, %v1665
      %v3175 = vpop.permute.xlu0 %3174
      %3177 = vset.pattern.permute.xlu0 22
      %3178 = vperm.xlu0 %3177, %v1678
      %v3179 = vpop.permute.xlu0 %3178
      %3181 = vset.pattern.permute.xlu0 22
      %3182 = vperm.xlu0 %3181, %v1681
      %v3183 = vpop.permute.xlu0 %3182
      %v3185 = vsel %vm1702, %v3171, %v3179
      %v3186 = vsel %vm1702, %v3175, %v3183
      %3187 = vset.pattern.permute.xlu0 22
      %3188 = vperm.xlu0 %3187, %v1670
      %v3189 = vpop.permute.xlu0 %3188
      %3191 = vset.pattern.permute.xlu0 22
      %3192 = vperm.xlu0 %3191, %v1673
      %v3193 = vpop.permute.xlu0 %3192
      %3195 = vset.pattern.permute.xlu0 22
      %3196 = vperm.xlu0 %3195, %v1686
      %v3197 = vpop.permute.xlu0 %3196
      %3199 = vset.pattern.permute.xlu0 22
      %3200 = vperm.xlu0 %3199, %v1689
      %v3201 = vpop.permute.xlu0 %3200
      %v3203 = vsel %vm1702, %v3189, %v3197
      %v3204 = vsel %vm1702, %v3193, %v3201
      %v3205 = vmul.f32 %v3166, %v3148
      %v3206 = vmul.f32 %v3168, %v3149
      %v3207 = vlaneseq
      %v3208 = vshrl.u32 %v3207, 7
      %v3209 = vsub.s32 6, %v3208
      %v3210 = vrot.slane %v1694, %v3209
      %v3211 = vmul.f32 %v3210, %v3185
      %v3212 = vmul.f32 %v3210, %v3186
      %v3213 = vadd.f32 %v3205, %v3211
      %v3214 = vadd.f32 %v3206, %v3212
      %v3215 = vmul.f32 %v3213, %v3203
      %v3216 = vmul.f32 %v3214, %v3204
      %v3217 = vadd.f32 %v3215, %v3216
      %v3218 = vrot.slane %v3217, 4
      %v3219 = vadd.f32 %v3217, %v3218
      %v3220 = vrot.slane %v3219, 2
      %v3221 = vadd.f32 %v3219, %v3220
      %v3222 = vrot.slane %v3221, 1
      %v3223 = vadd.f32 %v3221, %v3222
      %v3224 = vlaneseq
      %v3225 = vshrl.u32 %v3224, 7
      %v3226 = vsub.s32 7, %v3225
      %v3227 = vrot.slane %v1589, %v3226
      %v3228 = vmul.f32 %v3227, %v394
      %v3229 = vmul.f32 %v3227, %v395
      %v3230 = vmul.f32 %v3228, 1.442695
      %v3231 = vpow.pop %v3230
      %v3232 = vmul.f32 %v3229, 1.442695
      %v3233 = vpow.pop %v3232
      %3234 = vset.pattern.permute.xlu0 23
      %3235 = vperm.xlu0 %3234, %v1662
      %v3236 = vpop.permute.xlu0 %3235
      %3238 = vset.pattern.permute.xlu0 23
      %3239 = vperm.xlu0 %3238, %v1665
      %v3240 = vpop.permute.xlu0 %3239
      %3242 = vset.pattern.permute.xlu0 23
      %3243 = vperm.xlu0 %3242, %v1678
      %v3244 = vpop.permute.xlu0 %3243
      %3246 = vset.pattern.permute.xlu0 23
      %3247 = vperm.xlu0 %3246, %v1681
      %v3248 = vpop.permute.xlu0 %3247
      %v3250 = vsel %vm1702, %v3236, %v3244
      %v3251 = vsel %vm1702, %v3240, %v3248
      %3252 = vset.pattern.permute.xlu0 23
      %3253 = vperm.xlu0 %3252, %v1670
      %v3254 = vpop.permute.xlu0 %3253
      %3256 = vset.pattern.permute.xlu0 23
      %3257 = vperm.xlu0 %3256, %v1673
      %v3258 = vpop.permute.xlu0 %3257
      %3260 = vset.pattern.permute.xlu0 23
      %3261 = vperm.xlu0 %3260, %v1686
      %v3262 = vpop.permute.xlu0 %3261
      %3264 = vset.pattern.permute.xlu0 23
      %3265 = vperm.xlu0 %3264, %v1689
      %v3266 = vpop.permute.xlu0 %3265
      %v3268 = vsel %vm1702, %v3254, %v3262
      %v3269 = vsel %vm1702, %v3258, %v3266
      %v3270 = vmul.f32 %v3231, %v3213
      %v3271 = vmul.f32 %v3233, %v3214
      %v3272 = vlaneseq
      %v3273 = vshrl.u32 %v3272, 7
      %v3274 = vsub.s32 7, %v3273
      %v3275 = vrot.slane %v1694, %v3274
      %v3276 = vmul.f32 %v3275, %v3250
      %v3277 = vmul.f32 %v3275, %v3251
      %v3278 = vadd.f32 %v3270, %v3276
      %v3279 = vadd.f32 %v3271, %v3277
      %v3280 = vmul.f32 %v3278, %v3268
      %v3281 = vmul.f32 %v3279, %v3269
      %v3282 = vadd.f32 %v3280, %v3281
      %v3283 = vrot.slane %v3282, 4
      %v3284 = vadd.f32 %v3282, %v3283
      %v3285 = vrot.slane %v3284, 2
      %v3286 = vadd.f32 %v3284, %v3285
      %v3287 = vrot.slane %v3286, 1
      %v3288 = vadd.f32 %v3286, %v3287
      %v3289 = vsel %vm1194, %v2833, %v2898
      %v3290 = vsel %vm1132, %v3289, %v2963
      %v3291 = vsel %vm1070, %v3290, %v3028
      %v3292 = vsel %vm2234, %v3291, %v3093
      %v3293 = vsel %vm2236, %v3292, %v3158
      %v3294 = vsel %vm2238, %v3293, %v3223
      %v3295 = vsel %vm2240, %v3294, %v3288
      %v3296 = vlaneseq
      %v3297 = vshrl.u32 %v3296, 7
      %v3298 = vsub.s32 0, %v3297
      %v3299 = vrot.slane %v1590, %v3298
      %v3300 = vmul.f32 %v3299, %v394
      %v3301 = vmul.f32 %v3299, %v395
      %v3302 = vmul.f32 %v3300, 1.442695
      %v3303 = vpow.pop %v3302
      %v3304 = vmul.f32 %v3301, 1.442695
      %v3305 = vpow.pop %v3304
      %3306 = vset.pattern.permute.xlu0 24
      %3307 = vperm.xlu0 %3306, %v1662
      %v3308 = vpop.permute.xlu0 %3307
      %3310 = vset.pattern.permute.xlu0 24
      %3311 = vperm.xlu0 %3310, %v1665
      %v3312 = vpop.permute.xlu0 %3311
      %3314 = vset.pattern.permute.xlu0 24
      %3315 = vperm.xlu0 %3314, %v1678
      %v3316 = vpop.permute.xlu0 %3315
      %3318 = vset.pattern.permute.xlu0 24
      %3319 = vperm.xlu0 %3318, %v1681
      %v3320 = vpop.permute.xlu0 %3319
      %v3322 = vsel %vm1702, %v3308, %v3316
      %v3323 = vsel %vm1702, %v3312, %v3320
      %3324 = vset.pattern.permute.xlu0 24
      %3325 = vperm.xlu0 %3324, %v1670
      %v3326 = vpop.permute.xlu0 %3325
      %3328 = vset.pattern.permute.xlu0 24
      %3329 = vperm.xlu0 %3328, %v1673
      %v3330 = vpop.permute.xlu0 %3329
      %3332 = vset.pattern.permute.xlu0 24
      %3333 = vperm.xlu0 %3332, %v1686
      %v3334 = vpop.permute.xlu0 %3333
      %3336 = vset.pattern.permute.xlu0 24
      %3337 = vperm.xlu0 %3336, %v1689
      %v3338 = vpop.permute.xlu0 %3337
      %v3340 = vsel %vm1702, %v3326, %v3334
      %v3341 = vsel %vm1702, %v3330, %v3338
      %v3342 = vmul.f32 %v3303, %v3278
      %v3343 = vmul.f32 %v3305, %v3279
      %v3344 = vlaneseq
      %v3345 = vshrl.u32 %v3344, 7
      %v3346 = vsub.s32 0, %v3345
      %v3347 = vrot.slane %v1695, %v3346
      %v3348 = vmul.f32 %v3347, %v3322
      %v3349 = vmul.f32 %v3347, %v3323
      %v3350 = vadd.f32 %v3342, %v3348
      %v3351 = vadd.f32 %v3343, %v3349
      %v3352 = vmul.f32 %v3350, %v3340
      %v3353 = vmul.f32 %v3351, %v3341
      %v3354 = vadd.f32 %v3352, %v3353
      %v3355 = vrot.slane %v3354, 4
      %v3356 = vadd.f32 %v3354, %v3355
      %v3357 = vrot.slane %v3356, 2
      %v3358 = vadd.f32 %v3356, %v3357
      %v3359 = vrot.slane %v3358, 1
      %v3360 = vadd.f32 %v3358, %v3359
      %v3361 = vlaneseq
      %v3362 = vshrl.u32 %v3361, 7
      %v3363 = vsub.s32 1, %v3362
      %v3364 = vrot.slane %v1590, %v3363
      %v3365 = vmul.f32 %v3364, %v394
      %v3366 = vmul.f32 %v3364, %v395
      %v3367 = vmul.f32 %v3365, 1.442695
      %v3368 = vpow.pop %v3367
      %v3369 = vmul.f32 %v3366, 1.442695
      %v3370 = vpow.pop %v3369
      %3371 = vset.pattern.permute.xlu0 25
      %3372 = vperm.xlu0 %3371, %v1662
      %v3373 = vpop.permute.xlu0 %3372
      %3375 = vset.pattern.permute.xlu0 25
      %3376 = vperm.xlu0 %3375, %v1665
      %v3377 = vpop.permute.xlu0 %3376
      %3379 = vset.pattern.permute.xlu0 25
      %3380 = vperm.xlu0 %3379, %v1678
      %v3381 = vpop.permute.xlu0 %3380
      %3383 = vset.pattern.permute.xlu0 25
      %3384 = vperm.xlu0 %3383, %v1681
      %v3385 = vpop.permute.xlu0 %3384
      %v3387 = vsel %vm1702, %v3373, %v3381
      %v3388 = vsel %vm1702, %v3377, %v3385
      %3389 = vset.pattern.permute.xlu0 25
      %3390 = vperm.xlu0 %3389, %v1670
      %v3391 = vpop.permute.xlu0 %3390
      %3393 = vset.pattern.permute.xlu0 25
      %3394 = vperm.xlu0 %3393, %v1673
      %v3395 = vpop.permute.xlu0 %3394
      %3397 = vset.pattern.permute.xlu0 25
      %3398 = vperm.xlu0 %3397, %v1686
      %v3399 = vpop.permute.xlu0 %3398
      %3401 = vset.pattern.permute.xlu0 25
      %3402 = vperm.xlu0 %3401, %v1689
      %v3403 = vpop.permute.xlu0 %3402
      %v3405 = vsel %vm1702, %v3391, %v3399
      %v3406 = vsel %vm1702, %v3395, %v3403
      %v3407 = vmul.f32 %v3368, %v3350
      %v3408 = vmul.f32 %v3370, %v3351
      %v3409 = vlaneseq
      %v3410 = vshrl.u32 %v3409, 7
      %v3411 = vsub.s32 1, %v3410
      %v3412 = vrot.slane %v1695, %v3411
      %v3413 = vmul.f32 %v3412, %v3387
      %v3414 = vmul.f32 %v3412, %v3388
      %v3415 = vadd.f32 %v3407, %v3413
      %v3416 = vadd.f32 %v3408, %v3414
      %v3417 = vmul.f32 %v3415, %v3405
      %v3418 = vmul.f32 %v3416, %v3406
      %v3419 = vadd.f32 %v3417, %v3418
      %v3420 = vrot.slane %v3419, 4
      %v3421 = vadd.f32 %v3419, %v3420
      %v3422 = vrot.slane %v3421, 2
      %v3423 = vadd.f32 %v3421, %v3422
      %v3424 = vrot.slane %v3423, 1
      %v3425 = vadd.f32 %v3423, %v3424
      %v3426 = vlaneseq
      %v3427 = vshrl.u32 %v3426, 7
      %v3428 = vsub.s32 2, %v3427
      %v3429 = vrot.slane %v1590, %v3428
      %v3430 = vmul.f32 %v3429, %v394
      %v3431 = vmul.f32 %v3429, %v395
      %v3432 = vmul.f32 %v3430, 1.442695
      %v3433 = vpow.pop %v3432
      %v3434 = vmul.f32 %v3431, 1.442695
      %v3435 = vpow.pop %v3434
      %3436 = vset.pattern.permute.xlu0 26
      %3437 = vperm.xlu0 %3436, %v1662
      %v3438 = vpop.permute.xlu0 %3437
      %3440 = vset.pattern.permute.xlu0 26
      %3441 = vperm.xlu0 %3440, %v1665
      %v3442 = vpop.permute.xlu0 %3441
      %3444 = vset.pattern.permute.xlu0 26
      %3445 = vperm.xlu0 %3444, %v1678
      %v3446 = vpop.permute.xlu0 %3445
      %3448 = vset.pattern.permute.xlu0 26
      %3449 = vperm.xlu0 %3448, %v1681
      %v3450 = vpop.permute.xlu0 %3449
      %v3452 = vsel %vm1702, %v3438, %v3446
      %v3453 = vsel %vm1702, %v3442, %v3450
      %3454 = vset.pattern.permute.xlu0 26
      %3455 = vperm.xlu0 %3454, %v1670
      %v3456 = vpop.permute.xlu0 %3455
      %3458 = vset.pattern.permute.xlu0 26
      %3459 = vperm.xlu0 %3458, %v1673
      %v3460 = vpop.permute.xlu0 %3459
      %3462 = vset.pattern.permute.xlu0 26
      %3463 = vperm.xlu0 %3462, %v1686
      %v3464 = vpop.permute.xlu0 %3463
      %3466 = vset.pattern.permute.xlu0 26
      %3467 = vperm.xlu0 %3466, %v1689
      %v3468 = vpop.permute.xlu0 %3467
      %v3470 = vsel %vm1702, %v3456, %v3464
      %v3471 = vsel %vm1702, %v3460, %v3468
      %v3472 = vmul.f32 %v3433, %v3415
      %v3473 = vmul.f32 %v3435, %v3416
      %v3474 = vlaneseq
      %v3475 = vshrl.u32 %v3474, 7
      %v3476 = vsub.s32 2, %v3475
      %v3477 = vrot.slane %v1695, %v3476
      %v3478 = vmul.f32 %v3477, %v3452
      %v3479 = vmul.f32 %v3477, %v3453
      %v3480 = vadd.f32 %v3472, %v3478
      %v3481 = vadd.f32 %v3473, %v3479
      %v3482 = vmul.f32 %v3480, %v3470
      %v3483 = vmul.f32 %v3481, %v3471
      %v3484 = vadd.f32 %v3482, %v3483
      %v3485 = vrot.slane %v3484, 4
      %v3486 = vadd.f32 %v3484, %v3485
      %v3487 = vrot.slane %v3486, 2
      %v3488 = vadd.f32 %v3486, %v3487
      %v3489 = vrot.slane %v3488, 1
      %v3490 = vadd.f32 %v3488, %v3489
      %v3491 = vlaneseq
      %v3492 = vshrl.u32 %v3491, 7
      %v3493 = vsub.s32 3, %v3492
      %v3494 = vrot.slane %v1590, %v3493
      %v3495 = vmul.f32 %v3494, %v394
      %v3496 = vmul.f32 %v3494, %v395
      %v3497 = vmul.f32 %v3495, 1.442695
      %v3498 = vpow.pop %v3497
      %v3499 = vmul.f32 %v3496, 1.442695
      %v3500 = vpow.pop %v3499
      %3501 = vset.pattern.permute.xlu0 27
      %3502 = vperm.xlu0 %3501, %v1662
      %v3503 = vpop.permute.xlu0 %3502
      %3505 = vset.pattern.permute.xlu0 27
      %3506 = vperm.xlu0 %3505, %v1665
      %v3507 = vpop.permute.xlu0 %3506
      %3509 = vset.pattern.permute.xlu0 27
      %3510 = vperm.xlu0 %3509, %v1678
      %v3511 = vpop.permute.xlu0 %3510
      %3513 = vset.pattern.permute.xlu0 27
      %3514 = vperm.xlu0 %3513, %v1681
      %v3515 = vpop.permute.xlu0 %3514
      %v3517 = vsel %vm1702, %v3503, %v3511
      %v3518 = vsel %vm1702, %v3507, %v3515
      %3519 = vset.pattern.permute.xlu0 27
      %3520 = vperm.xlu0 %3519, %v1670
      %v3521 = vpop.permute.xlu0 %3520
      %3523 = vset.pattern.permute.xlu0 27
      %3524 = vperm.xlu0 %3523, %v1673
      %v3525 = vpop.permute.xlu0 %3524
      %3527 = vset.pattern.permute.xlu0 27
      %3528 = vperm.xlu0 %3527, %v1686
      %v3529 = vpop.permute.xlu0 %3528
      %3531 = vset.pattern.permute.xlu0 27
      %3532 = vperm.xlu0 %3531, %v1689
      %v3533 = vpop.permute.xlu0 %3532
      %v3535 = vsel %vm1702, %v3521, %v3529
      %v3536 = vsel %vm1702, %v3525, %v3533
      %v3537 = vmul.f32 %v3498, %v3480
      %v3538 = vmul.f32 %v3500, %v3481
      %v3539 = vlaneseq
      %v3540 = vshrl.u32 %v3539, 7
      %v3541 = vsub.s32 3, %v3540
      %v3542 = vrot.slane %v1695, %v3541
      %v3543 = vmul.f32 %v3542, %v3517
      %v3544 = vmul.f32 %v3542, %v3518
      %v3545 = vadd.f32 %v3537, %v3543
      %v3546 = vadd.f32 %v3538, %v3544
      %v3547 = vmul.f32 %v3545, %v3535
      %v3548 = vmul.f32 %v3546, %v3536
      %v3549 = vadd.f32 %v3547, %v3548
      %v3550 = vrot.slane %v3549, 4
      %v3551 = vadd.f32 %v3549, %v3550
      %v3552 = vrot.slane %v3551, 2
      %v3553 = vadd.f32 %v3551, %v3552
      %v3554 = vrot.slane %v3553, 1
      %v3555 = vadd.f32 %v3553, %v3554
      %v3556 = vlaneseq
      %v3557 = vshrl.u32 %v3556, 7
      %v3558 = vsub.s32 4, %v3557
      %v3559 = vrot.slane %v1590, %v3558
      %v3560 = vmul.f32 %v3559, %v394
      %v3561 = vmul.f32 %v3559, %v395
      %v3562 = vmul.f32 %v3560, 1.442695
      %v3563 = vpow.pop %v3562
      %v3564 = vmul.f32 %v3561, 1.442695
      %v3565 = vpow.pop %v3564
      %3566 = vset.pattern.permute.xlu0 28
      %3567 = vperm.xlu0 %3566, %v1662
      %v3568 = vpop.permute.xlu0 %3567
      %3570 = vset.pattern.permute.xlu0 28
      %3571 = vperm.xlu0 %3570, %v1665
      %v3572 = vpop.permute.xlu0 %3571
      %3574 = vset.pattern.permute.xlu0 28
      %3575 = vperm.xlu0 %3574, %v1678
      %v3576 = vpop.permute.xlu0 %3575
      %3578 = vset.pattern.permute.xlu0 28
      %3579 = vperm.xlu0 %3578, %v1681
      %v3580 = vpop.permute.xlu0 %3579
      %v3582 = vsel %vm1702, %v3568, %v3576
      %v3583 = vsel %vm1702, %v3572, %v3580
      %3584 = vset.pattern.permute.xlu0 28
      %3585 = vperm.xlu0 %3584, %v1670
      %v3586 = vpop.permute.xlu0 %3585
      %3588 = vset.pattern.permute.xlu0 28
      %3589 = vperm.xlu0 %3588, %v1673
      %v3590 = vpop.permute.xlu0 %3589
      %3592 = vset.pattern.permute.xlu0 28
      %3593 = vperm.xlu0 %3592, %v1686
      %v3594 = vpop.permute.xlu0 %3593
      %3596 = vset.pattern.permute.xlu0 28
      %3597 = vperm.xlu0 %3596, %v1689
      %v3598 = vpop.permute.xlu0 %3597
      %v3600 = vsel %vm1702, %v3586, %v3594
      %v3601 = vsel %vm1702, %v3590, %v3598
      %v3602 = vmul.f32 %v3563, %v3545
      %v3603 = vmul.f32 %v3565, %v3546
      %v3604 = vlaneseq
      %v3605 = vshrl.u32 %v3604, 7
      %v3606 = vsub.s32 4, %v3605
      %v3607 = vrot.slane %v1695, %v3606
      %v3608 = vmul.f32 %v3607, %v3582
      %v3609 = vmul.f32 %v3607, %v3583
      %v3610 = vadd.f32 %v3602, %v3608
      %v3611 = vadd.f32 %v3603, %v3609
      %v3612 = vmul.f32 %v3610, %v3600
      %v3613 = vmul.f32 %v3611, %v3601
      %v3614 = vadd.f32 %v3612, %v3613
      %v3615 = vrot.slane %v3614, 4
      %v3616 = vadd.f32 %v3614, %v3615
      %v3617 = vrot.slane %v3616, 2
      %v3618 = vadd.f32 %v3616, %v3617
      %v3619 = vrot.slane %v3618, 1
      %v3620 = vadd.f32 %v3618, %v3619
      %v3621 = vlaneseq
      %v3622 = vshrl.u32 %v3621, 7
      %v3623 = vsub.s32 5, %v3622
      %v3624 = vrot.slane %v1590, %v3623
      %v3625 = vmul.f32 %v3624, %v394
      %v3626 = vmul.f32 %v3624, %v395
      %v3627 = vmul.f32 %v3625, 1.442695
      %v3628 = vpow.pop %v3627
      %v3629 = vmul.f32 %v3626, 1.442695
      %v3630 = vpow.pop %v3629
      %3631 = vset.pattern.permute.xlu0 29
      %3632 = vperm.xlu0 %3631, %v1662
      %v3633 = vpop.permute.xlu0 %3632
      %3635 = vset.pattern.permute.xlu0 29
      %3636 = vperm.xlu0 %3635, %v1665
      %v3637 = vpop.permute.xlu0 %3636
      %3639 = vset.pattern.permute.xlu0 29
      %3640 = vperm.xlu0 %3639, %v1678
      %v3641 = vpop.permute.xlu0 %3640
      %3643 = vset.pattern.permute.xlu0 29
      %3644 = vperm.xlu0 %3643, %v1681
      %v3645 = vpop.permute.xlu0 %3644
      %v3647 = vsel %vm1702, %v3633, %v3641
      %v3648 = vsel %vm1702, %v3637, %v3645
      %3649 = vset.pattern.permute.xlu0 29
      %3650 = vperm.xlu0 %3649, %v1670
      %v3651 = vpop.permute.xlu0 %3650
      %3653 = vset.pattern.permute.xlu0 29
      %3654 = vperm.xlu0 %3653, %v1673
      %v3655 = vpop.permute.xlu0 %3654
      %3657 = vset.pattern.permute.xlu0 29
      %3658 = vperm.xlu0 %3657, %v1686
      %v3659 = vpop.permute.xlu0 %3658
      %3661 = vset.pattern.permute.xlu0 29
      %3662 = vperm.xlu0 %3661, %v1689
      %v3663 = vpop.permute.xlu0 %3662
      %v3665 = vsel %vm1702, %v3651, %v3659
      %v3666 = vsel %vm1702, %v3655, %v3663
      %v3667 = vmul.f32 %v3628, %v3610
      %v3668 = vmul.f32 %v3630, %v3611
      %v3669 = vlaneseq
      %v3670 = vshrl.u32 %v3669, 7
      %v3671 = vsub.s32 5, %v3670
      %v3672 = vrot.slane %v1695, %v3671
      %v3673 = vmul.f32 %v3672, %v3647
      %v3674 = vmul.f32 %v3672, %v3648
      %v3675 = vadd.f32 %v3667, %v3673
      %v3676 = vadd.f32 %v3668, %v3674
      %v3677 = vmul.f32 %v3675, %v3665
      %v3678 = vmul.f32 %v3676, %v3666
      %v3679 = vadd.f32 %v3677, %v3678
      %v3680 = vrot.slane %v3679, 4
      %v3681 = vadd.f32 %v3679, %v3680
      %v3682 = vrot.slane %v3681, 2
      %v3683 = vadd.f32 %v3681, %v3682
      %v3684 = vrot.slane %v3683, 1
      %v3685 = vadd.f32 %v3683, %v3684
      %v3686 = vlaneseq
      %v3687 = vshrl.u32 %v3686, 7
      %v3688 = vsub.s32 6, %v3687
      %v3689 = vrot.slane %v1590, %v3688
      %v3690 = vmul.f32 %v3689, %v394
      %v3691 = vmul.f32 %v3689, %v395
      %v3692 = vmul.f32 %v3690, 1.442695
      %v3693 = vpow.pop %v3692
      %v3694 = vmul.f32 %v3691, 1.442695
      %v3695 = vpow.pop %v3694
      %3696 = vset.pattern.permute.xlu0 30
      %3697 = vperm.xlu0 %3696, %v1662
      %v3698 = vpop.permute.xlu0 %3697
      %3700 = vset.pattern.permute.xlu0 30
      %3701 = vperm.xlu0 %3700, %v1665
      %v3702 = vpop.permute.xlu0 %3701
      %3704 = vset.pattern.permute.xlu0 30
      %3705 = vperm.xlu0 %3704, %v1678
      %v3706 = vpop.permute.xlu0 %3705
      %3708 = vset.pattern.permute.xlu0 30
      %3709 = vperm.xlu0 %3708, %v1681
      %v3710 = vpop.permute.xlu0 %3709
      %v3712 = vsel %vm1702, %v3698, %v3706
      %v3713 = vsel %vm1702, %v3702, %v3710
      %3714 = vset.pattern.permute.xlu0 30
      %3715 = vperm.xlu0 %3714, %v1670
      %v3716 = vpop.permute.xlu0 %3715
      %3718 = vset.pattern.permute.xlu0 30
      %3719 = vperm.xlu0 %3718, %v1673
      %v3720 = vpop.permute.xlu0 %3719
      %3722 = vset.pattern.permute.xlu0 30
      %3723 = vperm.xlu0 %3722, %v1686
      %v3724 = vpop.permute.xlu0 %3723
      %3726 = vset.pattern.permute.xlu0 30
      %3727 = vperm.xlu0 %3726, %v1689
      %v3728 = vpop.permute.xlu0 %3727
      %v3730 = vsel %vm1702, %v3716, %v3724
      %v3731 = vsel %vm1702, %v3720, %v3728
      %v3732 = vmul.f32 %v3693, %v3675
      %v3733 = vmul.f32 %v3695, %v3676
      %v3734 = vlaneseq
      %v3735 = vshrl.u32 %v3734, 7
      %v3736 = vsub.s32 6, %v3735
      %v3737 = vrot.slane %v1695, %v3736
      %v3738 = vmul.f32 %v3737, %v3712
      %v3739 = vmul.f32 %v3737, %v3713
      %v3740 = vadd.f32 %v3732, %v3738
      %v3741 = vadd.f32 %v3733, %v3739
      %v3742 = vmul.f32 %v3740, %v3730
      %v3743 = vmul.f32 %v3741, %v3731
      %v3744 = vadd.f32 %v3742, %v3743
      %v3745 = vrot.slane %v3744, 4
      %v3746 = vadd.f32 %v3744, %v3745
      %v3747 = vrot.slane %v3746, 2
      %v3748 = vadd.f32 %v3746, %v3747
      %v3749 = vrot.slane %v3748, 1
      %v3750 = vadd.f32 %v3748, %v3749
      %v3751 = vlaneseq
      %v3752 = vshrl.u32 %v3751, 7
      %v3753 = vsub.s32 7, %v3752
      %v3754 = vrot.slane %v1590, %v3753
      %v3755 = vmul.f32 %v3754, %v394
      %v3756 = vmul.f32 %v3754, %v395
      %v3757 = vmul.f32 %v3755, 1.442695
      %v3758 = vpow.pop %v3757
      %v3759 = vmul.f32 %v3756, 1.442695
      %v3760 = vpow.pop %v3759
      %3761 = vset.pattern.permute.xlu0 31
      %3762 = vperm.xlu0 %3761, %v1662
      %v3763 = vpop.permute.xlu0 %3762
      %3765 = vset.pattern.permute.xlu0 31
      %3766 = vperm.xlu0 %3765, %v1665
      %v3767 = vpop.permute.xlu0 %3766
      %3769 = vset.pattern.permute.xlu0 31
      %3770 = vperm.xlu0 %3769, %v1678
      %v3771 = vpop.permute.xlu0 %3770
      %3773 = vset.pattern.permute.xlu0 31
      %3774 = vperm.xlu0 %3773, %v1681
      %v3775 = vpop.permute.xlu0 %3774
      %v3777 = vsel %vm1702, %v3763, %v3771
      %v3778 = vsel %vm1702, %v3767, %v3775
      %3779 = vset.pattern.permute.xlu0 31
      %3780 = vperm.xlu0 %3779, %v1670
      %v3781 = vpop.permute.xlu0 %3780
      %3783 = vset.pattern.permute.xlu0 31
      %3784 = vperm.xlu0 %3783, %v1673
      %v3785 = vpop.permute.xlu0 %3784
      %3787 = vset.pattern.permute.xlu0 31
      %3788 = vperm.xlu0 %3787, %v1686
      %v3789 = vpop.permute.xlu0 %3788
      %3791 = vset.pattern.permute.xlu0 31
      %3792 = vperm.xlu0 %3791, %v1689
      %v3793 = vpop.permute.xlu0 %3792
      %v3795 = vsel %vm1702, %v3781, %v3789
      %v3796 = vsel %vm1702, %v3785, %v3793
      %v3797 = vmul.f32 %v3758, %v3740
      %v3798 = vmul.f32 %v3760, %v3741
      %v3799 = vlaneseq
      %v3800 = vshrl.u32 %v3799, 7
      %v3801 = vsub.s32 7, %v3800
      %v3802 = vrot.slane %v1695, %v3801
      %v3803 = vmul.f32 %v3802, %v3777
      %v3804 = vmul.f32 %v3802, %v3778
      %v3805 = vadd.f32 %v3797, %v3803
      %v3806 = vadd.f32 %v3798, %v3804
      %v3807 = vmul.f32 %v3805, %v3795
      %v3808 = vmul.f32 %v3806, %v3796
      %v3809 = vadd.f32 %v3807, %v3808
      %v3810 = vrot.slane %v3809, 4
      %v3811 = vadd.f32 %v3809, %v3810
      %v3812 = vrot.slane %v3811, 2
      %v3813 = vadd.f32 %v3811, %v3812
      %v3814 = vrot.slane %v3813, 1
      %v3815 = vadd.f32 %v3813, %v3814
      %v3816 = vsel %vm1194, %v3360, %v3425
      %v3817 = vsel %vm1132, %v3816, %v3490
      %v3818 = vsel %vm1070, %v3817, %v3555
      %v3819 = vsel %vm2234, %v3818, %v3620
      %v3820 = vsel %vm2236, %v3819, %v3685
      %v3821 = vsel %vm2238, %v3820, %v3750
      %v3822 = vsel %vm2240, %v3821, %v3815
      %v3823 = vlaneseq
      %v3824 = vshrl.u32 %v3823, 7
      %v3825 = vsub.s32 0, %v3824
      %v3826 = vrot.slane %v1591, %v3825
      %v3827 = vmul.f32 %v3826, %v394
      %v3828 = vmul.f32 %v3826, %v395
      %v3829 = vmul.f32 %v3827, 1.442695
      %v3830 = vpow.pop %v3829
      %v3831 = vmul.f32 %v3828, 1.442695
      %v3832 = vpow.pop %v3831
      %3833 = vset.pattern.permute.xlu0 32
      %3834 = vperm.xlu0 %3833, %v1662
      %v3835 = vpop.permute.xlu0 %3834
      %3837 = vset.pattern.permute.xlu0 32
      %3838 = vperm.xlu0 %3837, %v1665
      %v3839 = vpop.permute.xlu0 %3838
      %3841 = vset.pattern.permute.xlu0 32
      %3842 = vperm.xlu0 %3841, %v1678
      %v3843 = vpop.permute.xlu0 %3842
      %3845 = vset.pattern.permute.xlu0 32
      %3846 = vperm.xlu0 %3845, %v1681
      %v3847 = vpop.permute.xlu0 %3846
      %v3849 = vsel %vm1702, %v3835, %v3843
      %v3850 = vsel %vm1702, %v3839, %v3847
      %3851 = vset.pattern.permute.xlu0 32
      %3852 = vperm.xlu0 %3851, %v1670
      %v3853 = vpop.permute.xlu0 %3852
      %3855 = vset.pattern.permute.xlu0 32
      %3856 = vperm.xlu0 %3855, %v1673
      %v3857 = vpop.permute.xlu0 %3856
      %3859 = vset.pattern.permute.xlu0 32
      %3860 = vperm.xlu0 %3859, %v1686
      %v3861 = vpop.permute.xlu0 %3860
      %3863 = vset.pattern.permute.xlu0 32
      %3864 = vperm.xlu0 %3863, %v1689
      %v3865 = vpop.permute.xlu0 %3864
      %v3867 = vsel %vm1702, %v3853, %v3861
      %v3868 = vsel %vm1702, %v3857, %v3865
      %v3869 = vmul.f32 %v3830, %v3805
      %v3870 = vmul.f32 %v3832, %v3806
      %v3871 = vlaneseq
      %v3872 = vshrl.u32 %v3871, 7
      %v3873 = vsub.s32 0, %v3872
      %v3874 = vrot.slane %v1696, %v3873
      %v3875 = vmul.f32 %v3874, %v3849
      %v3876 = vmul.f32 %v3874, %v3850
      %v3877 = vadd.f32 %v3869, %v3875
      %v3878 = vadd.f32 %v3870, %v3876
      %v3879 = vmul.f32 %v3877, %v3867
      %v3880 = vmul.f32 %v3878, %v3868
      %v3881 = vadd.f32 %v3879, %v3880
      %v3882 = vrot.slane %v3881, 4
      %v3883 = vadd.f32 %v3881, %v3882
      %v3884 = vrot.slane %v3883, 2
      %v3885 = vadd.f32 %v3883, %v3884
      %v3886 = vrot.slane %v3885, 1
      %v3887 = vadd.f32 %v3885, %v3886
      %v3888 = vlaneseq
      %v3889 = vshrl.u32 %v3888, 7
      %v3890 = vsub.s32 1, %v3889
      %v3891 = vrot.slane %v1591, %v3890
      %v3892 = vmul.f32 %v3891, %v394
      %v3893 = vmul.f32 %v3891, %v395
      %v3894 = vmul.f32 %v3892, 1.442695
      %v3895 = vpow.pop %v3894
      %v3896 = vmul.f32 %v3893, 1.442695
      %v3897 = vpow.pop %v3896
      %3898 = vset.pattern.permute.xlu0 33
      %3899 = vperm.xlu0 %3898, %v1662
      %v3900 = vpop.permute.xlu0 %3899
      %3902 = vset.pattern.permute.xlu0 33
      %3903 = vperm.xlu0 %3902, %v1665
      %v3904 = vpop.permute.xlu0 %3903
      %3906 = vset.pattern.permute.xlu0 33
      %3907 = vperm.xlu0 %3906, %v1678
      %v3908 = vpop.permute.xlu0 %3907
      %3910 = vset.pattern.permute.xlu0 33
      %3911 = vperm.xlu0 %3910, %v1681
      %v3912 = vpop.permute.xlu0 %3911
      %v3914 = vsel %vm1702, %v3900, %v3908
      %v3915 = vsel %vm1702, %v3904, %v3912
      %3916 = vset.pattern.permute.xlu0 33
      %3917 = vperm.xlu0 %3916, %v1670
      %v3918 = vpop.permute.xlu0 %3917
      %3920 = vset.pattern.permute.xlu0 33
      %3921 = vperm.xlu0 %3920, %v1673
      %v3922 = vpop.permute.xlu0 %3921
      %3924 = vset.pattern.permute.xlu0 33
      %3925 = vperm.xlu0 %3924, %v1686
      %v3926 = vpop.permute.xlu0 %3925
      %3928 = vset.pattern.permute.xlu0 33
      %3929 = vperm.xlu0 %3928, %v1689
      %v3930 = vpop.permute.xlu0 %3929
      %v3932 = vsel %vm1702, %v3918, %v3926
      %v3933 = vsel %vm1702, %v3922, %v3930
      %v3934 = vmul.f32 %v3895, %v3877
      %v3935 = vmul.f32 %v3897, %v3878
      %v3936 = vlaneseq
      %v3937 = vshrl.u32 %v3936, 7
      %v3938 = vsub.s32 1, %v3937
      %v3939 = vrot.slane %v1696, %v3938
      %v3940 = vmul.f32 %v3939, %v3914
      %v3941 = vmul.f32 %v3939, %v3915
      %v3942 = vadd.f32 %v3934, %v3940
      %v3943 = vadd.f32 %v3935, %v3941
      %v3944 = vmul.f32 %v3942, %v3932
      %v3945 = vmul.f32 %v3943, %v3933
      %v3946 = vadd.f32 %v3944, %v3945
      %v3947 = vrot.slane %v3946, 4
      %v3948 = vadd.f32 %v3946, %v3947
      %v3949 = vrot.slane %v3948, 2
      %v3950 = vadd.f32 %v3948, %v3949
      %v3951 = vrot.slane %v3950, 1
      %v3952 = vadd.f32 %v3950, %v3951
      %v3953 = vlaneseq
      %v3954 = vshrl.u32 %v3953, 7
      %v3955 = vsub.s32 2, %v3954
      %v3956 = vrot.slane %v1591, %v3955
      %v3957 = vmul.f32 %v3956, %v394
      %v3958 = vmul.f32 %v3956, %v395
      %v3959 = vmul.f32 %v3957, 1.442695
      %v3960 = vpow.pop %v3959
      %v3961 = vmul.f32 %v3958, 1.442695
      %v3962 = vpow.pop %v3961
      %3963 = vset.pattern.permute.xlu0 34
      %3964 = vperm.xlu0 %3963, %v1662
      %v3965 = vpop.permute.xlu0 %3964
      %3967 = vset.pattern.permute.xlu0 34
      %3968 = vperm.xlu0 %3967, %v1665
      %v3969 = vpop.permute.xlu0 %3968
      %3971 = vset.pattern.permute.xlu0 34
      %3972 = vperm.xlu0 %3971, %v1678
      %v3973 = vpop.permute.xlu0 %3972
      %3975 = vset.pattern.permute.xlu0 34
      %3976 = vperm.xlu0 %3975, %v1681
      %v3977 = vpop.permute.xlu0 %3976
      %v3979 = vsel %vm1702, %v3965, %v3973
      %v3980 = vsel %vm1702, %v3969, %v3977
      %3981 = vset.pattern.permute.xlu0 34
      %3982 = vperm.xlu0 %3981, %v1670
      %v3983 = vpop.permute.xlu0 %3982
      %3985 = vset.pattern.permute.xlu0 34
      %3986 = vperm.xlu0 %3985, %v1673
      %v3987 = vpop.permute.xlu0 %3986
      %3989 = vset.pattern.permute.xlu0 34
      %3990 = vperm.xlu0 %3989, %v1686
      %v3991 = vpop.permute.xlu0 %3990
      %3993 = vset.pattern.permute.xlu0 34
      %3994 = vperm.xlu0 %3993, %v1689
      %v3995 = vpop.permute.xlu0 %3994
      %v3997 = vsel %vm1702, %v3983, %v3991
      %v3998 = vsel %vm1702, %v3987, %v3995
      %v3999 = vmul.f32 %v3960, %v3942
      %v4000 = vmul.f32 %v3962, %v3943
      %v4001 = vlaneseq
      %v4002 = vshrl.u32 %v4001, 7
      %v4003 = vsub.s32 2, %v4002
      %v4004 = vrot.slane %v1696, %v4003
      %v4005 = vmul.f32 %v4004, %v3979
      %v4006 = vmul.f32 %v4004, %v3980
      %v4007 = vadd.f32 %v3999, %v4005
      %v4008 = vadd.f32 %v4000, %v4006
      %v4009 = vmul.f32 %v4007, %v3997
      %v4010 = vmul.f32 %v4008, %v3998
      %v4011 = vadd.f32 %v4009, %v4010
      %v4012 = vrot.slane %v4011, 4
      %v4013 = vadd.f32 %v4011, %v4012
      %v4014 = vrot.slane %v4013, 2
      %v4015 = vadd.f32 %v4013, %v4014
      %v4016 = vrot.slane %v4015, 1
      %v4017 = vadd.f32 %v4015, %v4016
      %v4018 = vlaneseq
      %v4019 = vshrl.u32 %v4018, 7
      %v4020 = vsub.s32 3, %v4019
      %v4021 = vrot.slane %v1591, %v4020
      %v4022 = vmul.f32 %v4021, %v394
      %v4023 = vmul.f32 %v4021, %v395
      %v4024 = vmul.f32 %v4022, 1.442695
      %v4025 = vpow.pop %v4024
      %v4026 = vmul.f32 %v4023, 1.442695
      %v4027 = vpow.pop %v4026
      %4028 = vset.pattern.permute.xlu0 35
      %4029 = vperm.xlu0 %4028, %v1662
      %v4030 = vpop.permute.xlu0 %4029
      %4032 = vset.pattern.permute.xlu0 35
      %4033 = vperm.xlu0 %4032, %v1665
      %v4034 = vpop.permute.xlu0 %4033
      %4036 = vset.pattern.permute.xlu0 35
      %4037 = vperm.xlu0 %4036, %v1678
      %v4038 = vpop.permute.xlu0 %4037
      %4040 = vset.pattern.permute.xlu0 35
      %4041 = vperm.xlu0 %4040, %v1681
      %v4042 = vpop.permute.xlu0 %4041
      %v4044 = vsel %vm1702, %v4030, %v4038
      %v4045 = vsel %vm1702, %v4034, %v4042
      %4046 = vset.pattern.permute.xlu0 35
      %4047 = vperm.xlu0 %4046, %v1670
      %v4048 = vpop.permute.xlu0 %4047
      %4050 = vset.pattern.permute.xlu0 35
      %4051 = vperm.xlu0 %4050, %v1673
      %v4052 = vpop.permute.xlu0 %4051
      %4054 = vset.pattern.permute.xlu0 35
      %4055 = vperm.xlu0 %4054, %v1686
      %v4056 = vpop.permute.xlu0 %4055
      %4058 = vset.pattern.permute.xlu0 35
      %4059 = vperm.xlu0 %4058, %v1689
      %v4060 = vpop.permute.xlu0 %4059
      %v4062 = vsel %vm1702, %v4048, %v4056
      %v4063 = vsel %vm1702, %v4052, %v4060
      %v4064 = vmul.f32 %v4025, %v4007
      %v4065 = vmul.f32 %v4027, %v4008
      %v4066 = vlaneseq
      %v4067 = vshrl.u32 %v4066, 7
      %v4068 = vsub.s32 3, %v4067
      %v4069 = vrot.slane %v1696, %v4068
      %v4070 = vmul.f32 %v4069, %v4044
      %v4071 = vmul.f32 %v4069, %v4045
      %v4072 = vadd.f32 %v4064, %v4070
      %v4073 = vadd.f32 %v4065, %v4071
      %v4074 = vmul.f32 %v4072, %v4062
      %v4075 = vmul.f32 %v4073, %v4063
      %v4076 = vadd.f32 %v4074, %v4075
      %v4077 = vrot.slane %v4076, 4
      %v4078 = vadd.f32 %v4076, %v4077
      %v4079 = vrot.slane %v4078, 2
      %v4080 = vadd.f32 %v4078, %v4079
      %v4081 = vrot.slane %v4080, 1
      %v4082 = vadd.f32 %v4080, %v4081
      %v4083 = vlaneseq
      %v4084 = vshrl.u32 %v4083, 7
      %v4085 = vsub.s32 4, %v4084
      %v4086 = vrot.slane %v1591, %v4085
      %v4087 = vmul.f32 %v4086, %v394
      %v4088 = vmul.f32 %v4086, %v395
      %v4089 = vmul.f32 %v4087, 1.442695
      %v4090 = vpow.pop %v4089
      %v4091 = vmul.f32 %v4088, 1.442695
      %v4092 = vpow.pop %v4091
      %4093 = vset.pattern.permute.xlu0 36
      %4094 = vperm.xlu0 %4093, %v1662
      %v4095 = vpop.permute.xlu0 %4094
      %4097 = vset.pattern.permute.xlu0 36
      %4098 = vperm.xlu0 %4097, %v1665
      %v4099 = vpop.permute.xlu0 %4098
      %4101 = vset.pattern.permute.xlu0 36
      %4102 = vperm.xlu0 %4101, %v1678
      %v4103 = vpop.permute.xlu0 %4102
      %4105 = vset.pattern.permute.xlu0 36
      %4106 = vperm.xlu0 %4105, %v1681
      %v4107 = vpop.permute.xlu0 %4106
      %v4109 = vsel %vm1702, %v4095, %v4103
      %v4110 = vsel %vm1702, %v4099, %v4107
      %4111 = vset.pattern.permute.xlu0 36
      %4112 = vperm.xlu0 %4111, %v1670
      %v4113 = vpop.permute.xlu0 %4112
      %4115 = vset.pattern.permute.xlu0 36
      %4116 = vperm.xlu0 %4115, %v1673
      %v4117 = vpop.permute.xlu0 %4116
      %4119 = vset.pattern.permute.xlu0 36
      %4120 = vperm.xlu0 %4119, %v1686
      %v4121 = vpop.permute.xlu0 %4120
      %4123 = vset.pattern.permute.xlu0 36
      %4124 = vperm.xlu0 %4123, %v1689
      %v4125 = vpop.permute.xlu0 %4124
      %v4127 = vsel %vm1702, %v4113, %v4121
      %v4128 = vsel %vm1702, %v4117, %v4125
      %v4129 = vmul.f32 %v4090, %v4072
      %v4130 = vmul.f32 %v4092, %v4073
      %v4131 = vlaneseq
      %v4132 = vshrl.u32 %v4131, 7
      %v4133 = vsub.s32 4, %v4132
      %v4134 = vrot.slane %v1696, %v4133
      %v4135 = vmul.f32 %v4134, %v4109
      %v4136 = vmul.f32 %v4134, %v4110
      %v4137 = vadd.f32 %v4129, %v4135
      %v4138 = vadd.f32 %v4130, %v4136
      %v4139 = vmul.f32 %v4137, %v4127
      %v4140 = vmul.f32 %v4138, %v4128
      %v4141 = vadd.f32 %v4139, %v4140
      %v4142 = vrot.slane %v4141, 4
      %v4143 = vadd.f32 %v4141, %v4142
      %v4144 = vrot.slane %v4143, 2
      %v4145 = vadd.f32 %v4143, %v4144
      %v4146 = vrot.slane %v4145, 1
      %v4147 = vadd.f32 %v4145, %v4146
      %v4148 = vlaneseq
      %v4149 = vshrl.u32 %v4148, 7
      %v4150 = vsub.s32 5, %v4149
      %v4151 = vrot.slane %v1591, %v4150
      %v4152 = vmul.f32 %v4151, %v394
      %v4153 = vmul.f32 %v4151, %v395
      %v4154 = vmul.f32 %v4152, 1.442695
      %v4155 = vpow.pop %v4154
      %v4156 = vmul.f32 %v4153, 1.442695
      %v4157 = vpow.pop %v4156
      %4158 = vset.pattern.permute.xlu0 37
      %4159 = vperm.xlu0 %4158, %v1662
      %v4160 = vpop.permute.xlu0 %4159
      %4162 = vset.pattern.permute.xlu0 37
      %4163 = vperm.xlu0 %4162, %v1665
      %v4164 = vpop.permute.xlu0 %4163
      %4166 = vset.pattern.permute.xlu0 37
      %4167 = vperm.xlu0 %4166, %v1678
      %v4168 = vpop.permute.xlu0 %4167
      %4170 = vset.pattern.permute.xlu0 37
      %4171 = vperm.xlu0 %4170, %v1681
      %v4172 = vpop.permute.xlu0 %4171
      %v4174 = vsel %vm1702, %v4160, %v4168
      %v4175 = vsel %vm1702, %v4164, %v4172
      %4176 = vset.pattern.permute.xlu0 37
      %4177 = vperm.xlu0 %4176, %v1670
      %v4178 = vpop.permute.xlu0 %4177
      %4180 = vset.pattern.permute.xlu0 37
      %4181 = vperm.xlu0 %4180, %v1673
      %v4182 = vpop.permute.xlu0 %4181
      %4184 = vset.pattern.permute.xlu0 37
      %4185 = vperm.xlu0 %4184, %v1686
      %v4186 = vpop.permute.xlu0 %4185
      %4188 = vset.pattern.permute.xlu0 37
      %4189 = vperm.xlu0 %4188, %v1689
      %v4190 = vpop.permute.xlu0 %4189
      %v4192 = vsel %vm1702, %v4178, %v4186
      %v4193 = vsel %vm1702, %v4182, %v4190
      %v4194 = vmul.f32 %v4155, %v4137
      %v4195 = vmul.f32 %v4157, %v4138
      %v4196 = vlaneseq
      %v4197 = vshrl.u32 %v4196, 7
      %v4198 = vsub.s32 5, %v4197
      %v4199 = vrot.slane %v1696, %v4198
      %v4200 = vmul.f32 %v4199, %v4174
      %v4201 = vmul.f32 %v4199, %v4175
      %v4202 = vadd.f32 %v4194, %v4200
      %v4203 = vadd.f32 %v4195, %v4201
      %v4204 = vmul.f32 %v4202, %v4192
      %v4205 = vmul.f32 %v4203, %v4193
      %v4206 = vadd.f32 %v4204, %v4205
      %v4207 = vrot.slane %v4206, 4
      %v4208 = vadd.f32 %v4206, %v4207
      %v4209 = vrot.slane %v4208, 2
      %v4210 = vadd.f32 %v4208, %v4209
      %v4211 = vrot.slane %v4210, 1
      %v4212 = vadd.f32 %v4210, %v4211
      %v4213 = vlaneseq
      %v4214 = vshrl.u32 %v4213, 7
      %v4215 = vsub.s32 6, %v4214
      %v4216 = vrot.slane %v1591, %v4215
      %v4217 = vmul.f32 %v4216, %v394
      %v4218 = vmul.f32 %v4216, %v395
      %v4219 = vmul.f32 %v4217, 1.442695
      %v4220 = vpow.pop %v4219
      %v4221 = vmul.f32 %v4218, 1.442695
      %v4222 = vpow.pop %v4221
      %4223 = vset.pattern.permute.xlu0 38
      %4224 = vperm.xlu0 %4223, %v1662
      %v4225 = vpop.permute.xlu0 %4224
      %4227 = vset.pattern.permute.xlu0 38
      %4228 = vperm.xlu0 %4227, %v1665
      %v4229 = vpop.permute.xlu0 %4228
      %4231 = vset.pattern.permute.xlu0 38
      %4232 = vperm.xlu0 %4231, %v1678
      %v4233 = vpop.permute.xlu0 %4232
      %4235 = vset.pattern.permute.xlu0 38
      %4236 = vperm.xlu0 %4235, %v1681
      %v4237 = vpop.permute.xlu0 %4236
      %v4239 = vsel %vm1702, %v4225, %v4233
      %v4240 = vsel %vm1702, %v4229, %v4237
      %4241 = vset.pattern.permute.xlu0 38
      %4242 = vperm.xlu0 %4241, %v1670
      %v4243 = vpop.permute.xlu0 %4242
      %4245 = vset.pattern.permute.xlu0 38
      %4246 = vperm.xlu0 %4245, %v1673
      %v4247 = vpop.permute.xlu0 %4246
      %4249 = vset.pattern.permute.xlu0 38
      %4250 = vperm.xlu0 %4249, %v1686
      %v4251 = vpop.permute.xlu0 %4250
      %4253 = vset.pattern.permute.xlu0 38
      %4254 = vperm.xlu0 %4253, %v1689
      %v4255 = vpop.permute.xlu0 %4254
      %v4257 = vsel %vm1702, %v4243, %v4251
      %v4258 = vsel %vm1702, %v4247, %v4255
      %v4259 = vmul.f32 %v4220, %v4202
      %v4260 = vmul.f32 %v4222, %v4203
      %v4261 = vlaneseq
      %v4262 = vshrl.u32 %v4261, 7
      %v4263 = vsub.s32 6, %v4262
      %v4264 = vrot.slane %v1696, %v4263
      %v4265 = vmul.f32 %v4264, %v4239
      %v4266 = vmul.f32 %v4264, %v4240
      %v4267 = vadd.f32 %v4259, %v4265
      %v4268 = vadd.f32 %v4260, %v4266
      %v4269 = vmul.f32 %v4267, %v4257
      %v4270 = vmul.f32 %v4268, %v4258
      %v4271 = vadd.f32 %v4269, %v4270
      %v4272 = vrot.slane %v4271, 4
      %v4273 = vadd.f32 %v4271, %v4272
      %v4274 = vrot.slane %v4273, 2
      %v4275 = vadd.f32 %v4273, %v4274
      %v4276 = vrot.slane %v4275, 1
      %v4277 = vadd.f32 %v4275, %v4276
      %v4278 = vlaneseq
      %v4279 = vshrl.u32 %v4278, 7
      %v4280 = vsub.s32 7, %v4279
      %v4281 = vrot.slane %v1591, %v4280
      %v4282 = vmul.f32 %v4281, %v394
      %v4283 = vmul.f32 %v4281, %v395
      %v4284 = vmul.f32 %v4282, 1.442695
      %v4285 = vpow.pop %v4284
      %v4286 = vmul.f32 %v4283, 1.442695
      %v4287 = vpow.pop %v4286
      %4288 = vset.pattern.permute.xlu0 39
      %4289 = vperm.xlu0 %4288, %v1662
      %v4290 = vpop.permute.xlu0 %4289
      %4292 = vset.pattern.permute.xlu0 39
      %4293 = vperm.xlu0 %4292, %v1665
      %v4294 = vpop.permute.xlu0 %4293
      %4296 = vset.pattern.permute.xlu0 39
      %4297 = vperm.xlu0 %4296, %v1678
      %v4298 = vpop.permute.xlu0 %4297
      %4300 = vset.pattern.permute.xlu0 39
      %4301 = vperm.xlu0 %4300, %v1681
      %v4302 = vpop.permute.xlu0 %4301
      %v4304 = vsel %vm1702, %v4290, %v4298
      %v4305 = vsel %vm1702, %v4294, %v4302
      %4306 = vset.pattern.permute.xlu0 39
      %4307 = vperm.xlu0 %4306, %v1670
      %v4308 = vpop.permute.xlu0 %4307
      %4310 = vset.pattern.permute.xlu0 39
      %4311 = vperm.xlu0 %4310, %v1673
      %v4312 = vpop.permute.xlu0 %4311
      %4314 = vset.pattern.permute.xlu0 39
      %4315 = vperm.xlu0 %4314, %v1686
      %v4316 = vpop.permute.xlu0 %4315
      %4318 = vset.pattern.permute.xlu0 39
      %4319 = vperm.xlu0 %4318, %v1689
      %v4320 = vpop.permute.xlu0 %4319
      %v4322 = vsel %vm1702, %v4308, %v4316
      %v4323 = vsel %vm1702, %v4312, %v4320
      %v4324 = vmul.f32 %v4285, %v4267
      %v4325 = vmul.f32 %v4287, %v4268
      %v4326 = vlaneseq
      %v4327 = vshrl.u32 %v4326, 7
      %v4328 = vsub.s32 7, %v4327
      %v4329 = vrot.slane %v1696, %v4328
      %v4330 = vmul.f32 %v4329, %v4304
      %v4331 = vmul.f32 %v4329, %v4305
      %v4332 = vadd.f32 %v4324, %v4330
      %v4333 = vadd.f32 %v4325, %v4331
      %v4334 = vmul.f32 %v4332, %v4322
      %v4335 = vmul.f32 %v4333, %v4323
      %v4336 = vadd.f32 %v4334, %v4335
      %v4337 = vrot.slane %v4336, 4
      %v4338 = vadd.f32 %v4336, %v4337
      %v4339 = vrot.slane %v4338, 2
      %v4340 = vadd.f32 %v4338, %v4339
      %v4341 = vrot.slane %v4340, 1
      %v4342 = vadd.f32 %v4340, %v4341
      %v4343 = vsel %vm1194, %v3887, %v3952
      %v4344 = vsel %vm1132, %v4343, %v4017
      %v4345 = vsel %vm1070, %v4344, %v4082
      %v4346 = vsel %vm2234, %v4345, %v4147
      %v4347 = vsel %vm2236, %v4346, %v4212
      %v4348 = vsel %vm2238, %v4347, %v4277
      %v4349 = vsel %vm2240, %v4348, %v4342
      %v4350 = vlaneseq
      %v4351 = vshrl.u32 %v4350, 7
      %v4352 = vsub.s32 0, %v4351
      %v4353 = vrot.slane %v1592, %v4352
      %v4354 = vmul.f32 %v4353, %v394
      %v4355 = vmul.f32 %v4353, %v395
      %v4356 = vmul.f32 %v4354, 1.442695
      %v4357 = vpow.pop %v4356
      %v4358 = vmul.f32 %v4355, 1.442695
      %v4359 = vpow.pop %v4358
      %4360 = vset.pattern.permute.xlu0 40
      %4361 = vperm.xlu0 %4360, %v1662
      %v4362 = vpop.permute.xlu0 %4361
      %4364 = vset.pattern.permute.xlu0 40
      %4365 = vperm.xlu0 %4364, %v1665
      %v4366 = vpop.permute.xlu0 %4365
      %4368 = vset.pattern.permute.xlu0 40
      %4369 = vperm.xlu0 %4368, %v1678
      %v4370 = vpop.permute.xlu0 %4369
      %4372 = vset.pattern.permute.xlu0 40
      %4373 = vperm.xlu0 %4372, %v1681
      %v4374 = vpop.permute.xlu0 %4373
      %v4376 = vsel %vm1702, %v4362, %v4370
      %v4377 = vsel %vm1702, %v4366, %v4374
      %4378 = vset.pattern.permute.xlu0 40
      %4379 = vperm.xlu0 %4378, %v1670
      %v4380 = vpop.permute.xlu0 %4379
      %4382 = vset.pattern.permute.xlu0 40
      %4383 = vperm.xlu0 %4382, %v1673
      %v4384 = vpop.permute.xlu0 %4383
      %4386 = vset.pattern.permute.xlu0 40
      %4387 = vperm.xlu0 %4386, %v1686
      %v4388 = vpop.permute.xlu0 %4387
      %4390 = vset.pattern.permute.xlu0 40
      %4391 = vperm.xlu0 %4390, %v1689
      %v4392 = vpop.permute.xlu0 %4391
      %v4394 = vsel %vm1702, %v4380, %v4388
      %v4395 = vsel %vm1702, %v4384, %v4392
      %v4396 = vmul.f32 %v4357, %v4332
      %v4397 = vmul.f32 %v4359, %v4333
      %v4398 = vlaneseq
      %v4399 = vshrl.u32 %v4398, 7
      %v4400 = vsub.s32 0, %v4399
      %v4401 = vrot.slane %v1697, %v4400
      %v4402 = vmul.f32 %v4401, %v4376
      %v4403 = vmul.f32 %v4401, %v4377
      %v4404 = vadd.f32 %v4396, %v4402
      %v4405 = vadd.f32 %v4397, %v4403
      %v4406 = vmul.f32 %v4404, %v4394
      %v4407 = vmul.f32 %v4405, %v4395
      %v4408 = vadd.f32 %v4406, %v4407
      %v4409 = vrot.slane %v4408, 4
      %v4410 = vadd.f32 %v4408, %v4409
      %v4411 = vrot.slane %v4410, 2
      %v4412 = vadd.f32 %v4410, %v4411
      %v4413 = vrot.slane %v4412, 1
      %v4414 = vadd.f32 %v4412, %v4413
      %v4415 = vlaneseq
      %v4416 = vshrl.u32 %v4415, 7
      %v4417 = vsub.s32 1, %v4416
      %v4418 = vrot.slane %v1592, %v4417
      %v4419 = vmul.f32 %v4418, %v394
      %v4420 = vmul.f32 %v4418, %v395
      %v4421 = vmul.f32 %v4419, 1.442695
      %v4422 = vpow.pop %v4421
      %v4423 = vmul.f32 %v4420, 1.442695
      %v4424 = vpow.pop %v4423
      %4425 = vset.pattern.permute.xlu0 41
      %4426 = vperm.xlu0 %4425, %v1662
      %v4427 = vpop.permute.xlu0 %4426
      %4429 = vset.pattern.permute.xlu0 41
      %4430 = vperm.xlu0 %4429, %v1665
      %v4431 = vpop.permute.xlu0 %4430
      %4433 = vset.pattern.permute.xlu0 41
      %4434 = vperm.xlu0 %4433, %v1678
      %v4435 = vpop.permute.xlu0 %4434
      %4437 = vset.pattern.permute.xlu0 41
      %4438 = vperm.xlu0 %4437, %v1681
      %v4439 = vpop.permute.xlu0 %4438
      %v4441 = vsel %vm1702, %v4427, %v4435
      %v4442 = vsel %vm1702, %v4431, %v4439
      %4443 = vset.pattern.permute.xlu0 41
      %4444 = vperm.xlu0 %4443, %v1670
      %v4445 = vpop.permute.xlu0 %4444
      %4447 = vset.pattern.permute.xlu0 41
      %4448 = vperm.xlu0 %4447, %v1673
      %v4449 = vpop.permute.xlu0 %4448
      %4451 = vset.pattern.permute.xlu0 41
      %4452 = vperm.xlu0 %4451, %v1686
      %v4453 = vpop.permute.xlu0 %4452
      %4455 = vset.pattern.permute.xlu0 41
      %4456 = vperm.xlu0 %4455, %v1689
      %v4457 = vpop.permute.xlu0 %4456
      %v4459 = vsel %vm1702, %v4445, %v4453
      %v4460 = vsel %vm1702, %v4449, %v4457
      %v4461 = vmul.f32 %v4422, %v4404
      %v4462 = vmul.f32 %v4424, %v4405
      %v4463 = vlaneseq
      %v4464 = vshrl.u32 %v4463, 7
      %v4465 = vsub.s32 1, %v4464
      %v4466 = vrot.slane %v1697, %v4465
      %v4467 = vmul.f32 %v4466, %v4441
      %v4468 = vmul.f32 %v4466, %v4442
      %v4469 = vadd.f32 %v4461, %v4467
      %v4470 = vadd.f32 %v4462, %v4468
      %v4471 = vmul.f32 %v4469, %v4459
      %v4472 = vmul.f32 %v4470, %v4460
      %v4473 = vadd.f32 %v4471, %v4472
      %v4474 = vrot.slane %v4473, 4
      %v4475 = vadd.f32 %v4473, %v4474
      %v4476 = vrot.slane %v4475, 2
      %v4477 = vadd.f32 %v4475, %v4476
      %v4478 = vrot.slane %v4477, 1
      %v4479 = vadd.f32 %v4477, %v4478
      %v4480 = vlaneseq
      %v4481 = vshrl.u32 %v4480, 7
      %v4482 = vsub.s32 2, %v4481
      %v4483 = vrot.slane %v1592, %v4482
      %v4484 = vmul.f32 %v4483, %v394
      %v4485 = vmul.f32 %v4483, %v395
      %v4486 = vmul.f32 %v4484, 1.442695
      %v4487 = vpow.pop %v4486
      %v4488 = vmul.f32 %v4485, 1.442695
      %v4489 = vpow.pop %v4488
      %4490 = vset.pattern.permute.xlu0 42
      %4491 = vperm.xlu0 %4490, %v1662
      %v4492 = vpop.permute.xlu0 %4491
      %4494 = vset.pattern.permute.xlu0 42
      %4495 = vperm.xlu0 %4494, %v1665
      %v4496 = vpop.permute.xlu0 %4495
      %4498 = vset.pattern.permute.xlu0 42
      %4499 = vperm.xlu0 %4498, %v1678
      %v4500 = vpop.permute.xlu0 %4499
      %4502 = vset.pattern.permute.xlu0 42
      %4503 = vperm.xlu0 %4502, %v1681
      %v4504 = vpop.permute.xlu0 %4503
      %v4506 = vsel %vm1702, %v4492, %v4500
      %v4507 = vsel %vm1702, %v4496, %v4504
      %4508 = vset.pattern.permute.xlu0 42
      %4509 = vperm.xlu0 %4508, %v1670
      %v4510 = vpop.permute.xlu0 %4509
      %4512 = vset.pattern.permute.xlu0 42
      %4513 = vperm.xlu0 %4512, %v1673
      %v4514 = vpop.permute.xlu0 %4513
      %4516 = vset.pattern.permute.xlu0 42
      %4517 = vperm.xlu0 %4516, %v1686
      %v4518 = vpop.permute.xlu0 %4517
      %4520 = vset.pattern.permute.xlu0 42
      %4521 = vperm.xlu0 %4520, %v1689
      %v4522 = vpop.permute.xlu0 %4521
      %v4524 = vsel %vm1702, %v4510, %v4518
      %v4525 = vsel %vm1702, %v4514, %v4522
      %v4526 = vmul.f32 %v4487, %v4469
      %v4527 = vmul.f32 %v4489, %v4470
      %v4528 = vlaneseq
      %v4529 = vshrl.u32 %v4528, 7
      %v4530 = vsub.s32 2, %v4529
      %v4531 = vrot.slane %v1697, %v4530
      %v4532 = vmul.f32 %v4531, %v4506
      %v4533 = vmul.f32 %v4531, %v4507
      %v4534 = vadd.f32 %v4526, %v4532
      %v4535 = vadd.f32 %v4527, %v4533
      %v4536 = vmul.f32 %v4534, %v4524
      %v4537 = vmul.f32 %v4535, %v4525
      %v4538 = vadd.f32 %v4536, %v4537
      %v4539 = vrot.slane %v4538, 4
      %v4540 = vadd.f32 %v4538, %v4539
      %v4541 = vrot.slane %v4540, 2
      %v4542 = vadd.f32 %v4540, %v4541
      %v4543 = vrot.slane %v4542, 1
      %v4544 = vadd.f32 %v4542, %v4543
      %v4545 = vlaneseq
      %v4546 = vshrl.u32 %v4545, 7
      %v4547 = vsub.s32 3, %v4546
      %v4548 = vrot.slane %v1592, %v4547
      %v4549 = vmul.f32 %v4548, %v394
      %v4550 = vmul.f32 %v4548, %v395
      %v4551 = vmul.f32 %v4549, 1.442695
      %v4552 = vpow.pop %v4551
      %v4553 = vmul.f32 %v4550, 1.442695
      %v4554 = vpow.pop %v4553
      %4555 = vset.pattern.permute.xlu0 43
      %4556 = vperm.xlu0 %4555, %v1662
      %v4557 = vpop.permute.xlu0 %4556
      %4559 = vset.pattern.permute.xlu0 43
      %4560 = vperm.xlu0 %4559, %v1665
      %v4561 = vpop.permute.xlu0 %4560
      %4563 = vset.pattern.permute.xlu0 43
      %4564 = vperm.xlu0 %4563, %v1678
      %v4565 = vpop.permute.xlu0 %4564
      %4567 = vset.pattern.permute.xlu0 43
      %4568 = vperm.xlu0 %4567, %v1681
      %v4569 = vpop.permute.xlu0 %4568
      %v4571 = vsel %vm1702, %v4557, %v4565
      %v4572 = vsel %vm1702, %v4561, %v4569
      %4573 = vset.pattern.permute.xlu0 43
      %4574 = vperm.xlu0 %4573, %v1670
      %v4575 = vpop.permute.xlu0 %4574
      %4577 = vset.pattern.permute.xlu0 43
      %4578 = vperm.xlu0 %4577, %v1673
      %v4579 = vpop.permute.xlu0 %4578
      %4581 = vset.pattern.permute.xlu0 43
      %4582 = vperm.xlu0 %4581, %v1686
      %v4583 = vpop.permute.xlu0 %4582
      %4585 = vset.pattern.permute.xlu0 43
      %4586 = vperm.xlu0 %4585, %v1689
      %v4587 = vpop.permute.xlu0 %4586
      %v4589 = vsel %vm1702, %v4575, %v4583
      %v4590 = vsel %vm1702, %v4579, %v4587
      %v4591 = vmul.f32 %v4552, %v4534
      %v4592 = vmul.f32 %v4554, %v4535
      %v4593 = vlaneseq
      %v4594 = vshrl.u32 %v4593, 7
      %v4595 = vsub.s32 3, %v4594
      %v4596 = vrot.slane %v1697, %v4595
      %v4597 = vmul.f32 %v4596, %v4571
      %v4598 = vmul.f32 %v4596, %v4572
      %v4599 = vadd.f32 %v4591, %v4597
      %v4600 = vadd.f32 %v4592, %v4598
      %v4601 = vmul.f32 %v4599, %v4589
      %v4602 = vmul.f32 %v4600, %v4590
      %v4603 = vadd.f32 %v4601, %v4602
      %v4604 = vrot.slane %v4603, 4
      %v4605 = vadd.f32 %v4603, %v4604
      %v4606 = vrot.slane %v4605, 2
      %v4607 = vadd.f32 %v4605, %v4606
      %v4608 = vrot.slane %v4607, 1
      %v4609 = vadd.f32 %v4607, %v4608
      %v4610 = vlaneseq
      %v4611 = vshrl.u32 %v4610, 7
      %v4612 = vsub.s32 4, %v4611
      %v4613 = vrot.slane %v1592, %v4612
      %v4614 = vmul.f32 %v4613, %v394
      %v4615 = vmul.f32 %v4613, %v395
      %v4616 = vmul.f32 %v4614, 1.442695
      %v4617 = vpow.pop %v4616
      %v4618 = vmul.f32 %v4615, 1.442695
      %v4619 = vpow.pop %v4618
      %4620 = vset.pattern.permute.xlu0 44
      %4621 = vperm.xlu0 %4620, %v1662
      %v4622 = vpop.permute.xlu0 %4621
      %4624 = vset.pattern.permute.xlu0 44
      %4625 = vperm.xlu0 %4624, %v1665
      %v4626 = vpop.permute.xlu0 %4625
      %4628 = vset.pattern.permute.xlu0 44
      %4629 = vperm.xlu0 %4628, %v1678
      %v4630 = vpop.permute.xlu0 %4629
      %4632 = vset.pattern.permute.xlu0 44
      %4633 = vperm.xlu0 %4632, %v1681
      %v4634 = vpop.permute.xlu0 %4633
      %v4636 = vsel %vm1702, %v4622, %v4630
      %v4637 = vsel %vm1702, %v4626, %v4634
      %4638 = vset.pattern.permute.xlu0 44
      %4639 = vperm.xlu0 %4638, %v1670
      %v4640 = vpop.permute.xlu0 %4639
      %4642 = vset.pattern.permute.xlu0 44
      %4643 = vperm.xlu0 %4642, %v1673
      %v4644 = vpop.permute.xlu0 %4643
      %4646 = vset.pattern.permute.xlu0 44
      %4647 = vperm.xlu0 %4646, %v1686
      %v4648 = vpop.permute.xlu0 %4647
      %4650 = vset.pattern.permute.xlu0 44
      %4651 = vperm.xlu0 %4650, %v1689
      %v4652 = vpop.permute.xlu0 %4651
      %v4654 = vsel %vm1702, %v4640, %v4648
      %v4655 = vsel %vm1702, %v4644, %v4652
      %v4656 = vmul.f32 %v4617, %v4599
      %v4657 = vmul.f32 %v4619, %v4600
      %v4658 = vlaneseq
      %v4659 = vshrl.u32 %v4658, 7
      %v4660 = vsub.s32 4, %v4659
      %v4661 = vrot.slane %v1697, %v4660
      %v4662 = vmul.f32 %v4661, %v4636
      %v4663 = vmul.f32 %v4661, %v4637
      %v4664 = vadd.f32 %v4656, %v4662
      %v4665 = vadd.f32 %v4657, %v4663
      %v4666 = vmul.f32 %v4664, %v4654
      %v4667 = vmul.f32 %v4665, %v4655
      %v4668 = vadd.f32 %v4666, %v4667
      %v4669 = vrot.slane %v4668, 4
      %v4670 = vadd.f32 %v4668, %v4669
      %v4671 = vrot.slane %v4670, 2
      %v4672 = vadd.f32 %v4670, %v4671
      %v4673 = vrot.slane %v4672, 1
      %v4674 = vadd.f32 %v4672, %v4673
      %v4675 = vlaneseq
      %v4676 = vshrl.u32 %v4675, 7
      %v4677 = vsub.s32 5, %v4676
      %v4678 = vrot.slane %v1592, %v4677
      %v4679 = vmul.f32 %v4678, %v394
      %v4680 = vmul.f32 %v4678, %v395
      %v4681 = vmul.f32 %v4679, 1.442695
      %v4682 = vpow.pop %v4681
      %v4683 = vmul.f32 %v4680, 1.442695
      %v4684 = vpow.pop %v4683
      %4685 = vset.pattern.permute.xlu0 45
      %4686 = vperm.xlu0 %4685, %v1662
      %v4687 = vpop.permute.xlu0 %4686
      %4689 = vset.pattern.permute.xlu0 45
      %4690 = vperm.xlu0 %4689, %v1665
      %v4691 = vpop.permute.xlu0 %4690
      %4693 = vset.pattern.permute.xlu0 45
      %4694 = vperm.xlu0 %4693, %v1678
      %v4695 = vpop.permute.xlu0 %4694
      %4697 = vset.pattern.permute.xlu0 45
      %4698 = vperm.xlu0 %4697, %v1681
      %v4699 = vpop.permute.xlu0 %4698
      %v4701 = vsel %vm1702, %v4687, %v4695
      %v4702 = vsel %vm1702, %v4691, %v4699
      %4703 = vset.pattern.permute.xlu0 45
      %4704 = vperm.xlu0 %4703, %v1670
      %v4705 = vpop.permute.xlu0 %4704
      %4707 = vset.pattern.permute.xlu0 45
      %4708 = vperm.xlu0 %4707, %v1673
      %v4709 = vpop.permute.xlu0 %4708
      %4711 = vset.pattern.permute.xlu0 45
      %4712 = vperm.xlu0 %4711, %v1686
      %v4713 = vpop.permute.xlu0 %4712
      %4715 = vset.pattern.permute.xlu0 45
      %4716 = vperm.xlu0 %4715, %v1689
      %v4717 = vpop.permute.xlu0 %4716
      %v4719 = vsel %vm1702, %v4705, %v4713
      %v4720 = vsel %vm1702, %v4709, %v4717
      %v4721 = vmul.f32 %v4682, %v4664
      %v4722 = vmul.f32 %v4684, %v4665
      %v4723 = vlaneseq
      %v4724 = vshrl.u32 %v4723, 7
      %v4725 = vsub.s32 5, %v4724
      %v4726 = vrot.slane %v1697, %v4725
      %v4727 = vmul.f32 %v4726, %v4701
      %v4728 = vmul.f32 %v4726, %v4702
      %v4729 = vadd.f32 %v4721, %v4727
      %v4730 = vadd.f32 %v4722, %v4728
      %v4731 = vmul.f32 %v4729, %v4719
      %v4732 = vmul.f32 %v4730, %v4720
      %v4733 = vadd.f32 %v4731, %v4732
      %v4734 = vrot.slane %v4733, 4
      %v4735 = vadd.f32 %v4733, %v4734
      %v4736 = vrot.slane %v4735, 2
      %v4737 = vadd.f32 %v4735, %v4736
      %v4738 = vrot.slane %v4737, 1
      %v4739 = vadd.f32 %v4737, %v4738
      %v4740 = vlaneseq
      %v4741 = vshrl.u32 %v4740, 7
      %v4742 = vsub.s32 6, %v4741
      %v4743 = vrot.slane %v1592, %v4742
      %v4744 = vmul.f32 %v4743, %v394
      %v4745 = vmul.f32 %v4743, %v395
      %v4746 = vmul.f32 %v4744, 1.442695
      %v4747 = vpow.pop %v4746
      %v4748 = vmul.f32 %v4745, 1.442695
      %v4749 = vpow.pop %v4748
      %4750 = vset.pattern.permute.xlu0 46
      %4751 = vperm.xlu0 %4750, %v1662
      %v4752 = vpop.permute.xlu0 %4751
      %4754 = vset.pattern.permute.xlu0 46
      %4755 = vperm.xlu0 %4754, %v1665
      %v4756 = vpop.permute.xlu0 %4755
      %4758 = vset.pattern.permute.xlu0 46
      %4759 = vperm.xlu0 %4758, %v1678
      %v4760 = vpop.permute.xlu0 %4759
      %4762 = vset.pattern.permute.xlu0 46
      %4763 = vperm.xlu0 %4762, %v1681
      %v4764 = vpop.permute.xlu0 %4763
      %v4766 = vsel %vm1702, %v4752, %v4760
      %v4767 = vsel %vm1702, %v4756, %v4764
      %4768 = vset.pattern.permute.xlu0 46
      %4769 = vperm.xlu0 %4768, %v1670
      %v4770 = vpop.permute.xlu0 %4769
      %4772 = vset.pattern.permute.xlu0 46
      %4773 = vperm.xlu0 %4772, %v1673
      %v4774 = vpop.permute.xlu0 %4773
      %4776 = vset.pattern.permute.xlu0 46
      %4777 = vperm.xlu0 %4776, %v1686
      %v4778 = vpop.permute.xlu0 %4777
      %4780 = vset.pattern.permute.xlu0 46
      %4781 = vperm.xlu0 %4780, %v1689
      %v4782 = vpop.permute.xlu0 %4781
      %v4784 = vsel %vm1702, %v4770, %v4778
      %v4785 = vsel %vm1702, %v4774, %v4782
      %v4786 = vmul.f32 %v4747, %v4729
      %v4787 = vmul.f32 %v4749, %v4730
      %v4788 = vlaneseq
      %v4789 = vshrl.u32 %v4788, 7
      %v4790 = vsub.s32 6, %v4789
      %v4791 = vrot.slane %v1697, %v4790
      %v4792 = vmul.f32 %v4791, %v4766
      %v4793 = vmul.f32 %v4791, %v4767
      %v4794 = vadd.f32 %v4786, %v4792
      %v4795 = vadd.f32 %v4787, %v4793
      %v4796 = vmul.f32 %v4794, %v4784
      %v4797 = vmul.f32 %v4795, %v4785
      %v4798 = vadd.f32 %v4796, %v4797
      %v4799 = vrot.slane %v4798, 4
      %v4800 = vadd.f32 %v4798, %v4799
      %v4801 = vrot.slane %v4800, 2
      %v4802 = vadd.f32 %v4800, %v4801
      %v4803 = vrot.slane %v4802, 1
      %v4804 = vadd.f32 %v4802, %v4803
      %v4805 = vlaneseq
      %v4806 = vshrl.u32 %v4805, 7
      %v4807 = vsub.s32 7, %v4806
      %v4808 = vrot.slane %v1592, %v4807
      %v4809 = vmul.f32 %v4808, %v394
      %v4810 = vmul.f32 %v4808, %v395
      %v4811 = vmul.f32 %v4809, 1.442695
      %v4812 = vpow.pop %v4811
      %v4813 = vmul.f32 %v4810, 1.442695
      %v4814 = vpow.pop %v4813
      %4815 = vset.pattern.permute.xlu0 47
      %4816 = vperm.xlu0 %4815, %v1662
      %v4817 = vpop.permute.xlu0 %4816
      %4819 = vset.pattern.permute.xlu0 47
      %4820 = vperm.xlu0 %4819, %v1665
      %v4821 = vpop.permute.xlu0 %4820
      %4823 = vset.pattern.permute.xlu0 47
      %4824 = vperm.xlu0 %4823, %v1678
      %v4825 = vpop.permute.xlu0 %4824
      %4827 = vset.pattern.permute.xlu0 47
      %4828 = vperm.xlu0 %4827, %v1681
      %v4829 = vpop.permute.xlu0 %4828
      %v4831 = vsel %vm1702, %v4817, %v4825
      %v4832 = vsel %vm1702, %v4821, %v4829
      %4833 = vset.pattern.permute.xlu0 47
      %4834 = vperm.xlu0 %4833, %v1670
      %v4835 = vpop.permute.xlu0 %4834
      %4837 = vset.pattern.permute.xlu0 47
      %4838 = vperm.xlu0 %4837, %v1673
      %v4839 = vpop.permute.xlu0 %4838
      %4841 = vset.pattern.permute.xlu0 47
      %4842 = vperm.xlu0 %4841, %v1686
      %v4843 = vpop.permute.xlu0 %4842
      %4845 = vset.pattern.permute.xlu0 47
      %4846 = vperm.xlu0 %4845, %v1689
      %v4847 = vpop.permute.xlu0 %4846
      %v4849 = vsel %vm1702, %v4835, %v4843
      %v4850 = vsel %vm1702, %v4839, %v4847
      %v4851 = vmul.f32 %v4812, %v4794
      %v4852 = vmul.f32 %v4814, %v4795
      %v4853 = vlaneseq
      %v4854 = vshrl.u32 %v4853, 7
      %v4855 = vsub.s32 7, %v4854
      %v4856 = vrot.slane %v1697, %v4855
      %v4857 = vmul.f32 %v4856, %v4831
      %v4858 = vmul.f32 %v4856, %v4832
      %v4859 = vadd.f32 %v4851, %v4857
      %v4860 = vadd.f32 %v4852, %v4858
      %v4861 = vmul.f32 %v4859, %v4849
      %v4862 = vmul.f32 %v4860, %v4850
      %v4863 = vadd.f32 %v4861, %v4862
      %v4864 = vrot.slane %v4863, 4
      %v4865 = vadd.f32 %v4863, %v4864
      %v4866 = vrot.slane %v4865, 2
      %v4867 = vadd.f32 %v4865, %v4866
      %v4868 = vrot.slane %v4867, 1
      %v4869 = vadd.f32 %v4867, %v4868
      %v4870 = vsel %vm1194, %v4414, %v4479
      %v4871 = vsel %vm1132, %v4870, %v4544
      %v4872 = vsel %vm1070, %v4871, %v4609
      %v4873 = vsel %vm2234, %v4872, %v4674
      %v4874 = vsel %vm2236, %v4873, %v4739
      %v4875 = vsel %vm2238, %v4874, %v4804
      %v4876 = vsel %vm2240, %v4875, %v4869
      %v4877 = vlaneseq
      %v4878 = vshrl.u32 %v4877, 7
      %v4879 = vsub.s32 0, %v4878
      %v4880 = vrot.slane %v1593, %v4879
      %v4881 = vmul.f32 %v4880, %v394
      %v4882 = vmul.f32 %v4880, %v395
      %v4883 = vmul.f32 %v4881, 1.442695
      %v4884 = vpow.pop %v4883
      %v4885 = vmul.f32 %v4882, 1.442695
      %v4886 = vpow.pop %v4885
      %4887 = vset.pattern.permute.xlu0 48
      %4888 = vperm.xlu0 %4887, %v1662
      %v4889 = vpop.permute.xlu0 %4888
      %4891 = vset.pattern.permute.xlu0 48
      %4892 = vperm.xlu0 %4891, %v1665
      %v4893 = vpop.permute.xlu0 %4892
      %4895 = vset.pattern.permute.xlu0 48
      %4896 = vperm.xlu0 %4895, %v1678
      %v4897 = vpop.permute.xlu0 %4896
      %4899 = vset.pattern.permute.xlu0 48
      %4900 = vperm.xlu0 %4899, %v1681
      %v4901 = vpop.permute.xlu0 %4900
      %v4903 = vsel %vm1702, %v4889, %v4897
      %v4904 = vsel %vm1702, %v4893, %v4901
      %4905 = vset.pattern.permute.xlu0 48
      %4906 = vperm.xlu0 %4905, %v1670
      %v4907 = vpop.permute.xlu0 %4906
      %4909 = vset.pattern.permute.xlu0 48
      %4910 = vperm.xlu0 %4909, %v1673
      %v4911 = vpop.permute.xlu0 %4910
      %4913 = vset.pattern.permute.xlu0 48
      %4914 = vperm.xlu0 %4913, %v1686
      %v4915 = vpop.permute.xlu0 %4914
      %4917 = vset.pattern.permute.xlu0 48
      %4918 = vperm.xlu0 %4917, %v1689
      %v4919 = vpop.permute.xlu0 %4918
      %v4921 = vsel %vm1702, %v4907, %v4915
      %v4922 = vsel %vm1702, %v4911, %v4919
      %v4923 = vmul.f32 %v4884, %v4859
      %v4924 = vmul.f32 %v4886, %v4860
      %v4925 = vlaneseq
      %v4926 = vshrl.u32 %v4925, 7
      %v4927 = vsub.s32 0, %v4926
      %v4928 = vrot.slane %v1698, %v4927
      %v4929 = vmul.f32 %v4928, %v4903
      %v4930 = vmul.f32 %v4928, %v4904
      %v4931 = vadd.f32 %v4923, %v4929
      %v4932 = vadd.f32 %v4924, %v4930
      %v4933 = vmul.f32 %v4931, %v4921
      %v4934 = vmul.f32 %v4932, %v4922
      %v4935 = vadd.f32 %v4933, %v4934
      %v4936 = vrot.slane %v4935, 4
      %v4937 = vadd.f32 %v4935, %v4936
      %v4938 = vrot.slane %v4937, 2
      %v4939 = vadd.f32 %v4937, %v4938
      %v4940 = vrot.slane %v4939, 1
      %v4941 = vadd.f32 %v4939, %v4940
      %v4942 = vlaneseq
      %v4943 = vshrl.u32 %v4942, 7
      %v4944 = vsub.s32 1, %v4943
      %v4945 = vrot.slane %v1593, %v4944
      %v4946 = vmul.f32 %v4945, %v394
      %v4947 = vmul.f32 %v4945, %v395
      %v4948 = vmul.f32 %v4946, 1.442695
      %v4949 = vpow.pop %v4948
      %v4950 = vmul.f32 %v4947, 1.442695
      %v4951 = vpow.pop %v4950
      %4952 = vset.pattern.permute.xlu0 49
      %4953 = vperm.xlu0 %4952, %v1662
      %v4954 = vpop.permute.xlu0 %4953
      %4956 = vset.pattern.permute.xlu0 49
      %4957 = vperm.xlu0 %4956, %v1665
      %v4958 = vpop.permute.xlu0 %4957
      %4960 = vset.pattern.permute.xlu0 49
      %4961 = vperm.xlu0 %4960, %v1678
      %v4962 = vpop.permute.xlu0 %4961
      %4964 = vset.pattern.permute.xlu0 49
      %4965 = vperm.xlu0 %4964, %v1681
      %v4966 = vpop.permute.xlu0 %4965
      %v4968 = vsel %vm1702, %v4954, %v4962
      %v4969 = vsel %vm1702, %v4958, %v4966
      %4970 = vset.pattern.permute.xlu0 49
      %4971 = vperm.xlu0 %4970, %v1670
      %v4972 = vpop.permute.xlu0 %4971
      %4974 = vset.pattern.permute.xlu0 49
      %4975 = vperm.xlu0 %4974, %v1673
      %v4976 = vpop.permute.xlu0 %4975
      %4978 = vset.pattern.permute.xlu0 49
      %4979 = vperm.xlu0 %4978, %v1686
      %v4980 = vpop.permute.xlu0 %4979
      %4982 = vset.pattern.permute.xlu0 49
      %4983 = vperm.xlu0 %4982, %v1689
      %v4984 = vpop.permute.xlu0 %4983
      %v4986 = vsel %vm1702, %v4972, %v4980
      %v4987 = vsel %vm1702, %v4976, %v4984
      %v4988 = vmul.f32 %v4949, %v4931
      %v4989 = vmul.f32 %v4951, %v4932
      %v4990 = vlaneseq
      %v4991 = vshrl.u32 %v4990, 7
      %v4992 = vsub.s32 1, %v4991
      %v4993 = vrot.slane %v1698, %v4992
      %v4994 = vmul.f32 %v4993, %v4968
      %v4995 = vmul.f32 %v4993, %v4969
      %v4996 = vadd.f32 %v4988, %v4994
      %v4997 = vadd.f32 %v4989, %v4995
      %v4998 = vmul.f32 %v4996, %v4986
      %v4999 = vmul.f32 %v4997, %v4987
      %v5000 = vadd.f32 %v4998, %v4999
      %v5001 = vrot.slane %v5000, 4
      %v5002 = vadd.f32 %v5000, %v5001
      %v5003 = vrot.slane %v5002, 2
      %v5004 = vadd.f32 %v5002, %v5003
      %v5005 = vrot.slane %v5004, 1
      %v5006 = vadd.f32 %v5004, %v5005
      %v5007 = vlaneseq
      %v5008 = vshrl.u32 %v5007, 7
      %v5009 = vsub.s32 2, %v5008
      %v5010 = vrot.slane %v1593, %v5009
      %v5011 = vmul.f32 %v5010, %v394
      %v5012 = vmul.f32 %v5010, %v395
      %v5013 = vmul.f32 %v5011, 1.442695
      %v5014 = vpow.pop %v5013
      %v5015 = vmul.f32 %v5012, 1.442695
      %v5016 = vpow.pop %v5015
      %5017 = vset.pattern.permute.xlu0 50
      %5018 = vperm.xlu0 %5017, %v1662
      %v5019 = vpop.permute.xlu0 %5018
      %5021 = vset.pattern.permute.xlu0 50
      %5022 = vperm.xlu0 %5021, %v1665
      %v5023 = vpop.permute.xlu0 %5022
      %5025 = vset.pattern.permute.xlu0 50
      %5026 = vperm.xlu0 %5025, %v1678
      %v5027 = vpop.permute.xlu0 %5026
      %5029 = vset.pattern.permute.xlu0 50
      %5030 = vperm.xlu0 %5029, %v1681
      %v5031 = vpop.permute.xlu0 %5030
      %v5033 = vsel %vm1702, %v5019, %v5027
      %v5034 = vsel %vm1702, %v5023, %v5031
      %5035 = vset.pattern.permute.xlu0 50
      %5036 = vperm.xlu0 %5035, %v1670
      %v5037 = vpop.permute.xlu0 %5036
      %5039 = vset.pattern.permute.xlu0 50
      %5040 = vperm.xlu0 %5039, %v1673
      %v5041 = vpop.permute.xlu0 %5040
      %5043 = vset.pattern.permute.xlu0 50
      %5044 = vperm.xlu0 %5043, %v1686
      %v5045 = vpop.permute.xlu0 %5044
      %5047 = vset.pattern.permute.xlu0 50
      %5048 = vperm.xlu0 %5047, %v1689
      %v5049 = vpop.permute.xlu0 %5048
      %v5051 = vsel %vm1702, %v5037, %v5045
      %v5052 = vsel %vm1702, %v5041, %v5049
      %v5053 = vmul.f32 %v5014, %v4996
      %v5054 = vmul.f32 %v5016, %v4997
      %v5055 = vlaneseq
      %v5056 = vshrl.u32 %v5055, 7
      %v5057 = vsub.s32 2, %v5056
      %v5058 = vrot.slane %v1698, %v5057
      %v5059 = vmul.f32 %v5058, %v5033
      %v5060 = vmul.f32 %v5058, %v5034
      %v5061 = vadd.f32 %v5053, %v5059
      %v5062 = vadd.f32 %v5054, %v5060
      %v5063 = vmul.f32 %v5061, %v5051
      %v5064 = vmul.f32 %v5062, %v5052
      %v5065 = vadd.f32 %v5063, %v5064
      %v5066 = vrot.slane %v5065, 4
      %v5067 = vadd.f32 %v5065, %v5066
      %v5068 = vrot.slane %v5067, 2
      %v5069 = vadd.f32 %v5067, %v5068
      %v5070 = vrot.slane %v5069, 1
      %v5071 = vadd.f32 %v5069, %v5070
      %v5072 = vlaneseq
      %v5073 = vshrl.u32 %v5072, 7
      %v5074 = vsub.s32 3, %v5073
      %v5075 = vrot.slane %v1593, %v5074
      %v5076 = vmul.f32 %v5075, %v394
      %v5077 = vmul.f32 %v5075, %v395
      %v5078 = vmul.f32 %v5076, 1.442695
      %v5079 = vpow.pop %v5078
      %v5080 = vmul.f32 %v5077, 1.442695
      %v5081 = vpow.pop %v5080
      %5082 = vset.pattern.permute.xlu0 51
      %5083 = vperm.xlu0 %5082, %v1662
      %v5084 = vpop.permute.xlu0 %5083
      %5086 = vset.pattern.permute.xlu0 51
      %5087 = vperm.xlu0 %5086, %v1665
      %v5088 = vpop.permute.xlu0 %5087
      %5090 = vset.pattern.permute.xlu0 51
      %5091 = vperm.xlu0 %5090, %v1678
      %v5092 = vpop.permute.xlu0 %5091
      %5094 = vset.pattern.permute.xlu0 51
      %5095 = vperm.xlu0 %5094, %v1681
      %v5096 = vpop.permute.xlu0 %5095
      %v5098 = vsel %vm1702, %v5084, %v5092
      %v5099 = vsel %vm1702, %v5088, %v5096
      %5100 = vset.pattern.permute.xlu0 51
      %5101 = vperm.xlu0 %5100, %v1670
      %v5102 = vpop.permute.xlu0 %5101
      %5104 = vset.pattern.permute.xlu0 51
      %5105 = vperm.xlu0 %5104, %v1673
      %v5106 = vpop.permute.xlu0 %5105
      %5108 = vset.pattern.permute.xlu0 51
      %5109 = vperm.xlu0 %5108, %v1686
      %v5110 = vpop.permute.xlu0 %5109
      %5112 = vset.pattern.permute.xlu0 51
      %5113 = vperm.xlu0 %5112, %v1689
      %v5114 = vpop.permute.xlu0 %5113
      %v5116 = vsel %vm1702, %v5102, %v5110
      %v5117 = vsel %vm1702, %v5106, %v5114
      %v5118 = vmul.f32 %v5079, %v5061
      %v5119 = vmul.f32 %v5081, %v5062
      %v5120 = vlaneseq
      %v5121 = vshrl.u32 %v5120, 7
      %v5122 = vsub.s32 3, %v5121
      %v5123 = vrot.slane %v1698, %v5122
      %v5124 = vmul.f32 %v5123, %v5098
      %v5125 = vmul.f32 %v5123, %v5099
      %v5126 = vadd.f32 %v5118, %v5124
      %v5127 = vadd.f32 %v5119, %v5125
      %v5128 = vmul.f32 %v5126, %v5116
      %v5129 = vmul.f32 %v5127, %v5117
      %v5130 = vadd.f32 %v5128, %v5129
      %v5131 = vrot.slane %v5130, 4
      %v5132 = vadd.f32 %v5130, %v5131
      %v5133 = vrot.slane %v5132, 2
      %v5134 = vadd.f32 %v5132, %v5133
      %v5135 = vrot.slane %v5134, 1
      %v5136 = vadd.f32 %v5134, %v5135
      %v5137 = vlaneseq
      %v5138 = vshrl.u32 %v5137, 7
      %v5139 = vsub.s32 4, %v5138
      %v5140 = vrot.slane %v1593, %v5139
      %v5141 = vmul.f32 %v5140, %v394
      %v5142 = vmul.f32 %v5140, %v395
      %v5143 = vmul.f32 %v5141, 1.442695
      %v5144 = vpow.pop %v5143
      %v5145 = vmul.f32 %v5142, 1.442695
      %v5146 = vpow.pop %v5145
      %5147 = vset.pattern.permute.xlu0 52
      %5148 = vperm.xlu0 %5147, %v1662
      %v5149 = vpop.permute.xlu0 %5148
      %5151 = vset.pattern.permute.xlu0 52
      %5152 = vperm.xlu0 %5151, %v1665
      %v5153 = vpop.permute.xlu0 %5152
      %5155 = vset.pattern.permute.xlu0 52
      %5156 = vperm.xlu0 %5155, %v1678
      %v5157 = vpop.permute.xlu0 %5156
      %5159 = vset.pattern.permute.xlu0 52
      %5160 = vperm.xlu0 %5159, %v1681
      %v5161 = vpop.permute.xlu0 %5160
      %v5163 = vsel %vm1702, %v5149, %v5157
      %v5164 = vsel %vm1702, %v5153, %v5161
      %5165 = vset.pattern.permute.xlu0 52
      %5166 = vperm.xlu0 %5165, %v1670
      %v5167 = vpop.permute.xlu0 %5166
      %5169 = vset.pattern.permute.xlu0 52
      %5170 = vperm.xlu0 %5169, %v1673
      %v5171 = vpop.permute.xlu0 %5170
      %5173 = vset.pattern.permute.xlu0 52
      %5174 = vperm.xlu0 %5173, %v1686
      %v5175 = vpop.permute.xlu0 %5174
      %5177 = vset.pattern.permute.xlu0 52
      %5178 = vperm.xlu0 %5177, %v1689
      %v5179 = vpop.permute.xlu0 %5178
      %v5181 = vsel %vm1702, %v5167, %v5175
      %v5182 = vsel %vm1702, %v5171, %v5179
      %v5183 = vmul.f32 %v5144, %v5126
      %v5184 = vmul.f32 %v5146, %v5127
      %v5185 = vlaneseq
      %v5186 = vshrl.u32 %v5185, 7
      %v5187 = vsub.s32 4, %v5186
      %v5188 = vrot.slane %v1698, %v5187
      %v5189 = vmul.f32 %v5188, %v5163
      %v5190 = vmul.f32 %v5188, %v5164
      %v5191 = vadd.f32 %v5183, %v5189
      %v5192 = vadd.f32 %v5184, %v5190
      %v5193 = vmul.f32 %v5191, %v5181
      %v5194 = vmul.f32 %v5192, %v5182
      %v5195 = vadd.f32 %v5193, %v5194
      %v5196 = vrot.slane %v5195, 4
      %v5197 = vadd.f32 %v5195, %v5196
      %v5198 = vrot.slane %v5197, 2
      %v5199 = vadd.f32 %v5197, %v5198
      %v5200 = vrot.slane %v5199, 1
      %v5201 = vadd.f32 %v5199, %v5200
      %v5202 = vlaneseq
      %v5203 = vshrl.u32 %v5202, 7
      %v5204 = vsub.s32 5, %v5203
      %v5205 = vrot.slane %v1593, %v5204
      %v5206 = vmul.f32 %v5205, %v394
      %v5207 = vmul.f32 %v5205, %v395
      %v5208 = vmul.f32 %v5206, 1.442695
      %v5209 = vpow.pop %v5208
      %v5210 = vmul.f32 %v5207, 1.442695
      %v5211 = vpow.pop %v5210
      %5212 = vset.pattern.permute.xlu0 53
      %5213 = vperm.xlu0 %5212, %v1662
      %v5214 = vpop.permute.xlu0 %5213
      %5216 = vset.pattern.permute.xlu0 53
      %5217 = vperm.xlu0 %5216, %v1665
      %v5218 = vpop.permute.xlu0 %5217
      %5220 = vset.pattern.permute.xlu0 53
      %5221 = vperm.xlu0 %5220, %v1678
      %v5222 = vpop.permute.xlu0 %5221
      %5224 = vset.pattern.permute.xlu0 53
      %5225 = vperm.xlu0 %5224, %v1681
      %v5226 = vpop.permute.xlu0 %5225
      %v5228 = vsel %vm1702, %v5214, %v5222
      %v5229 = vsel %vm1702, %v5218, %v5226
      %5230 = vset.pattern.permute.xlu0 53
      %5231 = vperm.xlu0 %5230, %v1670
      %v5232 = vpop.permute.xlu0 %5231
      %5234 = vset.pattern.permute.xlu0 53
      %5235 = vperm.xlu0 %5234, %v1673
      %v5236 = vpop.permute.xlu0 %5235
      %5238 = vset.pattern.permute.xlu0 53
      %5239 = vperm.xlu0 %5238, %v1686
      %v5240 = vpop.permute.xlu0 %5239
      %5242 = vset.pattern.permute.xlu0 53
      %5243 = vperm.xlu0 %5242, %v1689
      %v5244 = vpop.permute.xlu0 %5243
      %v5246 = vsel %vm1702, %v5232, %v5240
      %v5247 = vsel %vm1702, %v5236, %v5244
      %v5248 = vmul.f32 %v5209, %v5191
      %v5249 = vmul.f32 %v5211, %v5192
      %v5250 = vlaneseq
      %v5251 = vshrl.u32 %v5250, 7
      %v5252 = vsub.s32 5, %v5251
      %v5253 = vrot.slane %v1698, %v5252
      %v5254 = vmul.f32 %v5253, %v5228
      %v5255 = vmul.f32 %v5253, %v5229
      %v5256 = vadd.f32 %v5248, %v5254
      %v5257 = vadd.f32 %v5249, %v5255
      %v5258 = vmul.f32 %v5256, %v5246
      %v5259 = vmul.f32 %v5257, %v5247
      %v5260 = vadd.f32 %v5258, %v5259
      %v5261 = vrot.slane %v5260, 4
      %v5262 = vadd.f32 %v5260, %v5261
      %v5263 = vrot.slane %v5262, 2
      %v5264 = vadd.f32 %v5262, %v5263
      %v5265 = vrot.slane %v5264, 1
      %v5266 = vadd.f32 %v5264, %v5265
      %v5267 = vlaneseq
      %v5268 = vshrl.u32 %v5267, 7
      %v5269 = vsub.s32 6, %v5268
      %v5270 = vrot.slane %v1593, %v5269
      %v5271 = vmul.f32 %v5270, %v394
      %v5272 = vmul.f32 %v5270, %v395
      %v5273 = vmul.f32 %v5271, 1.442695
      %v5274 = vpow.pop %v5273
      %v5275 = vmul.f32 %v5272, 1.442695
      %v5276 = vpow.pop %v5275
      %5277 = vset.pattern.permute.xlu0 54
      %5278 = vperm.xlu0 %5277, %v1662
      %v5279 = vpop.permute.xlu0 %5278
      %5281 = vset.pattern.permute.xlu0 54
      %5282 = vperm.xlu0 %5281, %v1665
      %v5283 = vpop.permute.xlu0 %5282
      %5285 = vset.pattern.permute.xlu0 54
      %5286 = vperm.xlu0 %5285, %v1678
      %v5287 = vpop.permute.xlu0 %5286
      %5289 = vset.pattern.permute.xlu0 54
      %5290 = vperm.xlu0 %5289, %v1681
      %v5291 = vpop.permute.xlu0 %5290
      %v5293 = vsel %vm1702, %v5279, %v5287
      %v5294 = vsel %vm1702, %v5283, %v5291
      %5295 = vset.pattern.permute.xlu0 54
      %5296 = vperm.xlu0 %5295, %v1670
      %v5297 = vpop.permute.xlu0 %5296
      %5299 = vset.pattern.permute.xlu0 54
      %5300 = vperm.xlu0 %5299, %v1673
      %v5301 = vpop.permute.xlu0 %5300
      %5303 = vset.pattern.permute.xlu0 54
      %5304 = vperm.xlu0 %5303, %v1686
      %v5305 = vpop.permute.xlu0 %5304
      %5307 = vset.pattern.permute.xlu0 54
      %5308 = vperm.xlu0 %5307, %v1689
      %v5309 = vpop.permute.xlu0 %5308
      %v5311 = vsel %vm1702, %v5297, %v5305
      %v5312 = vsel %vm1702, %v5301, %v5309
      %v5313 = vmul.f32 %v5274, %v5256
      %v5314 = vmul.f32 %v5276, %v5257
      %v5315 = vlaneseq
      %v5316 = vshrl.u32 %v5315, 7
      %v5317 = vsub.s32 6, %v5316
      %v5318 = vrot.slane %v1698, %v5317
      %v5319 = vmul.f32 %v5318, %v5293
      %v5320 = vmul.f32 %v5318, %v5294
      %v5321 = vadd.f32 %v5313, %v5319
      %v5322 = vadd.f32 %v5314, %v5320
      %v5323 = vmul.f32 %v5321, %v5311
      %v5324 = vmul.f32 %v5322, %v5312
      %v5325 = vadd.f32 %v5323, %v5324
      %v5326 = vrot.slane %v5325, 4
      %v5327 = vadd.f32 %v5325, %v5326
      %v5328 = vrot.slane %v5327, 2
      %v5329 = vadd.f32 %v5327, %v5328
      %v5330 = vrot.slane %v5329, 1
      %v5331 = vadd.f32 %v5329, %v5330
      %v5332 = vlaneseq
      %v5333 = vshrl.u32 %v5332, 7
      %v5334 = vsub.s32 7, %v5333
      %v5335 = vrot.slane %v1593, %v5334
      %v5336 = vmul.f32 %v5335, %v394
      %v5337 = vmul.f32 %v5335, %v395
      %v5338 = vmul.f32 %v5336, 1.442695
      %v5339 = vpow.pop %v5338
      %v5340 = vmul.f32 %v5337, 1.442695
      %v5341 = vpow.pop %v5340
      %5342 = vset.pattern.permute.xlu0 55
      %5343 = vperm.xlu0 %5342, %v1662
      %v5344 = vpop.permute.xlu0 %5343
      %5346 = vset.pattern.permute.xlu0 55
      %5347 = vperm.xlu0 %5346, %v1665
      %v5348 = vpop.permute.xlu0 %5347
      %5350 = vset.pattern.permute.xlu0 55
      %5351 = vperm.xlu0 %5350, %v1678
      %v5352 = vpop.permute.xlu0 %5351
      %5354 = vset.pattern.permute.xlu0 55
      %5355 = vperm.xlu0 %5354, %v1681
      %v5356 = vpop.permute.xlu0 %5355
      %v5358 = vsel %vm1702, %v5344, %v5352
      %v5359 = vsel %vm1702, %v5348, %v5356
      %5360 = vset.pattern.permute.xlu0 55
      %5361 = vperm.xlu0 %5360, %v1670
      %v5362 = vpop.permute.xlu0 %5361
      %5364 = vset.pattern.permute.xlu0 55
      %5365 = vperm.xlu0 %5364, %v1673
      %v5366 = vpop.permute.xlu0 %5365
      %5368 = vset.pattern.permute.xlu0 55
      %5369 = vperm.xlu0 %5368, %v1686
      %v5370 = vpop.permute.xlu0 %5369
      %5372 = vset.pattern.permute.xlu0 55
      %5373 = vperm.xlu0 %5372, %v1689
      %v5374 = vpop.permute.xlu0 %5373
      %v5376 = vsel %vm1702, %v5362, %v5370
      %v5377 = vsel %vm1702, %v5366, %v5374
      %v5378 = vmul.f32 %v5339, %v5321
      %v5379 = vmul.f32 %v5341, %v5322
      %v5380 = vlaneseq
      %v5381 = vshrl.u32 %v5380, 7
      %v5382 = vsub.s32 7, %v5381
      %v5383 = vrot.slane %v1698, %v5382
      %v5384 = vmul.f32 %v5383, %v5358
      %v5385 = vmul.f32 %v5383, %v5359
      %v5386 = vadd.f32 %v5378, %v5384
      %v5387 = vadd.f32 %v5379, %v5385
      %v5388 = vmul.f32 %v5386, %v5376
      %v5389 = vmul.f32 %v5387, %v5377
      %v5390 = vadd.f32 %v5388, %v5389
      %v5391 = vrot.slane %v5390, 4
      %v5392 = vadd.f32 %v5390, %v5391
      %v5393 = vrot.slane %v5392, 2
      %v5394 = vadd.f32 %v5392, %v5393
      %v5395 = vrot.slane %v5394, 1
      %v5396 = vadd.f32 %v5394, %v5395
      %v5397 = vsel %vm1194, %v4941, %v5006
      %v5398 = vsel %vm1132, %v5397, %v5071
      %v5399 = vsel %vm1070, %v5398, %v5136
      %v5400 = vsel %vm2234, %v5399, %v5201
      %v5401 = vsel %vm2236, %v5400, %v5266
      %v5402 = vsel %vm2238, %v5401, %v5331
      %v5403 = vsel %vm2240, %v5402, %v5396
      %v5404 = vlaneseq
      %v5405 = vshrl.u32 %v5404, 7
      %v5406 = vsub.s32 0, %v5405
      %v5407 = vrot.slane %v1594, %v5406
      %v5408 = vmul.f32 %v5407, %v394
      %v5409 = vmul.f32 %v5407, %v395
      %v5410 = vmul.f32 %v5408, 1.442695
      %v5411 = vpow.pop %v5410
      %v5412 = vmul.f32 %v5409, 1.442695
      %v5413 = vpow.pop %v5412
      %5414 = vset.pattern.permute.xlu0 56
      %5415 = vperm.xlu0 %5414, %v1662
      %v5416 = vpop.permute.xlu0 %5415
      %5418 = vset.pattern.permute.xlu0 56
      %5419 = vperm.xlu0 %5418, %v1665
      %v5420 = vpop.permute.xlu0 %5419
      %5422 = vset.pattern.permute.xlu0 56
      %5423 = vperm.xlu0 %5422, %v1678
      %v5424 = vpop.permute.xlu0 %5423
      %5426 = vset.pattern.permute.xlu0 56
      %5427 = vperm.xlu0 %5426, %v1681
      %v5428 = vpop.permute.xlu0 %5427
      %v5430 = vsel %vm1702, %v5416, %v5424
      %v5431 = vsel %vm1702, %v5420, %v5428
      %5432 = vset.pattern.permute.xlu0 56
      %5433 = vperm.xlu0 %5432, %v1670
      %v5434 = vpop.permute.xlu0 %5433
      %5436 = vset.pattern.permute.xlu0 56
      %5437 = vperm.xlu0 %5436, %v1673
      %v5438 = vpop.permute.xlu0 %5437
      %5440 = vset.pattern.permute.xlu0 56
      %5441 = vperm.xlu0 %5440, %v1686
      %v5442 = vpop.permute.xlu0 %5441
      %5444 = vset.pattern.permute.xlu0 56
      %5445 = vperm.xlu0 %5444, %v1689
      %v5446 = vpop.permute.xlu0 %5445
      %v5448 = vsel %vm1702, %v5434, %v5442
      %v5449 = vsel %vm1702, %v5438, %v5446
      %v5450 = vmul.f32 %v5411, %v5386
      %v5451 = vmul.f32 %v5413, %v5387
      %v5452 = vlaneseq
      %v5453 = vshrl.u32 %v5452, 7
      %v5454 = vsub.s32 0, %v5453
      %v5455 = vrot.slane %v1699, %v5454
      %v5456 = vmul.f32 %v5455, %v5430
      %v5457 = vmul.f32 %v5455, %v5431
      %v5458 = vadd.f32 %v5450, %v5456
      %v5459 = vadd.f32 %v5451, %v5457
      %v5460 = vmul.f32 %v5458, %v5448
      %v5461 = vmul.f32 %v5459, %v5449
      %v5462 = vadd.f32 %v5460, %v5461
      %v5463 = vrot.slane %v5462, 4
      %v5464 = vadd.f32 %v5462, %v5463
      %v5465 = vrot.slane %v5464, 2
      %v5466 = vadd.f32 %v5464, %v5465
      %v5467 = vrot.slane %v5466, 1
      %v5468 = vadd.f32 %v5466, %v5467
      %v5469 = vlaneseq
      %v5470 = vshrl.u32 %v5469, 7
      %v5471 = vsub.s32 1, %v5470
      %v5472 = vrot.slane %v1594, %v5471
      %v5473 = vmul.f32 %v5472, %v394
      %v5474 = vmul.f32 %v5472, %v395
      %v5475 = vmul.f32 %v5473, 1.442695
      %v5476 = vpow.pop %v5475
      %v5477 = vmul.f32 %v5474, 1.442695
      %v5478 = vpow.pop %v5477
      %5479 = vset.pattern.permute.xlu0 57
      %5480 = vperm.xlu0 %5479, %v1662
      %v5481 = vpop.permute.xlu0 %5480
      %5483 = vset.pattern.permute.xlu0 57
      %5484 = vperm.xlu0 %5483, %v1665
      %v5485 = vpop.permute.xlu0 %5484
      %5487 = vset.pattern.permute.xlu0 57
      %5488 = vperm.xlu0 %5487, %v1678
      %v5489 = vpop.permute.xlu0 %5488
      %5491 = vset.pattern.permute.xlu0 57
      %5492 = vperm.xlu0 %5491, %v1681
      %v5493 = vpop.permute.xlu0 %5492
      %v5495 = vsel %vm1702, %v5481, %v5489
      %v5496 = vsel %vm1702, %v5485, %v5493
      %5497 = vset.pattern.permute.xlu0 57
      %5498 = vperm.xlu0 %5497, %v1670
      %v5499 = vpop.permute.xlu0 %5498
      %5501 = vset.pattern.permute.xlu0 57
      %5502 = vperm.xlu0 %5501, %v1673
      %v5503 = vpop.permute.xlu0 %5502
      %5505 = vset.pattern.permute.xlu0 57
      %5506 = vperm.xlu0 %5505, %v1686
      %v5507 = vpop.permute.xlu0 %5506
      %5509 = vset.pattern.permute.xlu0 57
      %5510 = vperm.xlu0 %5509, %v1689
      %v5511 = vpop.permute.xlu0 %5510
      %v5513 = vsel %vm1702, %v5499, %v5507
      %v5514 = vsel %vm1702, %v5503, %v5511
      %v5515 = vmul.f32 %v5476, %v5458
      %v5516 = vmul.f32 %v5478, %v5459
      %v5517 = vlaneseq
      %v5518 = vshrl.u32 %v5517, 7
      %v5519 = vsub.s32 1, %v5518
      %v5520 = vrot.slane %v1699, %v5519
      %v5521 = vmul.f32 %v5520, %v5495
      %v5522 = vmul.f32 %v5520, %v5496
      %v5523 = vadd.f32 %v5515, %v5521
      %v5524 = vadd.f32 %v5516, %v5522
      %v5525 = vmul.f32 %v5523, %v5513
      %v5526 = vmul.f32 %v5524, %v5514
      %v5527 = vadd.f32 %v5525, %v5526
      %v5528 = vrot.slane %v5527, 4
      %v5529 = vadd.f32 %v5527, %v5528
      %v5530 = vrot.slane %v5529, 2
      %v5531 = vadd.f32 %v5529, %v5530
      %v5532 = vrot.slane %v5531, 1
      %v5533 = vadd.f32 %v5531, %v5532
      %v5534 = vlaneseq
      %v5535 = vshrl.u32 %v5534, 7
      %v5536 = vsub.s32 2, %v5535
      %v5537 = vrot.slane %v1594, %v5536
      %v5538 = vmul.f32 %v5537, %v394
      %v5539 = vmul.f32 %v5537, %v395
      %v5540 = vmul.f32 %v5538, 1.442695
      %v5541 = vpow.pop %v5540
      %v5542 = vmul.f32 %v5539, 1.442695
      %v5543 = vpow.pop %v5542
      %5544 = vset.pattern.permute.xlu0 58
      %5545 = vperm.xlu0 %5544, %v1662
      %v5546 = vpop.permute.xlu0 %5545
      %5548 = vset.pattern.permute.xlu0 58
      %5549 = vperm.xlu0 %5548, %v1665
      %v5550 = vpop.permute.xlu0 %5549
      %5552 = vset.pattern.permute.xlu0 58
      %5553 = vperm.xlu0 %5552, %v1678
      %v5554 = vpop.permute.xlu0 %5553
      %5556 = vset.pattern.permute.xlu0 58
      %5557 = vperm.xlu0 %5556, %v1681
      %v5558 = vpop.permute.xlu0 %5557
      %v5560 = vsel %vm1702, %v5546, %v5554
      %v5561 = vsel %vm1702, %v5550, %v5558
      %5562 = vset.pattern.permute.xlu0 58
      %5563 = vperm.xlu0 %5562, %v1670
      %v5564 = vpop.permute.xlu0 %5563
      %5566 = vset.pattern.permute.xlu0 58
      %5567 = vperm.xlu0 %5566, %v1673
      %v5568 = vpop.permute.xlu0 %5567
      %5570 = vset.pattern.permute.xlu0 58
      %5571 = vperm.xlu0 %5570, %v1686
      %v5572 = vpop.permute.xlu0 %5571
      %5574 = vset.pattern.permute.xlu0 58
      %5575 = vperm.xlu0 %5574, %v1689
      %v5576 = vpop.permute.xlu0 %5575
      %v5578 = vsel %vm1702, %v5564, %v5572
      %v5579 = vsel %vm1702, %v5568, %v5576
      %v5580 = vmul.f32 %v5541, %v5523
      %v5581 = vmul.f32 %v5543, %v5524
      %v5582 = vlaneseq
      %v5583 = vshrl.u32 %v5582, 7
      %v5584 = vsub.s32 2, %v5583
      %v5585 = vrot.slane %v1699, %v5584
      %v5586 = vmul.f32 %v5585, %v5560
      %v5587 = vmul.f32 %v5585, %v5561
      %v5588 = vadd.f32 %v5580, %v5586
      %v5589 = vadd.f32 %v5581, %v5587
      %v5590 = vmul.f32 %v5588, %v5578
      %v5591 = vmul.f32 %v5589, %v5579
      %v5592 = vadd.f32 %v5590, %v5591
      %v5593 = vrot.slane %v5592, 4
      %v5594 = vadd.f32 %v5592, %v5593
      %v5595 = vrot.slane %v5594, 2
      %v5596 = vadd.f32 %v5594, %v5595
      %v5597 = vrot.slane %v5596, 1
      %v5598 = vadd.f32 %v5596, %v5597
      %v5599 = vlaneseq
      %v5600 = vshrl.u32 %v5599, 7
      %v5601 = vsub.s32 3, %v5600
      %v5602 = vrot.slane %v1594, %v5601
      %v5603 = vmul.f32 %v5602, %v394
      %v5604 = vmul.f32 %v5602, %v395
      %v5605 = vmul.f32 %v5603, 1.442695
      %v5606 = vpow.pop %v5605
      %v5607 = vmul.f32 %v5604, 1.442695
      %v5608 = vpow.pop %v5607
      %5609 = vset.pattern.permute.xlu0 59
      %5610 = vperm.xlu0 %5609, %v1662
      %v5611 = vpop.permute.xlu0 %5610
      %5613 = vset.pattern.permute.xlu0 59
      %5614 = vperm.xlu0 %5613, %v1665
      %v5615 = vpop.permute.xlu0 %5614
      %5617 = vset.pattern.permute.xlu0 59
      %5618 = vperm.xlu0 %5617, %v1678
      %v5619 = vpop.permute.xlu0 %5618
      %5621 = vset.pattern.permute.xlu0 59
      %5622 = vperm.xlu0 %5621, %v1681
      %v5623 = vpop.permute.xlu0 %5622
      %v5625 = vsel %vm1702, %v5611, %v5619
      %v5626 = vsel %vm1702, %v5615, %v5623
      %5627 = vset.pattern.permute.xlu0 59
      %5628 = vperm.xlu0 %5627, %v1670
      %v5629 = vpop.permute.xlu0 %5628
      %5631 = vset.pattern.permute.xlu0 59
      %5632 = vperm.xlu0 %5631, %v1673
      %v5633 = vpop.permute.xlu0 %5632
      %5635 = vset.pattern.permute.xlu0 59
      %5636 = vperm.xlu0 %5635, %v1686
      %v5637 = vpop.permute.xlu0 %5636
      %5639 = vset.pattern.permute.xlu0 59
      %5640 = vperm.xlu0 %5639, %v1689
      %v5641 = vpop.permute.xlu0 %5640
      %v5643 = vsel %vm1702, %v5629, %v5637
      %v5644 = vsel %vm1702, %v5633, %v5641
      %v5645 = vmul.f32 %v5606, %v5588
      %v5646 = vmul.f32 %v5608, %v5589
      %v5647 = vlaneseq
      %v5648 = vshrl.u32 %v5647, 7
      %v5649 = vsub.s32 3, %v5648
      %v5650 = vrot.slane %v1699, %v5649
      %v5651 = vmul.f32 %v5650, %v5625
      %v5652 = vmul.f32 %v5650, %v5626
      %v5653 = vadd.f32 %v5645, %v5651
      %v5654 = vadd.f32 %v5646, %v5652
      %v5655 = vmul.f32 %v5653, %v5643
      %v5656 = vmul.f32 %v5654, %v5644
      %v5657 = vadd.f32 %v5655, %v5656
      %v5658 = vrot.slane %v5657, 4
      %v5659 = vadd.f32 %v5657, %v5658
      %v5660 = vrot.slane %v5659, 2
      %v5661 = vadd.f32 %v5659, %v5660
      %v5662 = vrot.slane %v5661, 1
      %v5663 = vadd.f32 %v5661, %v5662
      %v5664 = vlaneseq
      %v5665 = vshrl.u32 %v5664, 7
      %v5666 = vsub.s32 4, %v5665
      %v5667 = vrot.slane %v1594, %v5666
      %v5668 = vmul.f32 %v5667, %v394
      %v5669 = vmul.f32 %v5667, %v395
      %v5670 = vmul.f32 %v5668, 1.442695
      %v5671 = vpow.pop %v5670
      %v5672 = vmul.f32 %v5669, 1.442695
      %v5673 = vpow.pop %v5672
      %5674 = vset.pattern.permute.xlu0 60
      %5675 = vperm.xlu0 %5674, %v1662
      %v5676 = vpop.permute.xlu0 %5675
      %5678 = vset.pattern.permute.xlu0 60
      %5679 = vperm.xlu0 %5678, %v1665
      %v5680 = vpop.permute.xlu0 %5679
      %5682 = vset.pattern.permute.xlu0 60
      %5683 = vperm.xlu0 %5682, %v1678
      %v5684 = vpop.permute.xlu0 %5683
      %5686 = vset.pattern.permute.xlu0 60
      %5687 = vperm.xlu0 %5686, %v1681
      %v5688 = vpop.permute.xlu0 %5687
      %v5690 = vsel %vm1702, %v5676, %v5684
      %v5691 = vsel %vm1702, %v5680, %v5688
      %5692 = vset.pattern.permute.xlu0 60
      %5693 = vperm.xlu0 %5692, %v1670
      %v5694 = vpop.permute.xlu0 %5693
      %5696 = vset.pattern.permute.xlu0 60
      %5697 = vperm.xlu0 %5696, %v1673
      %v5698 = vpop.permute.xlu0 %5697
      %5700 = vset.pattern.permute.xlu0 60
      %5701 = vperm.xlu0 %5700, %v1686
      %v5702 = vpop.permute.xlu0 %5701
      %5704 = vset.pattern.permute.xlu0 60
      %5705 = vperm.xlu0 %5704, %v1689
      %v5706 = vpop.permute.xlu0 %5705
      %v5708 = vsel %vm1702, %v5694, %v5702
      %v5709 = vsel %vm1702, %v5698, %v5706
      %v5710 = vmul.f32 %v5671, %v5653
      %v5711 = vmul.f32 %v5673, %v5654
      %v5712 = vlaneseq
      %v5713 = vshrl.u32 %v5712, 7
      %v5714 = vsub.s32 4, %v5713
      %v5715 = vrot.slane %v1699, %v5714
      %v5716 = vmul.f32 %v5715, %v5690
      %v5717 = vmul.f32 %v5715, %v5691
      %v5718 = vadd.f32 %v5710, %v5716
      %v5719 = vadd.f32 %v5711, %v5717
      %v5720 = vmul.f32 %v5718, %v5708
      %v5721 = vmul.f32 %v5719, %v5709
      %v5722 = vadd.f32 %v5720, %v5721
      %v5723 = vrot.slane %v5722, 4
      %v5724 = vadd.f32 %v5722, %v5723
      %v5725 = vrot.slane %v5724, 2
      %v5726 = vadd.f32 %v5724, %v5725
      %v5727 = vrot.slane %v5726, 1
      %v5728 = vadd.f32 %v5726, %v5727
      %v5729 = vlaneseq
      %v5730 = vshrl.u32 %v5729, 7
      %v5731 = vsub.s32 5, %v5730
      %v5732 = vrot.slane %v1594, %v5731
      %v5733 = vmul.f32 %v5732, %v394
      %v5734 = vmul.f32 %v5732, %v395
      %v5735 = vmul.f32 %v5733, 1.442695
      %v5736 = vpow.pop %v5735
      %v5737 = vmul.f32 %v5734, 1.442695
      %v5738 = vpow.pop %v5737
      %5739 = vset.pattern.permute.xlu0 61
      %5740 = vperm.xlu0 %5739, %v1662
      %v5741 = vpop.permute.xlu0 %5740
      %5743 = vset.pattern.permute.xlu0 61
      %5744 = vperm.xlu0 %5743, %v1665
      %v5745 = vpop.permute.xlu0 %5744
      %5747 = vset.pattern.permute.xlu0 61
      %5748 = vperm.xlu0 %5747, %v1678
      %v5749 = vpop.permute.xlu0 %5748
      %5751 = vset.pattern.permute.xlu0 61
      %5752 = vperm.xlu0 %5751, %v1681
      %v5753 = vpop.permute.xlu0 %5752
      %v5755 = vsel %vm1702, %v5741, %v5749
      %v5756 = vsel %vm1702, %v5745, %v5753
      %5757 = vset.pattern.permute.xlu0 61
      %5758 = vperm.xlu0 %5757, %v1670
      %v5759 = vpop.permute.xlu0 %5758
      %5761 = vset.pattern.permute.xlu0 61
      %5762 = vperm.xlu0 %5761, %v1673
      %v5763 = vpop.permute.xlu0 %5762
      %5765 = vset.pattern.permute.xlu0 61
      %5766 = vperm.xlu0 %5765, %v1686
      %v5767 = vpop.permute.xlu0 %5766
      %5769 = vset.pattern.permute.xlu0 61
      %5770 = vperm.xlu0 %5769, %v1689
      %v5771 = vpop.permute.xlu0 %5770
      %v5773 = vsel %vm1702, %v5759, %v5767
      %v5774 = vsel %vm1702, %v5763, %v5771
      %v5775 = vmul.f32 %v5736, %v5718
      %v5776 = vmul.f32 %v5738, %v5719
      %v5777 = vlaneseq
      %v5778 = vshrl.u32 %v5777, 7
      %v5779 = vsub.s32 5, %v5778
      %v5780 = vrot.slane %v1699, %v5779
      %v5781 = vmul.f32 %v5780, %v5755
      %v5782 = vmul.f32 %v5780, %v5756
      %v5783 = vadd.f32 %v5775, %v5781
      %v5784 = vadd.f32 %v5776, %v5782
      %v5785 = vmul.f32 %v5783, %v5773
      %v5786 = vmul.f32 %v5784, %v5774
      %v5787 = vadd.f32 %v5785, %v5786
      %v5788 = vrot.slane %v5787, 4
      %v5789 = vadd.f32 %v5787, %v5788
      %v5790 = vrot.slane %v5789, 2
      %v5791 = vadd.f32 %v5789, %v5790
      %v5792 = vrot.slane %v5791, 1
      %v5793 = vadd.f32 %v5791, %v5792
      %v5794 = vlaneseq
      %v5795 = vshrl.u32 %v5794, 7
      %v5796 = vsub.s32 6, %v5795
      %v5797 = vrot.slane %v1594, %v5796
      %v5798 = vmul.f32 %v5797, %v394
      %v5799 = vmul.f32 %v5797, %v395
      %v5800 = vmul.f32 %v5798, 1.442695
      %v5801 = vpow.pop %v5800
      %v5802 = vmul.f32 %v5799, 1.442695
      %v5803 = vpow.pop %v5802
      %5804 = vset.pattern.permute.xlu0 62
      %5805 = vperm.xlu0 %5804, %v1662
      %v5806 = vpop.permute.xlu0 %5805
      %5808 = vset.pattern.permute.xlu0 62
      %5809 = vperm.xlu0 %5808, %v1665
      %v5810 = vpop.permute.xlu0 %5809
      %5812 = vset.pattern.permute.xlu0 62
      %5813 = vperm.xlu0 %5812, %v1678
      %v5814 = vpop.permute.xlu0 %5813
      %5816 = vset.pattern.permute.xlu0 62
      %5817 = vperm.xlu0 %5816, %v1681
      %v5818 = vpop.permute.xlu0 %5817
      %v5820 = vsel %vm1702, %v5806, %v5814
      %v5821 = vsel %vm1702, %v5810, %v5818
      %5822 = vset.pattern.permute.xlu0 62
      %5823 = vperm.xlu0 %5822, %v1670
      %v5824 = vpop.permute.xlu0 %5823
      %5826 = vset.pattern.permute.xlu0 62
      %5827 = vperm.xlu0 %5826, %v1673
      %v5828 = vpop.permute.xlu0 %5827
      %5830 = vset.pattern.permute.xlu0 62
      %5831 = vperm.xlu0 %5830, %v1686
      %v5832 = vpop.permute.xlu0 %5831
      %5834 = vset.pattern.permute.xlu0 62
      %5835 = vperm.xlu0 %5834, %v1689
      %v5836 = vpop.permute.xlu0 %5835
      %v5838 = vsel %vm1702, %v5824, %v5832
      %v5839 = vsel %vm1702, %v5828, %v5836
      %v5840 = vmul.f32 %v5801, %v5783
      %v5841 = vmul.f32 %v5803, %v5784
      %v5842 = vlaneseq
      %v5843 = vshrl.u32 %v5842, 7
      %v5844 = vsub.s32 6, %v5843
      %v5845 = vrot.slane %v1699, %v5844
      %v5846 = vmul.f32 %v5845, %v5820
      %v5847 = vmul.f32 %v5845, %v5821
      %v5848 = vadd.f32 %v5840, %v5846
      %v5849 = vadd.f32 %v5841, %v5847
      %v5850 = vmul.f32 %v5848, %v5838
      %v5851 = vmul.f32 %v5849, %v5839
      %v5852 = vadd.f32 %v5850, %v5851
      %v5853 = vrot.slane %v5852, 4
      %v5854 = vadd.f32 %v5852, %v5853
      %v5855 = vrot.slane %v5854, 2
      %v5856 = vadd.f32 %v5854, %v5855
      %v5857 = vrot.slane %v5856, 1
      %v5858 = vadd.f32 %v5856, %v5857
      %v5859 = vlaneseq
      %v5860 = vshrl.u32 %v5859, 7
      %v5861 = vsub.s32 7, %v5860
      %v5862 = vrot.slane %v1594, %v5861
      %v5863 = vmul.f32 %v5862, %v394
      %v5864 = vmul.f32 %v5862, %v395
      %v5865 = vmul.f32 %v5863, 1.442695
      %v5866 = vpow.pop %v5865
      %v5867 = vmul.f32 %v5864, 1.442695
      %v5868 = vpow.pop %v5867
      %5869 = vset.pattern.permute.xlu0 63
      %5870 = vperm.xlu0 %5869, %v1662
      %v5871 = vpop.permute.xlu0 %5870
      %5873 = vset.pattern.permute.xlu0 63
      %5874 = vperm.xlu0 %5873, %v1665
      %v5875 = vpop.permute.xlu0 %5874
      %5877 = vset.pattern.permute.xlu0 63
      %5878 = vperm.xlu0 %5877, %v1678
      %v5879 = vpop.permute.xlu0 %5878
      %5881 = vset.pattern.permute.xlu0 63
      %5882 = vperm.xlu0 %5881, %v1681
      %v5883 = vpop.permute.xlu0 %5882
      %v5885 = vsel %vm1702, %v5871, %v5879
      %v5886 = vsel %vm1702, %v5875, %v5883
      %5887 = vset.pattern.permute.xlu0 63
      %5888 = vperm.xlu0 %5887, %v1670
      %v5889 = vpop.permute.xlu0 %5888
      %5891 = vset.pattern.permute.xlu0 63
      %5892 = vperm.xlu0 %5891, %v1673
      %v5893 = vpop.permute.xlu0 %5892
      %5895 = vset.pattern.permute.xlu0 63
      %5896 = vperm.xlu0 %5895, %v1686
      %v5897 = vpop.permute.xlu0 %5896
      %5899 = vset.pattern.permute.xlu0 63
      %5900 = vperm.xlu0 %5899, %v1689
      %v5901 = vpop.permute.xlu0 %5900
      %v5903 = vsel %vm1702, %v5889, %v5897
      %v5904 = vsel %vm1702, %v5893, %v5901
      %v5905 = vmul.f32 %v5866, %v5848
      %v5906 = vmul.f32 %v5868, %v5849
      %v5907 = vlaneseq
      %v5908 = vshrl.u32 %v5907, 7
      %v5909 = vsub.s32 7, %v5908
      %v5910 = vrot.slane %v1699, %v5909
      %v5911 = vmul.f32 %v5910, %v5885
      %v5912 = vmul.f32 %v5910, %v5886
      %v5913 = vadd.f32 %v5905, %v5911
      %v5914 = vadd.f32 %v5906, %v5912
      %v5915 = vmul.f32 %v5913, %v5903
      %v5916 = vmul.f32 %v5914, %v5904
      %v5917 = vadd.f32 %v5915, %v5916
      %v5918 = vrot.slane %v5917, 4
      %v5919 = vadd.f32 %v5917, %v5918
      %v5920 = vrot.slane %v5919, 2
      %v5921 = vadd.f32 %v5919, %v5920
      %v5922 = vrot.slane %v5921, 1
      %v5923 = vadd.f32 %v5921, %v5922
      %v5924 = vsel %vm1194, %v5468, %v5533
      %v5925 = vsel %vm1132, %v5924, %v5598
      %v5926 = vsel %vm1070, %v5925, %v5663
      %v5927 = vsel %vm2234, %v5926, %v5728
      %v5928 = vsel %vm2236, %v5927, %v5793
      %v5929 = vsel %vm2238, %v5928, %v5858
      %v5930 = vsel %vm2240, %v5929, %v5923
      %v5931 = vlaneseq
      %v5932 = vshrl.u32 %v5931, 7
      %v5933 = vsub.s32 6, %v5932
      %v5934 = vrot.slane %v396, %v5933
      %v5935 = vmul.f32 %v5934, %v1306
      %v5936 = vmul.f32 %v5934, %v1307
      %v5937 = vmul.f32 %v5934, %v1308
      %v5938 = vmul.f32 %v5934, %v1309
      %v5939 = vmul.f32 %v5934, %v1310
      %v5940 = vmul.f32 %v5934, %v1311
      %v5941 = vmul.f32 %v5934, %v1312
      %v5942 = vmul.f32 %v5934, %v1313
      %v5943 = vadd.f32 %v2241, %v5935
      %v5944 = vadd.f32 %v2768, %v5936
      %v5945 = vadd.f32 %v3295, %v5937
      %v5946 = vadd.f32 %v3822, %v5938
      %v5947 = vadd.f32 %v4349, %v5939
      %v5948 = vadd.f32 %v4876, %v5940
      %v5949 = vadd.f32 %v5403, %v5941
      %v5950 = vadd.f32 %v5930, %v5942
      %v5951 = vxor.u32 %v995, 2147483648
      %v5952 = vxor.u32 %v999, 2147483648
      %v5953 = vxor.u32 %v1005, 2147483648
      %v5954 = vxor.u32 %v1009, 2147483648
      %v5955 = vxor.u32 %v1015, 2147483648
      %v5956 = vxor.u32 %v1019, 2147483648
      %v5957 = vxor.u32 %v1025, 2147483648
      %v5958 = vxor.u32 %v1029, 2147483648
      %v5959 = vmul.f32 %v5951, 1.442695
      %v5960 = vpow.pop %v5959
      %v5961 = vmul.f32 %v5952, 1.442695
      %v5962 = vpow.pop %v5961
      %v5963 = vmul.f32 %v5953, 1.442695
      %v5964 = vpow.pop %v5963
      %v5965 = vmul.f32 %v5954, 1.442695
      %v5966 = vpow.pop %v5965
      %v5967 = vmul.f32 %v5955, 1.442695
      %v5968 = vpow.pop %v5967
      %v5969 = vmul.f32 %v5956, 1.442695
      %v5970 = vpow.pop %v5969
      %v5971 = vmul.f32 %v5957, 1.442695
      %v5972 = vpow.pop %v5971
      %v5973 = vmul.f32 %v5958, 1.442695
      %v5974 = vpow.pop %v5973
      %v5975 = vadd.f32 %v5960, 1.0
      %v5976 = vadd.f32 %v5962, 1.0
      %v5977 = vadd.f32 %v5964, 1.0
      %v5978 = vadd.f32 %v5966, 1.0
      %v5979 = vadd.f32 %v5968, 1.0
      %v5980 = vadd.f32 %v5970, 1.0
      %v5981 = vadd.f32 %v5972, 1.0
      %v5982 = vadd.f32 %v5974, 1.0
      %v5983 = vrcp.pop %v5975
      %v5984 = vmul.f32 1.0, %v5983
      %v5985 = vrcp.pop %v5976
      %v5986 = vmul.f32 1.0, %v5985
      %v5987 = vrcp.pop %v5977
      %v5988 = vmul.f32 1.0, %v5987
      %v5989 = vrcp.pop %v5978
      %v5990 = vmul.f32 1.0, %v5989
      %v5991 = vrcp.pop %v5979
      %v5992 = vmul.f32 1.0, %v5991
      %v5993 = vrcp.pop %v5980
      %v5994 = vmul.f32 1.0, %v5993
      %v5995 = vrcp.pop %v5981
      %v5996 = vmul.f32 1.0, %v5995
      %v5997 = vrcp.pop %v5982
      %v5998 = vmul.f32 1.0, %v5997
      %v5999 = vmul.f32 %v995, %v5984
      %v6000 = vmul.f32 %v999, %v5986
      %v6001 = vmul.f32 %v1005, %v5988
      %v6002 = vmul.f32 %v1009, %v5990
      %v6003 = vmul.f32 %v1015, %v5992
      %v6004 = vmul.f32 %v1019, %v5994
      %v6005 = vmul.f32 %v1025, %v5996
      %v6006 = vmul.f32 %v1029, %v5998
      %v6007 = vmul.f32 %v5943, %v5999
      %v6008 = vmul.f32 %v5944, %v6000
      %v6009 = vmul.f32 %v5945, %v6001
      %v6010 = vmul.f32 %v5946, %v6002
      %v6011 = vmul.f32 %v5947, %v6003
      %v6012 = vmul.f32 %v5948, %v6004
      %v6013 = vmul.f32 %v5949, %v6005
      %v6014 = vmul.f32 %v5950, %v6006
      %v6015 = vpack.c.bf16 %v6008, %v6007
      %v6016 = vpack.c.bf16 %v6010, %v6009
      %v6017 = vpack.c.bf16 %v6012, %v6011
      %v6018 = vpack.c.bf16 %v6014, %v6013
      %v6019 = vld [vmem:[%s8] sm:$0xf]
      %v6020 = vld [vmem:[%s8 + $0x4] sm:$0xf]
      %v6021 = vld [vmem:[%s8 + $0x8] sm:$0xf]
      %v6022 = vld [vmem:[%s8 + $0xc] sm:$0xf]
      %v6023 = vld [vmem:[%s8 + $0x10] sm:$0xf]
      %v6024 = vld [vmem:[%s8 + $0x14] sm:$0xf]
      %v6025 = vld [vmem:[%s8 + $0x18] sm:$0xf]
      %v6026 = vld [vmem:[%s8 + $0x1c] sm:$0xf]
      %v6027 = vld [vmem:[%s8 + $0x20] sm:$0xf]
      %v6028 = vld [vmem:[%s8 + $0x24] sm:$0xf]
      %v6029 = vld [vmem:[%s8 + $0x28] sm:$0xf]
      %v6030 = vld [vmem:[%s8 + $0x2c] sm:$0xf]
      %v6031 = vld [vmem:[%s8 + $0x30] sm:$0xf]
      %v6032 = vld [vmem:[%s8 + $0x34] sm:$0xf]
      %v6033 = vld [vmem:[%s8 + $0x38] sm:$0xf]
      %v6034 = vld [vmem:[%s8 + $0x3c] sm:$0xf]
      %v6051 = vunpack.c.l.b16 %v6019
      %v6052 = vunpack.c.l.b16 %v6020
      %v6053 = vunpack.c.l.b16 %v6021
      %v6054 = vunpack.c.l.b16 %v6022
      %v6055 = vunpack.c.l.b16 %v6023
      %v6056 = vunpack.c.l.b16 %v6024
      %v6057 = vunpack.c.l.b16 %v6025
      %v6058 = vunpack.c.l.b16 %v6026
      %v6059 = vunpack.c.l.b16 %v6027
      %v6060 = vunpack.c.l.b16 %v6028
      %v6061 = vunpack.c.l.b16 %v6029
      %v6062 = vunpack.c.l.b16 %v6030
      %v6063 = vunpack.c.l.b16 %v6031
      %v6064 = vunpack.c.l.b16 %v6032
      %v6065 = vunpack.c.l.b16 %v6033
      %v6066 = vunpack.c.l.b16 %v6034
      %v6067 = vpack.c.b16 %v6052, %v6051
      %v6068 = vpack.c.b16 %v6054, %v6053
      %v6069 = vpack.c.b16 %v6056, %v6055
      %v6070 = vpack.c.b16 %v6058, %v6057
      %v6071 = vpack.c.b16 %v6060, %v6059
      %v6072 = vpack.c.b16 %v6062, %v6061
      %v6073 = vpack.c.b16 %v6064, %v6063
      %v6074 = vpack.c.b16 %v6066, %v6065
      %6083 = vmatprep.subr.bf16.mxu0 0
      %6084 = vmatpush1.bf16.msra.mxu0 %v6067
      %6085 = vmatprep.subr.bf16.mxu0 0
      %6086 = vmatpush1.bf16.msra.mxu0 %v6068
      %6087 = vmatprep.subr.bf16.mxu0 0
      %6088 = vmatpush1.bf16.msra.mxu0 %v6069
      %6089 = vmatprep.subr.bf16.mxu0 0
      %6090 = vmatpush1.bf16.msra.mxu0 %v6070
      %6091 = vmatprep.subr.bf16.mxu0 0
      %6092 = vmatpush1.bf16.msra.mxu0 %v6071
      %6093 = vmatprep.subr.bf16.mxu0 0
      %6094 = vmatpush1.bf16.msra.mxu0 %v6072
      %6095 = vmatprep.subr.bf16.mxu0 0
      %6096 = vmatpush1.bf16.msra.mxu0 %v6073
      %6097 = vmatprep.subr.bf16.mxu0 0
      %6098 = vmatpush1.bf16.msra.mxu0 %v6074
      %6099 = vmatprep.subr.bf16.mxu0 0
      %6100 = vmatpush1.bf16.msra.mxu0 0
      %6101 = vmatprep.subr.bf16.mxu0 0
      %6102 = vmatpush1.bf16.msra.mxu0 0
      %6103 = vmatprep.subr.bf16.mxu0 0
      %6104 = vmatpush1.bf16.msra.mxu0 0
      %6105 = vmatprep.subr.bf16.mxu0 0
      %6106 = vmatpush1.bf16.msra.mxu0 0
      %6107 = vmatprep.subr.bf16.mxu0 0
      %6108 = vmatpush1.bf16.msra.mxu0 0
      %6109 = vmatprep.subr.bf16.mxu0 0
      %6110 = vmatpush1.bf16.msra.mxu0 0
      %6111 = vmatprep.subr.bf16.mxu0 0
      %6112 = vmatpush1.bf16.msra.mxu0 0
      %6113 = vmatprep.subr.bf16.mxu0 0
      %6114 = vmatpush1.bf16.msra.mxu0 0
      %6115 = vmatprep.mubr.bf16.mxu0 0
      %6116 = vmatmul.mubr.bf16.gmra.mrb[0].mxu0 %v6015
      %v6117 = vpop.f32.mrb[0].mxu0
      %v6118 = vadd.f32 0.0, %v6117
      %v6119 = vpop.f32.mrb[0].mxu0
      %v6120 = vpop.f32.mrb[0].mxu0
      %v6121 = vadd.f32 0.0, %v6120
      %v6122 = vpop.f32.mrb[0].mxu0
      %6123 = vmatprep.mubr.bf16.mxu0 0
      %6124 = vmatmul.mubr.bf16.gmra.mrb[0].mxu0 %v6016
      %v6125 = vpop.f32.mrb[0].mxu0
      %v6126 = vadd.f32 0.0, %v6125
      %v6127 = vpop.f32.mrb[0].mxu0
      %v6128 = vpop.f32.mrb[0].mxu0
      %v6129 = vadd.f32 0.0, %v6128
      %v6130 = vpop.f32.mrb[0].mxu0
      %6131 = vmatprep.mubr.bf16.mxu0 0
      %6132 = vmatmul.mubr.bf16.gmra.mrb[0].mxu0 %v6017
      %v6133 = vpop.f32.mrb[0].mxu0
      %v6134 = vadd.f32 0.0, %v6133
      %v6135 = vpop.f32.mrb[0].mxu0
      %v6136 = vpop.f32.mrb[0].mxu0
      %v6137 = vadd.f32 0.0, %v6136
      %v6138 = vpop.f32.mrb[0].mxu0
      %6139 = vmatprep.mubr.bf16.mxu0 0
      %6140 = vmatmul.mubr.bf16.gmra.mrb[0].mxu0 %v6018
      %v6141 = vpop.f32.mrb[0].mxu0
      %v6142 = vadd.f32 0.0, %v6141
      %v6143 = vpop.f32.mrb[0].mxu0
      %v6144 = vpop.f32.mrb[0].mxu0
      %v6145 = vadd.f32 0.0, %v6144
      %v6146 = vpop.f32.mrb[0].mxu0
      %6147 = vdwg.mxu0
      %6156 = vrot.lane.b32.xlu0 %v478, 64
      %v6157 = vpop.permute.xlu0 %6156
      %6158 = vrot.lane.b32.xlu0 %v479, 64
      %v6159 = vpop.permute.xlu0 %6158
      %6160 = vrot.lane.b32.xlu0 %v480, 64
      %v6161 = vpop.permute.xlu0 %6160
      %6162 = vrot.lane.b32.xlu0 %v481, 64
      %v6163 = vpop.permute.xlu0 %6162
      %6164 = vrot.lane.b32.xlu0 %v482, 64
      %v6165 = vpop.permute.xlu0 %6164
      %6166 = vrot.lane.b32.xlu0 %v483, 64
      %v6167 = vpop.permute.xlu0 %6166
      %6168 = vrot.lane.b32.xlu0 %v484, 64
      %v6169 = vpop.permute.xlu0 %6168
      %6170 = vrot.lane.b32.xlu0 %v485, 64
      %v6171 = vpop.permute.xlu0 %6170
      %v6180 = vsel %vm945, %v6118, %v6157
      %v6181 = vsel %vm945, %v6121, %v6159
      %v6182 = vsel %vm945, %v6126, %v6161
      %v6183 = vsel %vm945, %v6129, %v6163
      %v6184 = vsel %vm945, %v6134, %v6165
      %v6185 = vsel %vm945, %v6137, %v6167
      %v6186 = vsel %vm945, %v6142, %v6169
      %v6187 = vsel %vm945, %v6145, %v6171
      %6188 = vst [vmem:[%s392] sm:$0xff] %v6180
      %6189 = vst [vmem:[%s392 + $0x8] sm:$0xff] %v6181
      %6190 = vst [vmem:[%s392 + $0x10] sm:$0xff] %v6182
      %6191 = vst [vmem:[%s392 + $0x18] sm:$0xff] %v6183
      %6192 = vst [vmem:[%s392 + $0x20] sm:$0xff] %v6184
      %6193 = vst [vmem:[%s392 + $0x28] sm:$0xff] %v6185
      %6194 = vst [vmem:[%s392 + $0x30] sm:$0xff] %v6186
      %6195 = vst [vmem:[%s392 + $0x38] sm:$0xff] %v6187
      %p6196 = scmp.lt.s32.totalorder %s20, 1
      %s6197 = scalar_select %p6196, %s20, 1
      %s6198 = smul.addr %s6197, 8
      %s6199 = smul.addr %s6198, 8
      %s6200 = scalar_lea.vmem %s9, %s6199
      // Predicated region
      $region57: #{token_swap_mamba.1} parent=55 // pred_check
        %p6201 = pneg %p247
      $region58: #{token_swap_mamba.1} parent=55 // pred_check_branch
        %6203 = sbr.rel (%p6201) target = $region60
      $region59: #{token_swap_mamba.1} parent=55 // pred_region
        _
      $region60: #{token_swap_mamba.1} parent=55 // pred_fallthru
        _
    $region56: #{token_swap_mamba.1} parent=5 // pred_fallthru
      _
    %p6204 = scmp.le.s32.totalorder 2, %s15
    // Predicated region
    $region61: #{token_swap_mamba.1} parent=5 // pred_check
      %p6205 = pneg %p6204
    $region62: #{token_swap_mamba.1} parent=5 // pred_check_branch
      %6207 = sbr.rel (%p6205) target = $region64
    $region63: #{token_swap_mamba.1} parent=5 // pred_region
      %s6208 = ssub.s32 %s15, 2
      // Predicated region
      $region65: #{token_swap_mamba.1} parent=63 // pred_check
        %p6209 = pneg %p253
      $region66: #{token_swap_mamba.1} parent=63 // pred_check_branch
        %6211 = sbr.rel (%p6209) target = $region68
      $region67: #{token_swap_mamba.1} parent=63 // pred_region
        %p6212 = scmp.lt.s32.totalorder %s21, 1
        %s6213 = scalar_select %p6212, %s21, 1
        %s6214 = smul.addr %s6213, 8
        %s6215 = smul.addr %s6214, 8
        %s6216 = scalar_lea.vmem %s9, %s6215
      $region68: #{token_swap_mamba.1} parent=63 // pred_fallthru
        _
    $region64: #{token_swap_mamba.1} parent=5 // pred_fallthru
      _
  $region6: #{token_swap_mamba.1} parent=0 // loop_footer
    %s19 = sadd.s32 1, %s15
  $region7: #{token_swap_mamba.1} parent=0 // loop_footer_branch
    %14 = sbr.rel target = $region3
  $region8: #{token_swap_mamba.1} parent=0 // loop_exit
    _

</llo_original>
